<compile_context>
chip_gen: v7x
topology: tpu7x:2x2x1
jax: 0.10.0
libtpu: 0.0.40
codegen_flags: <defaults>
</compile_context>

<pallas_src>
import functools

import jax
import jax.numpy as jnp
from jax.experimental import pallas as pl
from jax.experimental.pallas import tpu as pltpu


def _layer_norm(v, w_row, b_row, eps=1e-5):
    mu = jnp.mean(v, axis=-1, keepdims=True)
    var = jnp.mean(jnp.square(v - mu), axis=-1, keepdims=True)
    return (v - mu) * jax.lax.rsqrt(var + eps) * w_row + b_row


def _transformer_kernel(x_ref, ln1w, ln1b, wqkv, wo, bo, ln2w, ln2b,
                        w1, b1, w2, b2, lnfw, lnfb, o_ref, x_sc,
                        *, seq, heads, dh, cp, scale, resident):
    l = pl.program_id(1)

    def wsel(ref):
        # Resident mode: whole weight stack is in VMEM, pick layer l.
        # Streaming mode: ref already holds only layer l's slice.
        return ref[l] if resident else ref[...]

    @pl.when(l == 0)
    def _():
        x_sc[...] = x_ref[...].astype(jnp.float32)

    x = x_sc[...]                      # (rows, C) f32 residual stream
    rows = x.shape[0]
    tb = rows // seq

    # ---- attention block: Residual(PreNormDrop(SelfAttention)) ----
    y = _layer_norm(x, wsel(ln1w), wsel(ln1b))
    qkv = jnp.dot(y.astype(jnp.bfloat16), wsel(wqkv),
                  preferred_element_type=jnp.float32)          # (rows, 3*cp)
    # Q occupies lanes [0, cp), K [cp, 2cp), V [2cp, 3cp); each padded to 128.

    # TODO(synk): a fully head-batched attention ("bqhd,bkhd->bhqk") needs a
    # multi-batch-dim dot_general or an interior-dim transpose / lane-splitting
    # reshape, which do not lower reliably in Mosaic on this toolchain, so the
    # attention core stays a short unrolled per-head loop (seq and dh are tiny);
    # QK now runs with bf16 MXU inputs and 128-lane-aligned Q/K/V base offsets.
    ctx_heads = []
    for h in range(heads):
        qh = qkv[:, h * dh:(h + 1) * dh].reshape(tb, seq, dh).astype(jnp.bfloat16)
        kh = qkv[:, cp + h * dh:cp + (h + 1) * dh].reshape(tb, seq, dh).astype(jnp.bfloat16)
        vh = qkv[:, 2 * cp + h * dh:2 * cp + (h + 1) * dh].reshape(tb, seq, dh).astype(jnp.bfloat16)
        logits = jnp.einsum("bqd,bkd->bqk", qh, kh,
                            preferred_element_type=jnp.float32) * scale
        m = jnp.max(logits, axis=-1, keepdims=True)
        e = jnp.exp(logits - m)
        p = e / jnp.sum(e, axis=-1, keepdims=True)             # exact softmax
        ch = jnp.einsum("bqk,bkd->bqd", p.astype(jnp.bfloat16), vh,
                        preferred_element_type=jnp.float32)
        ctx_heads.append(ch.reshape(rows, dh))
    ctx = jnp.concatenate(ctx_heads, axis=-1)                  # (rows, heads*dh)

    attn = jnp.dot(ctx.astype(jnp.bfloat16), wsel(wo),
                   preferred_element_type=jnp.float32) + wsel(bo)
    x = x + attn

    # ---- MLP block: Residual(PreNorm(FeedForward)) ----
    y = _layer_norm(x, wsel(ln2w), wsel(ln2b))
    h1 = jnp.dot(y.astype(jnp.bfloat16), wsel(w1),
                 preferred_element_type=jnp.float32) + wsel(b1)
    # TODO(synk): nn.GELU defaults to the exact erf GELU; erf has no clean Mosaic
    # lowering, so the tanh approximation is used (max abs diff ~1e-3 at this scale).
    h1 = jax.nn.gelu(h1, approximate=True)
    x = x + jnp.dot(h1.astype(jnp.bfloat16), wsel(w2),
                    preferred_element_type=jnp.float32) + wsel(b2)

    x_sc[...] = x

    # ---- final pre_head_ln on the last layer, then write out ----
    @pl.when(l == pl.num_programs(1) - 1)
    def _():
        # TODO(synk): with C < 128 this store is lane-masked; a lane-dense
        # (rows/k, k*C) output slab is a measure-first follow-up.
        o_ref[...] = _layer_norm(x, lnfw[...], lnfb[...]).astype(o_ref.dtype)


def _round_up(v, m):
    return (v + m - 1) // m * m


def _vmem_capacity_bytes():
    try:
        return int(pltpu.get_tpu_info().vmem_capacity_bytes)
    except Exception:
        return 64 << 20     # conservative default (v7x per-TensorCore VMEM)


def prepare_temporal_params(params, *, num_heads):
    """Fuse / pad / cast the weights once per parameter set (hoisted off the forward path)."""
    depth, heads, C, dh = params["wq"].shape
    assert heads == num_heads and heads * dh == C
    mlp = params["w1"].shape[-1]
    Cp = _round_up(C, 128)             # lane-aligned Q/K/V block width

    def fuse(wstack):  # (depth, heads, C, dh) -> (depth, C, heads*dh), head-major cols
        return jnp.transpose(wstack, (0, 2, 1, 3)).reshape(depth, C, heads * dh)

    def pad_cols(a):
        return jnp.pad(a, ((0, 0), (0, 0), (0, Cp - a.shape[-1])))

    wqkv = jnp.concatenate([pad_cols(fuse(params["wq"])),
                            pad_cols(fuse(params["wk"])),
                            pad_cols(fuse(params["wv"]))],
                           axis=-1).astype(jnp.bfloat16)       # (depth, C, 3*Cp)
    return {
        "wqkv": wqkv,
        "wo": params["wo"].reshape(depth, heads * dh, C).astype(jnp.bfloat16),
        "w1": params["w1"].astype(jnp.bfloat16),
        "w2": params["w2"].astype(jnp.bfloat16),
        "ln1_w": params["ln1_w"].reshape(depth, 1, C),
        "ln1_b": params["ln1_b"].reshape(depth, 1, C),
        "ln2_w": params["ln2_w"].reshape(depth, 1, C),
        "ln2_b": params["ln2_b"].reshape(depth, 1, C),
        "bo": params["bo"].reshape(depth, 1, C),
        "b1": params["b1"].reshape(depth, 1, mlp),
        "b2": params["b2"].reshape(depth, 1, C),
        "lnf_w": params["lnf_w"].reshape(1, C),
        "lnf_b": params["lnf_b"].reshape(1, C),
        "meta": dict(depth=depth, heads=heads, dh=dh, C=C, Cp=Cp, mlp=mlp),
    }


def temporal_transformer_pallas(x, params, *, num_heads, tb=None):
    prep = params if "wqkv" in params else prepare_temporal_params(params, num_heads=num_heads)
    meta = prep["meta"]
    depth, heads, dh = meta["depth"], meta["heads"], meta["dh"]
    C, Cp, mlp = meta["C"], meta["Cp"], meta["mlp"]
    assert heads == num_heads

    B, Cx, D, H, W = x.shape
    assert Cx == C
    S = D
    N = B * H * W
    scale = float(dh) ** -0.5
    f32b, bf16b = 4, 2
    xbytes = jnp.dtype(x.dtype).itemsize

    # ---- per-generation VMEM budget (v5e/v6e: 128 MiB phys, v7x: 64 MiB/core) ----
    budget = int(0.75 * _vmem_capacity_bytes())

    # ---- weight footprint & residency policy (avoid re-fetching per token tile) ----
    w_layer = (C * 3 * Cp + C * C + C * mlp + mlp * C) * bf16b + (6 * C + mlp) * f32b
    w_total = depth * w_layer + 2 * C * f32b
    resident = 2 * w_total <= int(0.4 * budget)   # DMA all layers' weights exactly once
    w_vmem = 2 * w_total if resident else 2 * w_layer + 4 * C * f32b

    # ---- per-row live bytes: residual scratch + intermediates + bf16 copies ----
    row_f32 = 9 * C + 3 * Cp + 3 * S + mlp        # x_sc/x/y/qkv/logits/ctx/attn/h1/out
    row_bf16 = 2 * C + 3 * Cp + mlp               # bf16 casts of y, q/k/v, ctx, h1
    row_bytes = row_f32 * f32b + row_bf16 * bf16b
    io_row_bytes = 2 * 2 * C * xbytes             # in + out blocks, double-buffered

    rows_cap = (budget - w_vmem - (4 << 20)) // (row_bytes + io_row_bytes)
    rows_cap = max(S, min(int(rows_cap), 1024))   # >1024 rows: diminishing returns

    # ---- token-tile pick: divisor of N, rows near 512, >=2 parallel steps (v7x) ----
    if tb is None:
        divs = [d for d in range(1, N + 1) if N % d == 0]
        fits = [d for d in divs if d * S <= rows_cap] or [1]
        pref = [d for d in fits if N // d >= 2] or fits
        tb = min(pref, key=lambda d: (abs(d * S - 512), -d))
    assert N % tb == 0
    rows = tb * S
    tiles = N // tb

    est = w_vmem + rows * (row_bytes + io_row_bytes) + 2 * C * f32b
    vmem_limit = int(min(budget, max(int(est * 1.3) + (4 << 20), min(budget, 32 << 20))))

    per_layer = [prep[k] for k in
                 ("ln1_w", "ln1_b", "wqkv", "wo", "bo", "ln2_w", "ln2_b",
                  "w1", "b1", "w2", "b2")]

    if resident:
        def wspec(a):  # whole stack resident, constant index map -> single DMA
            z = (0,) * a.ndim
            return pl.BlockSpec(a.shape, lambda i, l, _z=z: _z)
    else:
        def wspec(a):  # stream one layer's slice per grid step
            trail = a.shape[1:]
            z = (0,) * len(trail)
            return pl.BlockSpec((None,) + trail, lambda i, l, _z=z: (l,) + _z)

    in_specs = [pl.BlockSpec((rows, C), lambda i, l: (i, 0))]
    in_specs += [wspec(a) for a in per_layer]
    in_specs += [pl.BlockSpec((1, C), lambda i, l: (0, 0)),
                 pl.BlockSpec((1, C), lambda i, l: (0, 0))]

    kernel = functools.partial(_transformer_kernel, seq=S, heads=heads, dh=dh,
                               cp=Cp, scale=scale, resident=resident)

    # 'b c s h w -> (b h w) s c', flattened to a lane-dense 2-D (N*S, C) slab.
    xr = jnp.transpose(x, (0, 3, 4, 2, 1)).reshape(N * S, C)

    out = pl.pallas_call(
        kernel,
        out_shape=jax.ShapeDtypeStruct((N * S, C), x.dtype),
        grid=(tiles, depth),
        in_specs=in_specs,
        out_specs=pl.BlockSpec((rows, C), lambda i, l: (i, 0)),
        scratch_shapes=[pltpu.VMEM((rows, C), jnp.float32)],
        compiler_params=pltpu.CompilerParams(
            dimension_semantics=("parallel", "arbitrary"),
            vmem_limit_bytes=vmem_limit),
    )(xr, *per_layer, prep["lnf_w"], prep["lnf_b"])

    # '(b p1 p2) s c -> b c s p1 p2'
    return out.reshape(B, H, W, S, C).transpose(0, 4, 3, 1, 2)


def temporal_transformer_ref(x, params, *, num_heads):
    """Pure-JAX f32 reference with identical math, for validation."""
    B, C, D, H, W = x.shape
    depth = params["ln1_w"].shape[0]
    dh = C // num_heads
    scale = float(dh) ** -0.5
    z = jnp.transpose(x, (0, 3, 4, 2, 1)).reshape(B * H * W, D, C).astype(jnp.float32)

    for l in range(depth):
        y = _layer_norm(z, params["ln1_w"][l], params["ln1_b"][l])
        att = jnp.zeros_like(z)
        for h in range(num_heads):
            q = y @ params["wq"][l, h]
            k = y @ params["wk"][l, h]
            v = y @ params["wv"][l, h]
            p = jax.nn.softmax(jnp.einsum("bqd,bkd->bqk", q, k) * scale, axis=-1)
            att = att + jnp.einsum("bqk,bkd->bqd", p, v) @ params["wo"][l, h]
        z = z + att + params["bo"][l]
        y = _layer_norm(z, params["ln2_w"][l], params["ln2_b"][l])
        h1 = jax.nn.gelu(y @ params["w1"][l] + params["b1"][l], approximate=True)
        z = z + h1 @ params["w2"][l] + params["b2"][l]

    z = _layer_norm(z, params["lnf_w"][0], params["lnf_b"][0])
    return z.reshape(B, H, W, D, C).transpose(0, 4, 3, 1, 2).astype(x.dtype)


def init_params(key, *, depth, heads, dim, mlp_dim):
    dh = dim // heads
    ks = jax.random.split(key, 6)
    nrm = lambda k, shp: 0.02 * jax.random.normal(k, shp, jnp.float32)
    return {
        "ln1_w": jnp.ones((depth, dim), jnp.float32),
        "ln1_b": jnp.zeros((depth, dim), jnp.float32),
        "wq": nrm(ks[0], (depth, heads, dim, dh)),
        "wk": nrm(ks[1], (depth, heads, dim, dh)),
        "wv": nrm(ks[2], (depth, heads, dim, dh)),
        "wo": nrm(ks[3], (depth, heads, dh, dim)),
        "bo": jnp.zeros((depth, dim), jnp.float32),
        "ln2_w": jnp.ones((depth, dim), jnp.float32),
        "ln2_b": jnp.zeros((depth, dim), jnp.float32),
        "w1": nrm(ks[4], (depth, dim, mlp_dim)),
        "b1": jnp.zeros((depth, mlp_dim), jnp.float32),
        "w2": nrm(ks[5], (depth, mlp_dim, dim)),
        "b2": jnp.zeros((depth, dim), jnp.float32),
        "lnf_w": jnp.ones((1, dim), jnp.float32),
        "lnf_b": jnp.zeros((1, dim), jnp.float32),
    }


if __name__ == "__main__":
    # Module hyperparameters (small, consistent with the forward pass):
    seq_length, embedding_dim = 8, 32
    num_layers, num_heads, hidden_dim = 2, 4, 64
    B, H, W = 2, 4, 4

    root = jax.random.PRNGKey(0)
    k_x, k_p = jax.random.split(root)
    # Input follows PyTorch NCDHW: (B, C=embedding_dim, D=seq, H, W)
    x = jax.random.normal(k_x, (B, embedding_dim, seq_length, H, W), jnp.float32)
    params = init_params(k_p, depth=num_layers, heads=num_heads,
                         dim=embedding_dim, mlp_dim=hidden_dim)

    # Weight fusion/padding/casting hoisted out of the forward path (do once).
    prepared = prepare_temporal_params(params, num_heads=num_heads)

    out = temporal_transformer_pallas(x, prepared, num_heads=num_heads)
    out = jax.block_until_ready(out)
    assert out.shape == x.shape, out.shape

    ref = jax.block_until_ready(temporal_transformer_ref(x, params, num_heads=num_heads))
    # Tolerance accounts for bf16 matmul inputs (f32 accumulation).
    assert jnp.allclose(out, ref, atol=2e-2, rtol=2e-2), float(jnp.max(jnp.abs(out - ref)))

    print("KERNEL_OK")
</pallas_src>

<mosaic_0001>
module attributes {stable_mosaic.version = 11 : i64} {
  func.func @_transformer_kernel(%arg0: i32, %arg1: i32, %arg2: memref<128x32xf32, #tpu.memory_space<vmem>>, %arg3: memref<2x1x32xf32, #tpu.memory_space<vmem>>, %arg4: memref<2x1x32xf32, #tpu.memory_space<vmem>>, %arg5: memref<2x32x384xbf16, #tpu.memory_space<vmem>>, %arg6: memref<2x32x32xbf16, #tpu.memory_space<vmem>>, %arg7: memref<2x1x32xf32, #tpu.memory_space<vmem>>, %arg8: memref<2x1x32xf32, #tpu.memory_space<vmem>>, %arg9: memref<2x1x32xf32, #tpu.memory_space<vmem>>, %arg10: memref<2x32x64xbf16, #tpu.memory_space<vmem>>, %arg11: memref<2x1x64xf32, #tpu.memory_space<vmem>>, %arg12: memref<2x64x32xbf16, #tpu.memory_space<vmem>>, %arg13: memref<2x1x32xf32, #tpu.memory_space<vmem>>, %arg14: memref<1x32xf32, #tpu.memory_space<vmem>>, %arg15: memref<1x32xf32, #tpu.memory_space<vmem>>, %arg16: memref<128x32xf32, #tpu.memory_space<vmem>>, %arg17: memref<128x32xf32, #tpu.memory_space<vmem>>) attributes {dimension_semantics = [#tpu.dimension_semantics<parallel>, #tpu.dimension_semantics<arbitrary>], iteration_bounds = array<i64: 2, 2>, scalar_prefetch = 0 : i64, scratch_operands = 1 : i64, tpu.core_type = #tpu.core_type<tc>, window_params = [{transform_indices = @transform_0, window_bounds = array<i64: 128, 32>}, {pipeline_mode = #tpu.pipeline_mode<synchronous>, transform_indices = @transform_1, window_bounds = array<i64: 2, 1, 32>}, {pipeline_mode = #tpu.pipeline_mode<synchronous>, transform_indices = @transform_2, window_bounds = array<i64: 2, 1, 32>}, {pipeline_mode = #tpu.pipeline_mode<synchronous>, transform_indices = @transform_3, window_bounds = array<i64: 2, 32, 384>}, {pipeline_mode = #tpu.pipeline_mode<synchronous>, transform_indices = @transform_4, window_bounds = array<i64: 2, 32, 32>}, {pipeline_mode = #tpu.pipeline_mode<synchronous>, transform_indices = @transform_5, window_bounds = array<i64: 2, 1, 32>}, {pipeline_mode = #tpu.pipeline_mode<synchronous>, transform_indices = @transform_6, window_bounds = array<i64: 2, 1, 32>}, {pipeline_mode = #tpu.pipeline_mode<synchronous>, transform_indices = @transform_7, window_bounds = array<i64: 2, 1, 32>}, {pipeline_mode = #tpu.pipeline_mode<synchronous>, transform_indices = @transform_8, window_bounds = array<i64: 2, 32, 64>}, {pipeline_mode = #tpu.pipeline_mode<synchronous>, transform_indices = @transform_9, window_bounds = array<i64: 2, 1, 64>}, {pipeline_mode = #tpu.pipeline_mode<synchronous>, transform_indices = @transform_10, window_bounds = array<i64: 2, 64, 32>}, {pipeline_mode = #tpu.pipeline_mode<synchronous>, transform_indices = @transform_11, window_bounds = array<i64: 2, 1, 32>}, {pipeline_mode = #tpu.pipeline_mode<synchronous>, transform_indices = @transform_12, window_bounds = array<i64: 1, 32>}, {pipeline_mode = #tpu.pipeline_mode<synchronous>, transform_indices = @transform_13, window_bounds = array<i64: 1, 32>}, {transform_indices = @transform_14, window_bounds = array<i64: 128, 32>}]} {
    %c0_i32 = arith.constant 0 : i32
    %0 = arith.cmpi eq, %arg1, %c0_i32 : i32
    %1 = arith.extui %0 : i1 to i32
    %c0_i32_0 = arith.constant 0 : i32
    %2 = arith.cmpi ne, %1, %c0_i32_0 : i32
    scf.if %2 {
      %c0_64 = arith.constant 0 : index
      %c0_65 = arith.constant 0 : index
      %211 = vector.load %arg2[%c0_64, %c0_65] : memref<128x32xf32, #tpu.memory_space<vmem>>, vector<128x32xf32>
      %c0_66 = arith.constant 0 : index
      %c0_67 = arith.constant 0 : index
      %212 = vector.load %arg17[%c0_66, %c0_67] : memref<128x32xf32, #tpu.memory_space<vmem>>, vector<128x32xf32>
      tpu.vector_store %arg17[%c0_66, %c0_67], %211 {strides = array<i32>} : memref<128x32xf32, #tpu.memory_space<vmem>>, vector<128x32xf32>,
    } else {
    }
    %c0 = arith.constant 0 : index
    %c0_1 = arith.constant 0 : index
    %3 = vector.load %arg17[%c0, %c0_1] : memref<128x32xf32, #tpu.memory_space<vmem>>, vector<128x32xf32>
    %4 = arith.index_cast %arg1 : i32 to index
    %c0_2 = arith.constant 0 : index
    %c0_3 = arith.constant 0 : index
    %5 = vector.load %arg3[%4, %c0_2, %c0_3] : memref<2x1x32xf32, #tpu.memory_space<vmem>>, vector<1x1x32xf32>
    %6 = vector.shape_cast %5 : vector<1x1x32xf32> to vector<1x32xf32>
    %7 = arith.index_cast %arg1 : i32 to index
    %c0_4 = arith.constant 0 : index
    %c0_5 = arith.constant 0 : index
    %8 = vector.load %arg4[%7, %c0_4, %c0_5] : memref<2x1x32xf32, #tpu.memory_space<vmem>>, vector<1x1x32xf32>
    %9 = vector.shape_cast %8 : vector<1x1x32xf32> to vector<1x32xf32>
    %cst = arith.constant dense<0.000000e+00> : vector<128xf32>
    %10 = vector.multi_reduction <add>, %3, %cst [1] : vector<128x32xf32> to vector<128xf32>
    %11 = vector.shape_cast %10 : vector<128xf32> to vector<128x1xf32>
    %cst_6 = arith.constant 3.200000e+01 : f32
    %12 = vector.broadcast %cst_6 : f32 to vector<128x1xf32>
    %13 = arith.divf %11, %12 : vector<128x1xf32>
    %14 = vector.broadcast %13 : vector<128x1xf32> to vector<128x32xf32>
    %15 = arith.subf %3, %14 : vector<128x32xf32>
    %16 = arith.mulf %15, %15 : vector<128x32xf32>
    %cst_7 = arith.constant dense<0.000000e+00> : vector<128xf32>
    %17 = vector.multi_reduction <add>, %16, %cst_7 [1] : vector<128x32xf32> to vector<128xf32>
    %18 = vector.shape_cast %17 : vector<128xf32> to vector<128x1xf32>
    %cst_8 = arith.constant 3.200000e+01 : f32
    %19 = vector.broadcast %cst_8 : f32 to vector<128x1xf32>
    %20 = arith.divf %18, %19 : vector<128x1xf32>
    %21 = vector.broadcast %13 : vector<128x1xf32> to vector<128x32xf32>
    %22 = arith.subf %3, %21 : vector<128x32xf32>
    %cst_9 = arith.constant 9.99999974E-6 : f32
    %23 = vector.broadcast %cst_9 : f32 to vector<128x1xf32>
    %24 = arith.addf %20, %23 : vector<128x1xf32>
    %25 = math.rsqrt %24 : vector<128x1xf32>
    %26 = vector.broadcast %25 : vector<128x1xf32> to vector<128x32xf32>
    %27 = arith.mulf %22, %26 : vector<128x32xf32>
    %28 = vector.broadcast %6 : vector<1x32xf32> to vector<128x32xf32>
    %29 = arith.mulf %27, %28 : vector<128x32xf32>
    %30 = vector.broadcast %9 : vector<1x32xf32> to vector<128x32xf32>
    %31 = arith.addf %29, %30 : vector<128x32xf32>
    %32 = arith.truncf %31 : vector<128x32xf32> to vector<128x32xbf16>
    %33 = arith.index_cast %arg1 : i32 to index
    %c0_10 = arith.constant 0 : index
    %c0_11 = arith.constant 0 : index
    %34 = vector.load %arg5[%33, %c0_10, %c0_11] : memref<2x32x384xbf16, #tpu.memory_space<vmem>>, vector<1x32x384xbf16>
    %35 = vector.shape_cast %34 : vector<1x32x384xbf16> to vector<32x384xbf16>
    %cst_12 = arith.constant dense<0.000000e+00> : vector<128x384xf32>
    %36 = tpu.matmul %32, %35, %cst_12 {dimension_numbers = #tpu.dot_dimension_numbers<[1], [0], [0], [1], [0, 0, 1, 1], [], []>} : vector<128x32xbf16>, vector<32x384xbf16>, vector<128x384xf32> -> vector<128x384xf32>
    %37 = vector.extract_strided_slice %36 {offsets = [0, 0], sizes = [128, 8], strides = [1, 1]} : vector<128x384xf32> to vector<128x8xf32>
    %38 = vector.shape_cast %37 : vector<128x8xf32> to vector<16x8x8xf32>
    %39 = arith.truncf %38 : vector<16x8x8xf32> to vector<16x8x8xbf16>
    %40 = vector.extract_strided_slice %36 {offsets = [0, 128], sizes = [128, 8], strides = [1, 1]} : vector<128x384xf32> to vector<128x8xf32>
    %41 = vector.shape_cast %40 : vector<128x8xf32> to vector<16x8x8xf32>
    %42 = arith.truncf %41 : vector<16x8x8xf32> to vector<16x8x8xbf16>
    %43 = vector.extract_strided_slice %36 {offsets = [0, 256], sizes = [128, 8], strides = [1, 1]} : vector<128x384xf32> to vector<128x8xf32>
    %44 = vector.shape_cast %43 : vector<128x8xf32> to vector<16x8x8xf32>
    %45 = arith.truncf %44 : vector<16x8x8xf32> to vector<16x8x8xbf16>
    "tpu.trace_start"() <{level = 10 : i32, message = "bqd,bkd->bqk"}> : () -> ()
    %cst_13 = arith.constant dense<0.000000e+00> : vector<16x8x8xf32>
    %46 = tpu.matmul %39, %42, %cst_13 {dimension_numbers = #tpu.dot_dimension_numbers<[2], [2], [1], [1], [0, 0, 0, 1, 1, 1], [0], [0]>} : vector<16x8x8xbf16>, vector<16x8x8xbf16>, vector<16x8x8xf32> -> vector<16x8x8xf32>
    "tpu.trace_stop"() : () -> ()
    %cst_14 = arith.constant 0.353553385 : f32
    %47 = vector.broadcast %cst_14 : f32 to vector<16x8x8xf32>
    %48 = arith.mulf %46, %47 : vector<16x8x8xf32>
    %cst_15 = arith.constant dense<0xFF800000> : vector<16x8xf32>
    %49 = vector.multi_reduction <maximumf>, %48, %cst_15 [2] : vector<16x8x8xf32> to vector<16x8xf32>
    %50 = vector.shape_cast %49 : vector<16x8xf32> to vector<16x8x1xf32>
    %51 = vector.broadcast %50 : vector<16x8x1xf32> to vector<16x8x8xf32>
    %52 = arith.subf %48, %51 : vector<16x8x8xf32>
    %53 = math.exp %52 : vector<16x8x8xf32>
    %cst_16 = arith.constant dense<0.000000e+00> : vector<16x8xf32>
    %54 = vector.multi_reduction <add>, %53, %cst_16 [2] : vector<16x8x8xf32> to vector<16x8xf32>
    %55 = vector.shape_cast %54 : vector<16x8xf32> to vector<16x8x1xf32>
    %56 = vector.broadcast %55 : vector<16x8x1xf32> to vector<16x8x8xf32>
    %57 = arith.divf %53, %56 : vector<16x8x8xf32>
    %58 = arith.truncf %57 : vector<16x8x8xf32> to vector<16x8x8xbf16>
    "tpu.trace_start"() <{level = 10 : i32, message = "bqk,bkd->bqd"}> : () -> ()
    %cst_17 = arith.constant dense<0.000000e+00> : vector<16x8x8xf32>
    %59 = tpu.matmul %58, %45, %cst_17 {dimension_numbers = #tpu.dot_dimension_numbers<[2], [1], [1], [2], [0, 0, 0, 1, 1, 2], [0], [0]>} : vector<16x8x8xbf16>, vector<16x8x8xbf16>, vector<16x8x8xf32> -> vector<16x8x8xf32>
    "tpu.trace_stop"() : () -> ()
    %60 = vector.shape_cast %59 : vector<16x8x8xf32> to vector<128x8xf32>
    %61 = vector.extract_strided_slice %36 {offsets = [0, 8], sizes = [128, 8], strides = [1, 1]} : vector<128x384xf32> to vector<128x8xf32>
    %62 = vector.shape_cast %61 : vector<128x8xf32> to vector<16x8x8xf32>
    %63 = arith.truncf %62 : vector<16x8x8xf32> to vector<16x8x8xbf16>
    %64 = vector.extract_strided_slice %36 {offsets = [0, 136], sizes = [128, 8], strides = [1, 1]} : vector<128x384xf32> to vector<128x8xf32>
    %65 = vector.shape_cast %64 : vector<128x8xf32> to vector<16x8x8xf32>
    %66 = arith.truncf %65 : vector<16x8x8xf32> to vector<16x8x8xbf16>
    %67 = vector.extract_strided_slice %36 {offsets = [0, 264], sizes = [128, 8], strides = [1, 1]} : vector<128x384xf32> to vector<128x8xf32>
    %68 = vector.shape_cast %67 : vector<128x8xf32> to vector<16x8x8xf32>
    %69 = arith.truncf %68 : vector<16x8x8xf32> to vector<16x8x8xbf16>
    "tpu.trace_start"() <{level = 10 : i32, message = "bqd,bkd->bqk"}> : () -> ()
    %cst_18 = arith.constant dense<0.000000e+00> : vector<16x8x8xf32>
    %70 = tpu.matmul %63, %66, %cst_18 {dimension_numbers = #tpu.dot_dimension_numbers<[2], [2], [1], [1], [0, 0, 0, 1, 1, 1], [0], [0]>} : vector<16x8x8xbf16>, vector<16x8x8xbf16>, vector<16x8x8xf32> -> vector<16x8x8xf32>
    "tpu.trace_stop"() : () -> ()
    %cst_19 = arith.constant 0.353553385 : f32
    %71 = vector.broadcast %cst_19 : f32 to vector<16x8x8xf32>
    %72 = arith.mulf %70, %71 : vector<16x8x8xf32>
    %cst_20 = arith.constant dense<0xFF800000> : vector<16x8xf32>
    %73 = vector.multi_reduction <maximumf>, %72, %cst_20 [2] : vector<16x8x8xf32> to vector<16x8xf32>
    %74 = vector.shape_cast %73 : vector<16x8xf32> to vector<16x8x1xf32>
    %75 = vector.broadcast %74 : vector<16x8x1xf32> to vector<16x8x8xf32>
    %76 = arith.subf %72, %75 : vector<16x8x8xf32>
    %77 = math.exp %76 : vector<16x8x8xf32>
    %cst_21 = arith.constant dense<0.000000e+00> : vector<16x8xf32>
    %78 = vector.multi_reduction <add>, %77, %cst_21 [2] : vector<16x8x8xf32> to vector<16x8xf32>
    %79 = vector.shape_cast %78 : vector<16x8xf32> to vector<16x8x1xf32>
    %80 = vector.broadcast %79 : vector<16x8x1xf32> to vector<16x8x8xf32>
    %81 = arith.divf %77, %80 : vector<16x8x8xf32>
    %82 = arith.truncf %81 : vector<16x8x8xf32> to vector<16x8x8xbf16>
    "tpu.trace_start"() <{level = 10 : i32, message = "bqk,bkd->bqd"}> : () -> ()
    %cst_22 = arith.constant dense<0.000000e+00> : vector<16x8x8xf32>
    %83 = tpu.matmul %82, %69, %cst_22 {dimension_numbers = #tpu.dot_dimension_numbers<[2], [1], [1], [2], [0, 0, 0, 1, 1, 2], [0], [0]>} : vector<16x8x8xbf16>, vector<16x8x8xbf16>, vector<16x8x8xf32> -> vector<16x8x8xf32>
    "tpu.trace_stop"() : () -> ()
    %84 = vector.shape_cast %83 : vector<16x8x8xf32> to vector<128x8xf32>
    %85 = vector.extract_strided_slice %36 {offsets = [0, 16], sizes = [128, 8], strides = [1, 1]} : vector<128x384xf32> to vector<128x8xf32>
    %86 = vector.shape_cast %85 : vector<128x8xf32> to vector<16x8x8xf32>
    %87 = arith.truncf %86 : vector<16x8x8xf32> to vector<16x8x8xbf16>
    %88 = vector.extract_strided_slice %36 {offsets = [0, 144], sizes = [128, 8], strides = [1, 1]} : vector<128x384xf32> to vector<128x8xf32>
    %89 = vector.shape_cast %88 : vector<128x8xf32> to vector<16x8x8xf32>
    %90 = arith.truncf %89 : vector<16x8x8xf32> to vector<16x8x8xbf16>
    %91 = vector.extract_strided_slice %36 {offsets = [0, 272], sizes = [128, 8], strides = [1, 1]} : vector<128x384xf32> to vector<128x8xf32>
    %92 = vector.shape_cast %91 : vector<128x8xf32> to vector<16x8x8xf32>
    %93 = arith.truncf %92 : vector<16x8x8xf32> to vector<16x8x8xbf16>
    "tpu.trace_start"() <{level = 10 : i32, message = "bqd,bkd->bqk"}> : () -> ()
    %cst_23 = arith.constant dense<0.000000e+00> : vector<16x8x8xf32>
    %94 = tpu.matmul %87, %90, %cst_23 {dimension_numbers = #tpu.dot_dimension_numbers<[2], [2], [1], [1], [0, 0, 0, 1, 1, 1], [0], [0]>} : vector<16x8x8xbf16>, vector<16x8x8xbf16>, vector<16x8x8xf32> -> vector<16x8x8xf32>
    "tpu.trace_stop"() : () -> ()
    %cst_24 = arith.constant 0.353553385 : f32
    %95 = vector.broadcast %cst_24 : f32 to vector<16x8x8xf32>
    %96 = arith.mulf %94, %95 : vector<16x8x8xf32>
    %cst_25 = arith.constant dense<0xFF800000> : vector<16x8xf32>
    %97 = vector.multi_reduction <maximumf>, %96, %cst_25 [2] : vector<16x8x8xf32> to vector<16x8xf32>
    %98 = vector.shape_cast %97 : vector<16x8xf32> to vector<16x8x1xf32>
    %99 = vector.broadcast %98 : vector<16x8x1xf32> to vector<16x8x8xf32>
    %100 = arith.subf %96, %99 : vector<16x8x8xf32>
    %101 = math.exp %100 : vector<16x8x8xf32>
    %cst_26 = arith.constant dense<0.000000e+00> : vector<16x8xf32>
    %102 = vector.multi_reduction <add>, %101, %cst_26 [2] : vector<16x8x8xf32> to vector<16x8xf32>
    %103 = vector.shape_cast %102 : vector<16x8xf32> to vector<16x8x1xf32>
    %104 = vector.broadcast %103 : vector<16x8x1xf32> to vector<16x8x8xf32>
    %105 = arith.divf %101, %104 : vector<16x8x8xf32>
    %106 = arith.truncf %105 : vector<16x8x8xf32> to vector<16x8x8xbf16>
    "tpu.trace_start"() <{level = 10 : i32, message = "bqk,bkd->bqd"}> : () -> ()
    %cst_27 = arith.constant dense<0.000000e+00> : vector<16x8x8xf32>
    %107 = tpu.matmul %106, %93, %cst_27 {dimension_numbers = #tpu.dot_dimension_numbers<[2], [1], [1], [2], [0, 0, 0, 1, 1, 2], [0], [0]>} : vector<16x8x8xbf16>, vector<16x8x8xbf16>, vector<16x8x8xf32> -> vector<16x8x8xf32>
    "tpu.trace_stop"() : () -> ()
    %108 = vector.shape_cast %107 : vector<16x8x8xf32> to vector<128x8xf32>
    %109 = vector.extract_strided_slice %36 {offsets = [0, 24], sizes = [128, 8], strides = [1, 1]} : vector<128x384xf32> to vector<128x8xf32>
    %110 = vector.shape_cast %109 : vector<128x8xf32> to vector<16x8x8xf32>
    %111 = arith.truncf %110 : vector<16x8x8xf32> to vector<16x8x8xbf16>
    %112 = vector.extract_strided_slice %36 {offsets = [0, 152], sizes = [128, 8], strides = [1, 1]} : vector<128x384xf32> to vector<128x8xf32>
    %113 = vector.shape_cast %112 : vector<128x8xf32> to vector<16x8x8xf32>
    %114 = arith.truncf %113 : vector<16x8x8xf32> to vector<16x8x8xbf16>
    %115 = vector.extract_strided_slice %36 {offsets = [0, 280], sizes = [128, 8], strides = [1, 1]} : vector<128x384xf32> to vector<128x8xf32>
    %116 = vector.shape_cast %115 : vector<128x8xf32> to vector<16x8x8xf32>
    %117 = arith.truncf %116 : vector<16x8x8xf32> to vector<16x8x8xbf16>
    "tpu.trace_start"() <{level = 10 : i32, message = "bqd,bkd->bqk"}> : () -> ()
    %cst_28 = arith.constant dense<0.000000e+00> : vector<16x8x8xf32>
    %118 = tpu.matmul %111, %114, %cst_28 {dimension_numbers = #tpu.dot_dimension_numbers<[2], [2], [1], [1], [0, 0, 0, 1, 1, 1], [0], [0]>} : vector<16x8x8xbf16>, vector<16x8x8xbf16>, vector<16x8x8xf32> -> vector<16x8x8xf32>
    "tpu.trace_stop"() : () -> ()
    %cst_29 = arith.constant 0.353553385 : f32
    %119 = vector.broadcast %cst_29 : f32 to vector<16x8x8xf32>
    %120 = arith.mulf %118, %119 : vector<16x8x8xf32>
    %cst_30 = arith.constant dense<0xFF800000> : vector<16x8xf32>
    %121 = vector.multi_reduction <maximumf>, %120, %cst_30 [2] : vector<16x8x8xf32> to vector<16x8xf32>
    %122 = vector.shape_cast %121 : vector<16x8xf32> to vector<16x8x1xf32>
    %123 = vector.broadcast %122 : vector<16x8x1xf32> to vector<16x8x8xf32>
    %124 = arith.subf %120, %123 : vector<16x8x8xf32>
    %125 = math.exp %124 : vector<16x8x8xf32>
    %cst_31 = arith.constant dense<0.000000e+00> : vector<16x8xf32>
    %126 = vector.multi_reduction <add>, %125, %cst_31 [2] : vector<16x8x8xf32> to vector<16x8xf32>
    %127 = vector.shape_cast %126 : vector<16x8xf32> to vector<16x8x1xf32>
    %128 = vector.broadcast %127 : vector<16x8x1xf32> to vector<16x8x8xf32>
    %129 = arith.divf %125, %128 : vector<16x8x8xf32>
    %130 = arith.truncf %129 : vector<16x8x8xf32> to vector<16x8x8xbf16>
    "tpu.trace_start"() <{level = 10 : i32, message = "bqk,bkd->bqd"}> : () -> ()
    %cst_32 = arith.constant dense<0.000000e+00> : vector<16x8x8xf32>
    %131 = tpu.matmul %130, %117, %cst_32 {dimension_numbers = #tpu.dot_dimension_numbers<[2], [1], [1], [2], [0, 0, 0, 1, 1, 2], [0], [0]>} : vector<16x8x8xbf16>, vector<16x8x8xbf16>, vector<16x8x8xf32> -> vector<16x8x8xf32>
    "tpu.trace_stop"() : () -> ()
    %132 = vector.shape_cast %131 : vector<16x8x8xf32> to vector<128x8xf32>
    %133 = tpu.concatenate %60, %84, %108, %132 in 1 : vector<128x8xf32>, vector<128x8xf32>, vector<128x8xf32>, vector<128x8xf32> -> vector<128x32xf32>
    %134 = arith.truncf %133 : vector<128x32xf32> to vector<128x32xbf16>
    %135 = arith.index_cast %arg1 : i32 to index
    %c0_33 = arith.constant 0 : index
    %c0_34 = arith.constant 0 : index
    %136 = vector.load %arg6[%135, %c0_33, %c0_34] : memref<2x32x32xbf16, #tpu.memory_space<vmem>>, vector<1x32x32xbf16>
    %137 = vector.shape_cast %136 : vector<1x32x32xbf16> to vector<32x32xbf16>
    %cst_35 = arith.constant dense<0.000000e+00> : vector<128x32xf32>
    %138 = tpu.matmul %134, %137, %cst_35 {dimension_numbers = #tpu.dot_dimension_numbers<[1], [0], [0], [1], [0, 0, 1, 1], [], []>} : vector<128x32xbf16>, vector<32x32xbf16>, vector<128x32xf32> -> vector<128x32xf32>
    %139 = arith.index_cast %arg1 : i32 to index
    %c0_36 = arith.constant 0 : index
    %c0_37 = arith.constant 0 : index
    %140 = vector.load %arg7[%139, %c0_36, %c0_37] : memref<2x1x32xf32, #tpu.memory_space<vmem>>, vector<1x1x32xf32>
    %141 = vector.shape_cast %140 : vector<1x1x32xf32> to vector<1x32xf32>
    %142 = vector.broadcast %141 : vector<1x32xf32> to vector<128x32xf32>
    %143 = arith.addf %138, %142 : vector<128x32xf32>
    %144 = arith.addf %3, %143 : vector<128x32xf32>
    %145 = arith.index_cast %arg1 : i32 to index
    %c0_38 = arith.constant 0 : index
    %c0_39 = arith.constant 0 : index
    %146 = vector.load %arg8[%145, %c0_38, %c0_39] : memref<2x1x32xf32, #tpu.memory_space<vmem>>, vector<1x1x32xf32>
    %147 = vector.shape_cast %146 : vector<1x1x32xf32> to vector<1x32xf32>
    %148 = arith.index_cast %arg1 : i32 to index
    %c0_40 = arith.constant 0 : index
    %c0_41 = arith.constant 0 : index
    %149 = vector.load %arg9[%148, %c0_40, %c0_41] : memref<2x1x32xf32, #tpu.memory_space<vmem>>, vector<1x1x32xf32>
    %150 = vector.shape_cast %149 : vector<1x1x32xf32> to vector<1x32xf32>
    %cst_42 = arith.constant dense<0.000000e+00> : vector<128xf32>
    %151 = vector.multi_reduction <add>, %144, %cst_42 [1] : vector<128x32xf32> to vector<128xf32>
    %152 = vector.shape_cast %151 : vector<128xf32> to vector<128x1xf32>
    %cst_43 = arith.constant 3.200000e+01 : f32
    %153 = vector.broadcast %cst_43 : f32 to vector<128x1xf32>
    %154 = arith.divf %152, %153 : vector<128x1xf32>
    %155 = vector.broadcast %154 : vector<128x1xf32> to vector<128x32xf32>
    %156 = arith.subf %144, %155 : vector<128x32xf32>
    %157 = arith.mulf %156, %156 : vector<128x32xf32>
    %cst_44 = arith.constant dense<0.000000e+00> : vector<128xf32>
    %158 = vector.multi_reduction <add>, %157, %cst_44 [1] : vector<128x32xf32> to vector<128xf32>
    %159 = vector.shape_cast %158 : vector<128xf32> to vector<128x1xf32>
    %cst_45 = arith.constant 3.200000e+01 : f32
    %160 = vector.broadcast %cst_45 : f32 to vector<128x1xf32>
    %161 = arith.divf %159, %160 : vector<128x1xf32>
    %162 = vector.broadcast %154 : vector<128x1xf32> to vector<128x32xf32>
    %163 = arith.subf %144, %162 : vector<128x32xf32>
    %cst_46 = arith.constant 9.99999974E-6 : f32
    %164 = vector.broadcast %cst_46 : f32 to vector<128x1xf32>
    %165 = arith.addf %161, %164 : vector<128x1xf32>
    %166 = math.rsqrt %165 : vector<128x1xf32>
    %167 = vector.broadcast %166 : vector<128x1xf32> to vector<128x32xf32>
    %168 = arith.mulf %163, %167 : vector<128x32xf32>
    %169 = vector.broadcast %147 : vector<1x32xf32> to vector<128x32xf32>
    %170 = arith.mulf %168, %169 : vector<128x32xf32>
    %171 = vector.broadcast %150 : vector<1x32xf32> to vector<128x32xf32>
    %172 = arith.addf %170, %171 : vector<128x32xf32>
    %173 = arith.truncf %172 : vector<128x32xf32> to vector<128x32xbf16>
    %174 = arith.index_cast %arg1 : i32 to index
    %c0_47 = arith.constant 0 : index
    %c0_48 = arith.constant 0 : index
    %175 = vector.load %arg10[%174, %c0_47, %c0_48] : memref<2x32x64xbf16, #tpu.memory_space<vmem>>, vector<1x32x64xbf16>
    %176 = vector.shape_cast %175 : vector<1x32x64xbf16> to vector<32x64xbf16>
    %cst_49 = arith.constant dense<0.000000e+00> : vector<128x64xf32>
    %177 = tpu.matmul %173, %176, %cst_49 {dimension_numbers = #tpu.dot_dimension_numbers<[1], [0], [0], [1], [0, 0, 1, 1], [], []>} : vector<128x32xbf16>, vector<32x64xbf16>, vector<128x64xf32> -> vector<128x64xf32>
    %178 = arith.index_cast %arg1 : i32 to index
    %c0_50 = arith.constant 0 : index
    %c0_51 = arith.constant 0 : index
    %179 = vector.load %arg11[%178, %c0_50, %c0_51] : memref<2x1x64xf32, #tpu.memory_space<vmem>>, vector<1x1x64xf32>
    %180 = vector.shape_cast %179 : vector<1x1x64xf32> to vector<1x64xf32>
    %181 = vector.broadcast %180 : vector<1x64xf32> to vector<128x64xf32>
    %182 = arith.addf %177, %181 : vector<128x64xf32>
    %183 = arith.mulf %182, %182 : vector<128x64xf32>
    %184 = arith.mulf %182, %183 : vector<128x64xf32>
    %cst_52 = arith.constant 4.471500e-02 : f32
    %185 = vector.broadcast %cst_52 : f32 to vector<128x64xf32>
    %186 = arith.mulf %185, %184 : vector<128x64xf32>
    %187 = arith.addf %182, %186 : vector<128x64xf32>
    %cst_53 = arith.constant 0.797884583 : f32
    %188 = vector.broadcast %cst_53 : f32 to vector<128x64xf32>
    %189 = arith.mulf %188, %187 : vector<128x64xf32>
    %190 = math.tanh %189 : vector<128x64xf32>
    %cst_54 = arith.constant 1.000000e+00 : f32
    %191 = vector.broadcast %cst_54 : f32 to vector<128x64xf32>
    %192 = arith.addf %191, %190 : vector<128x64xf32>
    %cst_55 = arith.constant 5.000000e-01 : f32
    %193 = vector.broadcast %cst_55 : f32 to vector<128x64xf32>
    %194 = arith.mulf %193, %192 : vector<128x64xf32>
    %195 = arith.mulf %182, %194 : vector<128x64xf32>
    %196 = arith.truncf %195 : vector<128x64xf32> to vector<128x64xbf16>
    %197 = arith.index_cast %arg1 : i32 to index
    %c0_56 = arith.constant 0 : index
    %c0_57 = arith.constant 0 : index
    %198 = vector.load %arg12[%197, %c0_56, %c0_57] : memref<2x64x32xbf16, #tpu.memory_space<vmem>>, vector<1x64x32xbf16>
    %199 = vector.shape_cast %198 : vector<1x64x32xbf16> to vector<64x32xbf16>
    %cst_58 = arith.constant dense<0.000000e+00> : vector<128x32xf32>
    %200 = tpu.matmul %196, %199, %cst_58 {dimension_numbers = #tpu.dot_dimension_numbers<[1], [0], [0], [1], [0, 0, 1, 1], [], []>} : vector<128x64xbf16>, vector<64x32xbf16>, vector<128x32xf32> -> vector<128x32xf32>
    %201 = arith.addf %144, %200 : vector<128x32xf32>
    %202 = arith.index_cast %arg1 : i32 to index
    %c0_59 = arith.constant 0 : index
    %c0_60 = arith.constant 0 : index
    %203 = vector.load %arg13[%202, %c0_59, %c0_60] : memref<2x1x32xf32, #tpu.memory_space<vmem>>, vector<1x1x32xf32>
    %204 = vector.shape_cast %203 : vector<1x1x32xf32> to vector<1x32xf32>
    %205 = vector.broadcast %204 : vector<1x32xf32> to vector<128x32xf32>
    %206 = arith.addf %201, %205 : vector<128x32xf32>
    %c0_61 = arith.constant 0 : index
    %c0_62 = arith.constant 0 : index
    %207 = vector.load %arg17[%c0_61, %c0_62] : memref<128x32xf32, #tpu.memory_space<vmem>>, vector<128x32xf32>
    tpu.vector_store %arg17[%c0_61, %c0_62], %206 {strides = array<i32>} : memref<128x32xf32, #tpu.memory_space<vmem>>, vector<128x32xf32>,
    %c1_i32 = arith.constant 1 : i32
    %208 = arith.cmpi eq, %arg1, %c1_i32 : i32
    %209 = arith.extui %208 : i1 to i32
    %c0_i32_63 = arith.constant 0 : i32
    %210 = arith.cmpi ne, %209, %c0_i32_63 : i32
    scf.if %210 {
      %c0_64 = arith.constant 0 : index
      %c0_65 = arith.constant 0 : index
      %211 = vector.load %arg14[%c0_64, %c0_65] : memref<1x32xf32, #tpu.memory_space<vmem>>, vector<1x32xf32>
      %c0_66 = arith.constant 0 : index
      %c0_67 = arith.constant 0 : index
      %212 = vector.load %arg15[%c0_66, %c0_67] : memref<1x32xf32, #tpu.memory_space<vmem>>, vector<1x32xf32>
      %cst_68 = arith.constant dense<0.000000e+00> : vector<128xf32>
      %213 = vector.multi_reduction <add>, %206, %cst_68 [1] : vector<128x32xf32> to vector<128xf32>
      %214 = vector.shape_cast %213 : vector<128xf32> to vector<128x1xf32>
      %cst_69 = arith.constant 3.200000e+01 : f32
      %215 = vector.broadcast %cst_69 : f32 to vector<128x1xf32>
      %216 = arith.divf %214, %215 : vector<128x1xf32>
      %217 = vector.broadcast %216 : vector<128x1xf32> to vector<128x32xf32>
      %218 = arith.subf %206, %217 : vector<128x32xf32>
      %219 = arith.mulf %218, %218 : vector<128x32xf32>
      %cst_70 = arith.constant dense<0.000000e+00> : vector<128xf32>
      %220 = vector.multi_reduction <add>, %219, %cst_70 [1] : vector<128x32xf32> to vector<128xf32>
      %221 = vector.shape_cast %220 : vector<128xf32> to vector<128x1xf32>
      %cst_71 = arith.constant 3.200000e+01 : f32
      %222 = vector.broadcast %cst_71 : f32 to vector<128x1xf32>
      %223 = arith.divf %221, %222 : vector<128x1xf32>
      %224 = vector.broadcast %216 : vector<128x1xf32> to vector<128x32xf32>
      %225 = arith.subf %206, %224 : vector<128x32xf32>
      %cst_72 = arith.constant 9.99999974E-6 : f32
      %226 = vector.broadcast %cst_72 : f32 to vector<128x1xf32>
      %227 = arith.addf %223, %226 : vector<128x1xf32>
      %228 = math.rsqrt %227 : vector<128x1xf32>
      %229 = vector.broadcast %228 : vector<128x1xf32> to vector<128x32xf32>
      %230 = arith.mulf %225, %229 : vector<128x32xf32>
      %231 = vector.broadcast %211 : vector<1x32xf32> to vector<128x32xf32>
      %232 = arith.mulf %230, %231 : vector<128x32xf32>
      %233 = vector.broadcast %212 : vector<1x32xf32> to vector<128x32xf32>
      %234 = arith.addf %232, %233 : vector<128x32xf32>
      %c0_73 = arith.constant 0 : index
      %c0_74 = arith.constant 0 : index
      %235 = vector.load %arg16[%c0_73, %c0_74] : memref<128x32xf32, #tpu.memory_space<vmem>>, vector<128x32xf32>
      tpu.vector_store %arg16[%c0_73, %c0_74], %234 {strides = array<i32>} : memref<128x32xf32, #tpu.memory_space<vmem>>, vector<128x32xf32>,
    } else {
    }
    return
  }
  func.func @transform_0(%arg0: i32, %arg1: i32) -> (i32, i32) {
    %c0_i32 = arith.constant 0 : i32
    %c0_i32_0 = arith.constant 0 : i32
    return %arg0, %c0_i32 : i32, i32
  }
  func.func @transform_1(%arg0: i32, %arg1: i32) -> (i32, i32, i32) {
    %c0_i32 = arith.constant 0 : i32
    %c0_i32_0 = arith.constant 0 : i32
    %c0_i32_1 = arith.constant 0 : i32
    %c0_i32_2 = arith.constant 0 : i32
    return %c0_i32, %c0_i32_0, %c0_i32_1 : i32, i32, i32
  }
  func.func @transform_2(%arg0: i32, %arg1: i32) -> (i32, i32, i32) {
    %c0_i32 = arith.constant 0 : i32
    %c0_i32_0 = arith.constant 0 : i32
    %c0_i32_1 = arith.constant 0 : i32
    %c0_i32_2 = arith.constant 0 : i32
    return %c0_i32, %c0_i32_0, %c0_i32_1 : i32, i32, i32
  }
  func.func @transform_3(%arg0: i32, %arg1: i32) -> (i32, i32, i32) {
    %c0_i32 = arith.constant 0 : i32
    %c0_i32_0 = arith.constant 0 : i32
    %c0_i32_1 = arith.constant 0 : i32
    %c0_i32_2 = arith.constant 0 : i32
    return %c0_i32, %c0_i32_0, %c0_i32_1 : i32, i32, i32
  }
  func.func @transform_4(%arg0: i32, %arg1: i32) -> (i32, i32, i32) {
    %c0_i32 = arith.constant 0 : i32
    %c0_i32_0 = arith.constant 0 : i32
    %c0_i32_1 = arith.constant 0 : i32
    %c0_i32_2 = arith.constant 0 : i32
    return %c0_i32, %c0_i32_0, %c0_i32_1 : i32, i32, i32
  }
  func.func @transform_5(%arg0: i32, %arg1: i32) -> (i32, i32, i32) {
    %c0_i32 = arith.constant 0 : i32
    %c0_i32_0 = arith.constant 0 : i32
    %c0_i32_1 = arith.constant 0 : i32
    %c0_i32_2 = arith.constant 0 : i32
    return %c0_i32, %c0_i32_0, %c0_i32_1 : i32, i32, i32
  }
  func.func @transform_6(%arg0: i32, %arg1: i32) -> (i32, i32, i32) {
    %c0_i32 = arith.constant 0 : i32
    %c0_i32_0 = arith.constant 0 : i32
    %c0_i32_1 = arith.constant 0 : i32
    %c0_i32_2 = arith.constant 0 : i32
    return %c0_i32, %c0_i32_0, %c0_i32_1 : i32, i32, i32
  }
  func.func @transform_7(%arg0: i32, %arg1: i32) -> (i32, i32, i32) {
    %c0_i32 = arith.constant 0 : i32
    %c0_i32_0 = arith.constant 0 : i32
    %c0_i32_1 = arith.constant 0 : i32
    %c0_i32_2 = arith.constant 0 : i32
    return %c0_i32, %c0_i32_0, %c0_i32_1 : i32, i32, i32
  }
  func.func @transform_8(%arg0: i32, %arg1: i32) -> (i32, i32, i32) {
    %c0_i32 = arith.constant 0 : i32
    %c0_i32_0 = arith.constant 0 : i32
    %c0_i32_1 = arith.constant 0 : i32
    %c0_i32_2 = arith.constant 0 : i32
    return %c0_i32, %c0_i32_0, %c0_i32_1 : i32, i32, i32
  }
  func.func @transform_9(%arg0: i32, %arg1: i32) -> (i32, i32, i32) {
    %c0_i32 = arith.constant 0 : i32
    %c0_i32_0 = arith.constant 0 : i32
    %c0_i32_1 = arith.constant 0 : i32
    %c0_i32_2 = arith.constant 0 : i32
    return %c0_i32, %c0_i32_0, %c0_i32_1 : i32, i32, i32
  }
  func.func @transform_10(%arg0: i32, %arg1: i32) -> (i32, i32, i32) {
    %c0_i32 = arith.constant 0 : i32
    %c0_i32_0 = arith.constant 0 : i32
    %c0_i32_1 = arith.constant 0 : i32
    %c0_i32_2 = arith.constant 0 : i32
    return %c0_i32, %c0_i32_0, %c0_i32_1 : i32, i32, i32
  }
  func.func @transform_11(%arg0: i32, %arg1: i32) -> (i32, i32, i32) {
    %c0_i32 = arith.constant 0 : i32
    %c0_i32_0 = arith.constant 0 : i32
    %c0_i32_1 = arith.constant 0 : i32
    %c0_i32_2 = arith.constant 0 : i32
    return %c0_i32, %c0_i32_0, %c0_i32_1 : i32, i32, i32
  }
  func.func @transform_12(%arg0: i32, %arg1: i32) -> (i32, i32) {
    %c0_i32 = arith.constant 0 : i32
    %c0_i32_0 = arith.constant 0 : i32
    %c0_i32_1 = arith.constant 0 : i32
    return %c0_i32, %c0_i32_0 : i32, i32
  }
  func.func @transform_13(%arg0: i32, %arg1: i32) -> (i32, i32) {
    %c0_i32 = arith.constant 0 : i32
    %c0_i32_0 = arith.constant 0 : i32
    %c0_i32_1 = arith.constant 0 : i32
    return %c0_i32, %c0_i32_0 : i32, i32
  }
  func.func @transform_14(%arg0: i32, %arg1: i32) -> (i32, i32) {
    %c0_i32 = arith.constant 0 : i32
    %c0_i32_0 = arith.constant 0 : i32
    return %arg0, %c0_i32 : i32, i32
  }
}

</mosaic_0001>

<llo_original>
// kernel: tpu_custom_call.1
$region0: #{tpu_custom_call.1}
  #allocation0 [shape = 'u32[]', space=smem, size = 0x4, offset = 0x4, fixed_abs, tag = 'smem constant byte address 0x4 - core index']
  #allocation1 [shape = 'u32[144,128]{1,0:T(1,128)}', space=vmem, size = 0x12000, scoped, tag = 'internal scratch']
  #allocation2 [shape = 'f32[128,32]{1,0:T(8,128)}', space=vmem, size = 0x10000, scoped, tag = 'scratch operand']
  %s0 = inlined_call_operand.vmem [shape: f32[256,32], index: 0, kind: input, shape index: {}]
  %s1 = inlined_call_operand.vmem [shape: f32[2,1,32], index: 1, kind: input, shape index: {}]
  %s2 = inlined_call_operand.vmem [shape: f32[2,1,32], index: 2, kind: input, shape index: {}]
  %s3 = inlined_call_operand.vmem [shape: bf16[2,32,384], index: 3, kind: input, shape index: {}]
  %s4 = inlined_call_operand.vmem [shape: bf16[2,32,32], index: 4, kind: input, shape index: {}]
  %s5 = inlined_call_operand.vmem [shape: f32[2,1,32], index: 5, kind: input, shape index: {}]
  %s6 = inlined_call_operand.vmem [shape: f32[2,1,32], index: 6, kind: input, shape index: {}]
  %s7 = inlined_call_operand.vmem [shape: f32[2,1,32], index: 7, kind: input, shape index: {}]
  %s8 = inlined_call_operand.vmem [shape: bf16[2,32,64], index: 8, kind: input, shape index: {}]
  %s9 = inlined_call_operand.vmem [shape: f32[2,1,64], index: 9, kind: input, shape index: {}]
  %s10 = inlined_call_operand.vmem [shape: bf16[2,64,32], index: 10, kind: input, shape index: {}]
  %s11 = inlined_call_operand.vmem [shape: f32[2,1,32], index: 11, kind: input, shape index: {}]
  %s12 = inlined_call_operand.vmem [shape: f32[1,32], index: 12, kind: input, shape index: {}]
  %s13 = inlined_call_operand.vmem [shape: f32[1,32], index: 13, kind: input, shape index: {}]
  %s14 = inlined_call_operand.vmem [shape: f32[256,32], index: 14, kind: output, shape index: {}]
  %s15 = sld [smem:[#allocation0]]
  $region97: #{tpu_custom_call.1} parent=0
    _
  %s17 = ssub.s32 1, %s15
  %s18 = scalar_select 0, %s17, %s15
  loop: start=0, step=1, limit=6
  $region2: #{tpu_custom_call.1} parent=0 // loop_pre_header
    _
  $region3: #{tpu_custom_call.1} parent=0 // loop_header
    %s20 = sphi 0, %s24
    %p21 = scmp.ge.s32.totalorder %s20, 6
    %s27 = sphi 0, %s39
    %s28 = sphi 0, %s35
    %s29 = sphi 0, %s27
    %s30 = sphi 0, %s28
    %s31 = sphi 0, %s29
    %s32 = sphi 0, %s30
    %s42 = sphi 0, %s44
    %s45 = sphi 0, %s42
    %s46 = sphi 0, %s45
    %s62 = sphi 0, %s46
    %s66 = sphi 0, %s66
    %s68 = sphi 0, %s66
    %s69 = sphi 0, %s68
    %s83 = sphi 0, %s69
    %s87 = sphi 0, %s87
    %s89 = sphi 0, %s87
    %s90 = sphi 0, %s89
    %s104 = sphi 0, %s90
    %s108 = sphi 0, %s108
    %s110 = sphi 0, %s108
    %s111 = sphi 0, %s110
    %s125 = sphi 0, %s111
    %s129 = sphi 0, %s129
    %s131 = sphi 0, %s129
    %s132 = sphi 0, %s131
    %s146 = sphi 0, %s132
    %s150 = sphi 0, %s150
    %s152 = sphi 0, %s150
    %s153 = sphi 0, %s152
    %s167 = sphi 0, %s153
    %s171 = sphi 0, %s171
    %s173 = sphi 0, %s171
    %s174 = sphi 0, %s173
    %s188 = sphi 0, %s174
    %s192 = sphi 0, %s192
    %s194 = sphi 0, %s192
    %s195 = sphi 0, %s194
    %s209 = sphi 0, %s195
    %s213 = sphi 0, %s213
    %s215 = sphi 0, %s213
    %s216 = sphi 0, %s215
    %s230 = sphi 0, %s216
    %s234 = sphi 0, %s234
    %s236 = sphi 0, %s234
    %s237 = sphi 0, %s236
    %s251 = sphi 0, %s237
    %s255 = sphi 0, %s255
    %s257 = sphi 0, %s255
    %s258 = sphi 0, %s257
    %s272 = sphi 0, %s258
    %s276 = sphi 0, %s276
    %s278 = sphi 0, %s276
    %s279 = sphi 0, %s278
    %s293 = sphi 0, %s279
    %s297 = sphi 0, %s297
    %s299 = sphi 0, %s297
    %s300 = sphi 0, %s299
    %s314 = sphi 0, %s300
    %s318 = sphi 0, %s318
    %s320 = sphi 0, %s318
    %s321 = sphi 0, %s320
    %s335 = sphi 0, %s321
    %s341 = sphi 0, %s343
    %s344 = sphi 0, %s341
    %s345 = sphi 0, %s344
    %s361 = sphi 0, %s345
  $region4: #{tpu_custom_call.1} parent=0 // loop_header_branch
    %23 = sbr.rel (%p21) target = $region8
  $region5: #{tpu_custom_call.1} parent=0 // loop_body
    %s25 = ssub.s32 %s20, 1
    %s26 = ssub.s32 %s20, 2
    %s33 = sadd.s32 1, %s28
    %p34 = scmp.ge.s32.totalorder %s33, 2
    %s35 = scalar_select %p34, 0, %s33
    %s36 = sadd.s32 1, %s27
    %s37 = scalar_select %p34, %s36, %s27
    %p38 = scmp.ge.s32.totalorder %s37, 2
    %s39 = scalar_select %p38, 0, %s37
    %s40 = ssub.s32 %s27, %s39
    %p41 = scmp.eq.s32.totalorder %s40, 0
    %s43 = sadd.s32 %s42, 1
    %s44 = scalar_select %p41, %s42, %s43
    %p47 = pneg %p41
    %p48 = scmp.eq.s32.totalorder %s20, 3
    %p49 = por %p47, %p48
    %p50 = scmp.ne.s32.totalorder %s42, %s45
    %p51 = scmp.eq.s32.totalorder %s20, 0
    %p52 = por %p50, %p51
    %p53 = scmp.ne.s32.totalorder %s42, %s45
    %p54 = scmp.eq.s32.totalorder %s25, 3
    %p55 = por %p53, %p54
    %p56 = scmp.ne.s32.totalorder %s45, %s46
    %p57 = scmp.eq.s32.totalorder %s25, 0
    %p58 = por %p56, %p57
    %p59 = scmp.ne.s32.totalorder %s45, %s46
    %p60 = scmp.eq.s32.totalorder %s26, 3
    %p61 = por %p59, %p60
    %p63 = scmp.ne.s32.totalorder %s46, %s62
    %p64 = scmp.eq.s32.totalorder %s26, 0
    %p65 = por %p63, %p64
    %s67 = sadd.s32 %s66, 1
    %p70 = scmp.eq.s32.totalorder %s20, 3
    %p71 = scmp.ne.s32.totalorder %s66, %s68
    %p72 = scmp.eq.s32.totalorder %s20, 0
    %p73 = por %p71, %p72
    %p74 = scmp.ne.s32.totalorder %s66, %s68
    %p75 = scmp.eq.s32.totalorder %s25, 3
    %p76 = por %p74, %p75
    %p77 = scmp.ne.s32.totalorder %s68, %s69
    %p78 = scmp.eq.s32.totalorder %s25, 0
    %p79 = por %p77, %p78
    %p80 = scmp.ne.s32.totalorder %s68, %s69
    %p81 = scmp.eq.s32.totalorder %s26, 3
    %p82 = por %p80, %p81
    %p84 = scmp.ne.s32.totalorder %s69, %s83
    %p85 = scmp.eq.s32.totalorder %s26, 0
    %p86 = por %p84, %p85
    %s88 = sadd.s32 %s87, 1
    %p91 = scmp.eq.s32.totalorder %s20, 3
    %p92 = scmp.ne.s32.totalorder %s87, %s89
    %p93 = scmp.eq.s32.totalorder %s20, 0
    %p94 = por %p92, %p93
    %p95 = scmp.ne.s32.totalorder %s87, %s89
    %p96 = scmp.eq.s32.totalorder %s25, 3
    %p97 = por %p95, %p96
    %p98 = scmp.ne.s32.totalorder %s89, %s90
    %p99 = scmp.eq.s32.totalorder %s25, 0
    %p100 = por %p98, %p99
    %p101 = scmp.ne.s32.totalorder %s89, %s90
    %p102 = scmp.eq.s32.totalorder %s26, 3
    %p103 = por %p101, %p102
    %p105 = scmp.ne.s32.totalorder %s90, %s104
    %p106 = scmp.eq.s32.totalorder %s26, 0
    %p107 = por %p105, %p106
    %s109 = sadd.s32 %s108, 1
    %p112 = scmp.eq.s32.totalorder %s20, 3
    %p113 = scmp.ne.s32.totalorder %s108, %s110
    %p114 = scmp.eq.s32.totalorder %s20, 0
    %p115 = por %p113, %p114
    %p116 = scmp.ne.s32.totalorder %s108, %s110
    %p117 = scmp.eq.s32.totalorder %s25, 3
    %p118 = por %p116, %p117
    %p119 = scmp.ne.s32.totalorder %s110, %s111
    %p120 = scmp.eq.s32.totalorder %s25, 0
    %p121 = por %p119, %p120
    %p122 = scmp.ne.s32.totalorder %s110, %s111
    %p123 = scmp.eq.s32.totalorder %s26, 3
    %p124 = por %p122, %p123
    %p126 = scmp.ne.s32.totalorder %s111, %s125
    %p127 = scmp.eq.s32.totalorder %s26, 0
    %p128 = por %p126, %p127
    %s130 = sadd.s32 %s129, 1
    %p133 = scmp.eq.s32.totalorder %s20, 3
    %p134 = scmp.ne.s32.totalorder %s129, %s131
    %p135 = scmp.eq.s32.totalorder %s20, 0
    %p136 = por %p134, %p135
    %p137 = scmp.ne.s32.totalorder %s129, %s131
    %p138 = scmp.eq.s32.totalorder %s25, 3
    %p139 = por %p137, %p138
    %p140 = scmp.ne.s32.totalorder %s131, %s132
    %p141 = scmp.eq.s32.totalorder %s25, 0
    %p142 = por %p140, %p141
    %p143 = scmp.ne.s32.totalorder %s131, %s132
    %p144 = scmp.eq.s32.totalorder %s26, 3
    %p145 = por %p143, %p144
    %p147 = scmp.ne.s32.totalorder %s132, %s146
    %p148 = scmp.eq.s32.totalorder %s26, 0
    %p149 = por %p147, %p148
    %s151 = sadd.s32 %s150, 1
    %p154 = scmp.eq.s32.totalorder %s20, 3
    %p155 = scmp.ne.s32.totalorder %s150, %s152
    %p156 = scmp.eq.s32.totalorder %s20, 0
    %p157 = por %p155, %p156
    %p158 = scmp.ne.s32.totalorder %s150, %s152
    %p159 = scmp.eq.s32.totalorder %s25, 3
    %p160 = por %p158, %p159
    %p161 = scmp.ne.s32.totalorder %s152, %s153
    %p162 = scmp.eq.s32.totalorder %s25, 0
    %p163 = por %p161, %p162
    %p164 = scmp.ne.s32.totalorder %s152, %s153
    %p165 = scmp.eq.s32.totalorder %s26, 3
    %p166 = por %p164, %p165
    %p168 = scmp.ne.s32.totalorder %s153, %s167
    %p169 = scmp.eq.s32.totalorder %s26, 0
    %p170 = por %p168, %p169
    %s172 = sadd.s32 %s171, 1
    %p175 = scmp.eq.s32.totalorder %s20, 3
    %p176 = scmp.ne.s32.totalorder %s171, %s173
    %p177 = scmp.eq.s32.totalorder %s20, 0
    %p178 = por %p176, %p177
    %p179 = scmp.ne.s32.totalorder %s171, %s173
    %p180 = scmp.eq.s32.totalorder %s25, 3
    %p181 = por %p179, %p180
    %p182 = scmp.ne.s32.totalorder %s173, %s174
    %p183 = scmp.eq.s32.totalorder %s25, 0
    %p184 = por %p182, %p183
    %p185 = scmp.ne.s32.totalorder %s173, %s174
    %p186 = scmp.eq.s32.totalorder %s26, 3
    %p187 = por %p185, %p186
    %p189 = scmp.ne.s32.totalorder %s174, %s188
    %p190 = scmp.eq.s32.totalorder %s26, 0
    %p191 = por %p189, %p190
    %s193 = sadd.s32 %s192, 1
    %p196 = scmp.eq.s32.totalorder %s20, 3
    %p197 = scmp.ne.s32.totalorder %s192, %s194
    %p198 = scmp.eq.s32.totalorder %s20, 0
    %p199 = por %p197, %p198
    %p200 = scmp.ne.s32.totalorder %s192, %s194
    %p201 = scmp.eq.s32.totalorder %s25, 3
    %p202 = por %p200, %p201
    %p203 = scmp.ne.s32.totalorder %s194, %s195
    %p204 = scmp.eq.s32.totalorder %s25, 0
    %p205 = por %p203, %p204
    %p206 = scmp.ne.s32.totalorder %s194, %s195
    %p207 = scmp.eq.s32.totalorder %s26, 3
    %p208 = por %p206, %p207
    %p210 = scmp.ne.s32.totalorder %s195, %s209
    %p211 = scmp.eq.s32.totalorder %s26, 0
    %p212 = por %p210, %p211
    %s214 = sadd.s32 %s213, 1
    %p217 = scmp.eq.s32.totalorder %s20, 3
    %p218 = scmp.ne.s32.totalorder %s213, %s215
    %p219 = scmp.eq.s32.totalorder %s20, 0
    %p220 = por %p218, %p219
    %p221 = scmp.ne.s32.totalorder %s213, %s215
    %p222 = scmp.eq.s32.totalorder %s25, 3
    %p223 = por %p221, %p222
    %p224 = scmp.ne.s32.totalorder %s215, %s216
    %p225 = scmp.eq.s32.totalorder %s25, 0
    %p226 = por %p224, %p225
    %p227 = scmp.ne.s32.totalorder %s215, %s216
    %p228 = scmp.eq.s32.totalorder %s26, 3
    %p229 = por %p227, %p228
    %p231 = scmp.ne.s32.totalorder %s216, %s230
    %p232 = scmp.eq.s32.totalorder %s26, 0
    %p233 = por %p231, %p232
    %s235 = sadd.s32 %s234, 1
    %p238 = scmp.eq.s32.totalorder %s20, 3
    %p239 = scmp.ne.s32.totalorder %s234, %s236
    %p240 = scmp.eq.s32.totalorder %s20, 0
    %p241 = por %p239, %p240
    %p242 = scmp.ne.s32.totalorder %s234, %s236
    %p243 = scmp.eq.s32.totalorder %s25, 3
    %p244 = por %p242, %p243
    %p245 = scmp.ne.s32.totalorder %s236, %s237
    %p246 = scmp.eq.s32.totalorder %s25, 0
    %p247 = por %p245, %p246
    %p248 = scmp.ne.s32.totalorder %s236, %s237
    %p249 = scmp.eq.s32.totalorder %s26, 3
    %p250 = por %p248, %p249
    %p252 = scmp.ne.s32.totalorder %s237, %s251
    %p253 = scmp.eq.s32.totalorder %s26, 0
    %p254 = por %p252, %p253
    %s256 = sadd.s32 %s255, 1
    %p259 = scmp.eq.s32.totalorder %s20, 3
    %p260 = scmp.ne.s32.totalorder %s255, %s257
    %p261 = scmp.eq.s32.totalorder %s20, 0
    %p262 = por %p260, %p261
    %p263 = scmp.ne.s32.totalorder %s255, %s257
    %p264 = scmp.eq.s32.totalorder %s25, 3
    %p265 = por %p263, %p264
    %p266 = scmp.ne.s32.totalorder %s257, %s258
    %p267 = scmp.eq.s32.totalorder %s25, 0
    %p268 = por %p266, %p267
    %p269 = scmp.ne.s32.totalorder %s257, %s258
    %p270 = scmp.eq.s32.totalorder %s26, 3
    %p271 = por %p269, %p270
    %p273 = scmp.ne.s32.totalorder %s258, %s272
    %p274 = scmp.eq.s32.totalorder %s26, 0
    %p275 = por %p273, %p274
    %s277 = sadd.s32 %s276, 1
    %p280 = scmp.eq.s32.totalorder %s20, 3
    %p281 = scmp.ne.s32.totalorder %s276, %s278
    %p282 = scmp.eq.s32.totalorder %s20, 0
    %p283 = por %p281, %p282
    %p284 = scmp.ne.s32.totalorder %s276, %s278
    %p285 = scmp.eq.s32.totalorder %s25, 3
    %p286 = por %p284, %p285
    %p287 = scmp.ne.s32.totalorder %s278, %s279
    %p288 = scmp.eq.s32.totalorder %s25, 0
    %p289 = por %p287, %p288
    %p290 = scmp.ne.s32.totalorder %s278, %s279
    %p291 = scmp.eq.s32.totalorder %s26, 3
    %p292 = por %p290, %p291
    %p294 = scmp.ne.s32.totalorder %s279, %s293
    %p295 = scmp.eq.s32.totalorder %s26, 0
    %p296 = por %p294, %p295
    %s298 = sadd.s32 %s297, 1
    %p301 = scmp.eq.s32.totalorder %s20, 3
    %p302 = scmp.ne.s32.totalorder %s297, %s299
    %p303 = scmp.eq.s32.totalorder %s20, 0
    %p304 = por %p302, %p303
    %p305 = scmp.ne.s32.totalorder %s297, %s299
    %p306 = scmp.eq.s32.totalorder %s25, 3
    %p307 = por %p305, %p306
    %p308 = scmp.ne.s32.totalorder %s299, %s300
    %p309 = scmp.eq.s32.totalorder %s25, 0
    %p310 = por %p308, %p309
    %p311 = scmp.ne.s32.totalorder %s299, %s300
    %p312 = scmp.eq.s32.totalorder %s26, 3
    %p313 = por %p311, %p312
    %p315 = scmp.ne.s32.totalorder %s300, %s314
    %p316 = scmp.eq.s32.totalorder %s26, 0
    %p317 = por %p315, %p316
    %s319 = sadd.s32 %s318, 1
    %p322 = scmp.eq.s32.totalorder %s20, 3
    %p323 = scmp.ne.s32.totalorder %s318, %s320
    %p324 = scmp.eq.s32.totalorder %s20, 0
    %p325 = por %p323, %p324
    %p326 = scmp.ne.s32.totalorder %s318, %s320
    %p327 = scmp.eq.s32.totalorder %s25, 3
    %p328 = por %p326, %p327
    %p329 = scmp.ne.s32.totalorder %s320, %s321
    %p330 = scmp.eq.s32.totalorder %s25, 0
    %p331 = por %p329, %p330
    %p332 = scmp.ne.s32.totalorder %s320, %s321
    %p333 = scmp.eq.s32.totalorder %s26, 3
    %p334 = por %p332, %p333
    %p336 = scmp.ne.s32.totalorder %s321, %s335
    %p337 = scmp.eq.s32.totalorder %s26, 0
    %p338 = por %p336, %p337
    %s339 = ssub.s32 %s27, %s39
    %p340 = scmp.eq.s32.totalorder %s339, 0
    %s342 = sadd.s32 %s341, 1
    %s343 = scalar_select %p340, %s341, %s342
    %p346 = pneg %p340
    %p347 = scmp.eq.s32.totalorder %s20, 3
    %p348 = por %p346, %p347
    %p349 = scmp.ne.s32.totalorder %s341, %s344
    %p350 = scmp.eq.s32.totalorder %s20, 0
    %p351 = por %p349, %p350
    %p352 = scmp.ne.s32.totalorder %s341, %s344
    %p353 = scmp.eq.s32.totalorder %s25, 3
    %p354 = por %p352, %p353
    %p355 = scmp.ne.s32.totalorder %s344, %s345
    %p356 = scmp.eq.s32.totalorder %s25, 0
    %p357 = por %p355, %p356
    %p358 = scmp.ne.s32.totalorder %s344, %s345
    %p359 = scmp.eq.s32.totalorder %s26, 3
    %p360 = por %p358, %p359
    %p362 = scmp.ne.s32.totalorder %s345, %s361
    %p363 = scmp.eq.s32.totalorder %s26, 0
    %p364 = por %p362, %p363
    %p365 = scmp.le.s32.totalorder 1, %s20
    %p366 = scmp.lt.s32.totalorder %s20, 5
    %p367 = pnand %p365, %p366
    %p368 = pneg %p367
    // Predicated region
    $region9: #{tpu_custom_call.1} parent=5 // pred_check
      _
    $region10: #{tpu_custom_call.1} parent=5 // pred_check_branch
      %370 = sbr.rel (%p367) target = $region12
    $region11: #{tpu_custom_call.1} parent=5 // pred_region
      %s371 = ssub.s32 %s20, 1
      // Predicated region
      $region13: #{tpu_custom_call.1} parent=11 // pred_check
        %p372 = pneg %p79
      $region14: #{tpu_custom_call.1} parent=11 // pred_check_branch
        %374 = sbr.rel (%p372) target = $region16
      $region15: #{tpu_custom_call.1} parent=11 // pred_region
        _
      $region16: #{tpu_custom_call.1} parent=11 // pred_fallthru
        _
      // Predicated region
      $region17: #{tpu_custom_call.1} parent=11 // pred_check
        %p375 = pneg %p100
      $region18: #{tpu_custom_call.1} parent=11 // pred_check_branch
        %377 = sbr.rel (%p375) target = $region20
      $region19: #{tpu_custom_call.1} parent=11 // pred_region
        _
      $region20: #{tpu_custom_call.1} parent=11 // pred_fallthru
        _
      // Predicated region
      $region21: #{tpu_custom_call.1} parent=11 // pred_check
        %p378 = pneg %p121
      $region22: #{tpu_custom_call.1} parent=11 // pred_check_branch
        %380 = sbr.rel (%p378) target = $region24
      $region23: #{tpu_custom_call.1} parent=11 // pred_region
        _
      $region24: #{tpu_custom_call.1} parent=11 // pred_fallthru
        _
      // Predicated region
      $region25: #{tpu_custom_call.1} parent=11 // pred_check
        %p381 = pneg %p142
      $region26: #{tpu_custom_call.1} parent=11 // pred_check_branch
        %383 = sbr.rel (%p381) target = $region28
      $region27: #{tpu_custom_call.1} parent=11 // pred_region
        _
      $region28: #{tpu_custom_call.1} parent=11 // pred_fallthru
        _
      // Predicated region
      $region29: #{tpu_custom_call.1} parent=11 // pred_check
        %p384 = pneg %p163
      $region30: #{tpu_custom_call.1} parent=11 // pred_check_branch
        %386 = sbr.rel (%p384) target = $region32
      $region31: #{tpu_custom_call.1} parent=11 // pred_region
        _
      $region32: #{tpu_custom_call.1} parent=11 // pred_fallthru
        _
      // Predicated region
      $region33: #{tpu_custom_call.1} parent=11 // pred_check
        %p387 = pneg %p184
      $region34: #{tpu_custom_call.1} parent=11 // pred_check_branch
        %389 = sbr.rel (%p387) target = $region36
      $region35: #{tpu_custom_call.1} parent=11 // pred_region
        _
      $region36: #{tpu_custom_call.1} parent=11 // pred_fallthru
        _
      // Predicated region
      $region37: #{tpu_custom_call.1} parent=11 // pred_check
        %p390 = pneg %p205
      $region38: #{tpu_custom_call.1} parent=11 // pred_check_branch
        %392 = sbr.rel (%p390) target = $region40
      $region39: #{tpu_custom_call.1} parent=11 // pred_region
        _
      $region40: #{tpu_custom_call.1} parent=11 // pred_fallthru
        _
      // Predicated region
      $region41: #{tpu_custom_call.1} parent=11 // pred_check
        %p393 = pneg %p226
      $region42: #{tpu_custom_call.1} parent=11 // pred_check_branch
        %395 = sbr.rel (%p393) target = $region44
      $region43: #{tpu_custom_call.1} parent=11 // pred_region
        _
      $region44: #{tpu_custom_call.1} parent=11 // pred_fallthru
        _
      // Predicated region
      $region45: #{tpu_custom_call.1} parent=11 // pred_check
        %p396 = pneg %p247
      $region46: #{tpu_custom_call.1} parent=11 // pred_check_branch
        %398 = sbr.rel (%p396) target = $region48
      $region47: #{tpu_custom_call.1} parent=11 // pred_region
        _
      $region48: #{tpu_custom_call.1} parent=11 // pred_fallthru
        _
      // Predicated region
      $region49: #{tpu_custom_call.1} parent=11 // pred_check
        %p399 = pneg %p268
      $region50: #{tpu_custom_call.1} parent=11 // pred_check_branch
        %401 = sbr.rel (%p399) target = $region52
      $region51: #{tpu_custom_call.1} parent=11 // pred_region
        _
      $region52: #{tpu_custom_call.1} parent=11 // pred_fallthru
        _
      // Predicated region
      $region53: #{tpu_custom_call.1} parent=11 // pred_check
        %p402 = pneg %p289
      $region54: #{tpu_custom_call.1} parent=11 // pred_check_branch
        %404 = sbr.rel (%p402) target = $region56
      $region55: #{tpu_custom_call.1} parent=11 // pred_region
        _
      $region56: #{tpu_custom_call.1} parent=11 // pred_fallthru
        _
      // Predicated region
      $region57: #{tpu_custom_call.1} parent=11 // pred_check
        %p405 = pneg %p310
      $region58: #{tpu_custom_call.1} parent=11 // pred_check_branch
        %407 = sbr.rel (%p405) target = $region60
      $region59: #{tpu_custom_call.1} parent=11 // pred_region
        _
      $region60: #{tpu_custom_call.1} parent=11 // pred_fallthru
        _
      // Predicated region
      $region61: #{tpu_custom_call.1} parent=11 // pred_check
        %p408 = pneg %p331
      $region62: #{tpu_custom_call.1} parent=11 // pred_check_branch
        %410 = sbr.rel (%p408) target = $region64
      $region63: #{tpu_custom_call.1} parent=11 // pred_region
        _
      $region64: #{tpu_custom_call.1} parent=11 // pred_fallthru
        _
    $region12: #{tpu_custom_call.1} parent=5 // pred_fallthru
      _
    %p411 = scmp.lt.s32.totalorder %s20, 4
    // Predicated region
    $region65: #{tpu_custom_call.1} parent=5 // pred_check
      %p412 = pneg %p411
    $region66: #{tpu_custom_call.1} parent=5 // pred_check_branch
      %414 = sbr.rel (%p412) target = $region68
    $region67: #{tpu_custom_call.1} parent=5 // pred_region
      // Predicated region
      $region69: #{tpu_custom_call.1} parent=67 // pred_check
        %p415 = pneg %p52
      $region70: #{tpu_custom_call.1} parent=67 // pred_check_branch
        %417 = sbr.rel (%p415) target = $region72
      $region71: #{tpu_custom_call.1} parent=67 // pred_region
        %s418 = smul.u32 16, %s27
        %p419 = scmp.lt.s32.totalorder %s418, 31
        %s420 = scalar_select %p419, %s418, 31
        %s421 = smul.addr %s420, 8
        %s422 = scalar_lea.vmem %s0, %s421
        %s423 = smul.u32 16, %s27
      $region72: #{tpu_custom_call.1} parent=67 // pred_fallthru
        _
    $region68: #{tpu_custom_call.1} parent=5 // pred_fallthru
      _
    %p424 = scmp.le.s32.totalorder 1, %s20
    %p425 = scmp.lt.s32.totalorder %s20, 5
    %p426 = pnand %p424, %p425
    %p427 = pneg %p426
    // Predicated region
    $region73: #{tpu_custom_call.1} parent=5 // pred_check
      _
    $region74: #{tpu_custom_call.1} parent=5 // pred_check_branch
      %429 = sbr.rel (%p426) target = $region76
    $region75: #{tpu_custom_call.1} parent=5 // pred_region
      %s430 = ssub.s32 %s20, 1
      %s431 = smul.u32 16, %s29
      %p432 = scmp.lt.s32.totalorder %s431, 31
      %s433 = scalar_select %p432, %s431, 31
      %s434 = smul.addr %s433, 8
      %s435 = scalar_lea.vmem %s0, %s434
      %p436 = pneg %p58
      %p437 = pneg %p55
      %p438 = pneg %p79
      %p439 = pneg %p76
      %p440 = pneg %p100
      %p441 = pneg %p97
      %p442 = pneg %p121
      %p443 = pneg %p118
      %p444 = pneg %p142
      %p445 = pneg %p139
      %p446 = pneg %p163
      %p447 = pneg %p160
      %p448 = pneg %p184
      %p449 = pneg %p181
      %p450 = pneg %p205
      %p451 = pneg %p202
      %p452 = pneg %p226
      %p453 = pneg %p223
      %p454 = pneg %p247
      %p455 = pneg %p244
      %p456 = pneg %p268
      %p457 = pneg %p265
      %p458 = pneg %p289
      %p459 = pneg %p286
      %p460 = pneg %p310
      %p461 = pneg %p307
      %p462 = pneg %p331
      %p463 = pneg %p328
      %p464 = pneg %p357
      %p465 = pneg %p354
      %s466 = smul.u32 16, %s29
      %p467 = scmp.lt.s32.totalorder %s466, 31
      %s468 = scalar_select %p467, %s466, 31
      %s469 = smul.addr %s468, 8
      %s470 = scalar_lea.vmem %s14, %s469
      %s471 = smul.u32 16, %s29
      %p472 = scmp.lt.s32.totalorder %s471, 31
      %s473 = scalar_select %p472, %s471, 31
      %s474 = smul.addr %s473, 8
      %s475 = scalar_lea.vmem %s0, %s474
      %s476 = smul.u32 16, %s29
      %s477 = smul.u32 16, %s29
      %p478 = scmp.lt.s32.totalorder %s477, 31
      %s479 = scalar_select %p478, %s477, 31
      %s480 = smul.addr %s479, 8
      %s481 = scalar_lea.vmem %s14, %s480
      %s482 = smul.u32 16, %s29
      %p484 = scmp.eq.s32.totalorder %s30, 0
      // Predicated region
      $region77: #{tpu_custom_call.1} parent=75 // pred_check
        %p485 = pneg %p484
      $region78: #{tpu_custom_call.1} parent=75 // pred_check_branch
        %487 = sbr.rel (%p485) target = $region80
      $region79: #{tpu_custom_call.1} parent=75 // pred_region
        %v488 = vld [vmem:[%s475] sm:$0xff]
        %v489 = vld [vmem:[%s475 + $0x8] sm:$0xff]
        %v490 = vld [vmem:[%s475 + $0x10] sm:$0xff]
        %v491 = vld [vmem:[%s475 + $0x18] sm:$0xff]
        %v492 = vld [vmem:[%s475 + $0x20] sm:$0xff]
        %v493 = vld [vmem:[%s475 + $0x28] sm:$0xff]
        %v494 = vld [vmem:[%s475 + $0x30] sm:$0xff]
        %v495 = vld [vmem:[%s475 + $0x38] sm:$0xff]
        %v496 = vld [vmem:[%s475 + $0x40] sm:$0xff]
        %v497 = vld [vmem:[%s475 + $0x48] sm:$0xff]
        %v498 = vld [vmem:[%s475 + $0x50] sm:$0xff]
        %v499 = vld [vmem:[%s475 + $0x58] sm:$0xff]
        %v500 = vld [vmem:[%s475 + $0x60] sm:$0xff]
        %v501 = vld [vmem:[%s475 + $0x68] sm:$0xff]
        %v502 = vld [vmem:[%s475 + $0x70] sm:$0xff]
        %v503 = vld [vmem:[%s475 + $0x78] sm:$0xff]
        %vm504 = vcmask 261120
        %505 = vst.msk [vmem:[#allocation2] sm:$0xff] %vm504, %v488
        %506 = vst.msk [vmem:[#allocation2 + $0x8] sm:$0xff] %vm504, %v489
        %507 = vst.msk [vmem:[#allocation2 + $0x10] sm:$0xff] %vm504, %v490
        %508 = vst.msk [vmem:[#allocation2 + $0x18] sm:$0xff] %vm504, %v491
        %509 = vst.msk [vmem:[#allocation2 + $0x20] sm:$0xff] %vm504, %v492
        %510 = vst.msk [vmem:[#allocation2 + $0x28] sm:$0xff] %vm504, %v493
        %511 = vst.msk [vmem:[#allocation2 + $0x30] sm:$0xff] %vm504, %v494
        %512 = vst.msk [vmem:[#allocation2 + $0x38] sm:$0xff] %vm504, %v495
        %513 = vst.msk [vmem:[#allocation2 + $0x40] sm:$0xff] %vm504, %v496
        %514 = vst.msk [vmem:[#allocation2 + $0x48] sm:$0xff] %vm504, %v497
        %515 = vst.msk [vmem:[#allocation2 + $0x50] sm:$0xff] %vm504, %v498
        %516 = vst.msk [vmem:[#allocation2 + $0x58] sm:$0xff] %vm504, %v499
        %517 = vst.msk [vmem:[#allocation2 + $0x60] sm:$0xff] %vm504, %v500
        %518 = vst.msk [vmem:[#allocation2 + $0x68] sm:$0xff] %vm504, %v501
        %519 = vst.msk [vmem:[#allocation2 + $0x70] sm:$0xff] %vm504, %v502
        %520 = vst.msk [vmem:[#allocation2 + $0x78] sm:$0xff] %vm504, %v503
      $region80: #{tpu_custom_call.1} parent=75 // pred_fallthru
        _
      %v521 = vld [vmem:[#allocation2] sm:$0xff]
      %v522 = vld [vmem:[#allocation2 + $0x8] sm:$0xff]
      %v523 = vld [vmem:[#allocation2 + $0x10] sm:$0xff]
      %v524 = vld [vmem:[#allocation2 + $0x18] sm:$0xff]
      %v525 = vld [vmem:[#allocation2 + $0x20] sm:$0xff]
      %v526 = vld [vmem:[#allocation2 + $0x28] sm:$0xff]
      %v527 = vld [vmem:[#allocation2 + $0x30] sm:$0xff]
      %v528 = vld [vmem:[#allocation2 + $0x38] sm:$0xff]
      %v529 = vld [vmem:[#allocation2 + $0x40] sm:$0xff]
      %v530 = vld [vmem:[#allocation2 + $0x48] sm:$0xff]
      %v531 = vld [vmem:[#allocation2 + $0x50] sm:$0xff]
      %v532 = vld [vmem:[#allocation2 + $0x58] sm:$0xff]
      %v533 = vld [vmem:[#allocation2 + $0x60] sm:$0xff]
      %v534 = vld [vmem:[#allocation2 + $0x68] sm:$0xff]
      %v535 = vld [vmem:[#allocation2 + $0x70] sm:$0xff]
      %v536 = vld [vmem:[#allocation2 + $0x78] sm:$0xff]
      %s537 = scalar_lea.vmem %s1, %s30
      %v538 = vld [vmem:[%s537] sm:$0x1]
      %s539 = scalar_lea.vmem %s2, %s30
      %v540 = vld [vmem:[%s539] sm:$0x1]
      %vm541 = vcmask 261120
      %v542 = vsel %vm541, %v521, 0.0
      %543 = vadd.xlane.f32.xlu0 %v542
      %v544 = vpop.xlane.xlu0 %543
      %v545 = vsel %vm541, %v522, 0.0
      %546 = vadd.xlane.f32.xlu0 %v545
      %v547 = vpop.xlane.xlu0 %546
      %v548 = vsel %vm541, %v523, 0.0
      %549 = vadd.xlane.f32.xlu0 %v548
      %v550 = vpop.xlane.xlu0 %549
      %v551 = vsel %vm541, %v524, 0.0
      %552 = vadd.xlane.f32.xlu0 %v551
      %v553 = vpop.xlane.xlu0 %552
      %v554 = vsel %vm541, %v525, 0.0
      %555 = vadd.xlane.f32.xlu0 %v554
      %v556 = vpop.xlane.xlu0 %555
      %v557 = vsel %vm541, %v526, 0.0
      %558 = vadd.xlane.f32.xlu0 %v557
      %v559 = vpop.xlane.xlu0 %558
      %v560 = vsel %vm541, %v527, 0.0
      %561 = vadd.xlane.f32.xlu0 %v560
      %v562 = vpop.xlane.xlu0 %561
      %v563 = vsel %vm541, %v528, 0.0
      %564 = vadd.xlane.f32.xlu0 %v563
      %v565 = vpop.xlane.xlu0 %564
      %v566 = vsel %vm541, %v529, 0.0
      %567 = vadd.xlane.f32.xlu0 %v566
      %v568 = vpop.xlane.xlu0 %567
      %v569 = vsel %vm541, %v530, 0.0
      %570 = vadd.xlane.f32.xlu0 %v569
      %v571 = vpop.xlane.xlu0 %570
      %v572 = vsel %vm541, %v531, 0.0
      %573 = vadd.xlane.f32.xlu0 %v572
      %v574 = vpop.xlane.xlu0 %573
      %v575 = vsel %vm541, %v532, 0.0
      %576 = vadd.xlane.f32.xlu0 %v575
      %v577 = vpop.xlane.xlu0 %576
      %v578 = vsel %vm541, %v533, 0.0
      %579 = vadd.xlane.f32.xlu0 %v578
      %v580 = vpop.xlane.xlu0 %579
      %v581 = vsel %vm541, %v534, 0.0
      %582 = vadd.xlane.f32.xlu0 %v581
      %v583 = vpop.xlane.xlu0 %582
      %v584 = vsel %vm541, %v535, 0.0
      %585 = vadd.xlane.f32.xlu0 %v584
      %v586 = vpop.xlane.xlu0 %585
      %v587 = vsel %vm541, %v536, 0.0
      %588 = vadd.xlane.f32.xlu0 %v587
      %v589 = vpop.xlane.xlu0 %588
      %v590 = vrcp.pop 32.0
      %v591 = vmul.f32 %v544, %v590
      %v592 = vmul.f32 %v547, %v590
      %v593 = vmul.f32 %v550, %v590
      %v594 = vmul.f32 %v553, %v590
      %v595 = vmul.f32 %v556, %v590
      %v596 = vmul.f32 %v559, %v590
      %v597 = vmul.f32 %v562, %v590
      %v598 = vmul.f32 %v565, %v590
      %v599 = vmul.f32 %v568, %v590
      %v600 = vmul.f32 %v571, %v590
      %v601 = vmul.f32 %v574, %v590
      %v602 = vmul.f32 %v577, %v590
      %v603 = vmul.f32 %v580, %v590
      %v604 = vmul.f32 %v583, %v590
      %v605 = vmul.f32 %v586, %v590
      %v606 = vmul.f32 %v589, %v590
      %v607 = vsub.f32 %v521, %v591
      %v608 = vsub.f32 %v522, %v592
      %v609 = vsub.f32 %v523, %v593
      %v610 = vsub.f32 %v524, %v594
      %v611 = vsub.f32 %v525, %v595
      %v612 = vsub.f32 %v526, %v596
      %v613 = vsub.f32 %v527, %v597
      %v614 = vsub.f32 %v528, %v598
      %v615 = vsub.f32 %v529, %v599
      %v616 = vsub.f32 %v530, %v600
      %v617 = vsub.f32 %v531, %v601
      %v618 = vsub.f32 %v532, %v602
      %v619 = vsub.f32 %v533, %v603
      %v620 = vsub.f32 %v534, %v604
      %v621 = vsub.f32 %v535, %v605
      %v622 = vsub.f32 %v536, %v606
      %v623 = vmul.f32 %v607, %v607
      %v624 = vmul.f32 %v608, %v608
      %v625 = vmul.f32 %v609, %v609
      %v626 = vmul.f32 %v610, %v610
      %v627 = vmul.f32 %v611, %v611
      %v628 = vmul.f32 %v612, %v612
      %v629 = vmul.f32 %v613, %v613
      %v630 = vmul.f32 %v614, %v614
      %v631 = vmul.f32 %v615, %v615
      %v632 = vmul.f32 %v616, %v616
      %v633 = vmul.f32 %v617, %v617
      %v634 = vmul.f32 %v618, %v618
      %v635 = vmul.f32 %v619, %v619
      %v636 = vmul.f32 %v620, %v620
      %v637 = vmul.f32 %v621, %v621
      %v638 = vmul.f32 %v622, %v622
      %v639 = vsel %vm541, %v623, 0.0
      %640 = vadd.xlane.f32.xlu0 %v639
      %v641 = vpop.xlane.xlu0 %640
      %v642 = vsel %vm541, %v624, 0.0
      %643 = vadd.xlane.f32.xlu0 %v642
      %v644 = vpop.xlane.xlu0 %643
      %v645 = vsel %vm541, %v625, 0.0
      %646 = vadd.xlane.f32.xlu0 %v645
      %v647 = vpop.xlane.xlu0 %646
      %v648 = vsel %vm541, %v626, 0.0
      %649 = vadd.xlane.f32.xlu0 %v648
      %v650 = vpop.xlane.xlu0 %649
      %v651 = vsel %vm541, %v627, 0.0
      %652 = vadd.xlane.f32.xlu0 %v651
      %v653 = vpop.xlane.xlu0 %652
      %v654 = vsel %vm541, %v628, 0.0
      %655 = vadd.xlane.f32.xlu0 %v654
      %v656 = vpop.xlane.xlu0 %655
      %v657 = vsel %vm541, %v629, 0.0
      %658 = vadd.xlane.f32.xlu0 %v657
      %v659 = vpop.xlane.xlu0 %658
      %v660 = vsel %vm541, %v630, 0.0
      %661 = vadd.xlane.f32.xlu0 %v660
      %v662 = vpop.xlane.xlu0 %661
      %v663 = vsel %vm541, %v631, 0.0
      %664 = vadd.xlane.f32.xlu0 %v663
      %v665 = vpop.xlane.xlu0 %664
      %v666 = vsel %vm541, %v632, 0.0
      %667 = vadd.xlane.f32.xlu0 %v666
      %v668 = vpop.xlane.xlu0 %667
      %v669 = vsel %vm541, %v633, 0.0
      %670 = vadd.xlane.f32.xlu0 %v669
      %v671 = vpop.xlane.xlu0 %670
      %v672 = vsel %vm541, %v634, 0.0
      %673 = vadd.xlane.f32.xlu0 %v672
      %v674 = vpop.xlane.xlu0 %673
      %v675 = vsel %vm541, %v635, 0.0
      %676 = vadd.xlane.f32.xlu0 %v675
      %v677 = vpop.xlane.xlu0 %676
      %v678 = vsel %vm541, %v636, 0.0
      %679 = vadd.xlane.f32.xlu0 %v678
      %v680 = vpop.xlane.xlu0 %679
      %v681 = vsel %vm541, %v637, 0.0
      %682 = vadd.xlane.f32.xlu0 %v681
      %v683 = vpop.xlane.xlu0 %682
      %v684 = vsel %vm541, %v638, 0.0
      %685 = vadd.xlane.f32.xlu0 %v684
      %v686 = vpop.xlane.xlu0 %685
      %v687 = vmul.f32 %v641, %v590
      %v688 = vmul.f32 %v644, %v590
      %v689 = vmul.f32 %v647, %v590
      %v690 = vmul.f32 %v650, %v590
      %v691 = vmul.f32 %v653, %v590
      %v692 = vmul.f32 %v656, %v590
      %v693 = vmul.f32 %v659, %v590
      %v694 = vmul.f32 %v662, %v590
      %v695 = vmul.f32 %v665, %v590
      %v696 = vmul.f32 %v668, %v590
      %v697 = vmul.f32 %v671, %v590
      %v698 = vmul.f32 %v674, %v590
      %v699 = vmul.f32 %v677, %v590
      %v700 = vmul.f32 %v680, %v590
      %v701 = vmul.f32 %v683, %v590
      %v702 = vmul.f32 %v686, %v590
      %v703 = vadd.f32 %v687, 1e-05
      %v704 = vadd.f32 %v688, 1e-05
      %v705 = vadd.f32 %v689, 1e-05
      %v706 = vadd.f32 %v690, 1e-05
      %v707 = vadd.f32 %v691, 1e-05
      %v708 = vadd.f32 %v692, 1e-05
      %v709 = vadd.f32 %v693, 1e-05
      %v710 = vadd.f32 %v694, 1e-05
      %v711 = vadd.f32 %v695, 1e-05
      %v712 = vadd.f32 %v696, 1e-05
      %v713 = vadd.f32 %v697, 1e-05
      %v714 = vadd.f32 %v698, 1e-05
      %v715 = vadd.f32 %v699, 1e-05
      %v716 = vadd.f32 %v700, 1e-05
      %v717 = vadd.f32 %v701, 1e-05
      %v718 = vadd.f32 %v702, 1e-05
      %v719 = vrsqrt.pop %v703
      %v720 = vrsqrt.pop %v704
      %v721 = vrsqrt.pop %v705
      %v722 = vrsqrt.pop %v706
      %v723 = vrsqrt.pop %v707
      %v724 = vrsqrt.pop %v708
      %v725 = vrsqrt.pop %v709
      %v726 = vrsqrt.pop %v710
      %v727 = vrsqrt.pop %v711
      %v728 = vrsqrt.pop %v712
      %v729 = vrsqrt.pop %v713
      %v730 = vrsqrt.pop %v714
      %v731 = vrsqrt.pop %v715
      %v732 = vrsqrt.pop %v716
      %v733 = vrsqrt.pop %v717
      %v734 = vrsqrt.pop %v718
      %v735 = vmul.f32 %v607, %v719
      %v736 = vmul.f32 %v608, %v720
      %v737 = vmul.f32 %v609, %v721
      %v738 = vmul.f32 %v610, %v722
      %v739 = vmul.f32 %v611, %v723
      %v740 = vmul.f32 %v612, %v724
      %v741 = vmul.f32 %v613, %v725
      %v742 = vmul.f32 %v614, %v726
      %v743 = vmul.f32 %v615, %v727
      %v744 = vmul.f32 %v616, %v728
      %v745 = vmul.f32 %v617, %v729
      %v746 = vmul.f32 %v618, %v730
      %v747 = vmul.f32 %v619, %v731
      %v748 = vmul.f32 %v620, %v732
      %v749 = vmul.f32 %v621, %v733
      %v750 = vmul.f32 %v622, %v734
      %v752 = vlaneseq
      %v753 = vshrl.u32 %v752, 7
      %v754 = vsub.s32 0, %v753
      %v755 = vrot.slane %v538, %v754
      %v757 = vmul.f32 %v735, %v755
      %v758 = vmul.f32 %v736, %v755
      %v759 = vmul.f32 %v737, %v755
      %v760 = vmul.f32 %v738, %v755
      %v761 = vmul.f32 %v739, %v755
      %v762 = vmul.f32 %v740, %v755
      %v763 = vmul.f32 %v741, %v755
      %v764 = vmul.f32 %v742, %v755
      %v765 = vmul.f32 %v743, %v755
      %v766 = vmul.f32 %v744, %v755
      %v767 = vmul.f32 %v745, %v755
      %v768 = vmul.f32 %v746, %v755
      %v769 = vmul.f32 %v747, %v755
      %v770 = vmul.f32 %v748, %v755
      %v771 = vmul.f32 %v749, %v755
      %v772 = vmul.f32 %v750, %v755
      %v774 = vlaneseq
      %v775 = vshrl.u32 %v774, 7
      %v776 = vsub.s32 0, %v775
      %v777 = vrot.slane %v540, %v776
      %v779 = vadd.f32 %v757, %v777
      %v780 = vadd.f32 %v758, %v777
      %v781 = vadd.f32 %v759, %v777
      %v782 = vadd.f32 %v760, %v777
      %v783 = vadd.f32 %v761, %v777
      %v784 = vadd.f32 %v762, %v777
      %v785 = vadd.f32 %v763, %v777
      %v786 = vadd.f32 %v764, %v777
      %v787 = vadd.f32 %v765, %v777
      %v788 = vadd.f32 %v766, %v777
      %v789 = vadd.f32 %v767, %v777
      %v790 = vadd.f32 %v768, %v777
      %v791 = vadd.f32 %v769, %v777
      %v792 = vadd.f32 %v770, %v777
      %v793 = vadd.f32 %v771, %v777
      %v794 = vadd.f32 %v772, %v777
      %v795 = vpack.c.bf16 %v780, %v779
      %v796 = vpack.c.bf16 %v782, %v781
      %v797 = vpack.c.bf16 %v784, %v783
      %v798 = vpack.c.bf16 %v786, %v785
      %v799 = vpack.c.bf16 %v788, %v787
      %v800 = vpack.c.bf16 %v790, %v789
      %v801 = vpack.c.bf16 %v792, %v791
      %v802 = vpack.c.bf16 %v794, %v793
      %s803 = smul.u32 %s30, 12
      %s804 = smul.addr %s803, 4
      %s805 = scalar_lea.vmem %s3, %s804
      %v806 = vld [vmem:[%s805] sm:$0xff]
      %v807 = vld [vmem:[%s805 + $0x8] sm:$0xf]
      %v808 = vld [vmem:[%s805 + $0xc] sm:$0xff]
      %v809 = vld [vmem:[%s805 + $0x14] sm:$0xf]
      %v810 = vld [vmem:[%s805 + $0x18] sm:$0xff]
      %v811 = vld [vmem:[%s805 + $0x20] sm:$0xf]
      %v812 = vld [vmem:[%s805 + $0x24] sm:$0xff]
      %v813 = vld [vmem:[%s805 + $0x2c] sm:$0xf]
      %v822 = vunpack.c.l.b16 %v806
      %v823 = vunpack.c.h.b16 %v806
      %v824 = vunpack.c.l.b16 %v807
      %v825 = vunpack.c.l.b16 %v808
      %v826 = vunpack.c.h.b16 %v808
      %v827 = vunpack.c.l.b16 %v809
      %v828 = vunpack.c.l.b16 %v810
      %v829 = vunpack.c.h.b16 %v810
      %v830 = vunpack.c.l.b16 %v811
      %v831 = vunpack.c.l.b16 %v812
      %v832 = vunpack.c.h.b16 %v812
      %v833 = vunpack.c.l.b16 %v813
      %v834 = vpack.c.b16 %v825, %v822
      %v835 = vpack.c.b16 %v826, %v823
      %v836 = vpack.c.b16 %v827, %v824
      %v837 = vpack.c.b16 %v831, %v828
      %v838 = vpack.c.b16 %v832, %v829
      %v839 = vpack.c.b16 %v833, %v830
      %v847 = vsel %vm541, %v795, 0
      %v850 = vsel %vm541, %v796, 0
      %v853 = vsel %vm541, %v797, 0
      %v856 = vsel %vm541, %v798, 0
      %v859 = vsel %vm541, %v799, 0
      %v862 = vsel %vm541, %v800, 0
      %v865 = vsel %vm541, %v801, 0
      %v868 = vsel %vm541, %v802, 0
      %870 = vmatprep.subr.bf16.mxu0 %v835
      %871 = vmatpush1.bf16.msra.mxu0 %v834
      %872 = vmatprep.subr.bf16.mxu0 %v838
      %873 = vmatpush1.bf16.msra.mxu0 %v837
      %874 = vmatprep.subr.bf16.mxu0 0
      %875 = vmatpush1.bf16.msra.mxu0 0
      %876 = vmatprep.subr.bf16.mxu0 0
      %877 = vmatpush1.bf16.msra.mxu0 0
      %878 = vmatprep.subr.bf16.mxu0 0
      %879 = vmatpush1.bf16.msra.mxu0 0
      %880 = vmatprep.subr.bf16.mxu0 0
      %881 = vmatpush1.bf16.msra.mxu0 0
      %882 = vmatprep.subr.bf16.mxu0 0
      %883 = vmatpush1.bf16.msra.mxu0 0
      %884 = vmatprep.subr.bf16.mxu0 0
      %885 = vmatpush1.bf16.msra.mxu0 0
      %886 = vmatprep.subr.bf16.mxu0 0
      %887 = vmatpush1.bf16.msra.mxu0 0
      %888 = vmatprep.subr.bf16.mxu0 0
      %889 = vmatpush1.bf16.msra.mxu0 0
      %890 = vmatprep.subr.bf16.mxu0 0
      %891 = vmatpush1.bf16.msra.mxu0 0
      %892 = vmatprep.subr.bf16.mxu0 0
      %893 = vmatpush1.bf16.msra.mxu0 0
      %894 = vmatprep.subr.bf16.mxu0 0
      %895 = vmatpush1.bf16.msra.mxu0 0
      %896 = vmatprep.subr.bf16.mxu0 0
      %897 = vmatpush1.bf16.msra.mxu0 0
      %898 = vmatprep.subr.bf16.mxu0 0
      %899 = vmatpush1.bf16.msra.mxu0 0
      %900 = vmatprep.subr.bf16.mxu0 0
      %901 = vmatpush1.bf16.msra.mxu0 0
      %902 = vmatprep.mubr.bf16.mxu0 0
      %903 = vmatmul.mubr.bf16.gmra.mrb[0].mxu0 %v847
      %v904 = vpop.f32.mrb[0].mxu0
      %v905 = vadd.f32 0.0, %v904
      %v906 = vpop.f32.mrb[0].mxu0
      %v907 = vadd.f32 0.0, %v906
      %v908 = vpop.f32.mrb[0].mxu0
      %v909 = vadd.f32 0.0, %v908
      %v910 = vpop.f32.mrb[0].mxu0
      %v911 = vadd.f32 0.0, %v910
      %912 = vmatprep.mubr.bf16.mxu0 0
      %913 = vmatmul.mubr.bf16.gmra.mrb[0].mxu0 %v850
      %v914 = vpop.f32.mrb[0].mxu0
      %v915 = vadd.f32 0.0, %v914
      %v916 = vpop.f32.mrb[0].mxu0
      %v917 = vadd.f32 0.0, %v916
      %v918 = vpop.f32.mrb[0].mxu0
      %v919 = vadd.f32 0.0, %v918
      %v920 = vpop.f32.mrb[0].mxu0
      %v921 = vadd.f32 0.0, %v920
      %922 = vmatprep.mubr.bf16.mxu0 0
      %923 = vmatmul.mubr.bf16.gmra.mrb[0].mxu0 %v853
      %v924 = vpop.f32.mrb[0].mxu0
      %v925 = vadd.f32 0.0, %v924
      %v926 = vpop.f32.mrb[0].mxu0
      %v927 = vadd.f32 0.0, %v926
      %v928 = vpop.f32.mrb[0].mxu0
      %v929 = vadd.f32 0.0, %v928
      %v930 = vpop.f32.mrb[0].mxu0
      %v931 = vadd.f32 0.0, %v930
      %932 = vmatprep.mubr.bf16.mxu0 0
      %933 = vmatmul.mubr.bf16.gmra.mrb[0].mxu0 %v856
      %v934 = vpop.f32.mrb[0].mxu0
      %v935 = vadd.f32 0.0, %v934
      %v936 = vpop.f32.mrb[0].mxu0
      %v937 = vadd.f32 0.0, %v936
      %v938 = vpop.f32.mrb[0].mxu0
      %v939 = vadd.f32 0.0, %v938
      %v940 = vpop.f32.mrb[0].mxu0
      %v941 = vadd.f32 0.0, %v940
      %942 = vmatprep.mubr.bf16.mxu0 0
      %943 = vmatmul.mubr.bf16.gmra.mrb[0].mxu0 %v859
      %v944 = vpop.f32.mrb[0].mxu0
      %v945 = vadd.f32 0.0, %v944
      %v946 = vpop.f32.mrb[0].mxu0
      %v947 = vadd.f32 0.0, %v946
      %v948 = vpop.f32.mrb[0].mxu0
      %v949 = vadd.f32 0.0, %v948
      %v950 = vpop.f32.mrb[0].mxu0
      %v951 = vadd.f32 0.0, %v950
      %952 = vmatprep.mubr.bf16.mxu0 0
      %953 = vmatmul.mubr.bf16.gmra.mrb[0].mxu0 %v862
      %v954 = vpop.f32.mrb[0].mxu0
      %v955 = vadd.f32 0.0, %v954
      %v956 = vpop.f32.mrb[0].mxu0
      %v957 = vadd.f32 0.0, %v956
      %v958 = vpop.f32.mrb[0].mxu0
      %v959 = vadd.f32 0.0, %v958
      %v960 = vpop.f32.mrb[0].mxu0
      %v961 = vadd.f32 0.0, %v960
      %962 = vmatprep.mubr.bf16.mxu0 0
      %963 = vmatmul.mubr.bf16.gmra.mrb[0].mxu0 %v865
      %v964 = vpop.f32.mrb[0].mxu0
      %v965 = vadd.f32 0.0, %v964
      %v966 = vpop.f32.mrb[0].mxu0
      %v967 = vadd.f32 0.0, %v966
      %v968 = vpop.f32.mrb[0].mxu0
      %v969 = vadd.f32 0.0, %v968
      %v970 = vpop.f32.mrb[0].mxu0
      %v971 = vadd.f32 0.0, %v970
      %972 = vmatprep.mubr.bf16.mxu0 0
      %973 = vmatmul.mubr.bf16.gmra.mrb[0].mxu0 %v868
      %v974 = vpop.f32.mrb[0].mxu0
      %v975 = vadd.f32 0.0, %v974
      %v976 = vpop.f32.mrb[0].mxu0
      %v977 = vadd.f32 0.0, %v976
      %v978 = vpop.f32.mrb[0].mxu0
      %v979 = vadd.f32 0.0, %v978
      %v980 = vpop.f32.mrb[0].mxu0
      %v981 = vadd.f32 0.0, %v980
      %982 = vdwg.mxu0
      %983 = vmatprep.subr.bf16.mxu0 0
      %984 = vmatpush1.bf16.msra.mxu0 %v836
      %985 = vmatprep.subr.bf16.mxu0 0
      %986 = vmatpush1.bf16.msra.mxu0 %v839
      %987 = vmatprep.subr.bf16.mxu0 0
      %988 = vmatpush1.bf16.msra.mxu0 0
      %989 = vmatprep.subr.bf16.mxu0 0
      %990 = vmatpush1.bf16.msra.mxu0 0
      %991 = vmatprep.subr.bf16.mxu0 0
      %992 = vmatpush1.bf16.msra.mxu0 0
      %993 = vmatprep.subr.bf16.mxu0 0
      %994 = vmatpush1.bf16.msra.mxu0 0
      %995 = vmatprep.subr.bf16.mxu0 0
      %996 = vmatpush1.bf16.msra.mxu0 0
      %997 = vmatprep.subr.bf16.mxu0 0
      %998 = vmatpush1.bf16.msra.mxu0 0
      %999 = vmatprep.subr.bf16.mxu0 0
      %1000 = vmatpush1.bf16.msra.mxu0 0
      %1001 = vmatprep.subr.bf16.mxu0 0
      %1002 = vmatpush1.bf16.msra.mxu0 0
      %1003 = vmatprep.subr.bf16.mxu0 0
      %1004 = vmatpush1.bf16.msra.mxu0 0
      %1005 = vmatprep.subr.bf16.mxu0 0
      %1006 = vmatpush1.bf16.msra.mxu0 0
      %1007 = vmatprep.subr.bf16.mxu0 0
      %1008 = vmatpush1.bf16.msra.mxu0 0
      %1009 = vmatprep.subr.bf16.mxu0 0
      %1010 = vmatpush1.bf16.msra.mxu0 0
      %1011 = vmatprep.subr.bf16.mxu0 0
      %1012 = vmatpush1.bf16.msra.mxu0 0
      %1013 = vmatprep.subr.bf16.mxu0 0
      %1014 = vmatpush1.bf16.msra.mxu0 0
      %1015 = vmatprep.mubr.bf16.mxu0 0
      %1016 = vmatmul.mubr.bf16.gmra.mrb[0].mxu0 %v847
      %v1017 = vpop.f32.mrb[0].mxu0
      %v1018 = vadd.f32 0.0, %v1017
      %v1019 = vpop.f32.mrb[0].mxu0
      %v1020 = vpop.f32.mrb[0].mxu0
      %v1021 = vadd.f32 0.0, %v1020
      %v1022 = vpop.f32.mrb[0].mxu0
      %1023 = vmatprep.mubr.bf16.mxu0 0
      %1024 = vmatmul.mubr.bf16.gmra.mrb[0].mxu0 %v850
      %v1025 = vpop.f32.mrb[0].mxu0
      %v1026 = vadd.f32 0.0, %v1025
      %v1027 = vpop.f32.mrb[0].mxu0
      %v1028 = vpop.f32.mrb[0].mxu0
      %v1029 = vadd.f32 0.0, %v1028
      %v1030 = vpop.f32.mrb[0].mxu0
      %1031 = vmatprep.mubr.bf16.mxu0 0
      %1032 = vmatmul.mubr.bf16.gmra.mrb[0].mxu0 %v853
      %v1033 = vpop.f32.mrb[0].mxu0
      %v1034 = vadd.f32 0.0, %v1033
      %v1035 = vpop.f32.mrb[0].mxu0
      %v1036 = vpop.f32.mrb[0].mxu0
      %v1037 = vadd.f32 0.0, %v1036
      %v1038 = vpop.f32.mrb[0].mxu0
      %1039 = vmatprep.mubr.bf16.mxu0 0
      %1040 = vmatmul.mubr.bf16.gmra.mrb[0].mxu0 %v856
      %v1041 = vpop.f32.mrb[0].mxu0
      %v1042 = vadd.f32 0.0, %v1041
      %v1043 = vpop.f32.mrb[0].mxu0
      %v1044 = vpop.f32.mrb[0].mxu0
      %v1045 = vadd.f32 0.0, %v1044
      %v1046 = vpop.f32.mrb[0].mxu0
      %1047 = vmatprep.mubr.bf16.mxu0 0
      %1048 = vmatmul.mubr.bf16.gmra.mrb[0].mxu0 %v859
      %v1049 = vpop.f32.mrb[0].mxu0
      %v1050 = vadd.f32 0.0, %v1049
      %v1051 = vpop.f32.mrb[0].mxu0
      %v1052 = vpop.f32.mrb[0].mxu0
      %v1053 = vadd.f32 0.0, %v1052
      %v1054 = vpop.f32.mrb[0].mxu0
      %1055 = vmatprep.mubr.bf16.mxu0 0
      %1056 = vmatmul.mubr.bf16.gmra.mrb[0].mxu0 %v862
      %v1057 = vpop.f32.mrb[0].mxu0
      %v1058 = vadd.f32 0.0, %v1057
      %v1059 = vpop.f32.mrb[0].mxu0
      %v1060 = vpop.f32.mrb[0].mxu0
      %v1061 = vadd.f32 0.0, %v1060
      %v1062 = vpop.f32.mrb[0].mxu0
      %1063 = vmatprep.mubr.bf16.mxu0 0
      %1064 = vmatmul.mubr.bf16.gmra.mrb[0].mxu0 %v865
      %v1065 = vpop.f32.mrb[0].mxu0
      %v1066 = vadd.f32 0.0, %v1065
      %v1067 = vpop.f32.mrb[0].mxu0
      %v1068 = vpop.f32.mrb[0].mxu0
      %v1069 = vadd.f32 0.0, %v1068
      %v1070 = vpop.f32.mrb[0].mxu0
      %1071 = vmatprep.mubr.bf16.mxu0 0
      %1072 = vmatmul.mubr.bf16.gmra.mrb[0].mxu0 %v868
      %v1073 = vpop.f32.mrb[0].mxu0
      %v1074 = vadd.f32 0.0, %v1073
      %v1075 = vpop.f32.mrb[0].mxu0
      %v1076 = vpop.f32.mrb[0].mxu0
      %v1077 = vadd.f32 0.0, %v1076
      %v1078 = vpop.f32.mrb[0].mxu0
      %1079 = vdwg.mxu0
      %v1080 = vpack.c.bf16 %v905, %v905
      %v1081 = vpack.c.bf16 %v909, %v909
      %v1082 = vpack.c.bf16 %v915, %v915
      %v1083 = vpack.c.bf16 %v919, %v919
      %v1084 = vpack.c.bf16 %v925, %v925
      %v1085 = vpack.c.bf16 %v929, %v929
      %v1086 = vpack.c.bf16 %v935, %v935
      %v1087 = vpack.c.bf16 %v939, %v939
      %v1088 = vpack.c.bf16 %v945, %v945
      %v1089 = vpack.c.bf16 %v949, %v949
      %v1090 = vpack.c.bf16 %v955, %v955
      %v1091 = vpack.c.bf16 %v959, %v959
      %v1092 = vpack.c.bf16 %v965, %v965
      %v1093 = vpack.c.bf16 %v969, %v969
      %v1094 = vpack.c.bf16 %v975, %v975
      %v1095 = vpack.c.bf16 %v979, %v979
      %v1096 = vpack.c.bf16 %v907, %v907
      %v1097 = vpack.c.bf16 %v911, %v911
      %v1098 = vpack.c.bf16 %v917, %v917
      %v1099 = vpack.c.bf16 %v921, %v921
      %v1100 = vpack.c.bf16 %v927, %v927
      %v1101 = vpack.c.bf16 %v931, %v931
      %v1102 = vpack.c.bf16 %v937, %v937
      %v1103 = vpack.c.bf16 %v941, %v941
      %v1104 = vpack.c.bf16 %v947, %v947
      %v1105 = vpack.c.bf16 %v951, %v951
      %v1106 = vpack.c.bf16 %v957, %v957
      %v1107 = vpack.c.bf16 %v961, %v961
      %v1108 = vpack.c.bf16 %v967, %v967
      %v1109 = vpack.c.bf16 %v971, %v971
      %v1110 = vpack.c.bf16 %v977, %v977
      %v1111 = vpack.c.bf16 %v981, %v981
      %v1112 = vpack.c.bf16 %v1018, %v1018
      %v1113 = vpack.c.bf16 %v1021, %v1021
      %v1114 = vpack.c.bf16 %v1026, %v1026
      %v1115 = vpack.c.bf16 %v1029, %v1029
      %v1116 = vpack.c.bf16 %v1034, %v1034
      %v1117 = vpack.c.bf16 %v1037, %v1037
      %v1118 = vpack.c.bf16 %v1042, %v1042
      %v1119 = vpack.c.bf16 %v1045, %v1045
      %v1120 = vpack.c.bf16 %v1050, %v1050
      %v1121 = vpack.c.bf16 %v1053, %v1053
      %v1122 = vpack.c.bf16 %v1058, %v1058
      %v1123 = vpack.c.bf16 %v1061, %v1061
      %v1124 = vpack.c.bf16 %v1066, %v1066
      %v1125 = vpack.c.bf16 %v1069, %v1069
      %v1126 = vpack.c.bf16 %v1074, %v1074
      %v1127 = vpack.c.bf16 %v1077, %v1077
      %vm1128 = vcmask 64512
      %v1130 = vsel %vm1128, %v1080, 0
      %v1133 = vsel %vm1128, %v1096, 0
      %1135 = vmatprep.subr.bf16.mxu0 0
      %1136 = vmatpush1.bf16.xpose.msra.mxu0 %v1133
      %1137 = vmatprep.subr.bf16.mxu0 0
      %1138 = vmatpush1.bf16.xpose.msra.mxu0 0
      %1139 = vmatprep.subr.bf16.mxu0 0
      %1140 = vmatpush1.bf16.xpose.msra.mxu0 0
      %1141 = vmatprep.subr.bf16.mxu0 0
      %1142 = vmatpush1.bf16.xpose.msra.mxu0 0
      %1143 = vmatprep.subr.bf16.mxu0 0
      %1144 = vmatpush1.bf16.xpose.msra.mxu0 0
      %1145 = vmatprep.subr.bf16.mxu0 0
      %1146 = vmatpush1.bf16.xpose.msra.mxu0 0
      %1147 = vmatprep.subr.bf16.mxu0 0
      %1148 = vmatpush1.bf16.xpose.msra.mxu0 0
      %1149 = vmatprep.subr.bf16.mxu0 0
      %1150 = vmatpush1.bf16.xpose.msra.mxu0 0
      %1151 = vmatprep.subr.bf16.mxu0 0
      %1152 = vmatpush1.bf16.xpose.msra.mxu0 0
      %1153 = vmatprep.subr.bf16.mxu0 0
      %1154 = vmatpush1.bf16.xpose.msra.mxu0 0
      %1155 = vmatprep.subr.bf16.mxu0 0
      %1156 = vmatpush1.bf16.xpose.msra.mxu0 0
      %1157 = vmatprep.subr.bf16.mxu0 0
      %1158 = vmatpush1.bf16.xpose.msra.mxu0 0
      %1159 = vmatprep.subr.bf16.mxu0 0
      %1160 = vmatpush1.bf16.xpose.msra.mxu0 0
      %1161 = vmatprep.subr.bf16.mxu0 0
      %1162 = vmatpush1.bf16.xpose.msra.mxu0 0
      %1163 = vmatprep.subr.bf16.mxu0 0
      %1164 = vmatpush1.bf16.xpose.msra.mxu0 0
      %1165 = vmatprep.subr.bf16.mxu0 0
      %1166 = vmatpush1.bf16.xpose.msra.mxu0 0
      %1167 = vmatprep.mubr.bf16.mxu0 0
      %1168 = vmatmul.mubr.bf16.gmra.mrb[0].mxu0 %v1130
      %v1169 = vpop.f32.mrb[0].mxu0
      %v1170 = vadd.f32 0.0, %v1169
      %v1171 = vpop.f32.mrb[0].mxu0
      %v1172 = vpop.f32.mrb[0].mxu0
      %v1173 = vpop.f32.mrb[0].mxu0
      %1174 = vdwg.mxu0
      %v1176 = vsel %vm1128, %v1081, 0
      %v1179 = vsel %vm1128, %v1097, 0
      %1181 = vmatprep.subr.bf16.mxu0 0
      %1182 = vmatpush1.bf16.xpose.msra.mxu0 %v1179
      %1183 = vmatprep.subr.bf16.mxu0 0
      %1184 = vmatpush1.bf16.xpose.msra.mxu0 0
      %1185 = vmatprep.subr.bf16.mxu0 0
      %1186 = vmatpush1.bf16.xpose.msra.mxu0 0
      %1187 = vmatprep.subr.bf16.mxu0 0
      %1188 = vmatpush1.bf16.xpose.msra.mxu0 0
      %1189 = vmatprep.subr.bf16.mxu0 0
      %1190 = vmatpush1.bf16.xpose.msra.mxu0 0
      %1191 = vmatprep.subr.bf16.mxu0 0
      %1192 = vmatpush1.bf16.xpose.msra.mxu0 0
      %1193 = vmatprep.subr.bf16.mxu0 0
      %1194 = vmatpush1.bf16.xpose.msra.mxu0 0
      %1195 = vmatprep.subr.bf16.mxu0 0
      %1196 = vmatpush1.bf16.xpose.msra.mxu0 0
      %1197 = vmatprep.subr.bf16.mxu0 0
      %1198 = vmatpush1.bf16.xpose.msra.mxu0 0
      %1199 = vmatprep.subr.bf16.mxu0 0
      %1200 = vmatpush1.bf16.xpose.msra.mxu0 0
      %1201 = vmatprep.subr.bf16.mxu0 0
      %1202 = vmatpush1.bf16.xpose.msra.mxu0 0
      %1203 = vmatprep.subr.bf16.mxu0 0
      %1204 = vmatpush1.bf16.xpose.msra.mxu0 0
      %1205 = vmatprep.subr.bf16.mxu0 0
      %1206 = vmatpush1.bf16.xpose.msra.mxu0 0
      %1207 = vmatprep.subr.bf16.mxu0 0
      %1208 = vmatpush1.bf16.xpose.msra.mxu0 0
      %1209 = vmatprep.subr.bf16.mxu0 0
      %1210 = vmatpush1.bf16.xpose.msra.mxu0 0
      %1211 = vmatprep.subr.bf16.mxu0 0
      %1212 = vmatpush1.bf16.xpose.msra.mxu0 0
      %1213 = vmatprep.mubr.bf16.mxu0 0
      %1214 = vmatmul.mubr.bf16.gmra.mrb[0].mxu0 %v1176
      %v1215 = vpop.f32.mrb[0].mxu0
      %v1216 = vadd.f32 0.0, %v1215
      %v1217 = vpop.f32.mrb[0].mxu0
      %v1218 = vpop.f32.mrb[0].mxu0
      %v1219 = vpop.f32.mrb[0].mxu0
      %1220 = vdwg.mxu0
      %v1222 = vsel %vm1128, %v1082, 0
      %v1225 = vsel %vm1128, %v1098, 0
      %1227 = vmatprep.subr.bf16.mxu0 0
      %1228 = vmatpush1.bf16.xpose.msra.mxu0 %v1225
      %1229 = vmatprep.subr.bf16.mxu0 0
      %1230 = vmatpush1.bf16.xpose.msra.mxu0 0
      %1231 = vmatprep.subr.bf16.mxu0 0
      %1232 = vmatpush1.bf16.xpose.msra.mxu0 0
      %1233 = vmatprep.subr.bf16.mxu0 0
      %1234 = vmatpush1.bf16.xpose.msra.mxu0 0
      %1235 = vmatprep.subr.bf16.mxu0 0
      %1236 = vmatpush1.bf16.xpose.msra.mxu0 0
      %1237 = vmatprep.subr.bf16.mxu0 0
      %1238 = vmatpush1.bf16.xpose.msra.mxu0 0
      %1239 = vmatprep.subr.bf16.mxu0 0
      %1240 = vmatpush1.bf16.xpose.msra.mxu0 0
      %1241 = vmatprep.subr.bf16.mxu0 0
      %1242 = vmatpush1.bf16.xpose.msra.mxu0 0
      %1243 = vmatprep.subr.bf16.mxu0 0
      %1244 = vmatpush1.bf16.xpose.msra.mxu0 0
      %1245 = vmatprep.subr.bf16.mxu0 0
      %1246 = vmatpush1.bf16.xpose.msra.mxu0 0
      %1247 = vmatprep.subr.bf16.mxu0 0
      %1248 = vmatpush1.bf16.xpose.msra.mxu0 0
      %1249 = vmatprep.subr.bf16.mxu0 0
      %1250 = vmatpush1.bf16.xpose.msra.mxu0 0
      %1251 = vmatprep.subr.bf16.mxu0 0
      %1252 = vmatpush1.bf16.xpose.msra.mxu0 0
      %1253 = vmatprep.subr.bf16.mxu0 0
      %1254 = vmatpush1.bf16.xpose.msra.mxu0 0
      %1255 = vmatprep.subr.bf16.mxu0 0
      %1256 = vmatpush1.bf16.xpose.msra.mxu0 0
      %1257 = vmatprep.subr.bf16.mxu0 0
      %1258 = vmatpush1.bf16.xpose.msra.mxu0 0
      %1259 = vmatprep.mubr.bf16.mxu0 0
      %1260 = vmatmul.mubr.bf16.gmra.mrb[0].mxu0 %v1222
      %v1261 = vpop.f32.mrb[0].mxu0
      %v1262 = vadd.f32 0.0, %v1261
      %v1263 = vpop.f32.mrb[0].mxu0
      %v1264 = vpop.f32.mrb[0].mxu0
      %v1265 = vpop.f32.mrb[0].mxu0
      %1266 = vdwg.mxu0
      %v1268 = vsel %vm1128, %v1083, 0
      %v1271 = vsel %vm1128, %v1099, 0
      %1273 = vmatprep.subr.bf16.mxu0 0
      %1274 = vmatpush1.bf16.xpose.msra.mxu0 %v1271
      %1275 = vmatprep.subr.bf16.mxu0 0
      %1276 = vmatpush1.bf16.xpose.msra.mxu0 0
      %1277 = vmatprep.subr.bf16.mxu0 0
      %1278 = vmatpush1.bf16.xpose.msra.mxu0 0
      %1279 = vmatprep.subr.bf16.mxu0 0
      %1280 = vmatpush1.bf16.xpose.msra.mxu0 0
      %1281 = vmatprep.subr.bf16.mxu0 0
      %1282 = vmatpush1.bf16.xpose.msra.mxu0 0
      %1283 = vmatprep.subr.bf16.mxu0 0
      %1284 = vmatpush1.bf16.xpose.msra.mxu0 0
      %1285 = vmatprep.subr.bf16.mxu0 0
      %1286 = vmatpush1.bf16.xpose.msra.mxu0 0
      %1287 = vmatprep.subr.bf16.mxu0 0
      %1288 = vmatpush1.bf16.xpose.msra.mxu0 0
      %1289 = vmatprep.subr.bf16.mxu0 0
      %1290 = vmatpush1.bf16.xpose.msra.mxu0 0
      %1291 = vmatprep.subr.bf16.mxu0 0
      %1292 = vmatpush1.bf16.xpose.msra.mxu0 0
      %1293 = vmatprep.subr.bf16.mxu0 0
      %1294 = vmatpush1.bf16.xpose.msra.mxu0 0
      %1295 = vmatprep.subr.bf16.mxu0 0
      %1296 = vmatpush1.bf16.xpose.msra.mxu0 0
      %1297 = vmatprep.subr.bf16.mxu0 0
      %1298 = vmatpush1.bf16.xpose.msra.mxu0 0
      %1299 = vmatprep.subr.bf16.mxu0 0
      %1300 = vmatpush1.bf16.xpose.msra.mxu0 0
      %1301 = vmatprep.subr.bf16.mxu0 0
      %1302 = vmatpush1.bf16.xpose.msra.mxu0 0
      %1303 = vmatprep.subr.bf16.mxu0 0
      %1304 = vmatpush1.bf16.xpose.msra.mxu0 0
      %1305 = vmatprep.mubr.bf16.mxu0 0
      %1306 = vmatmul.mubr.bf16.gmra.mrb[0].mxu0 %v1268
      %v1307 = vpop.f32.mrb[0].mxu0
      %v1308 = vadd.f32 0.0, %v1307
      %v1309 = vpop.f32.mrb[0].mxu0
      %v1310 = vpop.f32.mrb[0].mxu0
      %v1311 = vpop.f32.mrb[0].mxu0
      %1312 = vdwg.mxu0
      %v1314 = vsel %vm1128, %v1084, 0
      %v1317 = vsel %vm1128, %v1100, 0
      %1319 = vmatprep.subr.bf16.mxu0 0
      %1320 = vmatpush1.bf16.xpose.msra.mxu0 %v1317
      %1321 = vmatprep.subr.bf16.mxu0 0
      %1322 = vmatpush1.bf16.xpose.msra.mxu0 0
      %1323 = vmatprep.subr.bf16.mxu0 0
      %1324 = vmatpush1.bf16.xpose.msra.mxu0 0
      %1325 = vmatprep.subr.bf16.mxu0 0
      %1326 = vmatpush1.bf16.xpose.msra.mxu0 0
      %1327 = vmatprep.subr.bf16.mxu0 0
      %1328 = vmatpush1.bf16.xpose.msra.mxu0 0
      %1329 = vmatprep.subr.bf16.mxu0 0
      %1330 = vmatpush1.bf16.xpose.msra.mxu0 0
      %1331 = vmatprep.subr.bf16.mxu0 0
      %1332 = vmatpush1.bf16.xpose.msra.mxu0 0
      %1333 = vmatprep.subr.bf16.mxu0 0
      %1334 = vmatpush1.bf16.xpose.msra.mxu0 0
      %1335 = vmatprep.subr.bf16.mxu0 0
      %1336 = vmatpush1.bf16.xpose.msra.mxu0 0
      %1337 = vmatprep.subr.bf16.mxu0 0
      %1338 = vmatpush1.bf16.xpose.msra.mxu0 0
      %1339 = vmatprep.subr.bf16.mxu0 0
      %1340 = vmatpush1.bf16.xpose.msra.mxu0 0
      %1341 = vmatprep.subr.bf16.mxu0 0
      %1342 = vmatpush1.bf16.xpose.msra.mxu0 0
      %1343 = vmatprep.subr.bf16.mxu0 0
      %1344 = vmatpush1.bf16.xpose.msra.mxu0 0
      %1345 = vmatprep.subr.bf16.mxu0 0
      %1346 = vmatpush1.bf16.xpose.msra.mxu0 0
      %1347 = vmatprep.subr.bf16.mxu0 0
      %1348 = vmatpush1.bf16.xpose.msra.mxu0 0
      %1349 = vmatprep.subr.bf16.mxu0 0
      %1350 = vmatpush1.bf16.xpose.msra.mxu0 0
      %1351 = vmatprep.mubr.bf16.mxu0 0
      %1352 = vmatmul.mubr.bf16.gmra.mrb[0].mxu0 %v1314
      %v1353 = vpop.f32.mrb[0].mxu0
      %v1354 = vadd.f32 0.0, %v1353
      %v1355 = vpop.f32.mrb[0].mxu0
      %v1356 = vpop.f32.mrb[0].mxu0
      %v1357 = vpop.f32.mrb[0].mxu0
      %1358 = vdwg.mxu0
      %v1360 = vsel %vm1128, %v1085, 0
      %v1363 = vsel %vm1128, %v1101, 0
      %1365 = vmatprep.subr.bf16.mxu0 0
      %1366 = vmatpush1.bf16.xpose.msra.mxu0 %v1363
      %1367 = vmatprep.subr.bf16.mxu0 0
      %1368 = vmatpush1.bf16.xpose.msra.mxu0 0
      %1369 = vmatprep.subr.bf16.mxu0 0
      %1370 = vmatpush1.bf16.xpose.msra.mxu0 0
      %1371 = vmatprep.subr.bf16.mxu0 0
      %1372 = vmatpush1.bf16.xpose.msra.mxu0 0
      %1373 = vmatprep.subr.bf16.mxu0 0
      %1374 = vmatpush1.bf16.xpose.msra.mxu0 0
      %1375 = vmatprep.subr.bf16.mxu0 0
      %1376 = vmatpush1.bf16.xpose.msra.mxu0 0
      %1377 = vmatprep.subr.bf16.mxu0 0
      %1378 = vmatpush1.bf16.xpose.msra.mxu0 0
      %1379 = vmatprep.subr.bf16.mxu0 0
      %1380 = vmatpush1.bf16.xpose.msra.mxu0 0
      %1381 = vmatprep.subr.bf16.mxu0 0
      %1382 = vmatpush1.bf16.xpose.msra.mxu0 0
      %1383 = vmatprep.subr.bf16.mxu0 0
      %1384 = vmatpush1.bf16.xpose.msra.mxu0 0
      %1385 = vmatprep.subr.bf16.mxu0 0
      %1386 = vmatpush1.bf16.xpose.msra.mxu0 0
      %1387 = vmatprep.subr.bf16.mxu0 0
      %1388 = vmatpush1.bf16.xpose.msra.mxu0 0
      %1389 = vmatprep.subr.bf16.mxu0 0
      %1390 = vmatpush1.bf16.xpose.msra.mxu0 0
      %1391 = vmatprep.subr.bf16.mxu0 0
      %1392 = vmatpush1.bf16.xpose.msra.mxu0 0
      %1393 = vmatprep.subr.bf16.mxu0 0
      %1394 = vmatpush1.bf16.xpose.msra.mxu0 0
      %1395 = vmatprep.subr.bf16.mxu0 0
      %1396 = vmatpush1.bf16.xpose.msra.mxu0 0
      %1397 = vmatprep.mubr.bf16.mxu0 0
      %1398 = vmatmul.mubr.bf16.gmra.mrb[0].mxu0 %v1360
      %v1399 = vpop.f32.mrb[0].mxu0
      %v1400 = vadd.f32 0.0, %v1399
      %v1401 = vpop.f32.mrb[0].mxu0
      %v1402 = vpop.f32.mrb[0].mxu0
      %v1403 = vpop.f32.mrb[0].mxu0
      %1404 = vdwg.mxu0
      %v1406 = vsel %vm1128, %v1086, 0
      %v1409 = vsel %vm1128, %v1102, 0
      %1411 = vmatprep.subr.bf16.mxu0 0
      %1412 = vmatpush1.bf16.xpose.msra.mxu0 %v1409
      %1413 = vmatprep.subr.bf16.mxu0 0
      %1414 = vmatpush1.bf16.xpose.msra.mxu0 0
      %1415 = vmatprep.subr.bf16.mxu0 0
      %1416 = vmatpush1.bf16.xpose.msra.mxu0 0
      %1417 = vmatprep.subr.bf16.mxu0 0
      %1418 = vmatpush1.bf16.xpose.msra.mxu0 0
      %1419 = vmatprep.subr.bf16.mxu0 0
      %1420 = vmatpush1.bf16.xpose.msra.mxu0 0
      %1421 = vmatprep.subr.bf16.mxu0 0
      %1422 = vmatpush1.bf16.xpose.msra.mxu0 0
      %1423 = vmatprep.subr.bf16.mxu0 0
      %1424 = vmatpush1.bf16.xpose.msra.mxu0 0
      %1425 = vmatprep.subr.bf16.mxu0 0
      %1426 = vmatpush1.bf16.xpose.msra.mxu0 0
      %1427 = vmatprep.subr.bf16.mxu0 0
      %1428 = vmatpush1.bf16.xpose.msra.mxu0 0
      %1429 = vmatprep.subr.bf16.mxu0 0
      %1430 = vmatpush1.bf16.xpose.msra.mxu0 0
      %1431 = vmatprep.subr.bf16.mxu0 0
      %1432 = vmatpush1.bf16.xpose.msra.mxu0 0
      %1433 = vmatprep.subr.bf16.mxu0 0
      %1434 = vmatpush1.bf16.xpose.msra.mxu0 0
      %1435 = vmatprep.subr.bf16.mxu0 0
      %1436 = vmatpush1.bf16.xpose.msra.mxu0 0
      %1437 = vmatprep.subr.bf16.mxu0 0
      %1438 = vmatpush1.bf16.xpose.msra.mxu0 0
      %1439 = vmatprep.subr.bf16.mxu0 0
      %1440 = vmatpush1.bf16.xpose.msra.mxu0 0
      %1441 = vmatprep.subr.bf16.mxu0 0
      %1442 = vmatpush1.bf16.xpose.msra.mxu0 0
      %1443 = vmatprep.mubr.bf16.mxu0 0
      %1444 = vmatmul.mubr.bf16.gmra.mrb[0].mxu0 %v1406
      %v1445 = vpop.f32.mrb[0].mxu0
      %v1446 = vadd.f32 0.0, %v1445
      %v1447 = vpop.f32.mrb[0].mxu0
      %v1448 = vpop.f32.mrb[0].mxu0
      %v1449 = vpop.f32.mrb[0].mxu0
      %1450 = vdwg.mxu0
      %v1452 = vsel %vm1128, %v1087, 0
      %v1455 = vsel %vm1128, %v1103, 0
      %1457 = vmatprep.subr.bf16.mxu0 0
      %1458 = vmatpush1.bf16.xpose.msra.mxu0 %v1455
      %1459 = vmatprep.subr.bf16.mxu0 0
      %1460 = vmatpush1.bf16.xpose.msra.mxu0 0
      %1461 = vmatprep.subr.bf16.mxu0 0
      %1462 = vmatpush1.bf16.xpose.msra.mxu0 0
      %1463 = vmatprep.subr.bf16.mxu0 0
      %1464 = vmatpush1.bf16.xpose.msra.mxu0 0
      %1465 = vmatprep.subr.bf16.mxu0 0
      %1466 = vmatpush1.bf16.xpose.msra.mxu0 0
      %1467 = vmatprep.subr.bf16.mxu0 0
      %1468 = vmatpush1.bf16.xpose.msra.mxu0 0
      %1469 = vmatprep.subr.bf16.mxu0 0
      %1470 = vmatpush1.bf16.xpose.msra.mxu0 0
      %1471 = vmatprep.subr.bf16.mxu0 0
      %1472 = vmatpush1.bf16.xpose.msra.mxu0 0
      %1473 = vmatprep.subr.bf16.mxu0 0
      %1474 = vmatpush1.bf16.xpose.msra.mxu0 0
      %1475 = vmatprep.subr.bf16.mxu0 0
      %1476 = vmatpush1.bf16.xpose.msra.mxu0 0
      %1477 = vmatprep.subr.bf16.mxu0 0
      %1478 = vmatpush1.bf16.xpose.msra.mxu0 0
      %1479 = vmatprep.subr.bf16.mxu0 0
      %1480 = vmatpush1.bf16.xpose.msra.mxu0 0
      %1481 = vmatprep.subr.bf16.mxu0 0
      %1482 = vmatpush1.bf16.xpose.msra.mxu0 0
      %1483 = vmatprep.subr.bf16.mxu0 0
      %1484 = vmatpush1.bf16.xpose.msra.mxu0 0
      %1485 = vmatprep.subr.bf16.mxu0 0
      %1486 = vmatpush1.bf16.xpose.msra.mxu0 0
      %1487 = vmatprep.subr.bf16.mxu0 0
      %1488 = vmatpush1.bf16.xpose.msra.mxu0 0
      %1489 = vmatprep.mubr.bf16.mxu0 0
      %1490 = vmatmul.mubr.bf16.gmra.mrb[0].mxu0 %v1452
      %v1491 = vpop.f32.mrb[0].mxu0
      %v1492 = vadd.f32 0.0, %v1491
      %v1493 = vpop.f32.mrb[0].mxu0
      %v1494 = vpop.f32.mrb[0].mxu0
      %v1495 = vpop.f32.mrb[0].mxu0
      %1496 = vdwg.mxu0
      %v1498 = vsel %vm1128, %v1088, 0
      %v1501 = vsel %vm1128, %v1104, 0
      %1503 = vmatprep.subr.bf16.mxu0 0
      %1504 = vmatpush1.bf16.xpose.msra.mxu0 %v1501
      %1505 = vmatprep.subr.bf16.mxu0 0
      %1506 = vmatpush1.bf16.xpose.msra.mxu0 0
      %1507 = vmatprep.subr.bf16.mxu0 0
      %1508 = vmatpush1.bf16.xpose.msra.mxu0 0
      %1509 = vmatprep.subr.bf16.mxu0 0
      %1510 = vmatpush1.bf16.xpose.msra.mxu0 0
      %1511 = vmatprep.subr.bf16.mxu0 0
      %1512 = vmatpush1.bf16.xpose.msra.mxu0 0
      %1513 = vmatprep.subr.bf16.mxu0 0
      %1514 = vmatpush1.bf16.xpose.msra.mxu0 0
      %1515 = vmatprep.subr.bf16.mxu0 0
      %1516 = vmatpush1.bf16.xpose.msra.mxu0 0
      %1517 = vmatprep.subr.bf16.mxu0 0
      %1518 = vmatpush1.bf16.xpose.msra.mxu0 0
      %1519 = vmatprep.subr.bf16.mxu0 0
      %1520 = vmatpush1.bf16.xpose.msra.mxu0 0
      %1521 = vmatprep.subr.bf16.mxu0 0
      %1522 = vmatpush1.bf16.xpose.msra.mxu0 0
      %1523 = vmatprep.subr.bf16.mxu0 0
      %1524 = vmatpush1.bf16.xpose.msra.mxu0 0
      %1525 = vmatprep.subr.bf16.mxu0 0
      %1526 = vmatpush1.bf16.xpose.msra.mxu0 0
      %1527 = vmatprep.subr.bf16.mxu0 0
      %1528 = vmatpush1.bf16.xpose.msra.mxu0 0
      %1529 = vmatprep.subr.bf16.mxu0 0
      %1530 = vmatpush1.bf16.xpose.msra.mxu0 0
      %1531 = vmatprep.subr.bf16.mxu0 0
      %1532 = vmatpush1.bf16.xpose.msra.mxu0 0
      %1533 = vmatprep.subr.bf16.mxu0 0
      %1534 = vmatpush1.bf16.xpose.msra.mxu0 0
      %1535 = vmatprep.mubr.bf16.mxu0 0
      %1536 = vmatmul.mubr.bf16.gmra.mrb[0].mxu0 %v1498
      %v1537 = vpop.f32.mrb[0].mxu0
      %v1538 = vadd.f32 0.0, %v1537
      %v1539 = vpop.f32.mrb[0].mxu0
      %v1540 = vpop.f32.mrb[0].mxu0
      %v1541 = vpop.f32.mrb[0].mxu0
      %1542 = vdwg.mxu0
      %v1544 = vsel %vm1128, %v1089, 0
      %v1547 = vsel %vm1128, %v1105, 0
      %1549 = vmatprep.subr.bf16.mxu0 0
      %1550 = vmatpush1.bf16.xpose.msra.mxu0 %v1547
      %1551 = vmatprep.subr.bf16.mxu0 0
      %1552 = vmatpush1.bf16.xpose.msra.mxu0 0
      %1553 = vmatprep.subr.bf16.mxu0 0
      %1554 = vmatpush1.bf16.xpose.msra.mxu0 0
      %1555 = vmatprep.subr.bf16.mxu0 0
      %1556 = vmatpush1.bf16.xpose.msra.mxu0 0
      %1557 = vmatprep.subr.bf16.mxu0 0
      %1558 = vmatpush1.bf16.xpose.msra.mxu0 0
      %1559 = vmatprep.subr.bf16.mxu0 0
      %1560 = vmatpush1.bf16.xpose.msra.mxu0 0
      %1561 = vmatprep.subr.bf16.mxu0 0
      %1562 = vmatpush1.bf16.xpose.msra.mxu0 0
      %1563 = vmatprep.subr.bf16.mxu0 0
      %1564 = vmatpush1.bf16.xpose.msra.mxu0 0
      %1565 = vmatprep.subr.bf16.mxu0 0
      %1566 = vmatpush1.bf16.xpose.msra.mxu0 0
      %1567 = vmatprep.subr.bf16.mxu0 0
      %1568 = vmatpush1.bf16.xpose.msra.mxu0 0
      %1569 = vmatprep.subr.bf16.mxu0 0
      %1570 = vmatpush1.bf16.xpose.msra.mxu0 0
      %1571 = vmatprep.subr.bf16.mxu0 0
      %1572 = vmatpush1.bf16.xpose.msra.mxu0 0
      %1573 = vmatprep.subr.bf16.mxu0 0
      %1574 = vmatpush1.bf16.xpose.msra.mxu0 0
      %1575 = vmatprep.subr.bf16.mxu0 0
      %1576 = vmatpush1.bf16.xpose.msra.mxu0 0
      %1577 = vmatprep.subr.bf16.mxu0 0
      %1578 = vmatpush1.bf16.xpose.msra.mxu0 0
      %1579 = vmatprep.subr.bf16.mxu0 0
      %1580 = vmatpush1.bf16.xpose.msra.mxu0 0
      %1581 = vmatprep.mubr.bf16.mxu0 0
      %1582 = vmatmul.mubr.bf16.gmra.mrb[0].mxu0 %v1544
      %v1583 = vpop.f32.mrb[0].mxu0
      %v1584 = vadd.f32 0.0, %v1583
      %v1585 = vpop.f32.mrb[0].mxu0
      %v1586 = vpop.f32.mrb[0].mxu0
      %v1587 = vpop.f32.mrb[0].mxu0
      %1588 = vdwg.mxu0
      %v1590 = vsel %vm1128, %v1090, 0
      %v1593 = vsel %vm1128, %v1106, 0
      %1595 = vmatprep.subr.bf16.mxu0 0
      %1596 = vmatpush1.bf16.xpose.msra.mxu0 %v1593
      %1597 = vmatprep.subr.bf16.mxu0 0
      %1598 = vmatpush1.bf16.xpose.msra.mxu0 0
      %1599 = vmatprep.subr.bf16.mxu0 0
      %1600 = vmatpush1.bf16.xpose.msra.mxu0 0
      %1601 = vmatprep.subr.bf16.mxu0 0
      %1602 = vmatpush1.bf16.xpose.msra.mxu0 0
      %1603 = vmatprep.subr.bf16.mxu0 0
      %1604 = vmatpush1.bf16.xpose.msra.mxu0 0
      %1605 = vmatprep.subr.bf16.mxu0 0
      %1606 = vmatpush1.bf16.xpose.msra.mxu0 0
      %1607 = vmatprep.subr.bf16.mxu0 0
      %1608 = vmatpush1.bf16.xpose.msra.mxu0 0
      %1609 = vmatprep.subr.bf16.mxu0 0
      %1610 = vmatpush1.bf16.xpose.msra.mxu0 0
      %1611 = vmatprep.subr.bf16.mxu0 0
      %1612 = vmatpush1.bf16.xpose.msra.mxu0 0
      %1613 = vmatprep.subr.bf16.mxu0 0
      %1614 = vmatpush1.bf16.xpose.msra.mxu0 0
      %1615 = vmatprep.subr.bf16.mxu0 0
      %1616 = vmatpush1.bf16.xpose.msra.mxu0 0
      %1617 = vmatprep.subr.bf16.mxu0 0
      %1618 = vmatpush1.bf16.xpose.msra.mxu0 0
      %1619 = vmatprep.subr.bf16.mxu0 0
      %1620 = vmatpush1.bf16.xpose.msra.mxu0 0
      %1621 = vmatprep.subr.bf16.mxu0 0
      %1622 = vmatpush1.bf16.xpose.msra.mxu0 0
      %1623 = vmatprep.subr.bf16.mxu0 0
      %1624 = vmatpush1.bf16.xpose.msra.mxu0 0
      %1625 = vmatprep.subr.bf16.mxu0 0
      %1626 = vmatpush1.bf16.xpose.msra.mxu0 0
      %1627 = vmatprep.mubr.bf16.mxu0 0
      %1628 = vmatmul.mubr.bf16.gmra.mrb[0].mxu0 %v1590
      %v1629 = vpop.f32.mrb[0].mxu0
      %v1630 = vadd.f32 0.0, %v1629
      %v1631 = vpop.f32.mrb[0].mxu0
      %v1632 = vpop.f32.mrb[0].mxu0
      %v1633 = vpop.f32.mrb[0].mxu0
      %1634 = vdwg.mxu0
      %v1636 = vsel %vm1128, %v1091, 0
      %v1639 = vsel %vm1128, %v1107, 0
      %1641 = vmatprep.subr.bf16.mxu0 0
      %1642 = vmatpush1.bf16.xpose.msra.mxu0 %v1639
      %1643 = vmatprep.subr.bf16.mxu0 0
      %1644 = vmatpush1.bf16.xpose.msra.mxu0 0
      %1645 = vmatprep.subr.bf16.mxu0 0
      %1646 = vmatpush1.bf16.xpose.msra.mxu0 0
      %1647 = vmatprep.subr.bf16.mxu0 0
      %1648 = vmatpush1.bf16.xpose.msra.mxu0 0
      %1649 = vmatprep.subr.bf16.mxu0 0
      %1650 = vmatpush1.bf16.xpose.msra.mxu0 0
      %1651 = vmatprep.subr.bf16.mxu0 0
      %1652 = vmatpush1.bf16.xpose.msra.mxu0 0
      %1653 = vmatprep.subr.bf16.mxu0 0
      %1654 = vmatpush1.bf16.xpose.msra.mxu0 0
      %1655 = vmatprep.subr.bf16.mxu0 0
      %1656 = vmatpush1.bf16.xpose.msra.mxu0 0
      %1657 = vmatprep.subr.bf16.mxu0 0
      %1658 = vmatpush1.bf16.xpose.msra.mxu0 0
      %1659 = vmatprep.subr.bf16.mxu0 0
      %1660 = vmatpush1.bf16.xpose.msra.mxu0 0
      %1661 = vmatprep.subr.bf16.mxu0 0
      %1662 = vmatpush1.bf16.xpose.msra.mxu0 0
      %1663 = vmatprep.subr.bf16.mxu0 0
      %1664 = vmatpush1.bf16.xpose.msra.mxu0 0
      %1665 = vmatprep.subr.bf16.mxu0 0
      %1666 = vmatpush1.bf16.xpose.msra.mxu0 0
      %1667 = vmatprep.subr.bf16.mxu0 0
      %1668 = vmatpush1.bf16.xpose.msra.mxu0 0
      %1669 = vmatprep.subr.bf16.mxu0 0
      %1670 = vmatpush1.bf16.xpose.msra.mxu0 0
      %1671 = vmatprep.subr.bf16.mxu0 0
      %1672 = vmatpush1.bf16.xpose.msra.mxu0 0
      %1673 = vmatprep.mubr.bf16.mxu0 0
      %1674 = vmatmul.mubr.bf16.gmra.mrb[0].mxu0 %v1636
      %v1675 = vpop.f32.mrb[0].mxu0
      %v1676 = vadd.f32 0.0, %v1675
      %v1677 = vpop.f32.mrb[0].mxu0
      %v1678 = vpop.f32.mrb[0].mxu0
      %v1679 = vpop.f32.mrb[0].mxu0
      %1680 = vdwg.mxu0
      %v1682 = vsel %vm1128, %v1092, 0
      %v1685 = vsel %vm1128, %v1108, 0
      %1687 = vmatprep.subr.bf16.mxu0 0
      %1688 = vmatpush1.bf16.xpose.msra.mxu0 %v1685
      %1689 = vmatprep.subr.bf16.mxu0 0
      %1690 = vmatpush1.bf16.xpose.msra.mxu0 0
      %1691 = vmatprep.subr.bf16.mxu0 0
      %1692 = vmatpush1.bf16.xpose.msra.mxu0 0
      %1693 = vmatprep.subr.bf16.mxu0 0
      %1694 = vmatpush1.bf16.xpose.msra.mxu0 0
      %1695 = vmatprep.subr.bf16.mxu0 0
      %1696 = vmatpush1.bf16.xpose.msra.mxu0 0
      %1697 = vmatprep.subr.bf16.mxu0 0
      %1698 = vmatpush1.bf16.xpose.msra.mxu0 0
      %1699 = vmatprep.subr.bf16.mxu0 0
      %1700 = vmatpush1.bf16.xpose.msra.mxu0 0
      %1701 = vmatprep.subr.bf16.mxu0 0
      %1702 = vmatpush1.bf16.xpose.msra.mxu0 0
      %1703 = vmatprep.subr.bf16.mxu0 0
      %1704 = vmatpush1.bf16.xpose.msra.mxu0 0
      %1705 = vmatprep.subr.bf16.mxu0 0
      %1706 = vmatpush1.bf16.xpose.msra.mxu0 0
      %1707 = vmatprep.subr.bf16.mxu0 0
      %1708 = vmatpush1.bf16.xpose.msra.mxu0 0
      %1709 = vmatprep.subr.bf16.mxu0 0
      %1710 = vmatpush1.bf16.xpose.msra.mxu0 0
      %1711 = vmatprep.subr.bf16.mxu0 0
      %1712 = vmatpush1.bf16.xpose.msra.mxu0 0
      %1713 = vmatprep.subr.bf16.mxu0 0
      %1714 = vmatpush1.bf16.xpose.msra.mxu0 0
      %1715 = vmatprep.subr.bf16.mxu0 0
      %1716 = vmatpush1.bf16.xpose.msra.mxu0 0
      %1717 = vmatprep.subr.bf16.mxu0 0
      %1718 = vmatpush1.bf16.xpose.msra.mxu0 0
      %1719 = vmatprep.mubr.bf16.mxu0 0
      %1720 = vmatmul.mubr.bf16.gmra.mrb[0].mxu0 %v1682
      %v1721 = vpop.f32.mrb[0].mxu0
      %v1722 = vadd.f32 0.0, %v1721
      %v1723 = vpop.f32.mrb[0].mxu0
      %v1724 = vpop.f32.mrb[0].mxu0
      %v1725 = vpop.f32.mrb[0].mxu0
      %1726 = vdwg.mxu0
      %v1728 = vsel %vm1128, %v1093, 0
      %v1731 = vsel %vm1128, %v1109, 0
      %1733 = vmatprep.subr.bf16.mxu0 0
      %1734 = vmatpush1.bf16.xpose.msra.mxu0 %v1731
      %1735 = vmatprep.subr.bf16.mxu0 0
      %1736 = vmatpush1.bf16.xpose.msra.mxu0 0
      %1737 = vmatprep.subr.bf16.mxu0 0
      %1738 = vmatpush1.bf16.xpose.msra.mxu0 0
      %1739 = vmatprep.subr.bf16.mxu0 0
      %1740 = vmatpush1.bf16.xpose.msra.mxu0 0
      %1741 = vmatprep.subr.bf16.mxu0 0
      %1742 = vmatpush1.bf16.xpose.msra.mxu0 0
      %1743 = vmatprep.subr.bf16.mxu0 0
      %1744 = vmatpush1.bf16.xpose.msra.mxu0 0
      %1745 = vmatprep.subr.bf16.mxu0 0
      %1746 = vmatpush1.bf16.xpose.msra.mxu0 0
      %1747 = vmatprep.subr.bf16.mxu0 0
      %1748 = vmatpush1.bf16.xpose.msra.mxu0 0
      %1749 = vmatprep.subr.bf16.mxu0 0
      %1750 = vmatpush1.bf16.xpose.msra.mxu0 0
      %1751 = vmatprep.subr.bf16.mxu0 0
      %1752 = vmatpush1.bf16.xpose.msra.mxu0 0
      %1753 = vmatprep.subr.bf16.mxu0 0
      %1754 = vmatpush1.bf16.xpose.msra.mxu0 0
      %1755 = vmatprep.subr.bf16.mxu0 0
      %1756 = vmatpush1.bf16.xpose.msra.mxu0 0
      %1757 = vmatprep.subr.bf16.mxu0 0
      %1758 = vmatpush1.bf16.xpose.msra.mxu0 0
      %1759 = vmatprep.subr.bf16.mxu0 0
      %1760 = vmatpush1.bf16.xpose.msra.mxu0 0
      %1761 = vmatprep.subr.bf16.mxu0 0
      %1762 = vmatpush1.bf16.xpose.msra.mxu0 0
      %1763 = vmatprep.subr.bf16.mxu0 0
      %1764 = vmatpush1.bf16.xpose.msra.mxu0 0
      %1765 = vmatprep.mubr.bf16.mxu0 0
      %1766 = vmatmul.mubr.bf16.gmra.mrb[0].mxu0 %v1728
      %v1767 = vpop.f32.mrb[0].mxu0
      %v1768 = vadd.f32 0.0, %v1767
      %v1769 = vpop.f32.mrb[0].mxu0
      %v1770 = vpop.f32.mrb[0].mxu0
      %v1771 = vpop.f32.mrb[0].mxu0
      %1772 = vdwg.mxu0
      %v1774 = vsel %vm1128, %v1094, 0
      %v1777 = vsel %vm1128, %v1110, 0
      %1779 = vmatprep.subr.bf16.mxu0 0
      %1780 = vmatpush1.bf16.xpose.msra.mxu0 %v1777
      %1781 = vmatprep.subr.bf16.mxu0 0
      %1782 = vmatpush1.bf16.xpose.msra.mxu0 0
      %1783 = vmatprep.subr.bf16.mxu0 0
      %1784 = vmatpush1.bf16.xpose.msra.mxu0 0
      %1785 = vmatprep.subr.bf16.mxu0 0
      %1786 = vmatpush1.bf16.xpose.msra.mxu0 0
      %1787 = vmatprep.subr.bf16.mxu0 0
      %1788 = vmatpush1.bf16.xpose.msra.mxu0 0
      %1789 = vmatprep.subr.bf16.mxu0 0
      %1790 = vmatpush1.bf16.xpose.msra.mxu0 0
      %1791 = vmatprep.subr.bf16.mxu0 0
      %1792 = vmatpush1.bf16.xpose.msra.mxu0 0
      %1793 = vmatprep.subr.bf16.mxu0 0
      %1794 = vmatpush1.bf16.xpose.msra.mxu0 0
      %1795 = vmatprep.subr.bf16.mxu0 0
      %1796 = vmatpush1.bf16.xpose.msra.mxu0 0
      %1797 = vmatprep.subr.bf16.mxu0 0
      %1798 = vmatpush1.bf16.xpose.msra.mxu0 0
      %1799 = vmatprep.subr.bf16.mxu0 0
      %1800 = vmatpush1.bf16.xpose.msra.mxu0 0
      %1801 = vmatprep.subr.bf16.mxu0 0
      %1802 = vmatpush1.bf16.xpose.msra.mxu0 0
      %1803 = vmatprep.subr.bf16.mxu0 0
      %1804 = vmatpush1.bf16.xpose.msra.mxu0 0
      %1805 = vmatprep.subr.bf16.mxu0 0
      %1806 = vmatpush1.bf16.xpose.msra.mxu0 0
      %1807 = vmatprep.subr.bf16.mxu0 0
      %1808 = vmatpush1.bf16.xpose.msra.mxu0 0
      %1809 = vmatprep.subr.bf16.mxu0 0
      %1810 = vmatpush1.bf16.xpose.msra.mxu0 0
      %1811 = vmatprep.mubr.bf16.mxu0 0
      %1812 = vmatmul.mubr.bf16.gmra.mrb[0].mxu0 %v1774
      %v1813 = vpop.f32.mrb[0].mxu0
      %v1814 = vadd.f32 0.0, %v1813
      %v1815 = vpop.f32.mrb[0].mxu0
      %v1816 = vpop.f32.mrb[0].mxu0
      %v1817 = vpop.f32.mrb[0].mxu0
      %1818 = vdwg.mxu0
      %v1820 = vsel %vm1128, %v1095, 0
      %v1823 = vsel %vm1128, %v1111, 0
      %1825 = vmatprep.subr.bf16.mxu0 0
      %1826 = vmatpush1.bf16.xpose.msra.mxu0 %v1823
      %1827 = vmatprep.subr.bf16.mxu0 0
      %1828 = vmatpush1.bf16.xpose.msra.mxu0 0
      %1829 = vmatprep.subr.bf16.mxu0 0
      %1830 = vmatpush1.bf16.xpose.msra.mxu0 0
      %1831 = vmatprep.subr.bf16.mxu0 0
      %1832 = vmatpush1.bf16.xpose.msra.mxu0 0
      %1833 = vmatprep.subr.bf16.mxu0 0
      %1834 = vmatpush1.bf16.xpose.msra.mxu0 0
      %1835 = vmatprep.subr.bf16.mxu0 0
      %1836 = vmatpush1.bf16.xpose.msra.mxu0 0
      %1837 = vmatprep.subr.bf16.mxu0 0
      %1838 = vmatpush1.bf16.xpose.msra.mxu0 0
      %1839 = vmatprep.subr.bf16.mxu0 0
      %1840 = vmatpush1.bf16.xpose.msra.mxu0 0
      %1841 = vmatprep.subr.bf16.mxu0 0
      %1842 = vmatpush1.bf16.xpose.msra.mxu0 0
      %1843 = vmatprep.subr.bf16.mxu0 0
      %1844 = vmatpush1.bf16.xpose.msra.mxu0 0
      %1845 = vmatprep.subr.bf16.mxu0 0
      %1846 = vmatpush1.bf16.xpose.msra.mxu0 0
      %1847 = vmatprep.subr.bf16.mxu0 0
      %1848 = vmatpush1.bf16.xpose.msra.mxu0 0
      %1849 = vmatprep.subr.bf16.mxu0 0
      %1850 = vmatpush1.bf16.xpose.msra.mxu0 0
      %1851 = vmatprep.subr.bf16.mxu0 0
      %1852 = vmatpush1.bf16.xpose.msra.mxu0 0
      %1853 = vmatprep.subr.bf16.mxu0 0
      %1854 = vmatpush1.bf16.xpose.msra.mxu0 0
      %1855 = vmatprep.subr.bf16.mxu0 0
      %1856 = vmatpush1.bf16.xpose.msra.mxu0 0
      %1857 = vmatprep.mubr.bf16.mxu0 0
      %1858 = vmatmul.mubr.bf16.gmra.mrb[0].mxu0 %v1820
      %v1859 = vpop.f32.mrb[0].mxu0
      %v1860 = vadd.f32 0.0, %v1859
      %v1861 = vpop.f32.mrb[0].mxu0
      %v1862 = vpop.f32.mrb[0].mxu0
      %v1863 = vpop.f32.mrb[0].mxu0
      %1864 = vdwg.mxu0
      %v1865 = vmul.f32 %v1170, 0.35355338
      %v1866 = vmul.f32 %v1216, 0.35355338
      %v1867 = vmul.f32 %v1262, 0.35355338
      %v1868 = vmul.f32 %v1308, 0.35355338
      %v1869 = vmul.f32 %v1354, 0.35355338
      %v1870 = vmul.f32 %v1400, 0.35355338
      %v1871 = vmul.f32 %v1446, 0.35355338
      %v1872 = vmul.f32 %v1492, 0.35355338
      %v1873 = vmul.f32 %v1538, 0.35355338
      %v1874 = vmul.f32 %v1584, 0.35355338
      %v1875 = vmul.f32 %v1630, 0.35355338
      %v1876 = vmul.f32 %v1676, 0.35355338
      %v1877 = vmul.f32 %v1722, 0.35355338
      %v1878 = vmul.f32 %v1768, 0.35355338
      %v1879 = vmul.f32 %v1814, 0.35355338
      %v1880 = vmul.f32 %v1860, 0.35355338
      %v1881 = vsel %vm1128, %v1865, -inf
      %1882 = vmax.xlane.f32.xlu0 %v1881
      %v1883 = vpop.xlane.xlu0 %1882
      %v1884 = vsel %vm1128, %v1866, -inf
      %1885 = vmax.xlane.f32.xlu0 %v1884
      %v1886 = vpop.xlane.xlu0 %1885
      %v1887 = vsel %vm1128, %v1867, -inf
      %1888 = vmax.xlane.f32.xlu0 %v1887
      %v1889 = vpop.xlane.xlu0 %1888
      %v1890 = vsel %vm1128, %v1868, -inf
      %1891 = vmax.xlane.f32.xlu0 %v1890
      %v1892 = vpop.xlane.xlu0 %1891
      %v1893 = vsel %vm1128, %v1869, -inf
      %1894 = vmax.xlane.f32.xlu0 %v1893
      %v1895 = vpop.xlane.xlu0 %1894
      %v1896 = vsel %vm1128, %v1870, -inf
      %1897 = vmax.xlane.f32.xlu0 %v1896
      %v1898 = vpop.xlane.xlu0 %1897
      %v1899 = vsel %vm1128, %v1871, -inf
      %1900 = vmax.xlane.f32.xlu0 %v1899
      %v1901 = vpop.xlane.xlu0 %1900
      %v1902 = vsel %vm1128, %v1872, -inf
      %1903 = vmax.xlane.f32.xlu0 %v1902
      %v1904 = vpop.xlane.xlu0 %1903
      %v1905 = vsel %vm1128, %v1873, -inf
      %1906 = vmax.xlane.f32.xlu0 %v1905
      %v1907 = vpop.xlane.xlu0 %1906
      %v1908 = vsel %vm1128, %v1874, -inf
      %1909 = vmax.xlane.f32.xlu0 %v1908
      %v1910 = vpop.xlane.xlu0 %1909
      %v1911 = vsel %vm1128, %v1875, -inf
      %1912 = vmax.xlane.f32.xlu0 %v1911
      %v1913 = vpop.xlane.xlu0 %1912
      %v1914 = vsel %vm1128, %v1876, -inf
      %1915 = vmax.xlane.f32.xlu0 %v1914
      %v1916 = vpop.xlane.xlu0 %1915
      %v1917 = vsel %vm1128, %v1877, -inf
      %1918 = vmax.xlane.f32.xlu0 %v1917
      %v1919 = vpop.xlane.xlu0 %1918
      %v1920 = vsel %vm1128, %v1878, -inf
      %1921 = vmax.xlane.f32.xlu0 %v1920
      %v1922 = vpop.xlane.xlu0 %1921
      %v1923 = vsel %vm1128, %v1879, -inf
      %1924 = vmax.xlane.f32.xlu0 %v1923
      %v1925 = vpop.xlane.xlu0 %1924
      %v1926 = vsel %vm1128, %v1880, -inf
      %1927 = vmax.xlane.f32.xlu0 %v1926
      %v1928 = vpop.xlane.xlu0 %1927
      %v1929 = vsub.f32 %v1865, %v1883
      %v1930 = vsub.f32 %v1866, %v1886
      %v1931 = vsub.f32 %v1867, %v1889
      %v1932 = vsub.f32 %v1868, %v1892
      %v1933 = vsub.f32 %v1869, %v1895
      %v1934 = vsub.f32 %v1870, %v1898
      %v1935 = vsub.f32 %v1871, %v1901
      %v1936 = vsub.f32 %v1872, %v1904
      %v1937 = vsub.f32 %v1873, %v1907
      %v1938 = vsub.f32 %v1874, %v1910
      %v1939 = vsub.f32 %v1875, %v1913
      %v1940 = vsub.f32 %v1876, %v1916
      %v1941 = vsub.f32 %v1877, %v1919
      %v1942 = vsub.f32 %v1878, %v1922
      %v1943 = vsub.f32 %v1879, %v1925
      %v1944 = vsub.f32 %v1880, %v1928
      %v1945 = vmul.f32 %v1929, 1.442695
      %v1946 = vpow.pop %v1945
      %v1947 = vmul.f32 %v1930, 1.442695
      %v1948 = vpow.pop %v1947
      %v1949 = vmul.f32 %v1931, 1.442695
      %v1950 = vpow.pop %v1949
      %v1951 = vmul.f32 %v1932, 1.442695
      %v1952 = vpow.pop %v1951
      %v1953 = vmul.f32 %v1933, 1.442695
      %v1954 = vpow.pop %v1953
      %v1955 = vmul.f32 %v1934, 1.442695
      %v1956 = vpow.pop %v1955
      %v1957 = vmul.f32 %v1935, 1.442695
      %v1958 = vpow.pop %v1957
      %v1959 = vmul.f32 %v1936, 1.442695
      %v1960 = vpow.pop %v1959
      %v1961 = vmul.f32 %v1937, 1.442695
      %v1962 = vpow.pop %v1961
      %v1963 = vmul.f32 %v1938, 1.442695
      %v1964 = vpow.pop %v1963
      %v1965 = vmul.f32 %v1939, 1.442695
      %v1966 = vpow.pop %v1965
      %v1967 = vmul.f32 %v1940, 1.442695
      %v1968 = vpow.pop %v1967
      %v1969 = vmul.f32 %v1941, 1.442695
      %v1970 = vpow.pop %v1969
      %v1971 = vmul.f32 %v1942, 1.442695
      %v1972 = vpow.pop %v1971
      %v1973 = vmul.f32 %v1943, 1.442695
      %v1974 = vpow.pop %v1973
      %v1975 = vmul.f32 %v1944, 1.442695
      %v1976 = vpow.pop %v1975
      %v1977 = vsel %vm1128, %v1946, 0.0
      %1978 = vadd.xlane.f32.xlu0 %v1977
      %v1979 = vpop.xlane.xlu0 %1978
      %v1980 = vsel %vm1128, %v1948, 0.0
      %1981 = vadd.xlane.f32.xlu0 %v1980
      %v1982 = vpop.xlane.xlu0 %1981
      %v1983 = vsel %vm1128, %v1950, 0.0
      %1984 = vadd.xlane.f32.xlu0 %v1983
      %v1985 = vpop.xlane.xlu0 %1984
      %v1986 = vsel %vm1128, %v1952, 0.0
      %1987 = vadd.xlane.f32.xlu0 %v1986
      %v1988 = vpop.xlane.xlu0 %1987
      %v1989 = vsel %vm1128, %v1954, 0.0
      %1990 = vadd.xlane.f32.xlu0 %v1989
      %v1991 = vpop.xlane.xlu0 %1990
      %v1992 = vsel %vm1128, %v1956, 0.0
      %1993 = vadd.xlane.f32.xlu0 %v1992
      %v1994 = vpop.xlane.xlu0 %1993
      %v1995 = vsel %vm1128, %v1958, 0.0
      %1996 = vadd.xlane.f32.xlu0 %v1995
      %v1997 = vpop.xlane.xlu0 %1996
      %v1998 = vsel %vm1128, %v1960, 0.0
      %1999 = vadd.xlane.f32.xlu0 %v1998
      %v2000 = vpop.xlane.xlu0 %1999
      %v2001 = vsel %vm1128, %v1962, 0.0
      %2002 = vadd.xlane.f32.xlu0 %v2001
      %v2003 = vpop.xlane.xlu0 %2002
      %v2004 = vsel %vm1128, %v1964, 0.0
      %2005 = vadd.xlane.f32.xlu0 %v2004
      %v2006 = vpop.xlane.xlu0 %2005
      %v2007 = vsel %vm1128, %v1966, 0.0
      %2008 = vadd.xlane.f32.xlu0 %v2007
      %v2009 = vpop.xlane.xlu0 %2008
      %v2010 = vsel %vm1128, %v1968, 0.0
      %2011 = vadd.xlane.f32.xlu0 %v2010
      %v2012 = vpop.xlane.xlu0 %2011
      %v2013 = vsel %vm1128, %v1970, 0.0
      %2014 = vadd.xlane.f32.xlu0 %v2013
      %v2015 = vpop.xlane.xlu0 %2014
      %v2016 = vsel %vm1128, %v1972, 0.0
      %2017 = vadd.xlane.f32.xlu0 %v2016
      %v2018 = vpop.xlane.xlu0 %2017
      %v2019 = vsel %vm1128, %v1974, 0.0
      %2020 = vadd.xlane.f32.xlu0 %v2019
      %v2021 = vpop.xlane.xlu0 %2020
      %v2022 = vsel %vm1128, %v1976, 0.0
      %2023 = vadd.xlane.f32.xlu0 %v2022
      %v2024 = vpop.xlane.xlu0 %2023
      %v2025 = vrcp.pop %v1979
      %v2026 = vmul.f32 %v1946, %v2025
      %v2027 = vrcp.pop %v1982
      %v2028 = vmul.f32 %v1948, %v2027
      %v2029 = vrcp.pop %v1985
      %v2030 = vmul.f32 %v1950, %v2029
      %v2031 = vrcp.pop %v1988
      %v2032 = vmul.f32 %v1952, %v2031
      %v2033 = vrcp.pop %v1991
      %v2034 = vmul.f32 %v1954, %v2033
      %v2035 = vrcp.pop %v1994
      %v2036 = vmul.f32 %v1956, %v2035
      %v2037 = vrcp.pop %v1997
      %v2038 = vmul.f32 %v1958, %v2037
      %v2039 = vrcp.pop %v2000
      %v2040 = vmul.f32 %v1960, %v2039
      %v2041 = vrcp.pop %v2003
      %v2042 = vmul.f32 %v1962, %v2041
      %v2043 = vrcp.pop %v2006
      %v2044 = vmul.f32 %v1964, %v2043
      %v2045 = vrcp.pop %v2009
      %v2046 = vmul.f32 %v1966, %v2045
      %v2047 = vrcp.pop %v2012
      %v2048 = vmul.f32 %v1968, %v2047
      %v2049 = vrcp.pop %v2015
      %v2050 = vmul.f32 %v1970, %v2049
      %v2051 = vrcp.pop %v2018
      %v2052 = vmul.f32 %v1972, %v2051
      %v2053 = vrcp.pop %v2021
      %v2054 = vmul.f32 %v1974, %v2053
      %v2055 = vrcp.pop %v2024
      %v2056 = vmul.f32 %v1976, %v2055
      %v2057 = vpack.c.bf16 %v2026, %v2026
      %v2058 = vpack.c.bf16 %v2028, %v2028
      %v2059 = vpack.c.bf16 %v2030, %v2030
      %v2060 = vpack.c.bf16 %v2032, %v2032
      %v2061 = vpack.c.bf16 %v2034, %v2034
      %v2062 = vpack.c.bf16 %v2036, %v2036
      %v2063 = vpack.c.bf16 %v2038, %v2038
      %v2064 = vpack.c.bf16 %v2040, %v2040
      %v2065 = vpack.c.bf16 %v2042, %v2042
      %v2066 = vpack.c.bf16 %v2044, %v2044
      %v2067 = vpack.c.bf16 %v2046, %v2046
      %v2068 = vpack.c.bf16 %v2048, %v2048
      %v2069 = vpack.c.bf16 %v2050, %v2050
      %v2070 = vpack.c.bf16 %v2052, %v2052
      %v2071 = vpack.c.bf16 %v2054, %v2054
      %v2072 = vpack.c.bf16 %v2056, %v2056
      %v2074 = vsel %vm1128, %v2057, 0
      %vm2076 = vcmask 1043456
      %v2078 = vsel %vm2076, %v1112, 0
      %2080 = vmatprep.subr.bf16.mxu0 0
      %2081 = vmatpush1.bf16.msra.mxu0 %v2078
      %2082 = vmatprep.subr.bf16.mxu0 0
      %2083 = vmatpush1.bf16.msra.mxu0 0
      %2084 = vmatprep.subr.bf16.mxu0 0
      %2085 = vmatpush1.bf16.msra.mxu0 0
      %2086 = vmatprep.subr.bf16.mxu0 0
      %2087 = vmatpush1.bf16.msra.mxu0 0
      %2088 = vmatprep.subr.bf16.mxu0 0
      %2089 = vmatpush1.bf16.msra.mxu0 0
      %2090 = vmatprep.subr.bf16.mxu0 0
      %2091 = vmatpush1.bf16.msra.mxu0 0
      %2092 = vmatprep.subr.bf16.mxu0 0
      %2093 = vmatpush1.bf16.msra.mxu0 0
      %2094 = vmatprep.subr.bf16.mxu0 0
      %2095 = vmatpush1.bf16.msra.mxu0 0
      %2096 = vmatprep.subr.bf16.mxu0 0
      %2097 = vmatpush1.bf16.msra.mxu0 0
      %2098 = vmatprep.subr.bf16.mxu0 0
      %2099 = vmatpush1.bf16.msra.mxu0 0
      %2100 = vmatprep.subr.bf16.mxu0 0
      %2101 = vmatpush1.bf16.msra.mxu0 0
      %2102 = vmatprep.subr.bf16.mxu0 0
      %2103 = vmatpush1.bf16.msra.mxu0 0
      %2104 = vmatprep.subr.bf16.mxu0 0
      %2105 = vmatpush1.bf16.msra.mxu0 0
      %2106 = vmatprep.subr.bf16.mxu0 0
      %2107 = vmatpush1.bf16.msra.mxu0 0
      %2108 = vmatprep.subr.bf16.mxu0 0
      %2109 = vmatpush1.bf16.msra.mxu0 0
      %2110 = vmatprep.subr.bf16.mxu0 0
      %2111 = vmatpush1.bf16.msra.mxu0 0
      %2112 = vmatprep.mubr.bf16.mxu0 0
      %2113 = vmatmul.mubr.bf16.gmra.mrb[0].mxu0 %v2074
      %v2114 = vpop.f32.mrb[0].mxu0
      %v2115 = vadd.f32 0.0, %v2114
      %v2116 = vpop.f32.mrb[0].mxu0
      %v2117 = vpop.f32.mrb[0].mxu0
      %v2118 = vpop.f32.mrb[0].mxu0
      %2119 = vdwg.mxu0
      %v2121 = vsel %vm1128, %v2058, 0
      %v2124 = vsel %vm2076, %v1113, 0
      %2126 = vmatprep.subr.bf16.mxu0 0
      %2127 = vmatpush1.bf16.msra.mxu0 %v2124
      %2128 = vmatprep.subr.bf16.mxu0 0
      %2129 = vmatpush1.bf16.msra.mxu0 0
      %2130 = vmatprep.subr.bf16.mxu0 0
      %2131 = vmatpush1.bf16.msra.mxu0 0
      %2132 = vmatprep.subr.bf16.mxu0 0
      %2133 = vmatpush1.bf16.msra.mxu0 0
      %2134 = vmatprep.subr.bf16.mxu0 0
      %2135 = vmatpush1.bf16.msra.mxu0 0
      %2136 = vmatprep.subr.bf16.mxu0 0
      %2137 = vmatpush1.bf16.msra.mxu0 0
      %2138 = vmatprep.subr.bf16.mxu0 0
      %2139 = vmatpush1.bf16.msra.mxu0 0
      %2140 = vmatprep.subr.bf16.mxu0 0
      %2141 = vmatpush1.bf16.msra.mxu0 0
      %2142 = vmatprep.subr.bf16.mxu0 0
      %2143 = vmatpush1.bf16.msra.mxu0 0
      %2144 = vmatprep.subr.bf16.mxu0 0
      %2145 = vmatpush1.bf16.msra.mxu0 0
      %2146 = vmatprep.subr.bf16.mxu0 0
      %2147 = vmatpush1.bf16.msra.mxu0 0
      %2148 = vmatprep.subr.bf16.mxu0 0
      %2149 = vmatpush1.bf16.msra.mxu0 0
      %2150 = vmatprep.subr.bf16.mxu0 0
      %2151 = vmatpush1.bf16.msra.mxu0 0
      %2152 = vmatprep.subr.bf16.mxu0 0
      %2153 = vmatpush1.bf16.msra.mxu0 0
      %2154 = vmatprep.subr.bf16.mxu0 0
      %2155 = vmatpush1.bf16.msra.mxu0 0
      %2156 = vmatprep.subr.bf16.mxu0 0
      %2157 = vmatpush1.bf16.msra.mxu0 0
      %2158 = vmatprep.mubr.bf16.mxu0 0
      %2159 = vmatmul.mubr.bf16.gmra.mrb[0].mxu0 %v2121
      %v2160 = vpop.f32.mrb[0].mxu0
      %v2161 = vadd.f32 0.0, %v2160
      %v2162 = vpop.f32.mrb[0].mxu0
      %v2163 = vpop.f32.mrb[0].mxu0
      %v2164 = vpop.f32.mrb[0].mxu0
      %2165 = vdwg.mxu0
      %v2167 = vsel %vm1128, %v2059, 0
      %v2170 = vsel %vm2076, %v1114, 0
      %2172 = vmatprep.subr.bf16.mxu0 0
      %2173 = vmatpush1.bf16.msra.mxu0 %v2170
      %2174 = vmatprep.subr.bf16.mxu0 0
      %2175 = vmatpush1.bf16.msra.mxu0 0
      %2176 = vmatprep.subr.bf16.mxu0 0
      %2177 = vmatpush1.bf16.msra.mxu0 0
      %2178 = vmatprep.subr.bf16.mxu0 0
      %2179 = vmatpush1.bf16.msra.mxu0 0
      %2180 = vmatprep.subr.bf16.mxu0 0
      %2181 = vmatpush1.bf16.msra.mxu0 0
      %2182 = vmatprep.subr.bf16.mxu0 0
      %2183 = vmatpush1.bf16.msra.mxu0 0
      %2184 = vmatprep.subr.bf16.mxu0 0
      %2185 = vmatpush1.bf16.msra.mxu0 0
      %2186 = vmatprep.subr.bf16.mxu0 0
      %2187 = vmatpush1.bf16.msra.mxu0 0
      %2188 = vmatprep.subr.bf16.mxu0 0
      %2189 = vmatpush1.bf16.msra.mxu0 0
      %2190 = vmatprep.subr.bf16.mxu0 0
      %2191 = vmatpush1.bf16.msra.mxu0 0
      %2192 = vmatprep.subr.bf16.mxu0 0
      %2193 = vmatpush1.bf16.msra.mxu0 0
      %2194 = vmatprep.subr.bf16.mxu0 0
      %2195 = vmatpush1.bf16.msra.mxu0 0
      %2196 = vmatprep.subr.bf16.mxu0 0
      %2197 = vmatpush1.bf16.msra.mxu0 0
      %2198 = vmatprep.subr.bf16.mxu0 0
      %2199 = vmatpush1.bf16.msra.mxu0 0
      %2200 = vmatprep.subr.bf16.mxu0 0
      %2201 = vmatpush1.bf16.msra.mxu0 0
      %2202 = vmatprep.subr.bf16.mxu0 0
      %2203 = vmatpush1.bf16.msra.mxu0 0
      %2204 = vmatprep.mubr.bf16.mxu0 0
      %2205 = vmatmul.mubr.bf16.gmra.mrb[0].mxu0 %v2167
      %v2206 = vpop.f32.mrb[0].mxu0
      %v2207 = vadd.f32 0.0, %v2206
      %v2208 = vpop.f32.mrb[0].mxu0
      %v2209 = vpop.f32.mrb[0].mxu0
      %v2210 = vpop.f32.mrb[0].mxu0
      %2211 = vdwg.mxu0
      %v2213 = vsel %vm1128, %v2060, 0
      %v2216 = vsel %vm2076, %v1115, 0
      %2218 = vmatprep.subr.bf16.mxu0 0
      %2219 = vmatpush1.bf16.msra.mxu0 %v2216
      %2220 = vmatprep.subr.bf16.mxu0 0
      %2221 = vmatpush1.bf16.msra.mxu0 0
      %2222 = vmatprep.subr.bf16.mxu0 0
      %2223 = vmatpush1.bf16.msra.mxu0 0
      %2224 = vmatprep.subr.bf16.mxu0 0
      %2225 = vmatpush1.bf16.msra.mxu0 0
      %2226 = vmatprep.subr.bf16.mxu0 0
      %2227 = vmatpush1.bf16.msra.mxu0 0
      %2228 = vmatprep.subr.bf16.mxu0 0
      %2229 = vmatpush1.bf16.msra.mxu0 0
      %2230 = vmatprep.subr.bf16.mxu0 0
      %2231 = vmatpush1.bf16.msra.mxu0 0
      %2232 = vmatprep.subr.bf16.mxu0 0
      %2233 = vmatpush1.bf16.msra.mxu0 0
      %2234 = vmatprep.subr.bf16.mxu0 0
      %2235 = vmatpush1.bf16.msra.mxu0 0
      %2236 = vmatprep.subr.bf16.mxu0 0
      %2237 = vmatpush1.bf16.msra.mxu0 0
      %2238 = vmatprep.subr.bf16.mxu0 0
      %2239 = vmatpush1.bf16.msra.mxu0 0
      %2240 = vmatprep.subr.bf16.mxu0 0
      %2241 = vmatpush1.bf16.msra.mxu0 0
      %2242 = vmatprep.subr.bf16.mxu0 0
      %2243 = vmatpush1.bf16.msra.mxu0 0
      %2244 = vmatprep.subr.bf16.mxu0 0
      %2245 = vmatpush1.bf16.msra.mxu0 0
      %2246 = vmatprep.subr.bf16.mxu0 0
      %2247 = vmatpush1.bf16.msra.mxu0 0
      %2248 = vmatprep.subr.bf16.mxu0 0
      %2249 = vmatpush1.bf16.msra.mxu0 0
      %2250 = vmatprep.mubr.bf16.mxu0 0
      %2251 = vmatmul.mubr.bf16.gmra.mrb[0].mxu0 %v2213
      %v2252 = vpop.f32.mrb[0].mxu0
      %v2253 = vadd.f32 0.0, %v2252
      %v2254 = vpop.f32.mrb[0].mxu0
      %v2255 = vpop.f32.mrb[0].mxu0
      %v2256 = vpop.f32.mrb[0].mxu0
      %2257 = vdwg.mxu0
      %v2259 = vsel %vm1128, %v2061, 0
      %v2262 = vsel %vm2076, %v1116, 0
      %2264 = vmatprep.subr.bf16.mxu0 0
      %2265 = vmatpush1.bf16.msra.mxu0 %v2262
      %2266 = vmatprep.subr.bf16.mxu0 0
      %2267 = vmatpush1.bf16.msra.mxu0 0
      %2268 = vmatprep.subr.bf16.mxu0 0
      %2269 = vmatpush1.bf16.msra.mxu0 0
      %2270 = vmatprep.subr.bf16.mxu0 0
      %2271 = vmatpush1.bf16.msra.mxu0 0
      %2272 = vmatprep.subr.bf16.mxu0 0
      %2273 = vmatpush1.bf16.msra.mxu0 0
      %2274 = vmatprep.subr.bf16.mxu0 0
      %2275 = vmatpush1.bf16.msra.mxu0 0
      %2276 = vmatprep.subr.bf16.mxu0 0
      %2277 = vmatpush1.bf16.msra.mxu0 0
      %2278 = vmatprep.subr.bf16.mxu0 0
      %2279 = vmatpush1.bf16.msra.mxu0 0
      %2280 = vmatprep.subr.bf16.mxu0 0
      %2281 = vmatpush1.bf16.msra.mxu0 0
      %2282 = vmatprep.subr.bf16.mxu0 0
      %2283 = vmatpush1.bf16.msra.mxu0 0
      %2284 = vmatprep.subr.bf16.mxu0 0
      %2285 = vmatpush1.bf16.msra.mxu0 0
      %2286 = vmatprep.subr.bf16.mxu0 0
      %2287 = vmatpush1.bf16.msra.mxu0 0
      %2288 = vmatprep.subr.bf16.mxu0 0
      %2289 = vmatpush1.bf16.msra.mxu0 0
      %2290 = vmatprep.subr.bf16.mxu0 0
      %2291 = vmatpush1.bf16.msra.mxu0 0
      %2292 = vmatprep.subr.bf16.mxu0 0
      %2293 = vmatpush1.bf16.msra.mxu0 0
      %2294 = vmatprep.subr.bf16.mxu0 0
      %2295 = vmatpush1.bf16.msra.mxu0 0
      %2296 = vmatprep.mubr.bf16.mxu0 0
      %2297 = vmatmul.mubr.bf16.gmra.mrb[0].mxu0 %v2259
      %v2298 = vpop.f32.mrb[0].mxu0
      %v2299 = vadd.f32 0.0, %v2298
      %v2300 = vpop.f32.mrb[0].mxu0
      %v2301 = vpop.f32.mrb[0].mxu0
      %v2302 = vpop.f32.mrb[0].mxu0
      %2303 = vdwg.mxu0
      %v2305 = vsel %vm1128, %v2062, 0
      %v2308 = vsel %vm2076, %v1117, 0
      %2310 = vmatprep.subr.bf16.mxu0 0
      %2311 = vmatpush1.bf16.msra.mxu0 %v2308
      %2312 = vmatprep.subr.bf16.mxu0 0
      %2313 = vmatpush1.bf16.msra.mxu0 0
      %2314 = vmatprep.subr.bf16.mxu0 0
      %2315 = vmatpush1.bf16.msra.mxu0 0
      %2316 = vmatprep.subr.bf16.mxu0 0
      %2317 = vmatpush1.bf16.msra.mxu0 0
      %2318 = vmatprep.subr.bf16.mxu0 0
      %2319 = vmatpush1.bf16.msra.mxu0 0
      %2320 = vmatprep.subr.bf16.mxu0 0
      %2321 = vmatpush1.bf16.msra.mxu0 0
      %2322 = vmatprep.subr.bf16.mxu0 0
      %2323 = vmatpush1.bf16.msra.mxu0 0
      %2324 = vmatprep.subr.bf16.mxu0 0
      %2325 = vmatpush1.bf16.msra.mxu0 0
      %2326 = vmatprep.subr.bf16.mxu0 0
      %2327 = vmatpush1.bf16.msra.mxu0 0
      %2328 = vmatprep.subr.bf16.mxu0 0
      %2329 = vmatpush1.bf16.msra.mxu0 0
      %2330 = vmatprep.subr.bf16.mxu0 0
      %2331 = vmatpush1.bf16.msra.mxu0 0
      %2332 = vmatprep.subr.bf16.mxu0 0
      %2333 = vmatpush1.bf16.msra.mxu0 0
      %2334 = vmatprep.subr.bf16.mxu0 0
      %2335 = vmatpush1.bf16.msra.mxu0 0
      %2336 = vmatprep.subr.bf16.mxu0 0
      %2337 = vmatpush1.bf16.msra.mxu0 0
      %2338 = vmatprep.subr.bf16.mxu0 0
      %2339 = vmatpush1.bf16.msra.mxu0 0
      %2340 = vmatprep.subr.bf16.mxu0 0
      %2341 = vmatpush1.bf16.msra.mxu0 0
      %2342 = vmatprep.mubr.bf16.mxu0 0
      %2343 = vmatmul.mubr.bf16.gmra.mrb[0].mxu0 %v2305
      %v2344 = vpop.f32.mrb[0].mxu0
      %v2345 = vadd.f32 0.0, %v2344
      %v2346 = vpop.f32.mrb[0].mxu0
      %v2347 = vpop.f32.mrb[0].mxu0
      %v2348 = vpop.f32.mrb[0].mxu0
      %2349 = vdwg.mxu0
      %v2351 = vsel %vm1128, %v2063, 0
      %v2354 = vsel %vm2076, %v1118, 0
      %2356 = vmatprep.subr.bf16.mxu0 0
      %2357 = vmatpush1.bf16.msra.mxu0 %v2354
      %2358 = vmatprep.subr.bf16.mxu0 0
      %2359 = vmatpush1.bf16.msra.mxu0 0
      %2360 = vmatprep.subr.bf16.mxu0 0
      %2361 = vmatpush1.bf16.msra.mxu0 0
      %2362 = vmatprep.subr.bf16.mxu0 0
      %2363 = vmatpush1.bf16.msra.mxu0 0
      %2364 = vmatprep.subr.bf16.mxu0 0
      %2365 = vmatpush1.bf16.msra.mxu0 0
      %2366 = vmatprep.subr.bf16.mxu0 0
      %2367 = vmatpush1.bf16.msra.mxu0 0
      %2368 = vmatprep.subr.bf16.mxu0 0
      %2369 = vmatpush1.bf16.msra.mxu0 0
      %2370 = vmatprep.subr.bf16.mxu0 0
      %2371 = vmatpush1.bf16.msra.mxu0 0
      %2372 = vmatprep.subr.bf16.mxu0 0
      %2373 = vmatpush1.bf16.msra.mxu0 0
      %2374 = vmatprep.subr.bf16.mxu0 0
      %2375 = vmatpush1.bf16.msra.mxu0 0
      %2376 = vmatprep.subr.bf16.mxu0 0
      %2377 = vmatpush1.bf16.msra.mxu0 0
      %2378 = vmatprep.subr.bf16.mxu0 0
      %2379 = vmatpush1.bf16.msra.mxu0 0
      %2380 = vmatprep.subr.bf16.mxu0 0
      %2381 = vmatpush1.bf16.msra.mxu0 0
      %2382 = vmatprep.subr.bf16.mxu0 0
      %2383 = vmatpush1.bf16.msra.mxu0 0
      %2384 = vmatprep.subr.bf16.mxu0 0
      %2385 = vmatpush1.bf16.msra.mxu0 0
      %2386 = vmatprep.subr.bf16.mxu0 0
      %2387 = vmatpush1.bf16.msra.mxu0 0
      %2388 = vmatprep.mubr.bf16.mxu0 0
      %2389 = vmatmul.mubr.bf16.gmra.mrb[0].mxu0 %v2351
      %v2390 = vpop.f32.mrb[0].mxu0
      %v2391 = vadd.f32 0.0, %v2390
      %v2392 = vpop.f32.mrb[0].mxu0
      %v2393 = vpop.f32.mrb[0].mxu0
      %v2394 = vpop.f32.mrb[0].mxu0
      %2395 = vdwg.mxu0
      %v2397 = vsel %vm1128, %v2064, 0
      %v2400 = vsel %vm2076, %v1119, 0
      %2402 = vmatprep.subr.bf16.mxu0 0
      %2403 = vmatpush1.bf16.msra.mxu0 %v2400
      %2404 = vmatprep.subr.bf16.mxu0 0
      %2405 = vmatpush1.bf16.msra.mxu0 0
      %2406 = vmatprep.subr.bf16.mxu0 0
      %2407 = vmatpush1.bf16.msra.mxu0 0
      %2408 = vmatprep.subr.bf16.mxu0 0
      %2409 = vmatpush1.bf16.msra.mxu0 0
      %2410 = vmatprep.subr.bf16.mxu0 0
      %2411 = vmatpush1.bf16.msra.mxu0 0
      %2412 = vmatprep.subr.bf16.mxu0 0
      %2413 = vmatpush1.bf16.msra.mxu0 0
      %2414 = vmatprep.subr.bf16.mxu0 0
      %2415 = vmatpush1.bf16.msra.mxu0 0
      %2416 = vmatprep.subr.bf16.mxu0 0
      %2417 = vmatpush1.bf16.msra.mxu0 0
      %2418 = vmatprep.subr.bf16.mxu0 0
      %2419 = vmatpush1.bf16.msra.mxu0 0
      %2420 = vmatprep.subr.bf16.mxu0 0
      %2421 = vmatpush1.bf16.msra.mxu0 0
      %2422 = vmatprep.subr.bf16.mxu0 0
      %2423 = vmatpush1.bf16.msra.mxu0 0
      %2424 = vmatprep.subr.bf16.mxu0 0
      %2425 = vmatpush1.bf16.msra.mxu0 0
      %2426 = vmatprep.subr.bf16.mxu0 0
      %2427 = vmatpush1.bf16.msra.mxu0 0
      %2428 = vmatprep.subr.bf16.mxu0 0
      %2429 = vmatpush1.bf16.msra.mxu0 0
      %2430 = vmatprep.subr.bf16.mxu0 0
      %2431 = vmatpush1.bf16.msra.mxu0 0
      %2432 = vmatprep.subr.bf16.mxu0 0
      %2433 = vmatpush1.bf16.msra.mxu0 0
      %2434 = vmatprep.mubr.bf16.mxu0 0
      %2435 = vmatmul.mubr.bf16.gmra.mrb[0].mxu0 %v2397
      %v2436 = vpop.f32.mrb[0].mxu0
      %v2437 = vadd.f32 0.0, %v2436
      %v2438 = vpop.f32.mrb[0].mxu0
      %v2439 = vpop.f32.mrb[0].mxu0
      %v2440 = vpop.f32.mrb[0].mxu0
      %2441 = vdwg.mxu0
      %v2443 = vsel %vm1128, %v2065, 0
      %v2446 = vsel %vm2076, %v1120, 0
      %2448 = vmatprep.subr.bf16.mxu0 0
      %2449 = vmatpush1.bf16.msra.mxu0 %v2446
      %2450 = vmatprep.subr.bf16.mxu0 0
      %2451 = vmatpush1.bf16.msra.mxu0 0
      %2452 = vmatprep.subr.bf16.mxu0 0
      %2453 = vmatpush1.bf16.msra.mxu0 0
      %2454 = vmatprep.subr.bf16.mxu0 0
      %2455 = vmatpush1.bf16.msra.mxu0 0
      %2456 = vmatprep.subr.bf16.mxu0 0
      %2457 = vmatpush1.bf16.msra.mxu0 0
      %2458 = vmatprep.subr.bf16.mxu0 0
      %2459 = vmatpush1.bf16.msra.mxu0 0
      %2460 = vmatprep.subr.bf16.mxu0 0
      %2461 = vmatpush1.bf16.msra.mxu0 0
      %2462 = vmatprep.subr.bf16.mxu0 0
      %2463 = vmatpush1.bf16.msra.mxu0 0
      %2464 = vmatprep.subr.bf16.mxu0 0
      %2465 = vmatpush1.bf16.msra.mxu0 0
      %2466 = vmatprep.subr.bf16.mxu0 0
      %2467 = vmatpush1.bf16.msra.mxu0 0
      %2468 = vmatprep.subr.bf16.mxu0 0
      %2469 = vmatpush1.bf16.msra.mxu0 0
      %2470 = vmatprep.subr.bf16.mxu0 0
      %2471 = vmatpush1.bf16.msra.mxu0 0
      %2472 = vmatprep.subr.bf16.mxu0 0
      %2473 = vmatpush1.bf16.msra.mxu0 0
      %2474 = vmatprep.subr.bf16.mxu0 0
      %2475 = vmatpush1.bf16.msra.mxu0 0
      %2476 = vmatprep.subr.bf16.mxu0 0
      %2477 = vmatpush1.bf16.msra.mxu0 0
      %2478 = vmatprep.subr.bf16.mxu0 0
      %2479 = vmatpush1.bf16.msra.mxu0 0
      %2480 = vmatprep.mubr.bf16.mxu0 0
      %2481 = vmatmul.mubr.bf16.gmra.mrb[0].mxu0 %v2443
      %v2482 = vpop.f32.mrb[0].mxu0
      %v2483 = vadd.f32 0.0, %v2482
      %v2484 = vpop.f32.mrb[0].mxu0
      %v2485 = vpop.f32.mrb[0].mxu0
      %v2486 = vpop.f32.mrb[0].mxu0
      %2487 = vdwg.mxu0
      %v2489 = vsel %vm1128, %v2066, 0
      %v2492 = vsel %vm2076, %v1121, 0
      %2494 = vmatprep.subr.bf16.mxu0 0
      %2495 = vmatpush1.bf16.msra.mxu0 %v2492
      %2496 = vmatprep.subr.bf16.mxu0 0
      %2497 = vmatpush1.bf16.msra.mxu0 0
      %2498 = vmatprep.subr.bf16.mxu0 0
      %2499 = vmatpush1.bf16.msra.mxu0 0
      %2500 = vmatprep.subr.bf16.mxu0 0
      %2501 = vmatpush1.bf16.msra.mxu0 0
      %2502 = vmatprep.subr.bf16.mxu0 0
      %2503 = vmatpush1.bf16.msra.mxu0 0
      %2504 = vmatprep.subr.bf16.mxu0 0
      %2505 = vmatpush1.bf16.msra.mxu0 0
      %2506 = vmatprep.subr.bf16.mxu0 0
      %2507 = vmatpush1.bf16.msra.mxu0 0
      %2508 = vmatprep.subr.bf16.mxu0 0
      %2509 = vmatpush1.bf16.msra.mxu0 0
      %2510 = vmatprep.subr.bf16.mxu0 0
      %2511 = vmatpush1.bf16.msra.mxu0 0
      %2512 = vmatprep.subr.bf16.mxu0 0
      %2513 = vmatpush1.bf16.msra.mxu0 0
      %2514 = vmatprep.subr.bf16.mxu0 0
      %2515 = vmatpush1.bf16.msra.mxu0 0
      %2516 = vmatprep.subr.bf16.mxu0 0
      %2517 = vmatpush1.bf16.msra.mxu0 0
      %2518 = vmatprep.subr.bf16.mxu0 0
      %2519 = vmatpush1.bf16.msra.mxu0 0
      %2520 = vmatprep.subr.bf16.mxu0 0
      %2521 = vmatpush1.bf16.msra.mxu0 0
      %2522 = vmatprep.subr.bf16.mxu0 0
      %2523 = vmatpush1.bf16.msra.mxu0 0
      %2524 = vmatprep.subr.bf16.mxu0 0
      %2525 = vmatpush1.bf16.msra.mxu0 0
      %2526 = vmatprep.mubr.bf16.mxu0 0
      %2527 = vmatmul.mubr.bf16.gmra.mrb[0].mxu0 %v2489
      %v2528 = vpop.f32.mrb[0].mxu0
      %v2529 = vadd.f32 0.0, %v2528
      %v2530 = vpop.f32.mrb[0].mxu0
      %v2531 = vpop.f32.mrb[0].mxu0
      %v2532 = vpop.f32.mrb[0].mxu0
      %2533 = vdwg.mxu0
      %v2535 = vsel %vm1128, %v2067, 0
      %v2538 = vsel %vm2076, %v1122, 0
      %2540 = vmatprep.subr.bf16.mxu0 0
      %2541 = vmatpush1.bf16.msra.mxu0 %v2538
      %2542 = vmatprep.subr.bf16.mxu0 0
      %2543 = vmatpush1.bf16.msra.mxu0 0
      %2544 = vmatprep.subr.bf16.mxu0 0
      %2545 = vmatpush1.bf16.msra.mxu0 0
      %2546 = vmatprep.subr.bf16.mxu0 0
      %2547 = vmatpush1.bf16.msra.mxu0 0
      %2548 = vmatprep.subr.bf16.mxu0 0
      %2549 = vmatpush1.bf16.msra.mxu0 0
      %2550 = vmatprep.subr.bf16.mxu0 0
      %2551 = vmatpush1.bf16.msra.mxu0 0
      %2552 = vmatprep.subr.bf16.mxu0 0
      %2553 = vmatpush1.bf16.msra.mxu0 0
      %2554 = vmatprep.subr.bf16.mxu0 0
      %2555 = vmatpush1.bf16.msra.mxu0 0
      %2556 = vmatprep.subr.bf16.mxu0 0
      %2557 = vmatpush1.bf16.msra.mxu0 0
      %2558 = vmatprep.subr.bf16.mxu0 0
      %2559 = vmatpush1.bf16.msra.mxu0 0
      %2560 = vmatprep.subr.bf16.mxu0 0
      %2561 = vmatpush1.bf16.msra.mxu0 0
      %2562 = vmatprep.subr.bf16.mxu0 0
      %2563 = vmatpush1.bf16.msra.mxu0 0
      %2564 = vmatprep.subr.bf16.mxu0 0
      %2565 = vmatpush1.bf16.msra.mxu0 0
      %2566 = vmatprep.subr.bf16.mxu0 0
      %2567 = vmatpush1.bf16.msra.mxu0 0
      %2568 = vmatprep.subr.bf16.mxu0 0
      %2569 = vmatpush1.bf16.msra.mxu0 0
      %2570 = vmatprep.subr.bf16.mxu0 0
      %2571 = vmatpush1.bf16.msra.mxu0 0
      %2572 = vmatprep.mubr.bf16.mxu0 0
      %2573 = vmatmul.mubr.bf16.gmra.mrb[0].mxu0 %v2535
      %v2574 = vpop.f32.mrb[0].mxu0
      %v2575 = vadd.f32 0.0, %v2574
      %v2576 = vpop.f32.mrb[0].mxu0
      %v2577 = vpop.f32.mrb[0].mxu0
      %v2578 = vpop.f32.mrb[0].mxu0
      %2579 = vdwg.mxu0
      %v2581 = vsel %vm1128, %v2068, 0
      %v2584 = vsel %vm2076, %v1123, 0
      %2586 = vmatprep.subr.bf16.mxu0 0
      %2587 = vmatpush1.bf16.msra.mxu0 %v2584
      %2588 = vmatprep.subr.bf16.mxu0 0
      %2589 = vmatpush1.bf16.msra.mxu0 0
      %2590 = vmatprep.subr.bf16.mxu0 0
      %2591 = vmatpush1.bf16.msra.mxu0 0
      %2592 = vmatprep.subr.bf16.mxu0 0
      %2593 = vmatpush1.bf16.msra.mxu0 0
      %2594 = vmatprep.subr.bf16.mxu0 0
      %2595 = vmatpush1.bf16.msra.mxu0 0
      %2596 = vmatprep.subr.bf16.mxu0 0
      %2597 = vmatpush1.bf16.msra.mxu0 0
      %2598 = vmatprep.subr.bf16.mxu0 0
      %2599 = vmatpush1.bf16.msra.mxu0 0
      %2600 = vmatprep.subr.bf16.mxu0 0
      %2601 = vmatpush1.bf16.msra.mxu0 0
      %2602 = vmatprep.subr.bf16.mxu0 0
      %2603 = vmatpush1.bf16.msra.mxu0 0
      %2604 = vmatprep.subr.bf16.mxu0 0
      %2605 = vmatpush1.bf16.msra.mxu0 0
      %2606 = vmatprep.subr.bf16.mxu0 0
      %2607 = vmatpush1.bf16.msra.mxu0 0
      %2608 = vmatprep.subr.bf16.mxu0 0
      %2609 = vmatpush1.bf16.msra.mxu0 0
      %2610 = vmatprep.subr.bf16.mxu0 0
      %2611 = vmatpush1.bf16.msra.mxu0 0
      %2612 = vmatprep.subr.bf16.mxu0 0
      %2613 = vmatpush1.bf16.msra.mxu0 0
      %2614 = vmatprep.subr.bf16.mxu0 0
      %2615 = vmatpush1.bf16.msra.mxu0 0
      %2616 = vmatprep.subr.bf16.mxu0 0
      %2617 = vmatpush1.bf16.msra.mxu0 0
      %2618 = vmatprep.mubr.bf16.mxu0 0
      %2619 = vmatmul.mubr.bf16.gmra.mrb[0].mxu0 %v2581
      %v2620 = vpop.f32.mrb[0].mxu0
      %v2621 = vadd.f32 0.0, %v2620
      %v2622 = vpop.f32.mrb[0].mxu0
      %v2623 = vpop.f32.mrb[0].mxu0
      %v2624 = vpop.f32.mrb[0].mxu0
      %2625 = vdwg.mxu0
      %v2627 = vsel %vm1128, %v2069, 0
      %v2630 = vsel %vm2076, %v1124, 0
      %2632 = vmatprep.subr.bf16.mxu0 0
      %2633 = vmatpush1.bf16.msra.mxu0 %v2630
      %2634 = vmatprep.subr.bf16.mxu0 0
      %2635 = vmatpush1.bf16.msra.mxu0 0
      %2636 = vmatprep.subr.bf16.mxu0 0
      %2637 = vmatpush1.bf16.msra.mxu0 0
      %2638 = vmatprep.subr.bf16.mxu0 0
      %2639 = vmatpush1.bf16.msra.mxu0 0
      %2640 = vmatprep.subr.bf16.mxu0 0
      %2641 = vmatpush1.bf16.msra.mxu0 0
      %2642 = vmatprep.subr.bf16.mxu0 0
      %2643 = vmatpush1.bf16.msra.mxu0 0
      %2644 = vmatprep.subr.bf16.mxu0 0
      %2645 = vmatpush1.bf16.msra.mxu0 0
      %2646 = vmatprep.subr.bf16.mxu0 0
      %2647 = vmatpush1.bf16.msra.mxu0 0
      %2648 = vmatprep.subr.bf16.mxu0 0
      %2649 = vmatpush1.bf16.msra.mxu0 0
      %2650 = vmatprep.subr.bf16.mxu0 0
      %2651 = vmatpush1.bf16.msra.mxu0 0
      %2652 = vmatprep.subr.bf16.mxu0 0
      %2653 = vmatpush1.bf16.msra.mxu0 0
      %2654 = vmatprep.subr.bf16.mxu0 0
      %2655 = vmatpush1.bf16.msra.mxu0 0
      %2656 = vmatprep.subr.bf16.mxu0 0
      %2657 = vmatpush1.bf16.msra.mxu0 0
      %2658 = vmatprep.subr.bf16.mxu0 0
      %2659 = vmatpush1.bf16.msra.mxu0 0
      %2660 = vmatprep.subr.bf16.mxu0 0
      %2661 = vmatpush1.bf16.msra.mxu0 0
      %2662 = vmatprep.subr.bf16.mxu0 0
      %2663 = vmatpush1.bf16.msra.mxu0 0
      %2664 = vmatprep.mubr.bf16.mxu0 0
      %2665 = vmatmul.mubr.bf16.gmra.mrb[0].mxu0 %v2627
      %v2666 = vpop.f32.mrb[0].mxu0
      %v2667 = vadd.f32 0.0, %v2666
      %v2668 = vpop.f32.mrb[0].mxu0
      %v2669 = vpop.f32.mrb[0].mxu0
      %v2670 = vpop.f32.mrb[0].mxu0
      %2671 = vdwg.mxu0
      %v2673 = vsel %vm1128, %v2070, 0
      %v2676 = vsel %vm2076, %v1125, 0
      %2678 = vmatprep.subr.bf16.mxu0 0
      %2679 = vmatpush1.bf16.msra.mxu0 %v2676
      %2680 = vmatprep.subr.bf16.mxu0 0
      %2681 = vmatpush1.bf16.msra.mxu0 0
      %2682 = vmatprep.subr.bf16.mxu0 0
      %2683 = vmatpush1.bf16.msra.mxu0 0
      %2684 = vmatprep.subr.bf16.mxu0 0
      %2685 = vmatpush1.bf16.msra.mxu0 0
      %2686 = vmatprep.subr.bf16.mxu0 0
      %2687 = vmatpush1.bf16.msra.mxu0 0
      %2688 = vmatprep.subr.bf16.mxu0 0
      %2689 = vmatpush1.bf16.msra.mxu0 0
      %2690 = vmatprep.subr.bf16.mxu0 0
      %2691 = vmatpush1.bf16.msra.mxu0 0
      %2692 = vmatprep.subr.bf16.mxu0 0
      %2693 = vmatpush1.bf16.msra.mxu0 0
      %2694 = vmatprep.subr.bf16.mxu0 0
      %2695 = vmatpush1.bf16.msra.mxu0 0
      %2696 = vmatprep.subr.bf16.mxu0 0
      %2697 = vmatpush1.bf16.msra.mxu0 0
      %2698 = vmatprep.subr.bf16.mxu0 0
      %2699 = vmatpush1.bf16.msra.mxu0 0
      %2700 = vmatprep.subr.bf16.mxu0 0
      %2701 = vmatpush1.bf16.msra.mxu0 0
      %2702 = vmatprep.subr.bf16.mxu0 0
      %2703 = vmatpush1.bf16.msra.mxu0 0
      %2704 = vmatprep.subr.bf16.mxu0 0
      %2705 = vmatpush1.bf16.msra.mxu0 0
      %2706 = vmatprep.subr.bf16.mxu0 0
      %2707 = vmatpush1.bf16.msra.mxu0 0
      %2708 = vmatprep.subr.bf16.mxu0 0
      %2709 = vmatpush1.bf16.msra.mxu0 0
      %2710 = vmatprep.mubr.bf16.mxu0 0
      %2711 = vmatmul.mubr.bf16.gmra.mrb[0].mxu0 %v2673
      %v2712 = vpop.f32.mrb[0].mxu0
      %v2713 = vadd.f32 0.0, %v2712
      %v2714 = vpop.f32.mrb[0].mxu0
      %v2715 = vpop.f32.mrb[0].mxu0
      %v2716 = vpop.f32.mrb[0].mxu0
      %2717 = vdwg.mxu0
      %v2719 = vsel %vm1128, %v2071, 0
      %v2722 = vsel %vm2076, %v1126, 0
      %2724 = vmatprep.subr.bf16.mxu0 0
      %2725 = vmatpush1.bf16.msra.mxu0 %v2722
      %2726 = vmatprep.subr.bf16.mxu0 0
      %2727 = vmatpush1.bf16.msra.mxu0 0
      %2728 = vmatprep.subr.bf16.mxu0 0
      %2729 = vmatpush1.bf16.msra.mxu0 0
      %2730 = vmatprep.subr.bf16.mxu0 0
      %2731 = vmatpush1.bf16.msra.mxu0 0
      %2732 = vmatprep.subr.bf16.mxu0 0
      %2733 = vmatpush1.bf16.msra.mxu0 0
      %2734 = vmatprep.subr.bf16.mxu0 0
      %2735 = vmatpush1.bf16.msra.mxu0 0
      %2736 = vmatprep.subr.bf16.mxu0 0
      %2737 = vmatpush1.bf16.msra.mxu0 0
      %2738 = vmatprep.subr.bf16.mxu0 0
      %2739 = vmatpush1.bf16.msra.mxu0 0
      %2740 = vmatprep.subr.bf16.mxu0 0
      %2741 = vmatpush1.bf16.msra.mxu0 0
      %2742 = vmatprep.subr.bf16.mxu0 0
      %2743 = vmatpush1.bf16.msra.mxu0 0
      %2744 = vmatprep.subr.bf16.mxu0 0
      %2745 = vmatpush1.bf16.msra.mxu0 0
      %2746 = vmatprep.subr.bf16.mxu0 0
      %2747 = vmatpush1.bf16.msra.mxu0 0
      %2748 = vmatprep.subr.bf16.mxu0 0
      %2749 = vmatpush1.bf16.msra.mxu0 0
      %2750 = vmatprep.subr.bf16.mxu0 0
      %2751 = vmatpush1.bf16.msra.mxu0 0
      %2752 = vmatprep.subr.bf16.mxu0 0
      %2753 = vmatpush1.bf16.msra.mxu0 0
      %2754 = vmatprep.subr.bf16.mxu0 0
      %2755 = vmatpush1.bf16.msra.mxu0 0
      %2756 = vmatprep.mubr.bf16.mxu0 0
      %2757 = vmatmul.mubr.bf16.gmra.mrb[0].mxu0 %v2719
      %v2758 = vpop.f32.mrb[0].mxu0
      %v2759 = vadd.f32 0.0, %v2758
      %v2760 = vpop.f32.mrb[0].mxu0
      %v2761 = vpop.f32.mrb[0].mxu0
      %v2762 = vpop.f32.mrb[0].mxu0
      %2763 = vdwg.mxu0
      %v2765 = vsel %vm1128, %v2072, 0
      %v2768 = vsel %vm2076, %v1127, 0
      %2770 = vmatprep.subr.bf16.mxu0 0
      %2771 = vmatpush1.bf16.msra.mxu0 %v2768
      %2772 = vmatprep.subr.bf16.mxu0 0
      %2773 = vmatpush1.bf16.msra.mxu0 0
      %2774 = vmatprep.subr.bf16.mxu0 0
      %2775 = vmatpush1.bf16.msra.mxu0 0
      %2776 = vmatprep.subr.bf16.mxu0 0
      %2777 = vmatpush1.bf16.msra.mxu0 0
      %2778 = vmatprep.subr.bf16.mxu0 0
      %2779 = vmatpush1.bf16.msra.mxu0 0
      %2780 = vmatprep.subr.bf16.mxu0 0
      %2781 = vmatpush1.bf16.msra.mxu0 0
      %2782 = vmatprep.subr.bf16.mxu0 0
      %2783 = vmatpush1.bf16.msra.mxu0 0
      %2784 = vmatprep.subr.bf16.mxu0 0
      %2785 = vmatpush1.bf16.msra.mxu0 0
      %2786 = vmatprep.subr.bf16.mxu0 0
      %2787 = vmatpush1.bf16.msra.mxu0 0
      %2788 = vmatprep.subr.bf16.mxu0 0
      %2789 = vmatpush1.bf16.msra.mxu0 0
      %2790 = vmatprep.subr.bf16.mxu0 0
      %2791 = vmatpush1.bf16.msra.mxu0 0
      %2792 = vmatprep.subr.bf16.mxu0 0
      %2793 = vmatpush1.bf16.msra.mxu0 0
      %2794 = vmatprep.subr.bf16.mxu0 0
      %2795 = vmatpush1.bf16.msra.mxu0 0
      %2796 = vmatprep.subr.bf16.mxu0 0
      %2797 = vmatpush1.bf16.msra.mxu0 0
      %2798 = vmatprep.subr.bf16.mxu0 0
      %2799 = vmatpush1.bf16.msra.mxu0 0
      %2800 = vmatprep.subr.bf16.mxu0 0
      %2801 = vmatpush1.bf16.msra.mxu0 0
      %2802 = vmatprep.mubr.bf16.mxu0 0
      %2803 = vmatmul.mubr.bf16.gmra.mrb[0].mxu0 %v2765
      %v2804 = vpop.f32.mrb[0].mxu0
      %v2805 = vadd.f32 0.0, %v2804
      %v2806 = vpop.f32.mrb[0].mxu0
      %v2807 = vpop.f32.mrb[0].mxu0
      %v2808 = vpop.f32.mrb[0].mxu0
      %2809 = vdwg.mxu0
      %2811 = vrot.lane.b32.xlu0 %v1080, 120
      %v2812 = vpop.permute.xlu0 %2811
      %2814 = vrot.lane.b32.xlu0 %v1096, 120
      %v2815 = vpop.permute.xlu0 %2814
      %v2817 = vsel %vm1128, %v2812, 0
      %v2820 = vsel %vm1128, %v2815, 0
      %2822 = vmatprep.subr.bf16.mxu0 0
      %2823 = vmatpush1.bf16.xpose.msra.mxu0 %v2820
      %2824 = vmatprep.subr.bf16.mxu0 0
      %2825 = vmatpush1.bf16.xpose.msra.mxu0 0
      %2826 = vmatprep.subr.bf16.mxu0 0
      %2827 = vmatpush1.bf16.xpose.msra.mxu0 0
      %2828 = vmatprep.subr.bf16.mxu0 0
      %2829 = vmatpush1.bf16.xpose.msra.mxu0 0
      %2830 = vmatprep.subr.bf16.mxu0 0
      %2831 = vmatpush1.bf16.xpose.msra.mxu0 0
      %2832 = vmatprep.subr.bf16.mxu0 0
      %2833 = vmatpush1.bf16.xpose.msra.mxu0 0
      %2834 = vmatprep.subr.bf16.mxu0 0
      %2835 = vmatpush1.bf16.xpose.msra.mxu0 0
      %2836 = vmatprep.subr.bf16.mxu0 0
      %2837 = vmatpush1.bf16.xpose.msra.mxu0 0
      %2838 = vmatprep.subr.bf16.mxu0 0
      %2839 = vmatpush1.bf16.xpose.msra.mxu0 0
      %2840 = vmatprep.subr.bf16.mxu0 0
      %2841 = vmatpush1.bf16.xpose.msra.mxu0 0
      %2842 = vmatprep.subr.bf16.mxu0 0
      %2843 = vmatpush1.bf16.xpose.msra.mxu0 0
      %2844 = vmatprep.subr.bf16.mxu0 0
      %2845 = vmatpush1.bf16.xpose.msra.mxu0 0
      %2846 = vmatprep.subr.bf16.mxu0 0
      %2847 = vmatpush1.bf16.xpose.msra.mxu0 0
      %2848 = vmatprep.subr.bf16.mxu0 0
      %2849 = vmatpush1.bf16.xpose.msra.mxu0 0
      %2850 = vmatprep.subr.bf16.mxu0 0
      %2851 = vmatpush1.bf16.xpose.msra.mxu0 0
      %2852 = vmatprep.subr.bf16.mxu0 0
      %2853 = vmatpush1.bf16.xpose.msra.mxu0 0
      %2854 = vmatprep.mubr.bf16.mxu0 0
      %2855 = vmatmul.mubr.bf16.gmra.mrb[0].mxu0 %v2817
      %v2856 = vpop.f32.mrb[0].mxu0
      %v2857 = vadd.f32 0.0, %v2856
      %v2858 = vpop.f32.mrb[0].mxu0
      %v2859 = vpop.f32.mrb[0].mxu0
      %v2860 = vpop.f32.mrb[0].mxu0
      %2861 = vdwg.mxu0
      %2863 = vrot.lane.b32.xlu0 %v1081, 120
      %v2864 = vpop.permute.xlu0 %2863
      %2866 = vrot.lane.b32.xlu0 %v1097, 120
      %v2867 = vpop.permute.xlu0 %2866
      %v2869 = vsel %vm1128, %v2864, 0
      %v2872 = vsel %vm1128, %v2867, 0
      %2874 = vmatprep.subr.bf16.mxu0 0
      %2875 = vmatpush1.bf16.xpose.msra.mxu0 %v2872
      %2876 = vmatprep.subr.bf16.mxu0 0
      %2877 = vmatpush1.bf16.xpose.msra.mxu0 0
      %2878 = vmatprep.subr.bf16.mxu0 0
      %2879 = vmatpush1.bf16.xpose.msra.mxu0 0
      %2880 = vmatprep.subr.bf16.mxu0 0
      %2881 = vmatpush1.bf16.xpose.msra.mxu0 0
      %2882 = vmatprep.subr.bf16.mxu0 0
      %2883 = vmatpush1.bf16.xpose.msra.mxu0 0
      %2884 = vmatprep.subr.bf16.mxu0 0
      %2885 = vmatpush1.bf16.xpose.msra.mxu0 0
      %2886 = vmatprep.subr.bf16.mxu0 0
      %2887 = vmatpush1.bf16.xpose.msra.mxu0 0
      %2888 = vmatprep.subr.bf16.mxu0 0
      %2889 = vmatpush1.bf16.xpose.msra.mxu0 0
      %2890 = vmatprep.subr.bf16.mxu0 0
      %2891 = vmatpush1.bf16.xpose.msra.mxu0 0
      %2892 = vmatprep.subr.bf16.mxu0 0
      %2893 = vmatpush1.bf16.xpose.msra.mxu0 0
      %2894 = vmatprep.subr.bf16.mxu0 0
      %2895 = vmatpush1.bf16.xpose.msra.mxu0 0
      %2896 = vmatprep.subr.bf16.mxu0 0
      %2897 = vmatpush1.bf16.xpose.msra.mxu0 0
      %2898 = vmatprep.subr.bf16.mxu0 0
      %2899 = vmatpush1.bf16.xpose.msra.mxu0 0
      %2900 = vmatprep.subr.bf16.mxu0 0
      %2901 = vmatpush1.bf16.xpose.msra.mxu0 0
      %2902 = vmatprep.subr.bf16.mxu0 0
      %2903 = vmatpush1.bf16.xpose.msra.mxu0 0
      %2904 = vmatprep.subr.bf16.mxu0 0
      %2905 = vmatpush1.bf16.xpose.msra.mxu0 0
      %2906 = vmatprep.mubr.bf16.mxu0 0
      %2907 = vmatmul.mubr.bf16.gmra.mrb[0].mxu0 %v2869
      %v2908 = vpop.f32.mrb[0].mxu0
      %v2909 = vadd.f32 0.0, %v2908
      %v2910 = vpop.f32.mrb[0].mxu0
      %v2911 = vpop.f32.mrb[0].mxu0
      %v2912 = vpop.f32.mrb[0].mxu0
      %2913 = vdwg.mxu0
      %2915 = vrot.lane.b32.xlu0 %v1082, 120
      %v2916 = vpop.permute.xlu0 %2915
      %2918 = vrot.lane.b32.xlu0 %v1098, 120
      %v2919 = vpop.permute.xlu0 %2918
      %v2921 = vsel %vm1128, %v2916, 0
      %v2924 = vsel %vm1128, %v2919, 0
      %2926 = vmatprep.subr.bf16.mxu0 0
      %2927 = vmatpush1.bf16.xpose.msra.mxu0 %v2924
      %2928 = vmatprep.subr.bf16.mxu0 0
      %2929 = vmatpush1.bf16.xpose.msra.mxu0 0
      %2930 = vmatprep.subr.bf16.mxu0 0
      %2931 = vmatpush1.bf16.xpose.msra.mxu0 0
      %2932 = vmatprep.subr.bf16.mxu0 0
      %2933 = vmatpush1.bf16.xpose.msra.mxu0 0
      %2934 = vmatprep.subr.bf16.mxu0 0
      %2935 = vmatpush1.bf16.xpose.msra.mxu0 0
      %2936 = vmatprep.subr.bf16.mxu0 0
      %2937 = vmatpush1.bf16.xpose.msra.mxu0 0
      %2938 = vmatprep.subr.bf16.mxu0 0
      %2939 = vmatpush1.bf16.xpose.msra.mxu0 0
      %2940 = vmatprep.subr.bf16.mxu0 0
      %2941 = vmatpush1.bf16.xpose.msra.mxu0 0
      %2942 = vmatprep.subr.bf16.mxu0 0
      %2943 = vmatpush1.bf16.xpose.msra.mxu0 0
      %2944 = vmatprep.subr.bf16.mxu0 0
      %2945 = vmatpush1.bf16.xpose.msra.mxu0 0
      %2946 = vmatprep.subr.bf16.mxu0 0
      %2947 = vmatpush1.bf16.xpose.msra.mxu0 0
      %2948 = vmatprep.subr.bf16.mxu0 0
      %2949 = vmatpush1.bf16.xpose.msra.mxu0 0
      %2950 = vmatprep.subr.bf16.mxu0 0
      %2951 = vmatpush1.bf16.xpose.msra.mxu0 0
      %2952 = vmatprep.subr.bf16.mxu0 0
      %2953 = vmatpush1.bf16.xpose.msra.mxu0 0
      %2954 = vmatprep.subr.bf16.mxu0 0
      %2955 = vmatpush1.bf16.xpose.msra.mxu0 0
      %2956 = vmatprep.subr.bf16.mxu0 0
      %2957 = vmatpush1.bf16.xpose.msra.mxu0 0
      %2958 = vmatprep.mubr.bf16.mxu0 0
      %2959 = vmatmul.mubr.bf16.gmra.mrb[0].mxu0 %v2921
      %v2960 = vpop.f32.mrb[0].mxu0
      %v2961 = vadd.f32 0.0, %v2960
      %v2962 = vpop.f32.mrb[0].mxu0
      %v2963 = vpop.f32.mrb[0].mxu0
      %v2964 = vpop.f32.mrb[0].mxu0
      %2965 = vdwg.mxu0
      %2967 = vrot.lane.b32.xlu0 %v1083, 120
      %v2968 = vpop.permute.xlu0 %2967
      %2970 = vrot.lane.b32.xlu0 %v1099, 120
      %v2971 = vpop.permute.xlu0 %2970
      %v2973 = vsel %vm1128, %v2968, 0
      %v2976 = vsel %vm1128, %v2971, 0
      %2978 = vmatprep.subr.bf16.mxu0 0
      %2979 = vmatpush1.bf16.xpose.msra.mxu0 %v2976
      %2980 = vmatprep.subr.bf16.mxu0 0
      %2981 = vmatpush1.bf16.xpose.msra.mxu0 0
      %2982 = vmatprep.subr.bf16.mxu0 0
      %2983 = vmatpush1.bf16.xpose.msra.mxu0 0
      %2984 = vmatprep.subr.bf16.mxu0 0
      %2985 = vmatpush1.bf16.xpose.msra.mxu0 0
      %2986 = vmatprep.subr.bf16.mxu0 0
      %2987 = vmatpush1.bf16.xpose.msra.mxu0 0
      %2988 = vmatprep.subr.bf16.mxu0 0
      %2989 = vmatpush1.bf16.xpose.msra.mxu0 0
      %2990 = vmatprep.subr.bf16.mxu0 0
      %2991 = vmatpush1.bf16.xpose.msra.mxu0 0
      %2992 = vmatprep.subr.bf16.mxu0 0
      %2993 = vmatpush1.bf16.xpose.msra.mxu0 0
      %2994 = vmatprep.subr.bf16.mxu0 0
      %2995 = vmatpush1.bf16.xpose.msra.mxu0 0
      %2996 = vmatprep.subr.bf16.mxu0 0
      %2997 = vmatpush1.bf16.xpose.msra.mxu0 0
      %2998 = vmatprep.subr.bf16.mxu0 0
      %2999 = vmatpush1.bf16.xpose.msra.mxu0 0
      %3000 = vmatprep.subr.bf16.mxu0 0
      %3001 = vmatpush1.bf16.xpose.msra.mxu0 0
      %3002 = vmatprep.subr.bf16.mxu0 0
      %3003 = vmatpush1.bf16.xpose.msra.mxu0 0
      %3004 = vmatprep.subr.bf16.mxu0 0
      %3005 = vmatpush1.bf16.xpose.msra.mxu0 0
      %3006 = vmatprep.subr.bf16.mxu0 0
      %3007 = vmatpush1.bf16.xpose.msra.mxu0 0
      %3008 = vmatprep.subr.bf16.mxu0 0
      %3009 = vmatpush1.bf16.xpose.msra.mxu0 0
      %3010 = vmatprep.mubr.bf16.mxu0 0
      %3011 = vmatmul.mubr.bf16.gmra.mrb[0].mxu0 %v2973
      %v3012 = vpop.f32.mrb[0].mxu0
      %v3013 = vadd.f32 0.0, %v3012
      %v3014 = vpop.f32.mrb[0].mxu0
      %v3015 = vpop.f32.mrb[0].mxu0
      %v3016 = vpop.f32.mrb[0].mxu0
      %3017 = vdwg.mxu0
      %3019 = vrot.lane.b32.xlu0 %v1084, 120
      %v3020 = vpop.permute.xlu0 %3019
      %3022 = vrot.lane.b32.xlu0 %v1100, 120
      %v3023 = vpop.permute.xlu0 %3022
      %v3025 = vsel %vm1128, %v3020, 0
      %v3028 = vsel %vm1128, %v3023, 0
      %3030 = vmatprep.subr.bf16.mxu0 0
      %3031 = vmatpush1.bf16.xpose.msra.mxu0 %v3028
      %3032 = vmatprep.subr.bf16.mxu0 0
      %3033 = vmatpush1.bf16.xpose.msra.mxu0 0
      %3034 = vmatprep.subr.bf16.mxu0 0
      %3035 = vmatpush1.bf16.xpose.msra.mxu0 0
      %3036 = vmatprep.subr.bf16.mxu0 0
      %3037 = vmatpush1.bf16.xpose.msra.mxu0 0
      %3038 = vmatprep.subr.bf16.mxu0 0
      %3039 = vmatpush1.bf16.xpose.msra.mxu0 0
      %3040 = vmatprep.subr.bf16.mxu0 0
      %3041 = vmatpush1.bf16.xpose.msra.mxu0 0
      %3042 = vmatprep.subr.bf16.mxu0 0
      %3043 = vmatpush1.bf16.xpose.msra.mxu0 0
      %3044 = vmatprep.subr.bf16.mxu0 0
      %3045 = vmatpush1.bf16.xpose.msra.mxu0 0
      %3046 = vmatprep.subr.bf16.mxu0 0
      %3047 = vmatpush1.bf16.xpose.msra.mxu0 0
      %3048 = vmatprep.subr.bf16.mxu0 0
      %3049 = vmatpush1.bf16.xpose.msra.mxu0 0
      %3050 = vmatprep.subr.bf16.mxu0 0
      %3051 = vmatpush1.bf16.xpose.msra.mxu0 0
      %3052 = vmatprep.subr.bf16.mxu0 0
      %3053 = vmatpush1.bf16.xpose.msra.mxu0 0
      %3054 = vmatprep.subr.bf16.mxu0 0
      %3055 = vmatpush1.bf16.xpose.msra.mxu0 0
      %3056 = vmatprep.subr.bf16.mxu0 0
      %3057 = vmatpush1.bf16.xpose.msra.mxu0 0
      %3058 = vmatprep.subr.bf16.mxu0 0
      %3059 = vmatpush1.bf16.xpose.msra.mxu0 0
      %3060 = vmatprep.subr.bf16.mxu0 0
      %3061 = vmatpush1.bf16.xpose.msra.mxu0 0
      %3062 = vmatprep.mubr.bf16.mxu0 0
      %3063 = vmatmul.mubr.bf16.gmra.mrb[0].mxu0 %v3025
      %v3064 = vpop.f32.mrb[0].mxu0
      %v3065 = vadd.f32 0.0, %v3064
      %v3066 = vpop.f32.mrb[0].mxu0
      %v3067 = vpop.f32.mrb[0].mxu0
      %v3068 = vpop.f32.mrb[0].mxu0
      %3069 = vdwg.mxu0
      %3071 = vrot.lane.b32.xlu0 %v1085, 120
      %v3072 = vpop.permute.xlu0 %3071
      %3074 = vrot.lane.b32.xlu0 %v1101, 120
      %v3075 = vpop.permute.xlu0 %3074
      %v3077 = vsel %vm1128, %v3072, 0
      %v3080 = vsel %vm1128, %v3075, 0
      %3082 = vmatprep.subr.bf16.mxu0 0
      %3083 = vmatpush1.bf16.xpose.msra.mxu0 %v3080
      %3084 = vmatprep.subr.bf16.mxu0 0
      %3085 = vmatpush1.bf16.xpose.msra.mxu0 0
      %3086 = vmatprep.subr.bf16.mxu0 0
      %3087 = vmatpush1.bf16.xpose.msra.mxu0 0
      %3088 = vmatprep.subr.bf16.mxu0 0
      %3089 = vmatpush1.bf16.xpose.msra.mxu0 0
      %3090 = vmatprep.subr.bf16.mxu0 0
      %3091 = vmatpush1.bf16.xpose.msra.mxu0 0
      %3092 = vmatprep.subr.bf16.mxu0 0
      %3093 = vmatpush1.bf16.xpose.msra.mxu0 0
      %3094 = vmatprep.subr.bf16.mxu0 0
      %3095 = vmatpush1.bf16.xpose.msra.mxu0 0
      %3096 = vmatprep.subr.bf16.mxu0 0
      %3097 = vmatpush1.bf16.xpose.msra.mxu0 0
      %3098 = vmatprep.subr.bf16.mxu0 0
      %3099 = vmatpush1.bf16.xpose.msra.mxu0 0
      %3100 = vmatprep.subr.bf16.mxu0 0
      %3101 = vmatpush1.bf16.xpose.msra.mxu0 0
      %3102 = vmatprep.subr.bf16.mxu0 0
      %3103 = vmatpush1.bf16.xpose.msra.mxu0 0
      %3104 = vmatprep.subr.bf16.mxu0 0
      %3105 = vmatpush1.bf16.xpose.msra.mxu0 0
      %3106 = vmatprep.subr.bf16.mxu0 0
      %3107 = vmatpush1.bf16.xpose.msra.mxu0 0
      %3108 = vmatprep.subr.bf16.mxu0 0
      %3109 = vmatpush1.bf16.xpose.msra.mxu0 0
      %3110 = vmatprep.subr.bf16.mxu0 0
      %3111 = vmatpush1.bf16.xpose.msra.mxu0 0
      %3112 = vmatprep.subr.bf16.mxu0 0
      %3113 = vmatpush1.bf16.xpose.msra.mxu0 0
      %3114 = vmatprep.mubr.bf16.mxu0 0
      %3115 = vmatmul.mubr.bf16.gmra.mrb[0].mxu0 %v3077
      %v3116 = vpop.f32.mrb[0].mxu0
      %v3117 = vadd.f32 0.0, %v3116
      %v3118 = vpop.f32.mrb[0].mxu0
      %v3119 = vpop.f32.mrb[0].mxu0
      %v3120 = vpop.f32.mrb[0].mxu0
      %3121 = vdwg.mxu0
      %3123 = vrot.lane.b32.xlu0 %v1086, 120
      %v3124 = vpop.permute.xlu0 %3123
      %3126 = vrot.lane.b32.xlu0 %v1102, 120
      %v3127 = vpop.permute.xlu0 %3126
      %v3129 = vsel %vm1128, %v3124, 0
      %v3132 = vsel %vm1128, %v3127, 0
      %3134 = vmatprep.subr.bf16.mxu0 0
      %3135 = vmatpush1.bf16.xpose.msra.mxu0 %v3132
      %3136 = vmatprep.subr.bf16.mxu0 0
      %3137 = vmatpush1.bf16.xpose.msra.mxu0 0
      %3138 = vmatprep.subr.bf16.mxu0 0
      %3139 = vmatpush1.bf16.xpose.msra.mxu0 0
      %3140 = vmatprep.subr.bf16.mxu0 0
      %3141 = vmatpush1.bf16.xpose.msra.mxu0 0
      %3142 = vmatprep.subr.bf16.mxu0 0
      %3143 = vmatpush1.bf16.xpose.msra.mxu0 0
      %3144 = vmatprep.subr.bf16.mxu0 0
      %3145 = vmatpush1.bf16.xpose.msra.mxu0 0
      %3146 = vmatprep.subr.bf16.mxu0 0
      %3147 = vmatpush1.bf16.xpose.msra.mxu0 0
      %3148 = vmatprep.subr.bf16.mxu0 0
      %3149 = vmatpush1.bf16.xpose.msra.mxu0 0
      %3150 = vmatprep.subr.bf16.mxu0 0
      %3151 = vmatpush1.bf16.xpose.msra.mxu0 0
      %3152 = vmatprep.subr.bf16.mxu0 0
      %3153 = vmatpush1.bf16.xpose.msra.mxu0 0
      %3154 = vmatprep.subr.bf16.mxu0 0
      %3155 = vmatpush1.bf16.xpose.msra.mxu0 0
      %3156 = vmatprep.subr.bf16.mxu0 0
      %3157 = vmatpush1.bf16.xpose.msra.mxu0 0
      %3158 = vmatprep.subr.bf16.mxu0 0
      %3159 = vmatpush1.bf16.xpose.msra.mxu0 0
      %3160 = vmatprep.subr.bf16.mxu0 0
      %3161 = vmatpush1.bf16.xpose.msra.mxu0 0
      %3162 = vmatprep.subr.bf16.mxu0 0
      %3163 = vmatpush1.bf16.xpose.msra.mxu0 0
      %3164 = vmatprep.subr.bf16.mxu0 0
      %3165 = vmatpush1.bf16.xpose.msra.mxu0 0
      %3166 = vmatprep.mubr.bf16.mxu0 0
      %3167 = vmatmul.mubr.bf16.gmra.mrb[0].mxu0 %v3129
      %v3168 = vpop.f32.mrb[0].mxu0
      %v3169 = vadd.f32 0.0, %v3168
      %v3170 = vpop.f32.mrb[0].mxu0
      %v3171 = vpop.f32.mrb[0].mxu0
      %v3172 = vpop.f32.mrb[0].mxu0
      %3173 = vdwg.mxu0
      %3175 = vrot.lane.b32.xlu0 %v1087, 120
      %v3176 = vpop.permute.xlu0 %3175
      %3178 = vrot.lane.b32.xlu0 %v1103, 120
      %v3179 = vpop.permute.xlu0 %3178
      %v3181 = vsel %vm1128, %v3176, 0
      %v3184 = vsel %vm1128, %v3179, 0
      %3186 = vmatprep.subr.bf16.mxu0 0
      %3187 = vmatpush1.bf16.xpose.msra.mxu0 %v3184
      %3188 = vmatprep.subr.bf16.mxu0 0
      %3189 = vmatpush1.bf16.xpose.msra.mxu0 0
      %3190 = vmatprep.subr.bf16.mxu0 0
      %3191 = vmatpush1.bf16.xpose.msra.mxu0 0
      %3192 = vmatprep.subr.bf16.mxu0 0
      %3193 = vmatpush1.bf16.xpose.msra.mxu0 0
      %3194 = vmatprep.subr.bf16.mxu0 0
      %3195 = vmatpush1.bf16.xpose.msra.mxu0 0
      %3196 = vmatprep.subr.bf16.mxu0 0
      %3197 = vmatpush1.bf16.xpose.msra.mxu0 0
      %3198 = vmatprep.subr.bf16.mxu0 0
      %3199 = vmatpush1.bf16.xpose.msra.mxu0 0
      %3200 = vmatprep.subr.bf16.mxu0 0
      %3201 = vmatpush1.bf16.xpose.msra.mxu0 0
      %3202 = vmatprep.subr.bf16.mxu0 0
      %3203 = vmatpush1.bf16.xpose.msra.mxu0 0
      %3204 = vmatprep.subr.bf16.mxu0 0
      %3205 = vmatpush1.bf16.xpose.msra.mxu0 0
      %3206 = vmatprep.subr.bf16.mxu0 0
      %3207 = vmatpush1.bf16.xpose.msra.mxu0 0
      %3208 = vmatprep.subr.bf16.mxu0 0
      %3209 = vmatpush1.bf16.xpose.msra.mxu0 0
      %3210 = vmatprep.subr.bf16.mxu0 0
      %3211 = vmatpush1.bf16.xpose.msra.mxu0 0
      %3212 = vmatprep.subr.bf16.mxu0 0
      %3213 = vmatpush1.bf16.xpose.msra.mxu0 0
      %3214 = vmatprep.subr.bf16.mxu0 0
      %3215 = vmatpush1.bf16.xpose.msra.mxu0 0
      %3216 = vmatprep.subr.bf16.mxu0 0
      %3217 = vmatpush1.bf16.xpose.msra.mxu0 0
      %3218 = vmatprep.mubr.bf16.mxu0 0
      %3219 = vmatmul.mubr.bf16.gmra.mrb[0].mxu0 %v3181
      %v3220 = vpop.f32.mrb[0].mxu0
      %v3221 = vadd.f32 0.0, %v3220
      %v3222 = vpop.f32.mrb[0].mxu0
      %v3223 = vpop.f32.mrb[0].mxu0
      %v3224 = vpop.f32.mrb[0].mxu0
      %3225 = vdwg.mxu0
      %3227 = vrot.lane.b32.xlu0 %v1088, 120
      %v3228 = vpop.permute.xlu0 %3227
      %3230 = vrot.lane.b32.xlu0 %v1104, 120
      %v3231 = vpop.permute.xlu0 %3230
      %v3233 = vsel %vm1128, %v3228, 0
      %v3236 = vsel %vm1128, %v3231, 0
      %3238 = vmatprep.subr.bf16.mxu0 0
      %3239 = vmatpush1.bf16.xpose.msra.mxu0 %v3236
      %3240 = vmatprep.subr.bf16.mxu0 0
      %3241 = vmatpush1.bf16.xpose.msra.mxu0 0
      %3242 = vmatprep.subr.bf16.mxu0 0
      %3243 = vmatpush1.bf16.xpose.msra.mxu0 0
      %3244 = vmatprep.subr.bf16.mxu0 0
      %3245 = vmatpush1.bf16.xpose.msra.mxu0 0
      %3246 = vmatprep.subr.bf16.mxu0 0
      %3247 = vmatpush1.bf16.xpose.msra.mxu0 0
      %3248 = vmatprep.subr.bf16.mxu0 0
      %3249 = vmatpush1.bf16.xpose.msra.mxu0 0
      %3250 = vmatprep.subr.bf16.mxu0 0
      %3251 = vmatpush1.bf16.xpose.msra.mxu0 0
      %3252 = vmatprep.subr.bf16.mxu0 0
      %3253 = vmatpush1.bf16.xpose.msra.mxu0 0
      %3254 = vmatprep.subr.bf16.mxu0 0
      %3255 = vmatpush1.bf16.xpose.msra.mxu0 0
      %3256 = vmatprep.subr.bf16.mxu0 0
      %3257 = vmatpush1.bf16.xpose.msra.mxu0 0
      %3258 = vmatprep.subr.bf16.mxu0 0
      %3259 = vmatpush1.bf16.xpose.msra.mxu0 0
      %3260 = vmatprep.subr.bf16.mxu0 0
      %3261 = vmatpush1.bf16.xpose.msra.mxu0 0
      %3262 = vmatprep.subr.bf16.mxu0 0
      %3263 = vmatpush1.bf16.xpose.msra.mxu0 0
      %3264 = vmatprep.subr.bf16.mxu0 0
      %3265 = vmatpush1.bf16.xpose.msra.mxu0 0
      %3266 = vmatprep.subr.bf16.mxu0 0
      %3267 = vmatpush1.bf16.xpose.msra.mxu0 0
      %3268 = vmatprep.subr.bf16.mxu0 0
      %3269 = vmatpush1.bf16.xpose.msra.mxu0 0
      %3270 = vmatprep.mubr.bf16.mxu0 0
      %3271 = vmatmul.mubr.bf16.gmra.mrb[0].mxu0 %v3233
      %v3272 = vpop.f32.mrb[0].mxu0
      %v3273 = vadd.f32 0.0, %v3272
      %v3274 = vpop.f32.mrb[0].mxu0
      %v3275 = vpop.f32.mrb[0].mxu0
      %v3276 = vpop.f32.mrb[0].mxu0
      %3277 = vdwg.mxu0
      %3279 = vrot.lane.b32.xlu0 %v1089, 120
      %v3280 = vpop.permute.xlu0 %3279
      %3282 = vrot.lane.b32.xlu0 %v1105, 120
      %v3283 = vpop.permute.xlu0 %3282
      %v3285 = vsel %vm1128, %v3280, 0
      %v3288 = vsel %vm1128, %v3283, 0
      %3290 = vmatprep.subr.bf16.mxu0 0
      %3291 = vmatpush1.bf16.xpose.msra.mxu0 %v3288
      %3292 = vmatprep.subr.bf16.mxu0 0
      %3293 = vmatpush1.bf16.xpose.msra.mxu0 0
      %3294 = vmatprep.subr.bf16.mxu0 0
      %3295 = vmatpush1.bf16.xpose.msra.mxu0 0
      %3296 = vmatprep.subr.bf16.mxu0 0
      %3297 = vmatpush1.bf16.xpose.msra.mxu0 0
      %3298 = vmatprep.subr.bf16.mxu0 0
      %3299 = vmatpush1.bf16.xpose.msra.mxu0 0
      %3300 = vmatprep.subr.bf16.mxu0 0
      %3301 = vmatpush1.bf16.xpose.msra.mxu0 0
      %3302 = vmatprep.subr.bf16.mxu0 0
      %3303 = vmatpush1.bf16.xpose.msra.mxu0 0
      %3304 = vmatprep.subr.bf16.mxu0 0
      %3305 = vmatpush1.bf16.xpose.msra.mxu0 0
      %3306 = vmatprep.subr.bf16.mxu0 0
      %3307 = vmatpush1.bf16.xpose.msra.mxu0 0
      %3308 = vmatprep.subr.bf16.mxu0 0
      %3309 = vmatpush1.bf16.xpose.msra.mxu0 0
      %3310 = vmatprep.subr.bf16.mxu0 0
      %3311 = vmatpush1.bf16.xpose.msra.mxu0 0
      %3312 = vmatprep.subr.bf16.mxu0 0
      %3313 = vmatpush1.bf16.xpose.msra.mxu0 0
      %3314 = vmatprep.subr.bf16.mxu0 0
      %3315 = vmatpush1.bf16.xpose.msra.mxu0 0
      %3316 = vmatprep.subr.bf16.mxu0 0
      %3317 = vmatpush1.bf16.xpose.msra.mxu0 0
      %3318 = vmatprep.subr.bf16.mxu0 0
      %3319 = vmatpush1.bf16.xpose.msra.mxu0 0
      %3320 = vmatprep.subr.bf16.mxu0 0
      %3321 = vmatpush1.bf16.xpose.msra.mxu0 0
      %3322 = vmatprep.mubr.bf16.mxu0 0
      %3323 = vmatmul.mubr.bf16.gmra.mrb[0].mxu0 %v3285
      %v3324 = vpop.f32.mrb[0].mxu0
      %v3325 = vadd.f32 0.0, %v3324
      %v3326 = vpop.f32.mrb[0].mxu0
      %v3327 = vpop.f32.mrb[0].mxu0
      %v3328 = vpop.f32.mrb[0].mxu0
      %3329 = vdwg.mxu0
      %3331 = vrot.lane.b32.xlu0 %v1090, 120
      %v3332 = vpop.permute.xlu0 %3331
      %3334 = vrot.lane.b32.xlu0 %v1106, 120
      %v3335 = vpop.permute.xlu0 %3334
      %v3337 = vsel %vm1128, %v3332, 0
      %v3340 = vsel %vm1128, %v3335, 0
      %3342 = vmatprep.subr.bf16.mxu0 0
      %3343 = vmatpush1.bf16.xpose.msra.mxu0 %v3340
      %3344 = vmatprep.subr.bf16.mxu0 0
      %3345 = vmatpush1.bf16.xpose.msra.mxu0 0
      %3346 = vmatprep.subr.bf16.mxu0 0
      %3347 = vmatpush1.bf16.xpose.msra.mxu0 0
      %3348 = vmatprep.subr.bf16.mxu0 0
      %3349 = vmatpush1.bf16.xpose.msra.mxu0 0
      %3350 = vmatprep.subr.bf16.mxu0 0
      %3351 = vmatpush1.bf16.xpose.msra.mxu0 0
      %3352 = vmatprep.subr.bf16.mxu0 0
      %3353 = vmatpush1.bf16.xpose.msra.mxu0 0
      %3354 = vmatprep.subr.bf16.mxu0 0
      %3355 = vmatpush1.bf16.xpose.msra.mxu0 0
      %3356 = vmatprep.subr.bf16.mxu0 0
      %3357 = vmatpush1.bf16.xpose.msra.mxu0 0
      %3358 = vmatprep.subr.bf16.mxu0 0
      %3359 = vmatpush1.bf16.xpose.msra.mxu0 0
      %3360 = vmatprep.subr.bf16.mxu0 0
      %3361 = vmatpush1.bf16.xpose.msra.mxu0 0
      %3362 = vmatprep.subr.bf16.mxu0 0
      %3363 = vmatpush1.bf16.xpose.msra.mxu0 0
      %3364 = vmatprep.subr.bf16.mxu0 0
      %3365 = vmatpush1.bf16.xpose.msra.mxu0 0
      %3366 = vmatprep.subr.bf16.mxu0 0
      %3367 = vmatpush1.bf16.xpose.msra.mxu0 0
      %3368 = vmatprep.subr.bf16.mxu0 0
      %3369 = vmatpush1.bf16.xpose.msra.mxu0 0
      %3370 = vmatprep.subr.bf16.mxu0 0
      %3371 = vmatpush1.bf16.xpose.msra.mxu0 0
      %3372 = vmatprep.subr.bf16.mxu0 0
      %3373 = vmatpush1.bf16.xpose.msra.mxu0 0
      %3374 = vmatprep.mubr.bf16.mxu0 0
      %3375 = vmatmul.mubr.bf16.gmra.mrb[0].mxu0 %v3337
      %v3376 = vpop.f32.mrb[0].mxu0
      %v3377 = vadd.f32 0.0, %v3376
      %v3378 = vpop.f32.mrb[0].mxu0
      %v3379 = vpop.f32.mrb[0].mxu0
      %v3380 = vpop.f32.mrb[0].mxu0
      %3381 = vdwg.mxu0
      %3383 = vrot.lane.b32.xlu0 %v1091, 120
      %v3384 = vpop.permute.xlu0 %3383
      %3386 = vrot.lane.b32.xlu0 %v1107, 120
      %v3387 = vpop.permute.xlu0 %3386
      %v3389 = vsel %vm1128, %v3384, 0
      %v3392 = vsel %vm1128, %v3387, 0
      %3394 = vmatprep.subr.bf16.mxu0 0
      %3395 = vmatpush1.bf16.xpose.msra.mxu0 %v3392
      %3396 = vmatprep.subr.bf16.mxu0 0
      %3397 = vmatpush1.bf16.xpose.msra.mxu0 0
      %3398 = vmatprep.subr.bf16.mxu0 0
      %3399 = vmatpush1.bf16.xpose.msra.mxu0 0
      %3400 = vmatprep.subr.bf16.mxu0 0
      %3401 = vmatpush1.bf16.xpose.msra.mxu0 0
      %3402 = vmatprep.subr.bf16.mxu0 0
      %3403 = vmatpush1.bf16.xpose.msra.mxu0 0
      %3404 = vmatprep.subr.bf16.mxu0 0
      %3405 = vmatpush1.bf16.xpose.msra.mxu0 0
      %3406 = vmatprep.subr.bf16.mxu0 0
      %3407 = vmatpush1.bf16.xpose.msra.mxu0 0
      %3408 = vmatprep.subr.bf16.mxu0 0
      %3409 = vmatpush1.bf16.xpose.msra.mxu0 0
      %3410 = vmatprep.subr.bf16.mxu0 0
      %3411 = vmatpush1.bf16.xpose.msra.mxu0 0
      %3412 = vmatprep.subr.bf16.mxu0 0
      %3413 = vmatpush1.bf16.xpose.msra.mxu0 0
      %3414 = vmatprep.subr.bf16.mxu0 0
      %3415 = vmatpush1.bf16.xpose.msra.mxu0 0
      %3416 = vmatprep.subr.bf16.mxu0 0
      %3417 = vmatpush1.bf16.xpose.msra.mxu0 0
      %3418 = vmatprep.subr.bf16.mxu0 0
      %3419 = vmatpush1.bf16.xpose.msra.mxu0 0
      %3420 = vmatprep.subr.bf16.mxu0 0
      %3421 = vmatpush1.bf16.xpose.msra.mxu0 0
      %3422 = vmatprep.subr.bf16.mxu0 0
      %3423 = vmatpush1.bf16.xpose.msra.mxu0 0
      %3424 = vmatprep.subr.bf16.mxu0 0
      %3425 = vmatpush1.bf16.xpose.msra.mxu0 0
      %3426 = vmatprep.mubr.bf16.mxu0 0
      %3427 = vmatmul.mubr.bf16.gmra.mrb[0].mxu0 %v3389
      %v3428 = vpop.f32.mrb[0].mxu0
      %v3429 = vadd.f32 0.0, %v3428
      %v3430 = vpop.f32.mrb[0].mxu0
      %v3431 = vpop.f32.mrb[0].mxu0
      %v3432 = vpop.f32.mrb[0].mxu0
      %3433 = vdwg.mxu0
      %3435 = vrot.lane.b32.xlu0 %v1092, 120
      %v3436 = vpop.permute.xlu0 %3435
      %3438 = vrot.lane.b32.xlu0 %v1108, 120
      %v3439 = vpop.permute.xlu0 %3438
      %v3441 = vsel %vm1128, %v3436, 0
      %v3444 = vsel %vm1128, %v3439, 0
      %3446 = vmatprep.subr.bf16.mxu0 0
      %3447 = vmatpush1.bf16.xpose.msra.mxu0 %v3444
      %3448 = vmatprep.subr.bf16.mxu0 0
      %3449 = vmatpush1.bf16.xpose.msra.mxu0 0
      %3450 = vmatprep.subr.bf16.mxu0 0
      %3451 = vmatpush1.bf16.xpose.msra.mxu0 0
      %3452 = vmatprep.subr.bf16.mxu0 0
      %3453 = vmatpush1.bf16.xpose.msra.mxu0 0
      %3454 = vmatprep.subr.bf16.mxu0 0
      %3455 = vmatpush1.bf16.xpose.msra.mxu0 0
      %3456 = vmatprep.subr.bf16.mxu0 0
      %3457 = vmatpush1.bf16.xpose.msra.mxu0 0
      %3458 = vmatprep.subr.bf16.mxu0 0
      %3459 = vmatpush1.bf16.xpose.msra.mxu0 0
      %3460 = vmatprep.subr.bf16.mxu0 0
      %3461 = vmatpush1.bf16.xpose.msra.mxu0 0
      %3462 = vmatprep.subr.bf16.mxu0 0
      %3463 = vmatpush1.bf16.xpose.msra.mxu0 0
      %3464 = vmatprep.subr.bf16.mxu0 0
      %3465 = vmatpush1.bf16.xpose.msra.mxu0 0
      %3466 = vmatprep.subr.bf16.mxu0 0
      %3467 = vmatpush1.bf16.xpose.msra.mxu0 0
      %3468 = vmatprep.subr.bf16.mxu0 0
      %3469 = vmatpush1.bf16.xpose.msra.mxu0 0
      %3470 = vmatprep.subr.bf16.mxu0 0
      %3471 = vmatpush1.bf16.xpose.msra.mxu0 0
      %3472 = vmatprep.subr.bf16.mxu0 0
      %3473 = vmatpush1.bf16.xpose.msra.mxu0 0
      %3474 = vmatprep.subr.bf16.mxu0 0
      %3475 = vmatpush1.bf16.xpose.msra.mxu0 0
      %3476 = vmatprep.subr.bf16.mxu0 0
      %3477 = vmatpush1.bf16.xpose.msra.mxu0 0
      %3478 = vmatprep.mubr.bf16.mxu0 0
      %3479 = vmatmul.mubr.bf16.gmra.mrb[0].mxu0 %v3441
      %v3480 = vpop.f32.mrb[0].mxu0
      %v3481 = vadd.f32 0.0, %v3480
      %v3482 = vpop.f32.mrb[0].mxu0
      %v3483 = vpop.f32.mrb[0].mxu0
      %v3484 = vpop.f32.mrb[0].mxu0
      %3485 = vdwg.mxu0
      %3487 = vrot.lane.b32.xlu0 %v1093, 120
      %v3488 = vpop.permute.xlu0 %3487
      %3490 = vrot.lane.b32.xlu0 %v1109, 120
      %v3491 = vpop.permute.xlu0 %3490
      %v3493 = vsel %vm1128, %v3488, 0
      %v3496 = vsel %vm1128, %v3491, 0
      %3498 = vmatprep.subr.bf16.mxu0 0
      %3499 = vmatpush1.bf16.xpose.msra.mxu0 %v3496
      %3500 = vmatprep.subr.bf16.mxu0 0
      %3501 = vmatpush1.bf16.xpose.msra.mxu0 0
      %3502 = vmatprep.subr.bf16.mxu0 0
      %3503 = vmatpush1.bf16.xpose.msra.mxu0 0
      %3504 = vmatprep.subr.bf16.mxu0 0
      %3505 = vmatpush1.bf16.xpose.msra.mxu0 0
      %3506 = vmatprep.subr.bf16.mxu0 0
      %3507 = vmatpush1.bf16.xpose.msra.mxu0 0
      %3508 = vmatprep.subr.bf16.mxu0 0
      %3509 = vmatpush1.bf16.xpose.msra.mxu0 0
      %3510 = vmatprep.subr.bf16.mxu0 0
      %3511 = vmatpush1.bf16.xpose.msra.mxu0 0
      %3512 = vmatprep.subr.bf16.mxu0 0
      %3513 = vmatpush1.bf16.xpose.msra.mxu0 0
      %3514 = vmatprep.subr.bf16.mxu0 0
      %3515 = vmatpush1.bf16.xpose.msra.mxu0 0
      %3516 = vmatprep.subr.bf16.mxu0 0
      %3517 = vmatpush1.bf16.xpose.msra.mxu0 0
      %3518 = vmatprep.subr.bf16.mxu0 0
      %3519 = vmatpush1.bf16.xpose.msra.mxu0 0
      %3520 = vmatprep.subr.bf16.mxu0 0
      %3521 = vmatpush1.bf16.xpose.msra.mxu0 0
      %3522 = vmatprep.subr.bf16.mxu0 0
      %3523 = vmatpush1.bf16.xpose.msra.mxu0 0
      %3524 = vmatprep.subr.bf16.mxu0 0
      %3525 = vmatpush1.bf16.xpose.msra.mxu0 0
      %3526 = vmatprep.subr.bf16.mxu0 0
      %3527 = vmatpush1.bf16.xpose.msra.mxu0 0
      %3528 = vmatprep.subr.bf16.mxu0 0
      %3529 = vmatpush1.bf16.xpose.msra.mxu0 0
      %3530 = vmatprep.mubr.bf16.mxu0 0
      %3531 = vmatmul.mubr.bf16.gmra.mrb[0].mxu0 %v3493
      %v3532 = vpop.f32.mrb[0].mxu0
      %v3533 = vadd.f32 0.0, %v3532
      %v3534 = vpop.f32.mrb[0].mxu0
      %v3535 = vpop.f32.mrb[0].mxu0
      %v3536 = vpop.f32.mrb[0].mxu0
      %3537 = vdwg.mxu0
      %3539 = vrot.lane.b32.xlu0 %v1094, 120
      %v3540 = vpop.permute.xlu0 %3539
      %3542 = vrot.lane.b32.xlu0 %v1110, 120
      %v3543 = vpop.permute.xlu0 %3542
      %v3545 = vsel %vm1128, %v3540, 0
      %v3548 = vsel %vm1128, %v3543, 0
      %3550 = vmatprep.subr.bf16.mxu0 0
      %3551 = vmatpush1.bf16.xpose.msra.mxu0 %v3548
      %3552 = vmatprep.subr.bf16.mxu0 0
      %3553 = vmatpush1.bf16.xpose.msra.mxu0 0
      %3554 = vmatprep.subr.bf16.mxu0 0
      %3555 = vmatpush1.bf16.xpose.msra.mxu0 0
      %3556 = vmatprep.subr.bf16.mxu0 0
      %3557 = vmatpush1.bf16.xpose.msra.mxu0 0
      %3558 = vmatprep.subr.bf16.mxu0 0
      %3559 = vmatpush1.bf16.xpose.msra.mxu0 0
      %3560 = vmatprep.subr.bf16.mxu0 0
      %3561 = vmatpush1.bf16.xpose.msra.mxu0 0
      %3562 = vmatprep.subr.bf16.mxu0 0
      %3563 = vmatpush1.bf16.xpose.msra.mxu0 0
      %3564 = vmatprep.subr.bf16.mxu0 0
      %3565 = vmatpush1.bf16.xpose.msra.mxu0 0
      %3566 = vmatprep.subr.bf16.mxu0 0
      %3567 = vmatpush1.bf16.xpose.msra.mxu0 0
      %3568 = vmatprep.subr.bf16.mxu0 0
      %3569 = vmatpush1.bf16.xpose.msra.mxu0 0
      %3570 = vmatprep.subr.bf16.mxu0 0
      %3571 = vmatpush1.bf16.xpose.msra.mxu0 0
      %3572 = vmatprep.subr.bf16.mxu0 0
      %3573 = vmatpush1.bf16.xpose.msra.mxu0 0
      %3574 = vmatprep.subr.bf16.mxu0 0
      %3575 = vmatpush1.bf16.xpose.msra.mxu0 0
      %3576 = vmatprep.subr.bf16.mxu0 0
      %3577 = vmatpush1.bf16.xpose.msra.mxu0 0
      %3578 = vmatprep.subr.bf16.mxu0 0
      %3579 = vmatpush1.bf16.xpose.msra.mxu0 0
      %3580 = vmatprep.subr.bf16.mxu0 0
      %3581 = vmatpush1.bf16.xpose.msra.mxu0 0
      %3582 = vmatprep.mubr.bf16.mxu0 0
      %3583 = vmatmul.mubr.bf16.gmra.mrb[0].mxu0 %v3545
      %v3584 = vpop.f32.mrb[0].mxu0
      %v3585 = vadd.f32 0.0, %v3584
      %v3586 = vpop.f32.mrb[0].mxu0
      %v3587 = vpop.f32.mrb[0].mxu0
      %v3588 = vpop.f32.mrb[0].mxu0
      %3589 = vdwg.mxu0
      %3591 = vrot.lane.b32.xlu0 %v1095, 120
      %v3592 = vpop.permute.xlu0 %3591
      %3594 = vrot.lane.b32.xlu0 %v1111, 120
      %v3595 = vpop.permute.xlu0 %3594
      %v3597 = vsel %vm1128, %v3592, 0
      %v3600 = vsel %vm1128, %v3595, 0
      %3602 = vmatprep.subr.bf16.mxu0 0
      %3603 = vmatpush1.bf16.xpose.msra.mxu0 %v3600
      %3604 = vmatprep.subr.bf16.mxu0 0
      %3605 = vmatpush1.bf16.xpose.msra.mxu0 0
      %3606 = vmatprep.subr.bf16.mxu0 0
      %3607 = vmatpush1.bf16.xpose.msra.mxu0 0
      %3608 = vmatprep.subr.bf16.mxu0 0
      %3609 = vmatpush1.bf16.xpose.msra.mxu0 0
      %3610 = vmatprep.subr.bf16.mxu0 0
      %3611 = vmatpush1.bf16.xpose.msra.mxu0 0
      %3612 = vmatprep.subr.bf16.mxu0 0
      %3613 = vmatpush1.bf16.xpose.msra.mxu0 0
      %3614 = vmatprep.subr.bf16.mxu0 0
      %3615 = vmatpush1.bf16.xpose.msra.mxu0 0
      %3616 = vmatprep.subr.bf16.mxu0 0
      %3617 = vmatpush1.bf16.xpose.msra.mxu0 0
      %3618 = vmatprep.subr.bf16.mxu0 0
      %3619 = vmatpush1.bf16.xpose.msra.mxu0 0
      %3620 = vmatprep.subr.bf16.mxu0 0
      %3621 = vmatpush1.bf16.xpose.msra.mxu0 0
      %3622 = vmatprep.subr.bf16.mxu0 0
      %3623 = vmatpush1.bf16.xpose.msra.mxu0 0
      %3624 = vmatprep.subr.bf16.mxu0 0
      %3625 = vmatpush1.bf16.xpose.msra.mxu0 0
      %3626 = vmatprep.subr.bf16.mxu0 0
      %3627 = vmatpush1.bf16.xpose.msra.mxu0 0
      %3628 = vmatprep.subr.bf16.mxu0 0
      %3629 = vmatpush1.bf16.xpose.msra.mxu0 0
      %3630 = vmatprep.subr.bf16.mxu0 0
      %3631 = vmatpush1.bf16.xpose.msra.mxu0 0
      %3632 = vmatprep.subr.bf16.mxu0 0
      %3633 = vmatpush1.bf16.xpose.msra.mxu0 0
      %3634 = vmatprep.mubr.bf16.mxu0 0
      %3635 = vmatmul.mubr.bf16.gmra.mrb[0].mxu0 %v3597
      %v3636 = vpop.f32.mrb[0].mxu0
      %v3637 = vadd.f32 0.0, %v3636
      %v3638 = vpop.f32.mrb[0].mxu0
      %v3639 = vpop.f32.mrb[0].mxu0
      %v3640 = vpop.f32.mrb[0].mxu0
      %3641 = vdwg.mxu0
      %v3642 = vmul.f32 %v2857, 0.35355338
      %v3643 = vmul.f32 %v2909, 0.35355338
      %v3644 = vmul.f32 %v2961, 0.35355338
      %v3645 = vmul.f32 %v3013, 0.35355338
      %v3646 = vmul.f32 %v3065, 0.35355338
      %v3647 = vmul.f32 %v3117, 0.35355338
      %v3648 = vmul.f32 %v3169, 0.35355338
      %v3649 = vmul.f32 %v3221, 0.35355338
      %v3650 = vmul.f32 %v3273, 0.35355338
      %v3651 = vmul.f32 %v3325, 0.35355338
      %v3652 = vmul.f32 %v3377, 0.35355338
      %v3653 = vmul.f32 %v3429, 0.35355338
      %v3654 = vmul.f32 %v3481, 0.35355338
      %v3655 = vmul.f32 %v3533, 0.35355338
      %v3656 = vmul.f32 %v3585, 0.35355338
      %v3657 = vmul.f32 %v3637, 0.35355338
      %v3658 = vsel %vm1128, %v3642, -inf
      %3659 = vmax.xlane.f32.xlu0 %v3658
      %v3660 = vpop.xlane.xlu0 %3659
      %v3661 = vsel %vm1128, %v3643, -inf
      %3662 = vmax.xlane.f32.xlu0 %v3661
      %v3663 = vpop.xlane.xlu0 %3662
      %v3664 = vsel %vm1128, %v3644, -inf
      %3665 = vmax.xlane.f32.xlu0 %v3664
      %v3666 = vpop.xlane.xlu0 %3665
      %v3667 = vsel %vm1128, %v3645, -inf
      %3668 = vmax.xlane.f32.xlu0 %v3667
      %v3669 = vpop.xlane.xlu0 %3668
      %v3670 = vsel %vm1128, %v3646, -inf
      %3671 = vmax.xlane.f32.xlu0 %v3670
      %v3672 = vpop.xlane.xlu0 %3671
      %v3673 = vsel %vm1128, %v3647, -inf
      %3674 = vmax.xlane.f32.xlu0 %v3673
      %v3675 = vpop.xlane.xlu0 %3674
      %v3676 = vsel %vm1128, %v3648, -inf
      %3677 = vmax.xlane.f32.xlu0 %v3676
      %v3678 = vpop.xlane.xlu0 %3677
      %v3679 = vsel %vm1128, %v3649, -inf
      %3680 = vmax.xlane.f32.xlu0 %v3679
      %v3681 = vpop.xlane.xlu0 %3680
      %v3682 = vsel %vm1128, %v3650, -inf
      %3683 = vmax.xlane.f32.xlu0 %v3682
      %v3684 = vpop.xlane.xlu0 %3683
      %v3685 = vsel %vm1128, %v3651, -inf
      %3686 = vmax.xlane.f32.xlu0 %v3685
      %v3687 = vpop.xlane.xlu0 %3686
      %v3688 = vsel %vm1128, %v3652, -inf
      %3689 = vmax.xlane.f32.xlu0 %v3688
      %v3690 = vpop.xlane.xlu0 %3689
      %v3691 = vsel %vm1128, %v3653, -inf
      %3692 = vmax.xlane.f32.xlu0 %v3691
      %v3693 = vpop.xlane.xlu0 %3692
      %v3694 = vsel %vm1128, %v3654, -inf
      %3695 = vmax.xlane.f32.xlu0 %v3694
      %v3696 = vpop.xlane.xlu0 %3695
      %v3697 = vsel %vm1128, %v3655, -inf
      %3698 = vmax.xlane.f32.xlu0 %v3697
      %v3699 = vpop.xlane.xlu0 %3698
      %v3700 = vsel %vm1128, %v3656, -inf
      %3701 = vmax.xlane.f32.xlu0 %v3700
      %v3702 = vpop.xlane.xlu0 %3701
      %v3703 = vsel %vm1128, %v3657, -inf
      %3704 = vmax.xlane.f32.xlu0 %v3703
      %v3705 = vpop.xlane.xlu0 %3704
      %v3706 = vsub.f32 %v3642, %v3660
      %v3707 = vsub.f32 %v3643, %v3663
      %v3708 = vsub.f32 %v3644, %v3666
      %v3709 = vsub.f32 %v3645, %v3669
      %v3710 = vsub.f32 %v3646, %v3672
      %v3711 = vsub.f32 %v3647, %v3675
      %v3712 = vsub.f32 %v3648, %v3678
      %v3713 = vsub.f32 %v3649, %v3681
      %v3714 = vsub.f32 %v3650, %v3684
      %v3715 = vsub.f32 %v3651, %v3687
      %v3716 = vsub.f32 %v3652, %v3690
      %v3717 = vsub.f32 %v3653, %v3693
      %v3718 = vsub.f32 %v3654, %v3696
      %v3719 = vsub.f32 %v3655, %v3699
      %v3720 = vsub.f32 %v3656, %v3702
      %v3721 = vsub.f32 %v3657, %v3705
      %v3722 = vmul.f32 %v3706, 1.442695
      %v3723 = vpow.pop %v3722
      %v3724 = vmul.f32 %v3707, 1.442695
      %v3725 = vpow.pop %v3724
      %v3726 = vmul.f32 %v3708, 1.442695
      %v3727 = vpow.pop %v3726
      %v3728 = vmul.f32 %v3709, 1.442695
      %v3729 = vpow.pop %v3728
      %v3730 = vmul.f32 %v3710, 1.442695
      %v3731 = vpow.pop %v3730
      %v3732 = vmul.f32 %v3711, 1.442695
      %v3733 = vpow.pop %v3732
      %v3734 = vmul.f32 %v3712, 1.442695
      %v3735 = vpow.pop %v3734
      %v3736 = vmul.f32 %v3713, 1.442695
      %v3737 = vpow.pop %v3736
      %v3738 = vmul.f32 %v3714, 1.442695
      %v3739 = vpow.pop %v3738
      %v3740 = vmul.f32 %v3715, 1.442695
      %v3741 = vpow.pop %v3740
      %v3742 = vmul.f32 %v3716, 1.442695
      %v3743 = vpow.pop %v3742
      %v3744 = vmul.f32 %v3717, 1.442695
      %v3745 = vpow.pop %v3744
      %v3746 = vmul.f32 %v3718, 1.442695
      %v3747 = vpow.pop %v3746
      %v3748 = vmul.f32 %v3719, 1.442695
      %v3749 = vpow.pop %v3748
      %v3750 = vmul.f32 %v3720, 1.442695
      %v3751 = vpow.pop %v3750
      %v3752 = vmul.f32 %v3721, 1.442695
      %v3753 = vpow.pop %v3752
      %v3754 = vsel %vm1128, %v3723, 0.0
      %3755 = vadd.xlane.f32.xlu0 %v3754
      %v3756 = vpop.xlane.xlu0 %3755
      %v3757 = vsel %vm1128, %v3725, 0.0
      %3758 = vadd.xlane.f32.xlu0 %v3757
      %v3759 = vpop.xlane.xlu0 %3758
      %v3760 = vsel %vm1128, %v3727, 0.0
      %3761 = vadd.xlane.f32.xlu0 %v3760
      %v3762 = vpop.xlane.xlu0 %3761
      %v3763 = vsel %vm1128, %v3729, 0.0
      %3764 = vadd.xlane.f32.xlu0 %v3763
      %v3765 = vpop.xlane.xlu0 %3764
      %v3766 = vsel %vm1128, %v3731, 0.0
      %3767 = vadd.xlane.f32.xlu0 %v3766
      %v3768 = vpop.xlane.xlu0 %3767
      %v3769 = vsel %vm1128, %v3733, 0.0
      %3770 = vadd.xlane.f32.xlu0 %v3769
      %v3771 = vpop.xlane.xlu0 %3770
      %v3772 = vsel %vm1128, %v3735, 0.0
      %3773 = vadd.xlane.f32.xlu0 %v3772
      %v3774 = vpop.xlane.xlu0 %3773
      %v3775 = vsel %vm1128, %v3737, 0.0
      %3776 = vadd.xlane.f32.xlu0 %v3775
      %v3777 = vpop.xlane.xlu0 %3776
      %v3778 = vsel %vm1128, %v3739, 0.0
      %3779 = vadd.xlane.f32.xlu0 %v3778
      %v3780 = vpop.xlane.xlu0 %3779
      %v3781 = vsel %vm1128, %v3741, 0.0
      %3782 = vadd.xlane.f32.xlu0 %v3781
      %v3783 = vpop.xlane.xlu0 %3782
      %v3784 = vsel %vm1128, %v3743, 0.0
      %3785 = vadd.xlane.f32.xlu0 %v3784
      %v3786 = vpop.xlane.xlu0 %3785
      %v3787 = vsel %vm1128, %v3745, 0.0
      %3788 = vadd.xlane.f32.xlu0 %v3787
      %v3789 = vpop.xlane.xlu0 %3788
      %v3790 = vsel %vm1128, %v3747, 0.0
      %3791 = vadd.xlane.f32.xlu0 %v3790
      %v3792 = vpop.xlane.xlu0 %3791
      %v3793 = vsel %vm1128, %v3749, 0.0
      %3794 = vadd.xlane.f32.xlu0 %v3793
      %v3795 = vpop.xlane.xlu0 %3794
      %v3796 = vsel %vm1128, %v3751, 0.0
      %3797 = vadd.xlane.f32.xlu0 %v3796
      %v3798 = vpop.xlane.xlu0 %3797
      %v3799 = vsel %vm1128, %v3753, 0.0
      %3800 = vadd.xlane.f32.xlu0 %v3799
      %v3801 = vpop.xlane.xlu0 %3800
      %v3802 = vrcp.pop %v3756
      %v3803 = vmul.f32 %v3723, %v3802
      %v3804 = vrcp.pop %v3759
      %v3805 = vmul.f32 %v3725, %v3804
      %v3806 = vrcp.pop %v3762
      %v3807 = vmul.f32 %v3727, %v3806
      %v3808 = vrcp.pop %v3765
      %v3809 = vmul.f32 %v3729, %v3808
      %v3810 = vrcp.pop %v3768
      %v3811 = vmul.f32 %v3731, %v3810
      %v3812 = vrcp.pop %v3771
      %v3813 = vmul.f32 %v3733, %v3812
      %v3814 = vrcp.pop %v3774
      %v3815 = vmul.f32 %v3735, %v3814
      %v3816 = vrcp.pop %v3777
      %v3817 = vmul.f32 %v3737, %v3816
      %v3818 = vrcp.pop %v3780
      %v3819 = vmul.f32 %v3739, %v3818
      %v3820 = vrcp.pop %v3783
      %v3821 = vmul.f32 %v3741, %v3820
      %v3822 = vrcp.pop %v3786
      %v3823 = vmul.f32 %v3743, %v3822
      %v3824 = vrcp.pop %v3789
      %v3825 = vmul.f32 %v3745, %v3824
      %v3826 = vrcp.pop %v3792
      %v3827 = vmul.f32 %v3747, %v3826
      %v3828 = vrcp.pop %v3795
      %v3829 = vmul.f32 %v3749, %v3828
      %v3830 = vrcp.pop %v3798
      %v3831 = vmul.f32 %v3751, %v3830
      %v3832 = vrcp.pop %v3801
      %v3833 = vmul.f32 %v3753, %v3832
      %v3834 = vpack.c.bf16 %v3803, %v3803
      %v3835 = vpack.c.bf16 %v3805, %v3805
      %v3836 = vpack.c.bf16 %v3807, %v3807
      %v3837 = vpack.c.bf16 %v3809, %v3809
      %v3838 = vpack.c.bf16 %v3811, %v3811
      %v3839 = vpack.c.bf16 %v3813, %v3813
      %v3840 = vpack.c.bf16 %v3815, %v3815
      %v3841 = vpack.c.bf16 %v3817, %v3817
      %v3842 = vpack.c.bf16 %v3819, %v3819
      %v3843 = vpack.c.bf16 %v3821, %v3821
      %v3844 = vpack.c.bf16 %v3823, %v3823
      %v3845 = vpack.c.bf16 %v3825, %v3825
      %v3846 = vpack.c.bf16 %v3827, %v3827
      %v3847 = vpack.c.bf16 %v3829, %v3829
      %v3848 = vpack.c.bf16 %v3831, %v3831
      %v3849 = vpack.c.bf16 %v3833, %v3833
      %3851 = vrot.lane.b32.xlu0 %v1112, 120
      %v3852 = vpop.permute.xlu0 %3851
      %v3854 = vsel %vm1128, %v3834, 0
      %v3857 = vsel %vm2076, %v3852, 0
      %3859 = vmatprep.subr.bf16.mxu0 0
      %3860 = vmatpush1.bf16.msra.mxu0 %v3857
      %3861 = vmatprep.subr.bf16.mxu0 0
      %3862 = vmatpush1.bf16.msra.mxu0 0
      %3863 = vmatprep.subr.bf16.mxu0 0
      %3864 = vmatpush1.bf16.msra.mxu0 0
      %3865 = vmatprep.subr.bf16.mxu0 0
      %3866 = vmatpush1.bf16.msra.mxu0 0
      %3867 = vmatprep.subr.bf16.mxu0 0
      %3868 = vmatpush1.bf16.msra.mxu0 0
      %3869 = vmatprep.subr.bf16.mxu0 0
      %3870 = vmatpush1.bf16.msra.mxu0 0
      %3871 = vmatprep.subr.bf16.mxu0 0
      %3872 = vmatpush1.bf16.msra.mxu0 0
      %3873 = vmatprep.subr.bf16.mxu0 0
      %3874 = vmatpush1.bf16.msra.mxu0 0
      %3875 = vmatprep.subr.bf16.mxu0 0
      %3876 = vmatpush1.bf16.msra.mxu0 0
      %3877 = vmatprep.subr.bf16.mxu0 0
      %3878 = vmatpush1.bf16.msra.mxu0 0
      %3879 = vmatprep.subr.bf16.mxu0 0
      %3880 = vmatpush1.bf16.msra.mxu0 0
      %3881 = vmatprep.subr.bf16.mxu0 0
      %3882 = vmatpush1.bf16.msra.mxu0 0
      %3883 = vmatprep.subr.bf16.mxu0 0
      %3884 = vmatpush1.bf16.msra.mxu0 0
      %3885 = vmatprep.subr.bf16.mxu0 0
      %3886 = vmatpush1.bf16.msra.mxu0 0
      %3887 = vmatprep.subr.bf16.mxu0 0
      %3888 = vmatpush1.bf16.msra.mxu0 0
      %3889 = vmatprep.subr.bf16.mxu0 0
      %3890 = vmatpush1.bf16.msra.mxu0 0
      %3891 = vmatprep.mubr.bf16.mxu0 0
      %3892 = vmatmul.mubr.bf16.gmra.mrb[0].mxu0 %v3854
      %v3893 = vpop.f32.mrb[0].mxu0
      %v3894 = vadd.f32 0.0, %v3893
      %v3895 = vpop.f32.mrb[0].mxu0
      %v3896 = vpop.f32.mrb[0].mxu0
      %v3897 = vpop.f32.mrb[0].mxu0
      %3898 = vdwg.mxu0
      %3900 = vrot.lane.b32.xlu0 %v1113, 120
      %v3901 = vpop.permute.xlu0 %3900
      %v3903 = vsel %vm1128, %v3835, 0
      %v3906 = vsel %vm2076, %v3901, 0
      %3908 = vmatprep.subr.bf16.mxu0 0
      %3909 = vmatpush1.bf16.msra.mxu0 %v3906
      %3910 = vmatprep.subr.bf16.mxu0 0
      %3911 = vmatpush1.bf16.msra.mxu0 0
      %3912 = vmatprep.subr.bf16.mxu0 0
      %3913 = vmatpush1.bf16.msra.mxu0 0
      %3914 = vmatprep.subr.bf16.mxu0 0
      %3915 = vmatpush1.bf16.msra.mxu0 0
      %3916 = vmatprep.subr.bf16.mxu0 0
      %3917 = vmatpush1.bf16.msra.mxu0 0
      %3918 = vmatprep.subr.bf16.mxu0 0
      %3919 = vmatpush1.bf16.msra.mxu0 0
      %3920 = vmatprep.subr.bf16.mxu0 0
      %3921 = vmatpush1.bf16.msra.mxu0 0
      %3922 = vmatprep.subr.bf16.mxu0 0
      %3923 = vmatpush1.bf16.msra.mxu0 0
      %3924 = vmatprep.subr.bf16.mxu0 0
      %3925 = vmatpush1.bf16.msra.mxu0 0
      %3926 = vmatprep.subr.bf16.mxu0 0
      %3927 = vmatpush1.bf16.msra.mxu0 0
      %3928 = vmatprep.subr.bf16.mxu0 0
      %3929 = vmatpush1.bf16.msra.mxu0 0
      %3930 = vmatprep.subr.bf16.mxu0 0
      %3931 = vmatpush1.bf16.msra.mxu0 0
      %3932 = vmatprep.subr.bf16.mxu0 0
      %3933 = vmatpush1.bf16.msra.mxu0 0
      %3934 = vmatprep.subr.bf16.mxu0 0
      %3935 = vmatpush1.bf16.msra.mxu0 0
      %3936 = vmatprep.subr.bf16.mxu0 0
      %3937 = vmatpush1.bf16.msra.mxu0 0
      %3938 = vmatprep.subr.bf16.mxu0 0
      %3939 = vmatpush1.bf16.msra.mxu0 0
      %3940 = vmatprep.mubr.bf16.mxu0 0
      %3941 = vmatmul.mubr.bf16.gmra.mrb[0].mxu0 %v3903
      %v3942 = vpop.f32.mrb[0].mxu0
      %v3943 = vadd.f32 0.0, %v3942
      %v3944 = vpop.f32.mrb[0].mxu0
      %v3945 = vpop.f32.mrb[0].mxu0
      %v3946 = vpop.f32.mrb[0].mxu0
      %3947 = vdwg.mxu0
      %3949 = vrot.lane.b32.xlu0 %v1114, 120
      %v3950 = vpop.permute.xlu0 %3949
      %v3952 = vsel %vm1128, %v3836, 0
      %v3955 = vsel %vm2076, %v3950, 0
      %3957 = vmatprep.subr.bf16.mxu0 0
      %3958 = vmatpush1.bf16.msra.mxu0 %v3955
      %3959 = vmatprep.subr.bf16.mxu0 0
      %3960 = vmatpush1.bf16.msra.mxu0 0
      %3961 = vmatprep.subr.bf16.mxu0 0
      %3962 = vmatpush1.bf16.msra.mxu0 0
      %3963 = vmatprep.subr.bf16.mxu0 0
      %3964 = vmatpush1.bf16.msra.mxu0 0
      %3965 = vmatprep.subr.bf16.mxu0 0
      %3966 = vmatpush1.bf16.msra.mxu0 0
      %3967 = vmatprep.subr.bf16.mxu0 0
      %3968 = vmatpush1.bf16.msra.mxu0 0
      %3969 = vmatprep.subr.bf16.mxu0 0
      %3970 = vmatpush1.bf16.msra.mxu0 0
      %3971 = vmatprep.subr.bf16.mxu0 0
      %3972 = vmatpush1.bf16.msra.mxu0 0
      %3973 = vmatprep.subr.bf16.mxu0 0
      %3974 = vmatpush1.bf16.msra.mxu0 0
      %3975 = vmatprep.subr.bf16.mxu0 0
      %3976 = vmatpush1.bf16.msra.mxu0 0
      %3977 = vmatprep.subr.bf16.mxu0 0
      %3978 = vmatpush1.bf16.msra.mxu0 0
      %3979 = vmatprep.subr.bf16.mxu0 0
      %3980 = vmatpush1.bf16.msra.mxu0 0
      %3981 = vmatprep.subr.bf16.mxu0 0
      %3982 = vmatpush1.bf16.msra.mxu0 0
      %3983 = vmatprep.subr.bf16.mxu0 0
      %3984 = vmatpush1.bf16.msra.mxu0 0
      %3985 = vmatprep.subr.bf16.mxu0 0
      %3986 = vmatpush1.bf16.msra.mxu0 0
      %3987 = vmatprep.subr.bf16.mxu0 0
      %3988 = vmatpush1.bf16.msra.mxu0 0
      %3989 = vmatprep.mubr.bf16.mxu0 0
      %3990 = vmatmul.mubr.bf16.gmra.mrb[0].mxu0 %v3952
      %v3991 = vpop.f32.mrb[0].mxu0
      %v3992 = vadd.f32 0.0, %v3991
      %v3993 = vpop.f32.mrb[0].mxu0
      %v3994 = vpop.f32.mrb[0].mxu0
      %v3995 = vpop.f32.mrb[0].mxu0
      %3996 = vdwg.mxu0
      %3998 = vrot.lane.b32.xlu0 %v1115, 120
      %v3999 = vpop.permute.xlu0 %3998
      %v4001 = vsel %vm1128, %v3837, 0
      %v4004 = vsel %vm2076, %v3999, 0
      %4006 = vmatprep.subr.bf16.mxu0 0
      %4007 = vmatpush1.bf16.msra.mxu0 %v4004
      %4008 = vmatprep.subr.bf16.mxu0 0
      %4009 = vmatpush1.bf16.msra.mxu0 0
      %4010 = vmatprep.subr.bf16.mxu0 0
      %4011 = vmatpush1.bf16.msra.mxu0 0
      %4012 = vmatprep.subr.bf16.mxu0 0
      %4013 = vmatpush1.bf16.msra.mxu0 0
      %4014 = vmatprep.subr.bf16.mxu0 0
      %4015 = vmatpush1.bf16.msra.mxu0 0
      %4016 = vmatprep.subr.bf16.mxu0 0
      %4017 = vmatpush1.bf16.msra.mxu0 0
      %4018 = vmatprep.subr.bf16.mxu0 0
      %4019 = vmatpush1.bf16.msra.mxu0 0
      %4020 = vmatprep.subr.bf16.mxu0 0
      %4021 = vmatpush1.bf16.msra.mxu0 0
      %4022 = vmatprep.subr.bf16.mxu0 0
      %4023 = vmatpush1.bf16.msra.mxu0 0
      %4024 = vmatprep.subr.bf16.mxu0 0
      %4025 = vmatpush1.bf16.msra.mxu0 0
      %4026 = vmatprep.subr.bf16.mxu0 0
      %4027 = vmatpush1.bf16.msra.mxu0 0
      %4028 = vmatprep.subr.bf16.mxu0 0
      %4029 = vmatpush1.bf16.msra.mxu0 0
      %4030 = vmatprep.subr.bf16.mxu0 0
      %4031 = vmatpush1.bf16.msra.mxu0 0
      %4032 = vmatprep.subr.bf16.mxu0 0
      %4033 = vmatpush1.bf16.msra.mxu0 0
      %4034 = vmatprep.subr.bf16.mxu0 0
      %4035 = vmatpush1.bf16.msra.mxu0 0
      %4036 = vmatprep.subr.bf16.mxu0 0
      %4037 = vmatpush1.bf16.msra.mxu0 0
      %4038 = vmatprep.mubr.bf16.mxu0 0
      %4039 = vmatmul.mubr.bf16.gmra.mrb[0].mxu0 %v4001
      %v4040 = vpop.f32.mrb[0].mxu0
      %v4041 = vadd.f32 0.0, %v4040
      %v4042 = vpop.f32.mrb[0].mxu0
      %v4043 = vpop.f32.mrb[0].mxu0
      %v4044 = vpop.f32.mrb[0].mxu0
      %4045 = vdwg.mxu0
      %4047 = vrot.lane.b32.xlu0 %v1116, 120
      %v4048 = vpop.permute.xlu0 %4047
      %v4050 = vsel %vm1128, %v3838, 0
      %v4053 = vsel %vm2076, %v4048, 0
      %4055 = vmatprep.subr.bf16.mxu0 0
      %4056 = vmatpush1.bf16.msra.mxu0 %v4053
      %4057 = vmatprep.subr.bf16.mxu0 0
      %4058 = vmatpush1.bf16.msra.mxu0 0
      %4059 = vmatprep.subr.bf16.mxu0 0
      %4060 = vmatpush1.bf16.msra.mxu0 0
      %4061 = vmatprep.subr.bf16.mxu0 0
      %4062 = vmatpush1.bf16.msra.mxu0 0
      %4063 = vmatprep.subr.bf16.mxu0 0
      %4064 = vmatpush1.bf16.msra.mxu0 0
      %4065 = vmatprep.subr.bf16.mxu0 0
      %4066 = vmatpush1.bf16.msra.mxu0 0
      %4067 = vmatprep.subr.bf16.mxu0 0
      %4068 = vmatpush1.bf16.msra.mxu0 0
      %4069 = vmatprep.subr.bf16.mxu0 0
      %4070 = vmatpush1.bf16.msra.mxu0 0
      %4071 = vmatprep.subr.bf16.mxu0 0
      %4072 = vmatpush1.bf16.msra.mxu0 0
      %4073 = vmatprep.subr.bf16.mxu0 0
      %4074 = vmatpush1.bf16.msra.mxu0 0
      %4075 = vmatprep.subr.bf16.mxu0 0
      %4076 = vmatpush1.bf16.msra.mxu0 0
      %4077 = vmatprep.subr.bf16.mxu0 0
      %4078 = vmatpush1.bf16.msra.mxu0 0
      %4079 = vmatprep.subr.bf16.mxu0 0
      %4080 = vmatpush1.bf16.msra.mxu0 0
      %4081 = vmatprep.subr.bf16.mxu0 0
      %4082 = vmatpush1.bf16.msra.mxu0 0
      %4083 = vmatprep.subr.bf16.mxu0 0
      %4084 = vmatpush1.bf16.msra.mxu0 0
      %4085 = vmatprep.subr.bf16.mxu0 0
      %4086 = vmatpush1.bf16.msra.mxu0 0
      %4087 = vmatprep.mubr.bf16.mxu0 0
      %4088 = vmatmul.mubr.bf16.gmra.mrb[0].mxu0 %v4050
      %v4089 = vpop.f32.mrb[0].mxu0
      %v4090 = vadd.f32 0.0, %v4089
      %v4091 = vpop.f32.mrb[0].mxu0
      %v4092 = vpop.f32.mrb[0].mxu0
      %v4093 = vpop.f32.mrb[0].mxu0
      %4094 = vdwg.mxu0
      %4096 = vrot.lane.b32.xlu0 %v1117, 120
      %v4097 = vpop.permute.xlu0 %4096
      %v4099 = vsel %vm1128, %v3839, 0
      %v4102 = vsel %vm2076, %v4097, 0
      %4104 = vmatprep.subr.bf16.mxu0 0
      %4105 = vmatpush1.bf16.msra.mxu0 %v4102
      %4106 = vmatprep.subr.bf16.mxu0 0
      %4107 = vmatpush1.bf16.msra.mxu0 0
      %4108 = vmatprep.subr.bf16.mxu0 0
      %4109 = vmatpush1.bf16.msra.mxu0 0
      %4110 = vmatprep.subr.bf16.mxu0 0
      %4111 = vmatpush1.bf16.msra.mxu0 0
      %4112 = vmatprep.subr.bf16.mxu0 0
      %4113 = vmatpush1.bf16.msra.mxu0 0
      %4114 = vmatprep.subr.bf16.mxu0 0
      %4115 = vmatpush1.bf16.msra.mxu0 0
      %4116 = vmatprep.subr.bf16.mxu0 0
      %4117 = vmatpush1.bf16.msra.mxu0 0
      %4118 = vmatprep.subr.bf16.mxu0 0
      %4119 = vmatpush1.bf16.msra.mxu0 0
      %4120 = vmatprep.subr.bf16.mxu0 0
      %4121 = vmatpush1.bf16.msra.mxu0 0
      %4122 = vmatprep.subr.bf16.mxu0 0
      %4123 = vmatpush1.bf16.msra.mxu0 0
      %4124 = vmatprep.subr.bf16.mxu0 0
      %4125 = vmatpush1.bf16.msra.mxu0 0
      %4126 = vmatprep.subr.bf16.mxu0 0
      %4127 = vmatpush1.bf16.msra.mxu0 0
      %4128 = vmatprep.subr.bf16.mxu0 0
      %4129 = vmatpush1.bf16.msra.mxu0 0
      %4130 = vmatprep.subr.bf16.mxu0 0
      %4131 = vmatpush1.bf16.msra.mxu0 0
      %4132 = vmatprep.subr.bf16.mxu0 0
      %4133 = vmatpush1.bf16.msra.mxu0 0
      %4134 = vmatprep.subr.bf16.mxu0 0
      %4135 = vmatpush1.bf16.msra.mxu0 0
      %4136 = vmatprep.mubr.bf16.mxu0 0
      %4137 = vmatmul.mubr.bf16.gmra.mrb[0].mxu0 %v4099
      %v4138 = vpop.f32.mrb[0].mxu0
      %v4139 = vadd.f32 0.0, %v4138
      %v4140 = vpop.f32.mrb[0].mxu0
      %v4141 = vpop.f32.mrb[0].mxu0
      %v4142 = vpop.f32.mrb[0].mxu0
      %4143 = vdwg.mxu0
      %4145 = vrot.lane.b32.xlu0 %v1118, 120
      %v4146 = vpop.permute.xlu0 %4145
      %v4148 = vsel %vm1128, %v3840, 0
      %v4151 = vsel %vm2076, %v4146, 0
      %4153 = vmatprep.subr.bf16.mxu0 0
      %4154 = vmatpush1.bf16.msra.mxu0 %v4151
      %4155 = vmatprep.subr.bf16.mxu0 0
      %4156 = vmatpush1.bf16.msra.mxu0 0
      %4157 = vmatprep.subr.bf16.mxu0 0
      %4158 = vmatpush1.bf16.msra.mxu0 0
      %4159 = vmatprep.subr.bf16.mxu0 0
      %4160 = vmatpush1.bf16.msra.mxu0 0
      %4161 = vmatprep.subr.bf16.mxu0 0
      %4162 = vmatpush1.bf16.msra.mxu0 0
      %4163 = vmatprep.subr.bf16.mxu0 0
      %4164 = vmatpush1.bf16.msra.mxu0 0
      %4165 = vmatprep.subr.bf16.mxu0 0
      %4166 = vmatpush1.bf16.msra.mxu0 0
      %4167 = vmatprep.subr.bf16.mxu0 0
      %4168 = vmatpush1.bf16.msra.mxu0 0
      %4169 = vmatprep.subr.bf16.mxu0 0
      %4170 = vmatpush1.bf16.msra.mxu0 0
      %4171 = vmatprep.subr.bf16.mxu0 0
      %4172 = vmatpush1.bf16.msra.mxu0 0
      %4173 = vmatprep.subr.bf16.mxu0 0
      %4174 = vmatpush1.bf16.msra.mxu0 0
      %4175 = vmatprep.subr.bf16.mxu0 0
      %4176 = vmatpush1.bf16.msra.mxu0 0
      %4177 = vmatprep.subr.bf16.mxu0 0
      %4178 = vmatpush1.bf16.msra.mxu0 0
      %4179 = vmatprep.subr.bf16.mxu0 0
      %4180 = vmatpush1.bf16.msra.mxu0 0
      %4181 = vmatprep.subr.bf16.mxu0 0
      %4182 = vmatpush1.bf16.msra.mxu0 0
      %4183 = vmatprep.subr.bf16.mxu0 0
      %4184 = vmatpush1.bf16.msra.mxu0 0
      %4185 = vmatprep.mubr.bf16.mxu0 0
      %4186 = vmatmul.mubr.bf16.gmra.mrb[0].mxu0 %v4148
      %v4187 = vpop.f32.mrb[0].mxu0
      %v4188 = vadd.f32 0.0, %v4187
      %v4189 = vpop.f32.mrb[0].mxu0
      %v4190 = vpop.f32.mrb[0].mxu0
      %v4191 = vpop.f32.mrb[0].mxu0
      %4192 = vdwg.mxu0
      %4194 = vrot.lane.b32.xlu0 %v1119, 120
      %v4195 = vpop.permute.xlu0 %4194
      %v4197 = vsel %vm1128, %v3841, 0
      %v4200 = vsel %vm2076, %v4195, 0
      %4202 = vmatprep.subr.bf16.mxu0 0
      %4203 = vmatpush1.bf16.msra.mxu0 %v4200
      %4204 = vmatprep.subr.bf16.mxu0 0
      %4205 = vmatpush1.bf16.msra.mxu0 0
      %4206 = vmatprep.subr.bf16.mxu0 0
      %4207 = vmatpush1.bf16.msra.mxu0 0
      %4208 = vmatprep.subr.bf16.mxu0 0
      %4209 = vmatpush1.bf16.msra.mxu0 0
      %4210 = vmatprep.subr.bf16.mxu0 0
      %4211 = vmatpush1.bf16.msra.mxu0 0
      %4212 = vmatprep.subr.bf16.mxu0 0
      %4213 = vmatpush1.bf16.msra.mxu0 0
      %4214 = vmatprep.subr.bf16.mxu0 0
      %4215 = vmatpush1.bf16.msra.mxu0 0
      %4216 = vmatprep.subr.bf16.mxu0 0
      %4217 = vmatpush1.bf16.msra.mxu0 0
      %4218 = vmatprep.subr.bf16.mxu0 0
      %4219 = vmatpush1.bf16.msra.mxu0 0
      %4220 = vmatprep.subr.bf16.mxu0 0
      %4221 = vmatpush1.bf16.msra.mxu0 0
      %4222 = vmatprep.subr.bf16.mxu0 0
      %4223 = vmatpush1.bf16.msra.mxu0 0
      %4224 = vmatprep.subr.bf16.mxu0 0
      %4225 = vmatpush1.bf16.msra.mxu0 0
      %4226 = vmatprep.subr.bf16.mxu0 0
      %4227 = vmatpush1.bf16.msra.mxu0 0
      %4228 = vmatprep.subr.bf16.mxu0 0
      %4229 = vmatpush1.bf16.msra.mxu0 0
      %4230 = vmatprep.subr.bf16.mxu0 0
      %4231 = vmatpush1.bf16.msra.mxu0 0
      %4232 = vmatprep.subr.bf16.mxu0 0
      %4233 = vmatpush1.bf16.msra.mxu0 0
      %4234 = vmatprep.mubr.bf16.mxu0 0
      %4235 = vmatmul.mubr.bf16.gmra.mrb[0].mxu0 %v4197
      %v4236 = vpop.f32.mrb[0].mxu0
      %v4237 = vadd.f32 0.0, %v4236
      %v4238 = vpop.f32.mrb[0].mxu0
      %v4239 = vpop.f32.mrb[0].mxu0
      %v4240 = vpop.f32.mrb[0].mxu0
      %4241 = vdwg.mxu0
      %4243 = vrot.lane.b32.xlu0 %v1120, 120
      %v4244 = vpop.permute.xlu0 %4243
      %v4246 = vsel %vm1128, %v3842, 0
      %v4249 = vsel %vm2076, %v4244, 0
      %4251 = vmatprep.subr.bf16.mxu0 0
      %4252 = vmatpush1.bf16.msra.mxu0 %v4249
      %4253 = vmatprep.subr.bf16.mxu0 0
      %4254 = vmatpush1.bf16.msra.mxu0 0
      %4255 = vmatprep.subr.bf16.mxu0 0
      %4256 = vmatpush1.bf16.msra.mxu0 0
      %4257 = vmatprep.subr.bf16.mxu0 0
      %4258 = vmatpush1.bf16.msra.mxu0 0
      %4259 = vmatprep.subr.bf16.mxu0 0
      %4260 = vmatpush1.bf16.msra.mxu0 0
      %4261 = vmatprep.subr.bf16.mxu0 0
      %4262 = vmatpush1.bf16.msra.mxu0 0
      %4263 = vmatprep.subr.bf16.mxu0 0
      %4264 = vmatpush1.bf16.msra.mxu0 0
      %4265 = vmatprep.subr.bf16.mxu0 0
      %4266 = vmatpush1.bf16.msra.mxu0 0
      %4267 = vmatprep.subr.bf16.mxu0 0
      %4268 = vmatpush1.bf16.msra.mxu0 0
      %4269 = vmatprep.subr.bf16.mxu0 0
      %4270 = vmatpush1.bf16.msra.mxu0 0
      %4271 = vmatprep.subr.bf16.mxu0 0
      %4272 = vmatpush1.bf16.msra.mxu0 0
      %4273 = vmatprep.subr.bf16.mxu0 0
      %4274 = vmatpush1.bf16.msra.mxu0 0
      %4275 = vmatprep.subr.bf16.mxu0 0
      %4276 = vmatpush1.bf16.msra.mxu0 0
      %4277 = vmatprep.subr.bf16.mxu0 0
      %4278 = vmatpush1.bf16.msra.mxu0 0
      %4279 = vmatprep.subr.bf16.mxu0 0
      %4280 = vmatpush1.bf16.msra.mxu0 0
      %4281 = vmatprep.subr.bf16.mxu0 0
      %4282 = vmatpush1.bf16.msra.mxu0 0
      %4283 = vmatprep.mubr.bf16.mxu0 0
      %4284 = vmatmul.mubr.bf16.gmra.mrb[0].mxu0 %v4246
      %v4285 = vpop.f32.mrb[0].mxu0
      %v4286 = vadd.f32 0.0, %v4285
      %v4287 = vpop.f32.mrb[0].mxu0
      %v4288 = vpop.f32.mrb[0].mxu0
      %v4289 = vpop.f32.mrb[0].mxu0
      %4290 = vdwg.mxu0
      %4292 = vrot.lane.b32.xlu0 %v1121, 120
      %v4293 = vpop.permute.xlu0 %4292
      %v4295 = vsel %vm1128, %v3843, 0
      %v4298 = vsel %vm2076, %v4293, 0
      %4300 = vmatprep.subr.bf16.mxu0 0
      %4301 = vmatpush1.bf16.msra.mxu0 %v4298
      %4302 = vmatprep.subr.bf16.mxu0 0
      %4303 = vmatpush1.bf16.msra.mxu0 0
      %4304 = vmatprep.subr.bf16.mxu0 0
      %4305 = vmatpush1.bf16.msra.mxu0 0
      %4306 = vmatprep.subr.bf16.mxu0 0
      %4307 = vmatpush1.bf16.msra.mxu0 0
      %4308 = vmatprep.subr.bf16.mxu0 0
      %4309 = vmatpush1.bf16.msra.mxu0 0
      %4310 = vmatprep.subr.bf16.mxu0 0
      %4311 = vmatpush1.bf16.msra.mxu0 0
      %4312 = vmatprep.subr.bf16.mxu0 0
      %4313 = vmatpush1.bf16.msra.mxu0 0
      %4314 = vmatprep.subr.bf16.mxu0 0
      %4315 = vmatpush1.bf16.msra.mxu0 0
      %4316 = vmatprep.subr.bf16.mxu0 0
      %4317 = vmatpush1.bf16.msra.mxu0 0
      %4318 = vmatprep.subr.bf16.mxu0 0
      %4319 = vmatpush1.bf16.msra.mxu0 0
      %4320 = vmatprep.subr.bf16.mxu0 0
      %4321 = vmatpush1.bf16.msra.mxu0 0
      %4322 = vmatprep.subr.bf16.mxu0 0
      %4323 = vmatpush1.bf16.msra.mxu0 0
      %4324 = vmatprep.subr.bf16.mxu0 0
      %4325 = vmatpush1.bf16.msra.mxu0 0
      %4326 = vmatprep.subr.bf16.mxu0 0
      %4327 = vmatpush1.bf16.msra.mxu0 0
      %4328 = vmatprep.subr.bf16.mxu0 0
      %4329 = vmatpush1.bf16.msra.mxu0 0
      %4330 = vmatprep.subr.bf16.mxu0 0
      %4331 = vmatpush1.bf16.msra.mxu0 0
      %4332 = vmatprep.mubr.bf16.mxu0 0
      %4333 = vmatmul.mubr.bf16.gmra.mrb[0].mxu0 %v4295
      %v4334 = vpop.f32.mrb[0].mxu0
      %v4335 = vadd.f32 0.0, %v4334
      %v4336 = vpop.f32.mrb[0].mxu0
      %v4337 = vpop.f32.mrb[0].mxu0
      %v4338 = vpop.f32.mrb[0].mxu0
      %4339 = vdwg.mxu0
      %4341 = vrot.lane.b32.xlu0 %v1122, 120
      %v4342 = vpop.permute.xlu0 %4341
      %v4344 = vsel %vm1128, %v3844, 0
      %v4347 = vsel %vm2076, %v4342, 0
      %4349 = vmatprep.subr.bf16.mxu0 0
      %4350 = vmatpush1.bf16.msra.mxu0 %v4347
      %4351 = vmatprep.subr.bf16.mxu0 0
      %4352 = vmatpush1.bf16.msra.mxu0 0
      %4353 = vmatprep.subr.bf16.mxu0 0
      %4354 = vmatpush1.bf16.msra.mxu0 0
      %4355 = vmatprep.subr.bf16.mxu0 0
      %4356 = vmatpush1.bf16.msra.mxu0 0
      %4357 = vmatprep.subr.bf16.mxu0 0
      %4358 = vmatpush1.bf16.msra.mxu0 0
      %4359 = vmatprep.subr.bf16.mxu0 0
      %4360 = vmatpush1.bf16.msra.mxu0 0
      %4361 = vmatprep.subr.bf16.mxu0 0
      %4362 = vmatpush1.bf16.msra.mxu0 0
      %4363 = vmatprep.subr.bf16.mxu0 0
      %4364 = vmatpush1.bf16.msra.mxu0 0
      %4365 = vmatprep.subr.bf16.mxu0 0
      %4366 = vmatpush1.bf16.msra.mxu0 0
      %4367 = vmatprep.subr.bf16.mxu0 0
      %4368 = vmatpush1.bf16.msra.mxu0 0
      %4369 = vmatprep.subr.bf16.mxu0 0
      %4370 = vmatpush1.bf16.msra.mxu0 0
      %4371 = vmatprep.subr.bf16.mxu0 0
      %4372 = vmatpush1.bf16.msra.mxu0 0
      %4373 = vmatprep.subr.bf16.mxu0 0
      %4374 = vmatpush1.bf16.msra.mxu0 0
      %4375 = vmatprep.subr.bf16.mxu0 0
      %4376 = vmatpush1.bf16.msra.mxu0 0
      %4377 = vmatprep.subr.bf16.mxu0 0
      %4378 = vmatpush1.bf16.msra.mxu0 0
      %4379 = vmatprep.subr.bf16.mxu0 0
      %4380 = vmatpush1.bf16.msra.mxu0 0
      %4381 = vmatprep.mubr.bf16.mxu0 0
      %4382 = vmatmul.mubr.bf16.gmra.mrb[0].mxu0 %v4344
      %v4383 = vpop.f32.mrb[0].mxu0
      %v4384 = vadd.f32 0.0, %v4383
      %v4385 = vpop.f32.mrb[0].mxu0
      %v4386 = vpop.f32.mrb[0].mxu0
      %v4387 = vpop.f32.mrb[0].mxu0
      %4388 = vdwg.mxu0
      %4390 = vrot.lane.b32.xlu0 %v1123, 120
      %v4391 = vpop.permute.xlu0 %4390
      %v4393 = vsel %vm1128, %v3845, 0
      %v4396 = vsel %vm2076, %v4391, 0
      %4398 = vmatprep.subr.bf16.mxu0 0
      %4399 = vmatpush1.bf16.msra.mxu0 %v4396
      %4400 = vmatprep.subr.bf16.mxu0 0
      %4401 = vmatpush1.bf16.msra.mxu0 0
      %4402 = vmatprep.subr.bf16.mxu0 0
      %4403 = vmatpush1.bf16.msra.mxu0 0
      %4404 = vmatprep.subr.bf16.mxu0 0
      %4405 = vmatpush1.bf16.msra.mxu0 0
      %4406 = vmatprep.subr.bf16.mxu0 0
      %4407 = vmatpush1.bf16.msra.mxu0 0
      %4408 = vmatprep.subr.bf16.mxu0 0
      %4409 = vmatpush1.bf16.msra.mxu0 0
      %4410 = vmatprep.subr.bf16.mxu0 0
      %4411 = vmatpush1.bf16.msra.mxu0 0
      %4412 = vmatprep.subr.bf16.mxu0 0
      %4413 = vmatpush1.bf16.msra.mxu0 0
      %4414 = vmatprep.subr.bf16.mxu0 0
      %4415 = vmatpush1.bf16.msra.mxu0 0
      %4416 = vmatprep.subr.bf16.mxu0 0
      %4417 = vmatpush1.bf16.msra.mxu0 0
      %4418 = vmatprep.subr.bf16.mxu0 0
      %4419 = vmatpush1.bf16.msra.mxu0 0
      %4420 = vmatprep.subr.bf16.mxu0 0
      %4421 = vmatpush1.bf16.msra.mxu0 0
      %4422 = vmatprep.subr.bf16.mxu0 0
      %4423 = vmatpush1.bf16.msra.mxu0 0
      %4424 = vmatprep.subr.bf16.mxu0 0
      %4425 = vmatpush1.bf16.msra.mxu0 0
      %4426 = vmatprep.subr.bf16.mxu0 0
      %4427 = vmatpush1.bf16.msra.mxu0 0
      %4428 = vmatprep.subr.bf16.mxu0 0
      %4429 = vmatpush1.bf16.msra.mxu0 0
      %4430 = vmatprep.mubr.bf16.mxu0 0
      %4431 = vmatmul.mubr.bf16.gmra.mrb[0].mxu0 %v4393
      %v4432 = vpop.f32.mrb[0].mxu0
      %v4433 = vadd.f32 0.0, %v4432
      %v4434 = vpop.f32.mrb[0].mxu0
      %v4435 = vpop.f32.mrb[0].mxu0
      %v4436 = vpop.f32.mrb[0].mxu0
      %4437 = vdwg.mxu0
      %4439 = vrot.lane.b32.xlu0 %v1124, 120
      %v4440 = vpop.permute.xlu0 %4439
      %v4442 = vsel %vm1128, %v3846, 0
      %v4445 = vsel %vm2076, %v4440, 0
      %4447 = vmatprep.subr.bf16.mxu0 0
      %4448 = vmatpush1.bf16.msra.mxu0 %v4445
      %4449 = vmatprep.subr.bf16.mxu0 0
      %4450 = vmatpush1.bf16.msra.mxu0 0
      %4451 = vmatprep.subr.bf16.mxu0 0
      %4452 = vmatpush1.bf16.msra.mxu0 0
      %4453 = vmatprep.subr.bf16.mxu0 0
      %4454 = vmatpush1.bf16.msra.mxu0 0
      %4455 = vmatprep.subr.bf16.mxu0 0
      %4456 = vmatpush1.bf16.msra.mxu0 0
      %4457 = vmatprep.subr.bf16.mxu0 0
      %4458 = vmatpush1.bf16.msra.mxu0 0
      %4459 = vmatprep.subr.bf16.mxu0 0
      %4460 = vmatpush1.bf16.msra.mxu0 0
      %4461 = vmatprep.subr.bf16.mxu0 0
      %4462 = vmatpush1.bf16.msra.mxu0 0
      %4463 = vmatprep.subr.bf16.mxu0 0
      %4464 = vmatpush1.bf16.msra.mxu0 0
      %4465 = vmatprep.subr.bf16.mxu0 0
      %4466 = vmatpush1.bf16.msra.mxu0 0
      %4467 = vmatprep.subr.bf16.mxu0 0
      %4468 = vmatpush1.bf16.msra.mxu0 0
      %4469 = vmatprep.subr.bf16.mxu0 0
      %4470 = vmatpush1.bf16.msra.mxu0 0
      %4471 = vmatprep.subr.bf16.mxu0 0
      %4472 = vmatpush1.bf16.msra.mxu0 0
      %4473 = vmatprep.subr.bf16.mxu0 0
      %4474 = vmatpush1.bf16.msra.mxu0 0
      %4475 = vmatprep.subr.bf16.mxu0 0
      %4476 = vmatpush1.bf16.msra.mxu0 0
      %4477 = vmatprep.subr.bf16.mxu0 0
      %4478 = vmatpush1.bf16.msra.mxu0 0
      %4479 = vmatprep.mubr.bf16.mxu0 0
      %4480 = vmatmul.mubr.bf16.gmra.mrb[0].mxu0 %v4442
      %v4481 = vpop.f32.mrb[0].mxu0
      %v4482 = vadd.f32 0.0, %v4481
      %v4483 = vpop.f32.mrb[0].mxu0
      %v4484 = vpop.f32.mrb[0].mxu0
      %v4485 = vpop.f32.mrb[0].mxu0
      %4486 = vdwg.mxu0
      %4488 = vrot.lane.b32.xlu0 %v1125, 120
      %v4489 = vpop.permute.xlu0 %4488
      %v4491 = vsel %vm1128, %v3847, 0
      %v4494 = vsel %vm2076, %v4489, 0
      %4496 = vmatprep.subr.bf16.mxu0 0
      %4497 = vmatpush1.bf16.msra.mxu0 %v4494
      %4498 = vmatprep.subr.bf16.mxu0 0
      %4499 = vmatpush1.bf16.msra.mxu0 0
      %4500 = vmatprep.subr.bf16.mxu0 0
      %4501 = vmatpush1.bf16.msra.mxu0 0
      %4502 = vmatprep.subr.bf16.mxu0 0
      %4503 = vmatpush1.bf16.msra.mxu0 0
      %4504 = vmatprep.subr.bf16.mxu0 0
      %4505 = vmatpush1.bf16.msra.mxu0 0
      %4506 = vmatprep.subr.bf16.mxu0 0
      %4507 = vmatpush1.bf16.msra.mxu0 0
      %4508 = vmatprep.subr.bf16.mxu0 0
      %4509 = vmatpush1.bf16.msra.mxu0 0
      %4510 = vmatprep.subr.bf16.mxu0 0
      %4511 = vmatpush1.bf16.msra.mxu0 0
      %4512 = vmatprep.subr.bf16.mxu0 0
      %4513 = vmatpush1.bf16.msra.mxu0 0
      %4514 = vmatprep.subr.bf16.mxu0 0
      %4515 = vmatpush1.bf16.msra.mxu0 0
      %4516 = vmatprep.subr.bf16.mxu0 0
      %4517 = vmatpush1.bf16.msra.mxu0 0
      %4518 = vmatprep.subr.bf16.mxu0 0
      %4519 = vmatpush1.bf16.msra.mxu0 0
      %4520 = vmatprep.subr.bf16.mxu0 0
      %4521 = vmatpush1.bf16.msra.mxu0 0
      %4522 = vmatprep.subr.bf16.mxu0 0
      %4523 = vmatpush1.bf16.msra.mxu0 0
      %4524 = vmatprep.subr.bf16.mxu0 0
      %4525 = vmatpush1.bf16.msra.mxu0 0
      %4526 = vmatprep.subr.bf16.mxu0 0
      %4527 = vmatpush1.bf16.msra.mxu0 0
      %4528 = vmatprep.mubr.bf16.mxu0 0
      %4529 = vmatmul.mubr.bf16.gmra.mrb[0].mxu0 %v4491
      %v4530 = vpop.f32.mrb[0].mxu0
      %v4531 = vadd.f32 0.0, %v4530
      %v4532 = vpop.f32.mrb[0].mxu0
      %v4533 = vpop.f32.mrb[0].mxu0
      %v4534 = vpop.f32.mrb[0].mxu0
      %4535 = vdwg.mxu0
      %4537 = vrot.lane.b32.xlu0 %v1126, 120
      %v4538 = vpop.permute.xlu0 %4537
      %v4540 = vsel %vm1128, %v3848, 0
      %v4543 = vsel %vm2076, %v4538, 0
      %4545 = vmatprep.subr.bf16.mxu0 0
      %4546 = vmatpush1.bf16.msra.mxu0 %v4543
      %4547 = vmatprep.subr.bf16.mxu0 0
      %4548 = vmatpush1.bf16.msra.mxu0 0
      %4549 = vmatprep.subr.bf16.mxu0 0
      %4550 = vmatpush1.bf16.msra.mxu0 0
      %4551 = vmatprep.subr.bf16.mxu0 0
      %4552 = vmatpush1.bf16.msra.mxu0 0
      %4553 = vmatprep.subr.bf16.mxu0 0
      %4554 = vmatpush1.bf16.msra.mxu0 0
      %4555 = vmatprep.subr.bf16.mxu0 0
      %4556 = vmatpush1.bf16.msra.mxu0 0
      %4557 = vmatprep.subr.bf16.mxu0 0
      %4558 = vmatpush1.bf16.msra.mxu0 0
      %4559 = vmatprep.subr.bf16.mxu0 0
      %4560 = vmatpush1.bf16.msra.mxu0 0
      %4561 = vmatprep.subr.bf16.mxu0 0
      %4562 = vmatpush1.bf16.msra.mxu0 0
      %4563 = vmatprep.subr.bf16.mxu0 0
      %4564 = vmatpush1.bf16.msra.mxu0 0
      %4565 = vmatprep.subr.bf16.mxu0 0
      %4566 = vmatpush1.bf16.msra.mxu0 0
      %4567 = vmatprep.subr.bf16.mxu0 0
      %4568 = vmatpush1.bf16.msra.mxu0 0
      %4569 = vmatprep.subr.bf16.mxu0 0
      %4570 = vmatpush1.bf16.msra.mxu0 0
      %4571 = vmatprep.subr.bf16.mxu0 0
      %4572 = vmatpush1.bf16.msra.mxu0 0
      %4573 = vmatprep.subr.bf16.mxu0 0
      %4574 = vmatpush1.bf16.msra.mxu0 0
      %4575 = vmatprep.subr.bf16.mxu0 0
      %4576 = vmatpush1.bf16.msra.mxu0 0
      %4577 = vmatprep.mubr.bf16.mxu0 0
      %4578 = vmatmul.mubr.bf16.gmra.mrb[0].mxu0 %v4540
      %v4579 = vpop.f32.mrb[0].mxu0
      %v4580 = vadd.f32 0.0, %v4579
      %v4581 = vpop.f32.mrb[0].mxu0
      %v4582 = vpop.f32.mrb[0].mxu0
      %v4583 = vpop.f32.mrb[0].mxu0
      %4584 = vdwg.mxu0
      %4586 = vrot.lane.b32.xlu0 %v1127, 120
      %v4587 = vpop.permute.xlu0 %4586
      %v4589 = vsel %vm1128, %v3849, 0
      %v4592 = vsel %vm2076, %v4587, 0
      %4594 = vmatprep.subr.bf16.mxu0 0
      %4595 = vmatpush1.bf16.msra.mxu0 %v4592
      %4596 = vmatprep.subr.bf16.mxu0 0
      %4597 = vmatpush1.bf16.msra.mxu0 0
      %4598 = vmatprep.subr.bf16.mxu0 0
      %4599 = vmatpush1.bf16.msra.mxu0 0
      %4600 = vmatprep.subr.bf16.mxu0 0
      %4601 = vmatpush1.bf16.msra.mxu0 0
      %4602 = vmatprep.subr.bf16.mxu0 0
      %4603 = vmatpush1.bf16.msra.mxu0 0
      %4604 = vmatprep.subr.bf16.mxu0 0
      %4605 = vmatpush1.bf16.msra.mxu0 0
      %4606 = vmatprep.subr.bf16.mxu0 0
      %4607 = vmatpush1.bf16.msra.mxu0 0
      %4608 = vmatprep.subr.bf16.mxu0 0
      %4609 = vmatpush1.bf16.msra.mxu0 0
      %4610 = vmatprep.subr.bf16.mxu0 0
      %4611 = vmatpush1.bf16.msra.mxu0 0
      %4612 = vmatprep.subr.bf16.mxu0 0
      %4613 = vmatpush1.bf16.msra.mxu0 0
      %4614 = vmatprep.subr.bf16.mxu0 0
      %4615 = vmatpush1.bf16.msra.mxu0 0
      %4616 = vmatprep.subr.bf16.mxu0 0
      %4617 = vmatpush1.bf16.msra.mxu0 0
      %4618 = vmatprep.subr.bf16.mxu0 0
      %4619 = vmatpush1.bf16.msra.mxu0 0
      %4620 = vmatprep.subr.bf16.mxu0 0
      %4621 = vmatpush1.bf16.msra.mxu0 0
      %4622 = vmatprep.subr.bf16.mxu0 0
      %4623 = vmatpush1.bf16.msra.mxu0 0
      %4624 = vmatprep.subr.bf16.mxu0 0
      %4625 = vmatpush1.bf16.msra.mxu0 0
      %4626 = vmatprep.mubr.bf16.mxu0 0
      %4627 = vmatmul.mubr.bf16.gmra.mrb[0].mxu0 %v4589
      %v4628 = vpop.f32.mrb[0].mxu0
      %v4629 = vadd.f32 0.0, %v4628
      %v4630 = vpop.f32.mrb[0].mxu0
      %v4631 = vpop.f32.mrb[0].mxu0
      %v4632 = vpop.f32.mrb[0].mxu0
      %4633 = vdwg.mxu0
      %4634 = vrot.lane.b32.xlu0 %v1080, 112
      %v4635 = vpop.permute.xlu0 %4634
      %4636 = vrot.lane.b32.xlu0 %v1096, 112
      %v4637 = vpop.permute.xlu0 %4636
      %v4639 = vsel %vm1128, %v4635, 0
      %v4642 = vsel %vm1128, %v4637, 0
      %4644 = vmatprep.subr.bf16.mxu0 0
      %4645 = vmatpush1.bf16.xpose.msra.mxu0 %v4642
      %4646 = vmatprep.subr.bf16.mxu0 0
      %4647 = vmatpush1.bf16.xpose.msra.mxu0 0
      %4648 = vmatprep.subr.bf16.mxu0 0
      %4649 = vmatpush1.bf16.xpose.msra.mxu0 0
      %4650 = vmatprep.subr.bf16.mxu0 0
      %4651 = vmatpush1.bf16.xpose.msra.mxu0 0
      %4652 = vmatprep.subr.bf16.mxu0 0
      %4653 = vmatpush1.bf16.xpose.msra.mxu0 0
      %4654 = vmatprep.subr.bf16.mxu0 0
      %4655 = vmatpush1.bf16.xpose.msra.mxu0 0
      %4656 = vmatprep.subr.bf16.mxu0 0
      %4657 = vmatpush1.bf16.xpose.msra.mxu0 0
      %4658 = vmatprep.subr.bf16.mxu0 0
      %4659 = vmatpush1.bf16.xpose.msra.mxu0 0
      %4660 = vmatprep.subr.bf16.mxu0 0
      %4661 = vmatpush1.bf16.xpose.msra.mxu0 0
      %4662 = vmatprep.subr.bf16.mxu0 0
      %4663 = vmatpush1.bf16.xpose.msra.mxu0 0
      %4664 = vmatprep.subr.bf16.mxu0 0
      %4665 = vmatpush1.bf16.xpose.msra.mxu0 0
      %4666 = vmatprep.subr.bf16.mxu0 0
      %4667 = vmatpush1.bf16.xpose.msra.mxu0 0
      %4668 = vmatprep.subr.bf16.mxu0 0
      %4669 = vmatpush1.bf16.xpose.msra.mxu0 0
      %4670 = vmatprep.subr.bf16.mxu0 0
      %4671 = vmatpush1.bf16.xpose.msra.mxu0 0
      %4672 = vmatprep.subr.bf16.mxu0 0
      %4673 = vmatpush1.bf16.xpose.msra.mxu0 0
      %4674 = vmatprep.subr.bf16.mxu0 0
      %4675 = vmatpush1.bf16.xpose.msra.mxu0 0
      %4676 = vmatprep.mubr.bf16.mxu0 0
      %4677 = vmatmul.mubr.bf16.gmra.mrb[0].mxu0 %v4639
      %v4678 = vpop.f32.mrb[0].mxu0
      %v4679 = vadd.f32 0.0, %v4678
      %v4680 = vpop.f32.mrb[0].mxu0
      %v4681 = vpop.f32.mrb[0].mxu0
      %v4682 = vpop.f32.mrb[0].mxu0
      %4683 = vdwg.mxu0
      %4684 = vrot.lane.b32.xlu0 %v1081, 112
      %v4685 = vpop.permute.xlu0 %4684
      %4686 = vrot.lane.b32.xlu0 %v1097, 112
      %v4687 = vpop.permute.xlu0 %4686
      %v4689 = vsel %vm1128, %v4685, 0
      %v4692 = vsel %vm1128, %v4687, 0
      %4694 = vmatprep.subr.bf16.mxu0 0
      %4695 = vmatpush1.bf16.xpose.msra.mxu0 %v4692
      %4696 = vmatprep.subr.bf16.mxu0 0
      %4697 = vmatpush1.bf16.xpose.msra.mxu0 0
      %4698 = vmatprep.subr.bf16.mxu0 0
      %4699 = vmatpush1.bf16.xpose.msra.mxu0 0
      %4700 = vmatprep.subr.bf16.mxu0 0
      %4701 = vmatpush1.bf16.xpose.msra.mxu0 0
      %4702 = vmatprep.subr.bf16.mxu0 0
      %4703 = vmatpush1.bf16.xpose.msra.mxu0 0
      %4704 = vmatprep.subr.bf16.mxu0 0
      %4705 = vmatpush1.bf16.xpose.msra.mxu0 0
      %4706 = vmatprep.subr.bf16.mxu0 0
      %4707 = vmatpush1.bf16.xpose.msra.mxu0 0
      %4708 = vmatprep.subr.bf16.mxu0 0
      %4709 = vmatpush1.bf16.xpose.msra.mxu0 0
      %4710 = vmatprep.subr.bf16.mxu0 0
      %4711 = vmatpush1.bf16.xpose.msra.mxu0 0
      %4712 = vmatprep.subr.bf16.mxu0 0
      %4713 = vmatpush1.bf16.xpose.msra.mxu0 0
      %4714 = vmatprep.subr.bf16.mxu0 0
      %4715 = vmatpush1.bf16.xpose.msra.mxu0 0
      %4716 = vmatprep.subr.bf16.mxu0 0
      %4717 = vmatpush1.bf16.xpose.msra.mxu0 0
      %4718 = vmatprep.subr.bf16.mxu0 0
      %4719 = vmatpush1.bf16.xpose.msra.mxu0 0
      %4720 = vmatprep.subr.bf16.mxu0 0
      %4721 = vmatpush1.bf16.xpose.msra.mxu0 0
      %4722 = vmatprep.subr.bf16.mxu0 0
      %4723 = vmatpush1.bf16.xpose.msra.mxu0 0
      %4724 = vmatprep.subr.bf16.mxu0 0
      %4725 = vmatpush1.bf16.xpose.msra.mxu0 0
      %4726 = vmatprep.mubr.bf16.mxu0 0
      %4727 = vmatmul.mubr.bf16.gmra.mrb[0].mxu0 %v4689
      %v4728 = vpop.f32.mrb[0].mxu0
      %v4729 = vadd.f32 0.0, %v4728
      %v4730 = vpop.f32.mrb[0].mxu0
      %v4731 = vpop.f32.mrb[0].mxu0
      %v4732 = vpop.f32.mrb[0].mxu0
      %4733 = vdwg.mxu0
      %4734 = vrot.lane.b32.xlu0 %v1082, 112
      %v4735 = vpop.permute.xlu0 %4734
      %4736 = vrot.lane.b32.xlu0 %v1098, 112
      %v4737 = vpop.permute.xlu0 %4736
      %v4739 = vsel %vm1128, %v4735, 0
      %v4742 = vsel %vm1128, %v4737, 0
      %4744 = vmatprep.subr.bf16.mxu0 0
      %4745 = vmatpush1.bf16.xpose.msra.mxu0 %v4742
      %4746 = vmatprep.subr.bf16.mxu0 0
      %4747 = vmatpush1.bf16.xpose.msra.mxu0 0
      %4748 = vmatprep.subr.bf16.mxu0 0
      %4749 = vmatpush1.bf16.xpose.msra.mxu0 0
      %4750 = vmatprep.subr.bf16.mxu0 0
      %4751 = vmatpush1.bf16.xpose.msra.mxu0 0
      %4752 = vmatprep.subr.bf16.mxu0 0
      %4753 = vmatpush1.bf16.xpose.msra.mxu0 0
      %4754 = vmatprep.subr.bf16.mxu0 0
      %4755 = vmatpush1.bf16.xpose.msra.mxu0 0
      %4756 = vmatprep.subr.bf16.mxu0 0
      %4757 = vmatpush1.bf16.xpose.msra.mxu0 0
      %4758 = vmatprep.subr.bf16.mxu0 0
      %4759 = vmatpush1.bf16.xpose.msra.mxu0 0
      %4760 = vmatprep.subr.bf16.mxu0 0
      %4761 = vmatpush1.bf16.xpose.msra.mxu0 0
      %4762 = vmatprep.subr.bf16.mxu0 0
      %4763 = vmatpush1.bf16.xpose.msra.mxu0 0
      %4764 = vmatprep.subr.bf16.mxu0 0
      %4765 = vmatpush1.bf16.xpose.msra.mxu0 0
      %4766 = vmatprep.subr.bf16.mxu0 0
      %4767 = vmatpush1.bf16.xpose.msra.mxu0 0
      %4768 = vmatprep.subr.bf16.mxu0 0
      %4769 = vmatpush1.bf16.xpose.msra.mxu0 0
      %4770 = vmatprep.subr.bf16.mxu0 0
      %4771 = vmatpush1.bf16.xpose.msra.mxu0 0
      %4772 = vmatprep.subr.bf16.mxu0 0
      %4773 = vmatpush1.bf16.xpose.msra.mxu0 0
      %4774 = vmatprep.subr.bf16.mxu0 0
      %4775 = vmatpush1.bf16.xpose.msra.mxu0 0
      %4776 = vmatprep.mubr.bf16.mxu0 0
      %4777 = vmatmul.mubr.bf16.gmra.mrb[0].mxu0 %v4739
      %v4778 = vpop.f32.mrb[0].mxu0
      %v4779 = vadd.f32 0.0, %v4778
      %v4780 = vpop.f32.mrb[0].mxu0
      %v4781 = vpop.f32.mrb[0].mxu0
      %v4782 = vpop.f32.mrb[0].mxu0
      %4783 = vdwg.mxu0
      %4784 = vrot.lane.b32.xlu0 %v1083, 112
      %v4785 = vpop.permute.xlu0 %4784
      %4786 = vrot.lane.b32.xlu0 %v1099, 112
      %v4787 = vpop.permute.xlu0 %4786
      %v4789 = vsel %vm1128, %v4785, 0
      %v4792 = vsel %vm1128, %v4787, 0
      %4794 = vmatprep.subr.bf16.mxu0 0
      %4795 = vmatpush1.bf16.xpose.msra.mxu0 %v4792
      %4796 = vmatprep.subr.bf16.mxu0 0
      %4797 = vmatpush1.bf16.xpose.msra.mxu0 0
      %4798 = vmatprep.subr.bf16.mxu0 0
      %4799 = vmatpush1.bf16.xpose.msra.mxu0 0
      %4800 = vmatprep.subr.bf16.mxu0 0
      %4801 = vmatpush1.bf16.xpose.msra.mxu0 0
      %4802 = vmatprep.subr.bf16.mxu0 0
      %4803 = vmatpush1.bf16.xpose.msra.mxu0 0
      %4804 = vmatprep.subr.bf16.mxu0 0
      %4805 = vmatpush1.bf16.xpose.msra.mxu0 0
      %4806 = vmatprep.subr.bf16.mxu0 0
      %4807 = vmatpush1.bf16.xpose.msra.mxu0 0
      %4808 = vmatprep.subr.bf16.mxu0 0
      %4809 = vmatpush1.bf16.xpose.msra.mxu0 0
      %4810 = vmatprep.subr.bf16.mxu0 0
      %4811 = vmatpush1.bf16.xpose.msra.mxu0 0
      %4812 = vmatprep.subr.bf16.mxu0 0
      %4813 = vmatpush1.bf16.xpose.msra.mxu0 0
      %4814 = vmatprep.subr.bf16.mxu0 0
      %4815 = vmatpush1.bf16.xpose.msra.mxu0 0
      %4816 = vmatprep.subr.bf16.mxu0 0
      %4817 = vmatpush1.bf16.xpose.msra.mxu0 0
      %4818 = vmatprep.subr.bf16.mxu0 0
      %4819 = vmatpush1.bf16.xpose.msra.mxu0 0
      %4820 = vmatprep.subr.bf16.mxu0 0
      %4821 = vmatpush1.bf16.xpose.msra.mxu0 0
      %4822 = vmatprep.subr.bf16.mxu0 0
      %4823 = vmatpush1.bf16.xpose.msra.mxu0 0
      %4824 = vmatprep.subr.bf16.mxu0 0
      %4825 = vmatpush1.bf16.xpose.msra.mxu0 0
      %4826 = vmatprep.mubr.bf16.mxu0 0
      %4827 = vmatmul.mubr.bf16.gmra.mrb[0].mxu0 %v4789
      %v4828 = vpop.f32.mrb[0].mxu0
      %v4829 = vadd.f32 0.0, %v4828
      %v4830 = vpop.f32.mrb[0].mxu0
      %v4831 = vpop.f32.mrb[0].mxu0
      %v4832 = vpop.f32.mrb[0].mxu0
      %4833 = vdwg.mxu0
      %4834 = vrot.lane.b32.xlu0 %v1084, 112
      %v4835 = vpop.permute.xlu0 %4834
      %4836 = vrot.lane.b32.xlu0 %v1100, 112
      %v4837 = vpop.permute.xlu0 %4836
      %v4839 = vsel %vm1128, %v4835, 0
      %v4842 = vsel %vm1128, %v4837, 0
      %4844 = vmatprep.subr.bf16.mxu0 0
      %4845 = vmatpush1.bf16.xpose.msra.mxu0 %v4842
      %4846 = vmatprep.subr.bf16.mxu0 0
      %4847 = vmatpush1.bf16.xpose.msra.mxu0 0
      %4848 = vmatprep.subr.bf16.mxu0 0
      %4849 = vmatpush1.bf16.xpose.msra.mxu0 0
      %4850 = vmatprep.subr.bf16.mxu0 0
      %4851 = vmatpush1.bf16.xpose.msra.mxu0 0
      %4852 = vmatprep.subr.bf16.mxu0 0
      %4853 = vmatpush1.bf16.xpose.msra.mxu0 0
      %4854 = vmatprep.subr.bf16.mxu0 0
      %4855 = vmatpush1.bf16.xpose.msra.mxu0 0
      %4856 = vmatprep.subr.bf16.mxu0 0
      %4857 = vmatpush1.bf16.xpose.msra.mxu0 0
      %4858 = vmatprep.subr.bf16.mxu0 0
      %4859 = vmatpush1.bf16.xpose.msra.mxu0 0
      %4860 = vmatprep.subr.bf16.mxu0 0
      %4861 = vmatpush1.bf16.xpose.msra.mxu0 0
      %4862 = vmatprep.subr.bf16.mxu0 0
      %4863 = vmatpush1.bf16.xpose.msra.mxu0 0
      %4864 = vmatprep.subr.bf16.mxu0 0
      %4865 = vmatpush1.bf16.xpose.msra.mxu0 0
      %4866 = vmatprep.subr.bf16.mxu0 0
      %4867 = vmatpush1.bf16.xpose.msra.mxu0 0
      %4868 = vmatprep.subr.bf16.mxu0 0
      %4869 = vmatpush1.bf16.xpose.msra.mxu0 0
      %4870 = vmatprep.subr.bf16.mxu0 0
      %4871 = vmatpush1.bf16.xpose.msra.mxu0 0
      %4872 = vmatprep.subr.bf16.mxu0 0
      %4873 = vmatpush1.bf16.xpose.msra.mxu0 0
      %4874 = vmatprep.subr.bf16.mxu0 0
      %4875 = vmatpush1.bf16.xpose.msra.mxu0 0
      %4876 = vmatprep.mubr.bf16.mxu0 0
      %4877 = vmatmul.mubr.bf16.gmra.mrb[0].mxu0 %v4839
      %v4878 = vpop.f32.mrb[0].mxu0
      %v4879 = vadd.f32 0.0, %v4878
      %v4880 = vpop.f32.mrb[0].mxu0
      %v4881 = vpop.f32.mrb[0].mxu0
      %v4882 = vpop.f32.mrb[0].mxu0
      %4883 = vdwg.mxu0
      %4884 = vrot.lane.b32.xlu0 %v1085, 112
      %v4885 = vpop.permute.xlu0 %4884
      %4886 = vrot.lane.b32.xlu0 %v1101, 112
      %v4887 = vpop.permute.xlu0 %4886
      %v4889 = vsel %vm1128, %v4885, 0
      %v4892 = vsel %vm1128, %v4887, 0
      %4894 = vmatprep.subr.bf16.mxu0 0
      %4895 = vmatpush1.bf16.xpose.msra.mxu0 %v4892
      %4896 = vmatprep.subr.bf16.mxu0 0
      %4897 = vmatpush1.bf16.xpose.msra.mxu0 0
      %4898 = vmatprep.subr.bf16.mxu0 0
      %4899 = vmatpush1.bf16.xpose.msra.mxu0 0
      %4900 = vmatprep.subr.bf16.mxu0 0
      %4901 = vmatpush1.bf16.xpose.msra.mxu0 0
      %4902 = vmatprep.subr.bf16.mxu0 0
      %4903 = vmatpush1.bf16.xpose.msra.mxu0 0
      %4904 = vmatprep.subr.bf16.mxu0 0
      %4905 = vmatpush1.bf16.xpose.msra.mxu0 0
      %4906 = vmatprep.subr.bf16.mxu0 0
      %4907 = vmatpush1.bf16.xpose.msra.mxu0 0
      %4908 = vmatprep.subr.bf16.mxu0 0
      %4909 = vmatpush1.bf16.xpose.msra.mxu0 0
      %4910 = vmatprep.subr.bf16.mxu0 0
      %4911 = vmatpush1.bf16.xpose.msra.mxu0 0
      %4912 = vmatprep.subr.bf16.mxu0 0
      %4913 = vmatpush1.bf16.xpose.msra.mxu0 0
      %4914 = vmatprep.subr.bf16.mxu0 0
      %4915 = vmatpush1.bf16.xpose.msra.mxu0 0
      %4916 = vmatprep.subr.bf16.mxu0 0
      %4917 = vmatpush1.bf16.xpose.msra.mxu0 0
      %4918 = vmatprep.subr.bf16.mxu0 0
      %4919 = vmatpush1.bf16.xpose.msra.mxu0 0
      %4920 = vmatprep.subr.bf16.mxu0 0
      %4921 = vmatpush1.bf16.xpose.msra.mxu0 0
      %4922 = vmatprep.subr.bf16.mxu0 0
      %4923 = vmatpush1.bf16.xpose.msra.mxu0 0
      %4924 = vmatprep.subr.bf16.mxu0 0
      %4925 = vmatpush1.bf16.xpose.msra.mxu0 0
      %4926 = vmatprep.mubr.bf16.mxu0 0
      %4927 = vmatmul.mubr.bf16.gmra.mrb[0].mxu0 %v4889
      %v4928 = vpop.f32.mrb[0].mxu0
      %v4929 = vadd.f32 0.0, %v4928
      %v4930 = vpop.f32.mrb[0].mxu0
      %v4931 = vpop.f32.mrb[0].mxu0
      %v4932 = vpop.f32.mrb[0].mxu0
      %4933 = vdwg.mxu0
      %4934 = vrot.lane.b32.xlu0 %v1086, 112
      %v4935 = vpop.permute.xlu0 %4934
      %4936 = vrot.lane.b32.xlu0 %v1102, 112
      %v4937 = vpop.permute.xlu0 %4936
      %v4939 = vsel %vm1128, %v4935, 0
      %v4942 = vsel %vm1128, %v4937, 0
      %4944 = vmatprep.subr.bf16.mxu0 0
      %4945 = vmatpush1.bf16.xpose.msra.mxu0 %v4942
      %4946 = vmatprep.subr.bf16.mxu0 0
      %4947 = vmatpush1.bf16.xpose.msra.mxu0 0
      %4948 = vmatprep.subr.bf16.mxu0 0
      %4949 = vmatpush1.bf16.xpose.msra.mxu0 0
      %4950 = vmatprep.subr.bf16.mxu0 0
      %4951 = vmatpush1.bf16.xpose.msra.mxu0 0
      %4952 = vmatprep.subr.bf16.mxu0 0
      %4953 = vmatpush1.bf16.xpose.msra.mxu0 0
      %4954 = vmatprep.subr.bf16.mxu0 0
      %4955 = vmatpush1.bf16.xpose.msra.mxu0 0
      %4956 = vmatprep.subr.bf16.mxu0 0
      %4957 = vmatpush1.bf16.xpose.msra.mxu0 0
      %4958 = vmatprep.subr.bf16.mxu0 0
      %4959 = vmatpush1.bf16.xpose.msra.mxu0 0
      %4960 = vmatprep.subr.bf16.mxu0 0
      %4961 = vmatpush1.bf16.xpose.msra.mxu0 0
      %4962 = vmatprep.subr.bf16.mxu0 0
      %4963 = vmatpush1.bf16.xpose.msra.mxu0 0
      %4964 = vmatprep.subr.bf16.mxu0 0
      %4965 = vmatpush1.bf16.xpose.msra.mxu0 0
      %4966 = vmatprep.subr.bf16.mxu0 0
      %4967 = vmatpush1.bf16.xpose.msra.mxu0 0
      %4968 = vmatprep.subr.bf16.mxu0 0
      %4969 = vmatpush1.bf16.xpose.msra.mxu0 0
      %4970 = vmatprep.subr.bf16.mxu0 0
      %4971 = vmatpush1.bf16.xpose.msra.mxu0 0
      %4972 = vmatprep.subr.bf16.mxu0 0
      %4973 = vmatpush1.bf16.xpose.msra.mxu0 0
      %4974 = vmatprep.subr.bf16.mxu0 0
      %4975 = vmatpush1.bf16.xpose.msra.mxu0 0
      %4976 = vmatprep.mubr.bf16.mxu0 0
      %4977 = vmatmul.mubr.bf16.gmra.mrb[0].mxu0 %v4939
      %v4978 = vpop.f32.mrb[0].mxu0
      %v4979 = vadd.f32 0.0, %v4978
      %v4980 = vpop.f32.mrb[0].mxu0
      %v4981 = vpop.f32.mrb[0].mxu0
      %v4982 = vpop.f32.mrb[0].mxu0
      %4983 = vdwg.mxu0
      %4984 = vrot.lane.b32.xlu0 %v1087, 112
      %v4985 = vpop.permute.xlu0 %4984
      %4986 = vrot.lane.b32.xlu0 %v1103, 112
      %v4987 = vpop.permute.xlu0 %4986
      %v4989 = vsel %vm1128, %v4985, 0
      %v4992 = vsel %vm1128, %v4987, 0
      %4994 = vmatprep.subr.bf16.mxu0 0
      %4995 = vmatpush1.bf16.xpose.msra.mxu0 %v4992
      %4996 = vmatprep.subr.bf16.mxu0 0
      %4997 = vmatpush1.bf16.xpose.msra.mxu0 0
      %4998 = vmatprep.subr.bf16.mxu0 0
      %4999 = vmatpush1.bf16.xpose.msra.mxu0 0
      %5000 = vmatprep.subr.bf16.mxu0 0
      %5001 = vmatpush1.bf16.xpose.msra.mxu0 0
      %5002 = vmatprep.subr.bf16.mxu0 0
      %5003 = vmatpush1.bf16.xpose.msra.mxu0 0
      %5004 = vmatprep.subr.bf16.mxu0 0
      %5005 = vmatpush1.bf16.xpose.msra.mxu0 0
      %5006 = vmatprep.subr.bf16.mxu0 0
      %5007 = vmatpush1.bf16.xpose.msra.mxu0 0
      %5008 = vmatprep.subr.bf16.mxu0 0
      %5009 = vmatpush1.bf16.xpose.msra.mxu0 0
      %5010 = vmatprep.subr.bf16.mxu0 0
      %5011 = vmatpush1.bf16.xpose.msra.mxu0 0
      %5012 = vmatprep.subr.bf16.mxu0 0
      %5013 = vmatpush1.bf16.xpose.msra.mxu0 0
      %5014 = vmatprep.subr.bf16.mxu0 0
      %5015 = vmatpush1.bf16.xpose.msra.mxu0 0
      %5016 = vmatprep.subr.bf16.mxu0 0
      %5017 = vmatpush1.bf16.xpose.msra.mxu0 0
      %5018 = vmatprep.subr.bf16.mxu0 0
      %5019 = vmatpush1.bf16.xpose.msra.mxu0 0
      %5020 = vmatprep.subr.bf16.mxu0 0
      %5021 = vmatpush1.bf16.xpose.msra.mxu0 0
      %5022 = vmatprep.subr.bf16.mxu0 0
      %5023 = vmatpush1.bf16.xpose.msra.mxu0 0
      %5024 = vmatprep.subr.bf16.mxu0 0
      %5025 = vmatpush1.bf16.xpose.msra.mxu0 0
      %5026 = vmatprep.mubr.bf16.mxu0 0
      %5027 = vmatmul.mubr.bf16.gmra.mrb[0].mxu0 %v4989
      %v5028 = vpop.f32.mrb[0].mxu0
      %v5029 = vadd.f32 0.0, %v5028
      %v5030 = vpop.f32.mrb[0].mxu0
      %v5031 = vpop.f32.mrb[0].mxu0
      %v5032 = vpop.f32.mrb[0].mxu0
      %5033 = vdwg.mxu0
      %5034 = vrot.lane.b32.xlu0 %v1088, 112
      %v5035 = vpop.permute.xlu0 %5034
      %5036 = vrot.lane.b32.xlu0 %v1104, 112
      %v5037 = vpop.permute.xlu0 %5036
      %v5039 = vsel %vm1128, %v5035, 0
      %v5042 = vsel %vm1128, %v5037, 0
      %5044 = vmatprep.subr.bf16.mxu0 0
      %5045 = vmatpush1.bf16.xpose.msra.mxu0 %v5042
      %5046 = vmatprep.subr.bf16.mxu0 0
      %5047 = vmatpush1.bf16.xpose.msra.mxu0 0
      %5048 = vmatprep.subr.bf16.mxu0 0
      %5049 = vmatpush1.bf16.xpose.msra.mxu0 0
      %5050 = vmatprep.subr.bf16.mxu0 0
      %5051 = vmatpush1.bf16.xpose.msra.mxu0 0
      %5052 = vmatprep.subr.bf16.mxu0 0
      %5053 = vmatpush1.bf16.xpose.msra.mxu0 0
      %5054 = vmatprep.subr.bf16.mxu0 0
      %5055 = vmatpush1.bf16.xpose.msra.mxu0 0
      %5056 = vmatprep.subr.bf16.mxu0 0
      %5057 = vmatpush1.bf16.xpose.msra.mxu0 0
      %5058 = vmatprep.subr.bf16.mxu0 0
      %5059 = vmatpush1.bf16.xpose.msra.mxu0 0
      %5060 = vmatprep.subr.bf16.mxu0 0
      %5061 = vmatpush1.bf16.xpose.msra.mxu0 0
      %5062 = vmatprep.subr.bf16.mxu0 0
      %5063 = vmatpush1.bf16.xpose.msra.mxu0 0
      %5064 = vmatprep.subr.bf16.mxu0 0
      %5065 = vmatpush1.bf16.xpose.msra.mxu0 0
      %5066 = vmatprep.subr.bf16.mxu0 0
      %5067 = vmatpush1.bf16.xpose.msra.mxu0 0
      %5068 = vmatprep.subr.bf16.mxu0 0
      %5069 = vmatpush1.bf16.xpose.msra.mxu0 0
      %5070 = vmatprep.subr.bf16.mxu0 0
      %5071 = vmatpush1.bf16.xpose.msra.mxu0 0
      %5072 = vmatprep.subr.bf16.mxu0 0
      %5073 = vmatpush1.bf16.xpose.msra.mxu0 0
      %5074 = vmatprep.subr.bf16.mxu0 0
      %5075 = vmatpush1.bf16.xpose.msra.mxu0 0
      %5076 = vmatprep.mubr.bf16.mxu0 0
      %5077 = vmatmul.mubr.bf16.gmra.mrb[0].mxu0 %v5039
      %v5078 = vpop.f32.mrb[0].mxu0
      %v5079 = vadd.f32 0.0, %v5078
      %v5080 = vpop.f32.mrb[0].mxu0
      %v5081 = vpop.f32.mrb[0].mxu0
      %v5082 = vpop.f32.mrb[0].mxu0
      %5083 = vdwg.mxu0
      %5084 = vrot.lane.b32.xlu0 %v1089, 112
      %v5085 = vpop.permute.xlu0 %5084
      %5086 = vrot.lane.b32.xlu0 %v1105, 112
      %v5087 = vpop.permute.xlu0 %5086
      %v5089 = vsel %vm1128, %v5085, 0
      %v5092 = vsel %vm1128, %v5087, 0
      %5094 = vmatprep.subr.bf16.mxu0 0
      %5095 = vmatpush1.bf16.xpose.msra.mxu0 %v5092
      %5096 = vmatprep.subr.bf16.mxu0 0
      %5097 = vmatpush1.bf16.xpose.msra.mxu0 0
      %5098 = vmatprep.subr.bf16.mxu0 0
      %5099 = vmatpush1.bf16.xpose.msra.mxu0 0
      %5100 = vmatprep.subr.bf16.mxu0 0
      %5101 = vmatpush1.bf16.xpose.msra.mxu0 0
      %5102 = vmatprep.subr.bf16.mxu0 0
      %5103 = vmatpush1.bf16.xpose.msra.mxu0 0
      %5104 = vmatprep.subr.bf16.mxu0 0
      %5105 = vmatpush1.bf16.xpose.msra.mxu0 0
      %5106 = vmatprep.subr.bf16.mxu0 0
      %5107 = vmatpush1.bf16.xpose.msra.mxu0 0
      %5108 = vmatprep.subr.bf16.mxu0 0
      %5109 = vmatpush1.bf16.xpose.msra.mxu0 0
      %5110 = vmatprep.subr.bf16.mxu0 0
      %5111 = vmatpush1.bf16.xpose.msra.mxu0 0
      %5112 = vmatprep.subr.bf16.mxu0 0
      %5113 = vmatpush1.bf16.xpose.msra.mxu0 0
      %5114 = vmatprep.subr.bf16.mxu0 0
      %5115 = vmatpush1.bf16.xpose.msra.mxu0 0
      %5116 = vmatprep.subr.bf16.mxu0 0
      %5117 = vmatpush1.bf16.xpose.msra.mxu0 0
      %5118 = vmatprep.subr.bf16.mxu0 0
      %5119 = vmatpush1.bf16.xpose.msra.mxu0 0
      %5120 = vmatprep.subr.bf16.mxu0 0
      %5121 = vmatpush1.bf16.xpose.msra.mxu0 0
      %5122 = vmatprep.subr.bf16.mxu0 0
      %5123 = vmatpush1.bf16.xpose.msra.mxu0 0
      %5124 = vmatprep.subr.bf16.mxu0 0
      %5125 = vmatpush1.bf16.xpose.msra.mxu0 0
      %5126 = vmatprep.mubr.bf16.mxu0 0
      %5127 = vmatmul.mubr.bf16.gmra.mrb[0].mxu0 %v5089
      %v5128 = vpop.f32.mrb[0].mxu0
      %v5129 = vadd.f32 0.0, %v5128
      %v5130 = vpop.f32.mrb[0].mxu0
      %v5131 = vpop.f32.mrb[0].mxu0
      %v5132 = vpop.f32.mrb[0].mxu0
      %5133 = vdwg.mxu0
      %5134 = vrot.lane.b32.xlu0 %v1090, 112
      %v5135 = vpop.permute.xlu0 %5134
      %5136 = vrot.lane.b32.xlu0 %v1106, 112
      %v5137 = vpop.permute.xlu0 %5136
      %v5139 = vsel %vm1128, %v5135, 0
      %v5142 = vsel %vm1128, %v5137, 0
      %5144 = vmatprep.subr.bf16.mxu0 0
      %5145 = vmatpush1.bf16.xpose.msra.mxu0 %v5142
      %5146 = vmatprep.subr.bf16.mxu0 0
      %5147 = vmatpush1.bf16.xpose.msra.mxu0 0
      %5148 = vmatprep.subr.bf16.mxu0 0
      %5149 = vmatpush1.bf16.xpose.msra.mxu0 0
      %5150 = vmatprep.subr.bf16.mxu0 0
      %5151 = vmatpush1.bf16.xpose.msra.mxu0 0
      %5152 = vmatprep.subr.bf16.mxu0 0
      %5153 = vmatpush1.bf16.xpose.msra.mxu0 0
      %5154 = vmatprep.subr.bf16.mxu0 0
      %5155 = vmatpush1.bf16.xpose.msra.mxu0 0
      %5156 = vmatprep.subr.bf16.mxu0 0
      %5157 = vmatpush1.bf16.xpose.msra.mxu0 0
      %5158 = vmatprep.subr.bf16.mxu0 0
      %5159 = vmatpush1.bf16.xpose.msra.mxu0 0
      %5160 = vmatprep.subr.bf16.mxu0 0
      %5161 = vmatpush1.bf16.xpose.msra.mxu0 0
      %5162 = vmatprep.subr.bf16.mxu0 0
      %5163 = vmatpush1.bf16.xpose.msra.mxu0 0
      %5164 = vmatprep.subr.bf16.mxu0 0
      %5165 = vmatpush1.bf16.xpose.msra.mxu0 0
      %5166 = vmatprep.subr.bf16.mxu0 0
      %5167 = vmatpush1.bf16.xpose.msra.mxu0 0
      %5168 = vmatprep.subr.bf16.mxu0 0
      %5169 = vmatpush1.bf16.xpose.msra.mxu0 0
      %5170 = vmatprep.subr.bf16.mxu0 0
      %5171 = vmatpush1.bf16.xpose.msra.mxu0 0
      %5172 = vmatprep.subr.bf16.mxu0 0
      %5173 = vmatpush1.bf16.xpose.msra.mxu0 0
      %5174 = vmatprep.subr.bf16.mxu0 0
      %5175 = vmatpush1.bf16.xpose.msra.mxu0 0
      %5176 = vmatprep.mubr.bf16.mxu0 0
      %5177 = vmatmul.mubr.bf16.gmra.mrb[0].mxu0 %v5139
      %v5178 = vpop.f32.mrb[0].mxu0
      %v5179 = vadd.f32 0.0, %v5178
      %v5180 = vpop.f32.mrb[0].mxu0
      %v5181 = vpop.f32.mrb[0].mxu0
      %v5182 = vpop.f32.mrb[0].mxu0
      %5183 = vdwg.mxu0
      %5184 = vrot.lane.b32.xlu0 %v1091, 112
      %v5185 = vpop.permute.xlu0 %5184
      %5186 = vrot.lane.b32.xlu0 %v1107, 112
      %v5187 = vpop.permute.xlu0 %5186
      %v5189 = vsel %vm1128, %v5185, 0
      %v5192 = vsel %vm1128, %v5187, 0
      %5194 = vmatprep.subr.bf16.mxu0 0
      %5195 = vmatpush1.bf16.xpose.msra.mxu0 %v5192
      %5196 = vmatprep.subr.bf16.mxu0 0
      %5197 = vmatpush1.bf16.xpose.msra.mxu0 0
      %5198 = vmatprep.subr.bf16.mxu0 0
      %5199 = vmatpush1.bf16.xpose.msra.mxu0 0
      %5200 = vmatprep.subr.bf16.mxu0 0
      %5201 = vmatpush1.bf16.xpose.msra.mxu0 0
      %5202 = vmatprep.subr.bf16.mxu0 0
      %5203 = vmatpush1.bf16.xpose.msra.mxu0 0
      %5204 = vmatprep.subr.bf16.mxu0 0
      %5205 = vmatpush1.bf16.xpose.msra.mxu0 0
      %5206 = vmatprep.subr.bf16.mxu0 0
      %5207 = vmatpush1.bf16.xpose.msra.mxu0 0
      %5208 = vmatprep.subr.bf16.mxu0 0
      %5209 = vmatpush1.bf16.xpose.msra.mxu0 0
      %5210 = vmatprep.subr.bf16.mxu0 0
      %5211 = vmatpush1.bf16.xpose.msra.mxu0 0
      %5212 = vmatprep.subr.bf16.mxu0 0
      %5213 = vmatpush1.bf16.xpose.msra.mxu0 0
      %5214 = vmatprep.subr.bf16.mxu0 0
      %5215 = vmatpush1.bf16.xpose.msra.mxu0 0
      %5216 = vmatprep.subr.bf16.mxu0 0
      %5217 = vmatpush1.bf16.xpose.msra.mxu0 0
      %5218 = vmatprep.subr.bf16.mxu0 0
      %5219 = vmatpush1.bf16.xpose.msra.mxu0 0
      %5220 = vmatprep.subr.bf16.mxu0 0
      %5221 = vmatpush1.bf16.xpose.msra.mxu0 0
      %5222 = vmatprep.subr.bf16.mxu0 0
      %5223 = vmatpush1.bf16.xpose.msra.mxu0 0
      %5224 = vmatprep.subr.bf16.mxu0 0
      %5225 = vmatpush1.bf16.xpose.msra.mxu0 0
      %5226 = vmatprep.mubr.bf16.mxu0 0
      %5227 = vmatmul.mubr.bf16.gmra.mrb[0].mxu0 %v5189
      %v5228 = vpop.f32.mrb[0].mxu0
      %v5229 = vadd.f32 0.0, %v5228
      %v5230 = vpop.f32.mrb[0].mxu0
      %v5231 = vpop.f32.mrb[0].mxu0
      %v5232 = vpop.f32.mrb[0].mxu0
      %5233 = vdwg.mxu0
      %5234 = vrot.lane.b32.xlu0 %v1092, 112
      %v5235 = vpop.permute.xlu0 %5234
      %5236 = vrot.lane.b32.xlu0 %v1108, 112
      %v5237 = vpop.permute.xlu0 %5236
      %v5239 = vsel %vm1128, %v5235, 0
      %v5242 = vsel %vm1128, %v5237, 0
      %5244 = vmatprep.subr.bf16.mxu0 0
      %5245 = vmatpush1.bf16.xpose.msra.mxu0 %v5242
      %5246 = vmatprep.subr.bf16.mxu0 0
      %5247 = vmatpush1.bf16.xpose.msra.mxu0 0
      %5248 = vmatprep.subr.bf16.mxu0 0
      %5249 = vmatpush1.bf16.xpose.msra.mxu0 0
      %5250 = vmatprep.subr.bf16.mxu0 0
      %5251 = vmatpush1.bf16.xpose.msra.mxu0 0
      %5252 = vmatprep.subr.bf16.mxu0 0
      %5253 = vmatpush1.bf16.xpose.msra.mxu0 0
      %5254 = vmatprep.subr.bf16.mxu0 0
      %5255 = vmatpush1.bf16.xpose.msra.mxu0 0
      %5256 = vmatprep.subr.bf16.mxu0 0
      %5257 = vmatpush1.bf16.xpose.msra.mxu0 0
      %5258 = vmatprep.subr.bf16.mxu0 0
      %5259 = vmatpush1.bf16.xpose.msra.mxu0 0
      %5260 = vmatprep.subr.bf16.mxu0 0
      %5261 = vmatpush1.bf16.xpose.msra.mxu0 0
      %5262 = vmatprep.subr.bf16.mxu0 0
      %5263 = vmatpush1.bf16.xpose.msra.mxu0 0
      %5264 = vmatprep.subr.bf16.mxu0 0
      %5265 = vmatpush1.bf16.xpose.msra.mxu0 0
      %5266 = vmatprep.subr.bf16.mxu0 0
      %5267 = vmatpush1.bf16.xpose.msra.mxu0 0
      %5268 = vmatprep.subr.bf16.mxu0 0
      %5269 = vmatpush1.bf16.xpose.msra.mxu0 0
      %5270 = vmatprep.subr.bf16.mxu0 0
      %5271 = vmatpush1.bf16.xpose.msra.mxu0 0
      %5272 = vmatprep.subr.bf16.mxu0 0
      %5273 = vmatpush1.bf16.xpose.msra.mxu0 0
      %5274 = vmatprep.subr.bf16.mxu0 0
      %5275 = vmatpush1.bf16.xpose.msra.mxu0 0
      %5276 = vmatprep.mubr.bf16.mxu0 0
      %5277 = vmatmul.mubr.bf16.gmra.mrb[0].mxu0 %v5239
      %v5278 = vpop.f32.mrb[0].mxu0
      %v5279 = vadd.f32 0.0, %v5278
      %v5280 = vpop.f32.mrb[0].mxu0
      %v5281 = vpop.f32.mrb[0].mxu0
      %v5282 = vpop.f32.mrb[0].mxu0
      %5283 = vdwg.mxu0
      %5284 = vrot.lane.b32.xlu0 %v1093, 112
      %v5285 = vpop.permute.xlu0 %5284
      %5286 = vrot.lane.b32.xlu0 %v1109, 112
      %v5287 = vpop.permute.xlu0 %5286
      %v5289 = vsel %vm1128, %v5285, 0
      %v5292 = vsel %vm1128, %v5287, 0
      %5294 = vmatprep.subr.bf16.mxu0 0
      %5295 = vmatpush1.bf16.xpose.msra.mxu0 %v5292
      %5296 = vmatprep.subr.bf16.mxu0 0
      %5297 = vmatpush1.bf16.xpose.msra.mxu0 0
      %5298 = vmatprep.subr.bf16.mxu0 0
      %5299 = vmatpush1.bf16.xpose.msra.mxu0 0
      %5300 = vmatprep.subr.bf16.mxu0 0
      %5301 = vmatpush1.bf16.xpose.msra.mxu0 0
      %5302 = vmatprep.subr.bf16.mxu0 0
      %5303 = vmatpush1.bf16.xpose.msra.mxu0 0
      %5304 = vmatprep.subr.bf16.mxu0 0
      %5305 = vmatpush1.bf16.xpose.msra.mxu0 0
      %5306 = vmatprep.subr.bf16.mxu0 0
      %5307 = vmatpush1.bf16.xpose.msra.mxu0 0
      %5308 = vmatprep.subr.bf16.mxu0 0
      %5309 = vmatpush1.bf16.xpose.msra.mxu0 0
      %5310 = vmatprep.subr.bf16.mxu0 0
      %5311 = vmatpush1.bf16.xpose.msra.mxu0 0
      %5312 = vmatprep.subr.bf16.mxu0 0
      %5313 = vmatpush1.bf16.xpose.msra.mxu0 0
      %5314 = vmatprep.subr.bf16.mxu0 0
      %5315 = vmatpush1.bf16.xpose.msra.mxu0 0
      %5316 = vmatprep.subr.bf16.mxu0 0
      %5317 = vmatpush1.bf16.xpose.msra.mxu0 0
      %5318 = vmatprep.subr.bf16.mxu0 0
      %5319 = vmatpush1.bf16.xpose.msra.mxu0 0
      %5320 = vmatprep.subr.bf16.mxu0 0
      %5321 = vmatpush1.bf16.xpose.msra.mxu0 0
      %5322 = vmatprep.subr.bf16.mxu0 0
      %5323 = vmatpush1.bf16.xpose.msra.mxu0 0
      %5324 = vmatprep.subr.bf16.mxu0 0
      %5325 = vmatpush1.bf16.xpose.msra.mxu0 0
      %5326 = vmatprep.mubr.bf16.mxu0 0
      %5327 = vmatmul.mubr.bf16.gmra.mrb[0].mxu0 %v5289
      %v5328 = vpop.f32.mrb[0].mxu0
      %v5329 = vadd.f32 0.0, %v5328
      %v5330 = vpop.f32.mrb[0].mxu0
      %v5331 = vpop.f32.mrb[0].mxu0
      %v5332 = vpop.f32.mrb[0].mxu0
      %5333 = vdwg.mxu0
      %5334 = vrot.lane.b32.xlu0 %v1094, 112
      %v5335 = vpop.permute.xlu0 %5334
      %5336 = vrot.lane.b32.xlu0 %v1110, 112
      %v5337 = vpop.permute.xlu0 %5336
      %v5339 = vsel %vm1128, %v5335, 0
      %v5342 = vsel %vm1128, %v5337, 0
      %5344 = vmatprep.subr.bf16.mxu0 0
      %5345 = vmatpush1.bf16.xpose.msra.mxu0 %v5342
      %5346 = vmatprep.subr.bf16.mxu0 0
      %5347 = vmatpush1.bf16.xpose.msra.mxu0 0
      %5348 = vmatprep.subr.bf16.mxu0 0
      %5349 = vmatpush1.bf16.xpose.msra.mxu0 0
      %5350 = vmatprep.subr.bf16.mxu0 0
      %5351 = vmatpush1.bf16.xpose.msra.mxu0 0
      %5352 = vmatprep.subr.bf16.mxu0 0
      %5353 = vmatpush1.bf16.xpose.msra.mxu0 0
      %5354 = vmatprep.subr.bf16.mxu0 0
      %5355 = vmatpush1.bf16.xpose.msra.mxu0 0
      %5356 = vmatprep.subr.bf16.mxu0 0
      %5357 = vmatpush1.bf16.xpose.msra.mxu0 0
      %5358 = vmatprep.subr.bf16.mxu0 0
      %5359 = vmatpush1.bf16.xpose.msra.mxu0 0
      %5360 = vmatprep.subr.bf16.mxu0 0
      %5361 = vmatpush1.bf16.xpose.msra.mxu0 0
      %5362 = vmatprep.subr.bf16.mxu0 0
      %5363 = vmatpush1.bf16.xpose.msra.mxu0 0
      %5364 = vmatprep.subr.bf16.mxu0 0
      %5365 = vmatpush1.bf16.xpose.msra.mxu0 0
      %5366 = vmatprep.subr.bf16.mxu0 0
      %5367 = vmatpush1.bf16.xpose.msra.mxu0 0
      %5368 = vmatprep.subr.bf16.mxu0 0
      %5369 = vmatpush1.bf16.xpose.msra.mxu0 0
      %5370 = vmatprep.subr.bf16.mxu0 0
      %5371 = vmatpush1.bf16.xpose.msra.mxu0 0
      %5372 = vmatprep.subr.bf16.mxu0 0
      %5373 = vmatpush1.bf16.xpose.msra.mxu0 0
      %5374 = vmatprep.subr.bf16.mxu0 0
      %5375 = vmatpush1.bf16.xpose.msra.mxu0 0
      %5376 = vmatprep.mubr.bf16.mxu0 0
      %5377 = vmatmul.mubr.bf16.gmra.mrb[0].mxu0 %v5339
      %v5378 = vpop.f32.mrb[0].mxu0
      %v5379 = vadd.f32 0.0, %v5378
      %v5380 = vpop.f32.mrb[0].mxu0
      %v5381 = vpop.f32.mrb[0].mxu0
      %v5382 = vpop.f32.mrb[0].mxu0
      %5383 = vdwg.mxu0
      %5384 = vrot.lane.b32.xlu0 %v1095, 112
      %v5385 = vpop.permute.xlu0 %5384
      %5386 = vrot.lane.b32.xlu0 %v1111, 112
      %v5387 = vpop.permute.xlu0 %5386
      %v5389 = vsel %vm1128, %v5385, 0
      %v5392 = vsel %vm1128, %v5387, 0
      %5394 = vmatprep.subr.bf16.mxu0 0
      %5395 = vmatpush1.bf16.xpose.msra.mxu0 %v5392
      %5396 = vmatprep.subr.bf16.mxu0 0
      %5397 = vmatpush1.bf16.xpose.msra.mxu0 0
      %5398 = vmatprep.subr.bf16.mxu0 0
      %5399 = vmatpush1.bf16.xpose.msra.mxu0 0
      %5400 = vmatprep.subr.bf16.mxu0 0
      %5401 = vmatpush1.bf16.xpose.msra.mxu0 0
      %5402 = vmatprep.subr.bf16.mxu0 0
      %5403 = vmatpush1.bf16.xpose.msra.mxu0 0
      %5404 = vmatprep.subr.bf16.mxu0 0
      %5405 = vmatpush1.bf16.xpose.msra.mxu0 0
      %5406 = vmatprep.subr.bf16.mxu0 0
      %5407 = vmatpush1.bf16.xpose.msra.mxu0 0
      %5408 = vmatprep.subr.bf16.mxu0 0
      %5409 = vmatpush1.bf16.xpose.msra.mxu0 0
      %5410 = vmatprep.subr.bf16.mxu0 0
      %5411 = vmatpush1.bf16.xpose.msra.mxu0 0
      %5412 = vmatprep.subr.bf16.mxu0 0
      %5413 = vmatpush1.bf16.xpose.msra.mxu0 0
      %5414 = vmatprep.subr.bf16.mxu0 0
      %5415 = vmatpush1.bf16.xpose.msra.mxu0 0
      %5416 = vmatprep.subr.bf16.mxu0 0
      %5417 = vmatpush1.bf16.xpose.msra.mxu0 0
      %5418 = vmatprep.subr.bf16.mxu0 0
      %5419 = vmatpush1.bf16.xpose.msra.mxu0 0
      %5420 = vmatprep.subr.bf16.mxu0 0
      %5421 = vmatpush1.bf16.xpose.msra.mxu0 0
      %5422 = vmatprep.subr.bf16.mxu0 0
      %5423 = vmatpush1.bf16.xpose.msra.mxu0 0
      %5424 = vmatprep.subr.bf16.mxu0 0
      %5425 = vmatpush1.bf16.xpose.msra.mxu0 0
      %5426 = vmatprep.mubr.bf16.mxu0 0
      %5427 = vmatmul.mubr.bf16.gmra.mrb[0].mxu0 %v5389
      %v5428 = vpop.f32.mrb[0].mxu0
      %v5429 = vadd.f32 0.0, %v5428
      %v5430 = vpop.f32.mrb[0].mxu0
      %v5431 = vpop.f32.mrb[0].mxu0
      %v5432 = vpop.f32.mrb[0].mxu0
      %5433 = vdwg.mxu0
      %v5434 = vmul.f32 %v4679, 0.35355338
      %v5435 = vmul.f32 %v4729, 0.35355338
      %v5436 = vmul.f32 %v4779, 0.35355338
      %v5437 = vmul.f32 %v4829, 0.35355338
      %v5438 = vmul.f32 %v4879, 0.35355338
      %v5439 = vmul.f32 %v4929, 0.35355338
      %v5440 = vmul.f32 %v4979, 0.35355338
      %v5441 = vmul.f32 %v5029, 0.35355338
      %v5442 = vmul.f32 %v5079, 0.35355338
      %v5443 = vmul.f32 %v5129, 0.35355338
      %v5444 = vmul.f32 %v5179, 0.35355338
      %v5445 = vmul.f32 %v5229, 0.35355338
      %v5446 = vmul.f32 %v5279, 0.35355338
      %v5447 = vmul.f32 %v5329, 0.35355338
      %v5448 = vmul.f32 %v5379, 0.35355338
      %v5449 = vmul.f32 %v5429, 0.35355338
      %v5450 = vsel %vm1128, %v5434, -inf
      %5451 = vmax.xlane.f32.xlu0 %v5450
      %v5452 = vpop.xlane.xlu0 %5451
      %v5453 = vsel %vm1128, %v5435, -inf
      %5454 = vmax.xlane.f32.xlu0 %v5453
      %v5455 = vpop.xlane.xlu0 %5454
      %v5456 = vsel %vm1128, %v5436, -inf
      %5457 = vmax.xlane.f32.xlu0 %v5456
      %v5458 = vpop.xlane.xlu0 %5457
      %v5459 = vsel %vm1128, %v5437, -inf
      %5460 = vmax.xlane.f32.xlu0 %v5459
      %v5461 = vpop.xlane.xlu0 %5460
      %v5462 = vsel %vm1128, %v5438, -inf
      %5463 = vmax.xlane.f32.xlu0 %v5462
      %v5464 = vpop.xlane.xlu0 %5463
      %v5465 = vsel %vm1128, %v5439, -inf
      %5466 = vmax.xlane.f32.xlu0 %v5465
      %v5467 = vpop.xlane.xlu0 %5466
      %v5468 = vsel %vm1128, %v5440, -inf
      %5469 = vmax.xlane.f32.xlu0 %v5468
      %v5470 = vpop.xlane.xlu0 %5469
      %v5471 = vsel %vm1128, %v5441, -inf
      %5472 = vmax.xlane.f32.xlu0 %v5471
      %v5473 = vpop.xlane.xlu0 %5472
      %v5474 = vsel %vm1128, %v5442, -inf
      %5475 = vmax.xlane.f32.xlu0 %v5474
      %v5476 = vpop.xlane.xlu0 %5475
      %v5477 = vsel %vm1128, %v5443, -inf
      %5478 = vmax.xlane.f32.xlu0 %v5477
      %v5479 = vpop.xlane.xlu0 %5478
      %v5480 = vsel %vm1128, %v5444, -inf
      %5481 = vmax.xlane.f32.xlu0 %v5480
      %v5482 = vpop.xlane.xlu0 %5481
      %v5483 = vsel %vm1128, %v5445, -inf
      %5484 = vmax.xlane.f32.xlu0 %v5483
      %v5485 = vpop.xlane.xlu0 %5484
      %v5486 = vsel %vm1128, %v5446, -inf
      %5487 = vmax.xlane.f32.xlu0 %v5486
      %v5488 = vpop.xlane.xlu0 %5487
      %v5489 = vsel %vm1128, %v5447, -inf
      %5490 = vmax.xlane.f32.xlu0 %v5489
      %v5491 = vpop.xlane.xlu0 %5490
      %v5492 = vsel %vm1128, %v5448, -inf
      %5493 = vmax.xlane.f32.xlu0 %v5492
      %v5494 = vpop.xlane.xlu0 %5493
      %v5495 = vsel %vm1128, %v5449, -inf
      %5496 = vmax.xlane.f32.xlu0 %v5495
      %v5497 = vpop.xlane.xlu0 %5496
      %v5498 = vsub.f32 %v5434, %v5452
      %v5499 = vsub.f32 %v5435, %v5455
      %v5500 = vsub.f32 %v5436, %v5458
      %v5501 = vsub.f32 %v5437, %v5461
      %v5502 = vsub.f32 %v5438, %v5464
      %v5503 = vsub.f32 %v5439, %v5467
      %v5504 = vsub.f32 %v5440, %v5470
      %v5505 = vsub.f32 %v5441, %v5473
      %v5506 = vsub.f32 %v5442, %v5476
      %v5507 = vsub.f32 %v5443, %v5479
      %v5508 = vsub.f32 %v5444, %v5482
      %v5509 = vsub.f32 %v5445, %v5485
      %v5510 = vsub.f32 %v5446, %v5488
      %v5511 = vsub.f32 %v5447, %v5491
      %v5512 = vsub.f32 %v5448, %v5494
      %v5513 = vsub.f32 %v5449, %v5497
      %v5514 = vmul.f32 %v5498, 1.442695
      %v5515 = vpow.pop %v5514
      %v5516 = vmul.f32 %v5499, 1.442695
      %v5517 = vpow.pop %v5516
      %v5518 = vmul.f32 %v5500, 1.442695
      %v5519 = vpow.pop %v5518
      %v5520 = vmul.f32 %v5501, 1.442695
      %v5521 = vpow.pop %v5520
      %v5522 = vmul.f32 %v5502, 1.442695
      %v5523 = vpow.pop %v5522
      %v5524 = vmul.f32 %v5503, 1.442695
      %v5525 = vpow.pop %v5524
      %v5526 = vmul.f32 %v5504, 1.442695
      %v5527 = vpow.pop %v5526
      %v5528 = vmul.f32 %v5505, 1.442695
      %v5529 = vpow.pop %v5528
      %v5530 = vmul.f32 %v5506, 1.442695
      %v5531 = vpow.pop %v5530
      %v5532 = vmul.f32 %v5507, 1.442695
      %v5533 = vpow.pop %v5532
      %v5534 = vmul.f32 %v5508, 1.442695
      %v5535 = vpow.pop %v5534
      %v5536 = vmul.f32 %v5509, 1.442695
      %v5537 = vpow.pop %v5536
      %v5538 = vmul.f32 %v5510, 1.442695
      %v5539 = vpow.pop %v5538
      %v5540 = vmul.f32 %v5511, 1.442695
      %v5541 = vpow.pop %v5540
      %v5542 = vmul.f32 %v5512, 1.442695
      %v5543 = vpow.pop %v5542
      %v5544 = vmul.f32 %v5513, 1.442695
      %v5545 = vpow.pop %v5544
      %v5546 = vsel %vm1128, %v5515, 0.0
      %5547 = vadd.xlane.f32.xlu0 %v5546
      %v5548 = vpop.xlane.xlu0 %5547
      %v5549 = vsel %vm1128, %v5517, 0.0
      %5550 = vadd.xlane.f32.xlu0 %v5549
      %v5551 = vpop.xlane.xlu0 %5550
      %v5552 = vsel %vm1128, %v5519, 0.0
      %5553 = vadd.xlane.f32.xlu0 %v5552
      %v5554 = vpop.xlane.xlu0 %5553
      %v5555 = vsel %vm1128, %v5521, 0.0
      %5556 = vadd.xlane.f32.xlu0 %v5555
      %v5557 = vpop.xlane.xlu0 %5556
      %v5558 = vsel %vm1128, %v5523, 0.0
      %5559 = vadd.xlane.f32.xlu0 %v5558
      %v5560 = vpop.xlane.xlu0 %5559
      %v5561 = vsel %vm1128, %v5525, 0.0
      %5562 = vadd.xlane.f32.xlu0 %v5561
      %v5563 = vpop.xlane.xlu0 %5562
      %v5564 = vsel %vm1128, %v5527, 0.0
      %5565 = vadd.xlane.f32.xlu0 %v5564
      %v5566 = vpop.xlane.xlu0 %5565
      %v5567 = vsel %vm1128, %v5529, 0.0
      %5568 = vadd.xlane.f32.xlu0 %v5567
      %v5569 = vpop.xlane.xlu0 %5568
      %v5570 = vsel %vm1128, %v5531, 0.0
      %5571 = vadd.xlane.f32.xlu0 %v5570
      %v5572 = vpop.xlane.xlu0 %5571
      %v5573 = vsel %vm1128, %v5533, 0.0
      %5574 = vadd.xlane.f32.xlu0 %v5573
      %v5575 = vpop.xlane.xlu0 %5574
      %v5576 = vsel %vm1128, %v5535, 0.0
      %5577 = vadd.xlane.f32.xlu0 %v5576
      %v5578 = vpop.xlane.xlu0 %5577
      %v5579 = vsel %vm1128, %v5537, 0.0
      %5580 = vadd.xlane.f32.xlu0 %v5579
      %v5581 = vpop.xlane.xlu0 %5580
      %v5582 = vsel %vm1128, %v5539, 0.0
      %5583 = vadd.xlane.f32.xlu0 %v5582
      %v5584 = vpop.xlane.xlu0 %5583
      %v5585 = vsel %vm1128, %v5541, 0.0
      %5586 = vadd.xlane.f32.xlu0 %v5585
      %v5587 = vpop.xlane.xlu0 %5586
      %v5588 = vsel %vm1128, %v5543, 0.0
      %5589 = vadd.xlane.f32.xlu0 %v5588
      %v5590 = vpop.xlane.xlu0 %5589
      %v5591 = vsel %vm1128, %v5545, 0.0
      %5592 = vadd.xlane.f32.xlu0 %v5591
      %v5593 = vpop.xlane.xlu0 %5592
      %v5594 = vrcp.pop %v5548
      %v5595 = vmul.f32 %v5515, %v5594
      %v5596 = vrcp.pop %v5551
      %v5597 = vmul.f32 %v5517, %v5596
      %v5598 = vrcp.pop %v5554
      %v5599 = vmul.f32 %v5519, %v5598
      %v5600 = vrcp.pop %v5557
      %v5601 = vmul.f32 %v5521, %v5600
      %v5602 = vrcp.pop %v5560
      %v5603 = vmul.f32 %v5523, %v5602
      %v5604 = vrcp.pop %v5563
      %v5605 = vmul.f32 %v5525, %v5604
      %v5606 = vrcp.pop %v5566
      %v5607 = vmul.f32 %v5527, %v5606
      %v5608 = vrcp.pop %v5569
      %v5609 = vmul.f32 %v5529, %v5608
      %v5610 = vrcp.pop %v5572
      %v5611 = vmul.f32 %v5531, %v5610
      %v5612 = vrcp.pop %v5575
      %v5613 = vmul.f32 %v5533, %v5612
      %v5614 = vrcp.pop %v5578
      %v5615 = vmul.f32 %v5535, %v5614
      %v5616 = vrcp.pop %v5581
      %v5617 = vmul.f32 %v5537, %v5616
      %v5618 = vrcp.pop %v5584
      %v5619 = vmul.f32 %v5539, %v5618
      %v5620 = vrcp.pop %v5587
      %v5621 = vmul.f32 %v5541, %v5620
      %v5622 = vrcp.pop %v5590
      %v5623 = vmul.f32 %v5543, %v5622
      %v5624 = vrcp.pop %v5593
      %v5625 = vmul.f32 %v5545, %v5624
      %v5626 = vpack.c.bf16 %v5595, %v5595
      %v5627 = vpack.c.bf16 %v5597, %v5597
      %v5628 = vpack.c.bf16 %v5599, %v5599
      %v5629 = vpack.c.bf16 %v5601, %v5601
      %v5630 = vpack.c.bf16 %v5603, %v5603
      %v5631 = vpack.c.bf16 %v5605, %v5605
      %v5632 = vpack.c.bf16 %v5607, %v5607
      %v5633 = vpack.c.bf16 %v5609, %v5609
      %v5634 = vpack.c.bf16 %v5611, %v5611
      %v5635 = vpack.c.bf16 %v5613, %v5613
      %v5636 = vpack.c.bf16 %v5615, %v5615
      %v5637 = vpack.c.bf16 %v5617, %v5617
      %v5638 = vpack.c.bf16 %v5619, %v5619
      %v5639 = vpack.c.bf16 %v5621, %v5621
      %v5640 = vpack.c.bf16 %v5623, %v5623
      %v5641 = vpack.c.bf16 %v5625, %v5625
      %5642 = vrot.lane.b32.xlu0 %v1112, 112
      %v5643 = vpop.permute.xlu0 %5642
      %v5645 = vsel %vm1128, %v5626, 0
      %v5648 = vsel %vm2076, %v5643, 0
      %5650 = vmatprep.subr.bf16.mxu0 0
      %5651 = vmatpush1.bf16.msra.mxu0 %v5648
      %5652 = vmatprep.subr.bf16.mxu0 0
      %5653 = vmatpush1.bf16.msra.mxu0 0
      %5654 = vmatprep.subr.bf16.mxu0 0
      %5655 = vmatpush1.bf16.msra.mxu0 0
      %5656 = vmatprep.subr.bf16.mxu0 0
      %5657 = vmatpush1.bf16.msra.mxu0 0
      %5658 = vmatprep.subr.bf16.mxu0 0
      %5659 = vmatpush1.bf16.msra.mxu0 0
      %5660 = vmatprep.subr.bf16.mxu0 0
      %5661 = vmatpush1.bf16.msra.mxu0 0
      %5662 = vmatprep.subr.bf16.mxu0 0
      %5663 = vmatpush1.bf16.msra.mxu0 0
      %5664 = vmatprep.subr.bf16.mxu0 0
      %5665 = vmatpush1.bf16.msra.mxu0 0
      %5666 = vmatprep.subr.bf16.mxu0 0
      %5667 = vmatpush1.bf16.msra.mxu0 0
      %5668 = vmatprep.subr.bf16.mxu0 0
      %5669 = vmatpush1.bf16.msra.mxu0 0
      %5670 = vmatprep.subr.bf16.mxu0 0
      %5671 = vmatpush1.bf16.msra.mxu0 0
      %5672 = vmatprep.subr.bf16.mxu0 0
      %5673 = vmatpush1.bf16.msra.mxu0 0
      %5674 = vmatprep.subr.bf16.mxu0 0
      %5675 = vmatpush1.bf16.msra.mxu0 0
      %5676 = vmatprep.subr.bf16.mxu0 0
      %5677 = vmatpush1.bf16.msra.mxu0 0
      %5678 = vmatprep.subr.bf16.mxu0 0
      %5679 = vmatpush1.bf16.msra.mxu0 0
      %5680 = vmatprep.subr.bf16.mxu0 0
      %5681 = vmatpush1.bf16.msra.mxu0 0
      %5682 = vmatprep.mubr.bf16.mxu0 0
      %5683 = vmatmul.mubr.bf16.gmra.mrb[0].mxu0 %v5645
      %v5684 = vpop.f32.mrb[0].mxu0
      %v5685 = vadd.f32 0.0, %v5684
      %v5686 = vpop.f32.mrb[0].mxu0
      %v5687 = vpop.f32.mrb[0].mxu0
      %v5688 = vpop.f32.mrb[0].mxu0
      %5689 = vdwg.mxu0
      %5690 = vrot.lane.b32.xlu0 %v1113, 112
      %v5691 = vpop.permute.xlu0 %5690
      %v5693 = vsel %vm1128, %v5627, 0
      %v5696 = vsel %vm2076, %v5691, 0
      %5698 = vmatprep.subr.bf16.mxu0 0
      %5699 = vmatpush1.bf16.msra.mxu0 %v5696
      %5700 = vmatprep.subr.bf16.mxu0 0
      %5701 = vmatpush1.bf16.msra.mxu0 0
      %5702 = vmatprep.subr.bf16.mxu0 0
      %5703 = vmatpush1.bf16.msra.mxu0 0
      %5704 = vmatprep.subr.bf16.mxu0 0
      %5705 = vmatpush1.bf16.msra.mxu0 0
      %5706 = vmatprep.subr.bf16.mxu0 0
      %5707 = vmatpush1.bf16.msra.mxu0 0
      %5708 = vmatprep.subr.bf16.mxu0 0
      %5709 = vmatpush1.bf16.msra.mxu0 0
      %5710 = vmatprep.subr.bf16.mxu0 0
      %5711 = vmatpush1.bf16.msra.mxu0 0
      %5712 = vmatprep.subr.bf16.mxu0 0
      %5713 = vmatpush1.bf16.msra.mxu0 0
      %5714 = vmatprep.subr.bf16.mxu0 0
      %5715 = vmatpush1.bf16.msra.mxu0 0
      %5716 = vmatprep.subr.bf16.mxu0 0
      %5717 = vmatpush1.bf16.msra.mxu0 0
      %5718 = vmatprep.subr.bf16.mxu0 0
      %5719 = vmatpush1.bf16.msra.mxu0 0
      %5720 = vmatprep.subr.bf16.mxu0 0
      %5721 = vmatpush1.bf16.msra.mxu0 0
      %5722 = vmatprep.subr.bf16.mxu0 0
      %5723 = vmatpush1.bf16.msra.mxu0 0
      %5724 = vmatprep.subr.bf16.mxu0 0
      %5725 = vmatpush1.bf16.msra.mxu0 0
      %5726 = vmatprep.subr.bf16.mxu0 0
      %5727 = vmatpush1.bf16.msra.mxu0 0
      %5728 = vmatprep.subr.bf16.mxu0 0
      %5729 = vmatpush1.bf16.msra.mxu0 0
      %5730 = vmatprep.mubr.bf16.mxu0 0
      %5731 = vmatmul.mubr.bf16.gmra.mrb[0].mxu0 %v5693
      %v5732 = vpop.f32.mrb[0].mxu0
      %v5733 = vadd.f32 0.0, %v5732
      %v5734 = vpop.f32.mrb[0].mxu0
      %v5735 = vpop.f32.mrb[0].mxu0
      %v5736 = vpop.f32.mrb[0].mxu0
      %5737 = vdwg.mxu0
      %5738 = vrot.lane.b32.xlu0 %v1114, 112
      %v5739 = vpop.permute.xlu0 %5738
      %v5741 = vsel %vm1128, %v5628, 0
      %v5744 = vsel %vm2076, %v5739, 0
      %5746 = vmatprep.subr.bf16.mxu0 0
      %5747 = vmatpush1.bf16.msra.mxu0 %v5744
      %5748 = vmatprep.subr.bf16.mxu0 0
      %5749 = vmatpush1.bf16.msra.mxu0 0
      %5750 = vmatprep.subr.bf16.mxu0 0
      %5751 = vmatpush1.bf16.msra.mxu0 0
      %5752 = vmatprep.subr.bf16.mxu0 0
      %5753 = vmatpush1.bf16.msra.mxu0 0
      %5754 = vmatprep.subr.bf16.mxu0 0
      %5755 = vmatpush1.bf16.msra.mxu0 0
      %5756 = vmatprep.subr.bf16.mxu0 0
      %5757 = vmatpush1.bf16.msra.mxu0 0
      %5758 = vmatprep.subr.bf16.mxu0 0
      %5759 = vmatpush1.bf16.msra.mxu0 0
      %5760 = vmatprep.subr.bf16.mxu0 0
      %5761 = vmatpush1.bf16.msra.mxu0 0
      %5762 = vmatprep.subr.bf16.mxu0 0
      %5763 = vmatpush1.bf16.msra.mxu0 0
      %5764 = vmatprep.subr.bf16.mxu0 0
      %5765 = vmatpush1.bf16.msra.mxu0 0
      %5766 = vmatprep.subr.bf16.mxu0 0
      %5767 = vmatpush1.bf16.msra.mxu0 0
      %5768 = vmatprep.subr.bf16.mxu0 0
      %5769 = vmatpush1.bf16.msra.mxu0 0
      %5770 = vmatprep.subr.bf16.mxu0 0
      %5771 = vmatpush1.bf16.msra.mxu0 0
      %5772 = vmatprep.subr.bf16.mxu0 0
      %5773 = vmatpush1.bf16.msra.mxu0 0
      %5774 = vmatprep.subr.bf16.mxu0 0
      %5775 = vmatpush1.bf16.msra.mxu0 0
      %5776 = vmatprep.subr.bf16.mxu0 0
      %5777 = vmatpush1.bf16.msra.mxu0 0
      %5778 = vmatprep.mubr.bf16.mxu0 0
      %5779 = vmatmul.mubr.bf16.gmra.mrb[0].mxu0 %v5741
      %v5780 = vpop.f32.mrb[0].mxu0
      %v5781 = vadd.f32 0.0, %v5780
      %v5782 = vpop.f32.mrb[0].mxu0
      %v5783 = vpop.f32.mrb[0].mxu0
      %v5784 = vpop.f32.mrb[0].mxu0
      %5785 = vdwg.mxu0
      %5786 = vrot.lane.b32.xlu0 %v1115, 112
      %v5787 = vpop.permute.xlu0 %5786
      %v5789 = vsel %vm1128, %v5629, 0
      %v5792 = vsel %vm2076, %v5787, 0
      %5794 = vmatprep.subr.bf16.mxu0 0
      %5795 = vmatpush1.bf16.msra.mxu0 %v5792
      %5796 = vmatprep.subr.bf16.mxu0 0
      %5797 = vmatpush1.bf16.msra.mxu0 0
      %5798 = vmatprep.subr.bf16.mxu0 0
      %5799 = vmatpush1.bf16.msra.mxu0 0
      %5800 = vmatprep.subr.bf16.mxu0 0
      %5801 = vmatpush1.bf16.msra.mxu0 0
      %5802 = vmatprep.subr.bf16.mxu0 0
      %5803 = vmatpush1.bf16.msra.mxu0 0
      %5804 = vmatprep.subr.bf16.mxu0 0
      %5805 = vmatpush1.bf16.msra.mxu0 0
      %5806 = vmatprep.subr.bf16.mxu0 0
      %5807 = vmatpush1.bf16.msra.mxu0 0
      %5808 = vmatprep.subr.bf16.mxu0 0
      %5809 = vmatpush1.bf16.msra.mxu0 0
      %5810 = vmatprep.subr.bf16.mxu0 0
      %5811 = vmatpush1.bf16.msra.mxu0 0
      %5812 = vmatprep.subr.bf16.mxu0 0
      %5813 = vmatpush1.bf16.msra.mxu0 0
      %5814 = vmatprep.subr.bf16.mxu0 0
      %5815 = vmatpush1.bf16.msra.mxu0 0
      %5816 = vmatprep.subr.bf16.mxu0 0
      %5817 = vmatpush1.bf16.msra.mxu0 0
      %5818 = vmatprep.subr.bf16.mxu0 0
      %5819 = vmatpush1.bf16.msra.mxu0 0
      %5820 = vmatprep.subr.bf16.mxu0 0
      %5821 = vmatpush1.bf16.msra.mxu0 0
      %5822 = vmatprep.subr.bf16.mxu0 0
      %5823 = vmatpush1.bf16.msra.mxu0 0
      %5824 = vmatprep.subr.bf16.mxu0 0
      %5825 = vmatpush1.bf16.msra.mxu0 0
      %5826 = vmatprep.mubr.bf16.mxu0 0
      %5827 = vmatmul.mubr.bf16.gmra.mrb[0].mxu0 %v5789
      %v5828 = vpop.f32.mrb[0].mxu0
      %v5829 = vadd.f32 0.0, %v5828
      %v5830 = vpop.f32.mrb[0].mxu0
      %v5831 = vpop.f32.mrb[0].mxu0
      %v5832 = vpop.f32.mrb[0].mxu0
      %5833 = vdwg.mxu0
      %5834 = vrot.lane.b32.xlu0 %v1116, 112
      %v5835 = vpop.permute.xlu0 %5834
      %v5837 = vsel %vm1128, %v5630, 0
      %v5840 = vsel %vm2076, %v5835, 0
      %5842 = vmatprep.subr.bf16.mxu0 0
      %5843 = vmatpush1.bf16.msra.mxu0 %v5840
      %5844 = vmatprep.subr.bf16.mxu0 0
      %5845 = vmatpush1.bf16.msra.mxu0 0
      %5846 = vmatprep.subr.bf16.mxu0 0
      %5847 = vmatpush1.bf16.msra.mxu0 0
      %5848 = vmatprep.subr.bf16.mxu0 0
      %5849 = vmatpush1.bf16.msra.mxu0 0
      %5850 = vmatprep.subr.bf16.mxu0 0
      %5851 = vmatpush1.bf16.msra.mxu0 0
      %5852 = vmatprep.subr.bf16.mxu0 0
      %5853 = vmatpush1.bf16.msra.mxu0 0
      %5854 = vmatprep.subr.bf16.mxu0 0
      %5855 = vmatpush1.bf16.msra.mxu0 0
      %5856 = vmatprep.subr.bf16.mxu0 0
      %5857 = vmatpush1.bf16.msra.mxu0 0
      %5858 = vmatprep.subr.bf16.mxu0 0
      %5859 = vmatpush1.bf16.msra.mxu0 0
      %5860 = vmatprep.subr.bf16.mxu0 0
      %5861 = vmatpush1.bf16.msra.mxu0 0
      %5862 = vmatprep.subr.bf16.mxu0 0
      %5863 = vmatpush1.bf16.msra.mxu0 0
      %5864 = vmatprep.subr.bf16.mxu0 0
      %5865 = vmatpush1.bf16.msra.mxu0 0
      %5866 = vmatprep.subr.bf16.mxu0 0
      %5867 = vmatpush1.bf16.msra.mxu0 0
      %5868 = vmatprep.subr.bf16.mxu0 0
      %5869 = vmatpush1.bf16.msra.mxu0 0
      %5870 = vmatprep.subr.bf16.mxu0 0
      %5871 = vmatpush1.bf16.msra.mxu0 0
      %5872 = vmatprep.subr.bf16.mxu0 0
      %5873 = vmatpush1.bf16.msra.mxu0 0
      %5874 = vmatprep.mubr.bf16.mxu0 0
      %5875 = vmatmul.mubr.bf16.gmra.mrb[0].mxu0 %v5837
      %v5876 = vpop.f32.mrb[0].mxu0
      %v5877 = vadd.f32 0.0, %v5876
      %v5878 = vpop.f32.mrb[0].mxu0
      %v5879 = vpop.f32.mrb[0].mxu0
      %v5880 = vpop.f32.mrb[0].mxu0
      %5881 = vdwg.mxu0
      %5882 = vrot.lane.b32.xlu0 %v1117, 112
      %v5883 = vpop.permute.xlu0 %5882
      %v5885 = vsel %vm1128, %v5631, 0
      %v5888 = vsel %vm2076, %v5883, 0
      %5890 = vmatprep.subr.bf16.mxu0 0
      %5891 = vmatpush1.bf16.msra.mxu0 %v5888
      %5892 = vmatprep.subr.bf16.mxu0 0
      %5893 = vmatpush1.bf16.msra.mxu0 0
      %5894 = vmatprep.subr.bf16.mxu0 0
      %5895 = vmatpush1.bf16.msra.mxu0 0
      %5896 = vmatprep.subr.bf16.mxu0 0
      %5897 = vmatpush1.bf16.msra.mxu0 0
      %5898 = vmatprep.subr.bf16.mxu0 0
      %5899 = vmatpush1.bf16.msra.mxu0 0
      %5900 = vmatprep.subr.bf16.mxu0 0
      %5901 = vmatpush1.bf16.msra.mxu0 0
      %5902 = vmatprep.subr.bf16.mxu0 0
      %5903 = vmatpush1.bf16.msra.mxu0 0
      %5904 = vmatprep.subr.bf16.mxu0 0
      %5905 = vmatpush1.bf16.msra.mxu0 0
      %5906 = vmatprep.subr.bf16.mxu0 0
      %5907 = vmatpush1.bf16.msra.mxu0 0
      %5908 = vmatprep.subr.bf16.mxu0 0
      %5909 = vmatpush1.bf16.msra.mxu0 0
      %5910 = vmatprep.subr.bf16.mxu0 0
      %5911 = vmatpush1.bf16.msra.mxu0 0
      %5912 = vmatprep.subr.bf16.mxu0 0
      %5913 = vmatpush1.bf16.msra.mxu0 0
      %5914 = vmatprep.subr.bf16.mxu0 0
      %5915 = vmatpush1.bf16.msra.mxu0 0
      %5916 = vmatprep.subr.bf16.mxu0 0
      %5917 = vmatpush1.bf16.msra.mxu0 0
      %5918 = vmatprep.subr.bf16.mxu0 0
      %5919 = vmatpush1.bf16.msra.mxu0 0
      %5920 = vmatprep.subr.bf16.mxu0 0
      %5921 = vmatpush1.bf16.msra.mxu0 0
      %5922 = vmatprep.mubr.bf16.mxu0 0
      %5923 = vmatmul.mubr.bf16.gmra.mrb[0].mxu0 %v5885
      %v5924 = vpop.f32.mrb[0].mxu0
      %v5925 = vadd.f32 0.0, %v5924
      %v5926 = vpop.f32.mrb[0].mxu0
      %v5927 = vpop.f32.mrb[0].mxu0
      %v5928 = vpop.f32.mrb[0].mxu0
      %5929 = vdwg.mxu0
      %5930 = vrot.lane.b32.xlu0 %v1118, 112
      %v5931 = vpop.permute.xlu0 %5930
      %v5933 = vsel %vm1128, %v5632, 0
      %v5936 = vsel %vm2076, %v5931, 0
      %5938 = vmatprep.subr.bf16.mxu0 0
      %5939 = vmatpush1.bf16.msra.mxu0 %v5936
      %5940 = vmatprep.subr.bf16.mxu0 0
      %5941 = vmatpush1.bf16.msra.mxu0 0
      %5942 = vmatprep.subr.bf16.mxu0 0
      %5943 = vmatpush1.bf16.msra.mxu0 0
      %5944 = vmatprep.subr.bf16.mxu0 0
      %5945 = vmatpush1.bf16.msra.mxu0 0
      %5946 = vmatprep.subr.bf16.mxu0 0
      %5947 = vmatpush1.bf16.msra.mxu0 0
      %5948 = vmatprep.subr.bf16.mxu0 0
      %5949 = vmatpush1.bf16.msra.mxu0 0
      %5950 = vmatprep.subr.bf16.mxu0 0
      %5951 = vmatpush1.bf16.msra.mxu0 0
      %5952 = vmatprep.subr.bf16.mxu0 0
      %5953 = vmatpush1.bf16.msra.mxu0 0
      %5954 = vmatprep.subr.bf16.mxu0 0
      %5955 = vmatpush1.bf16.msra.mxu0 0
      %5956 = vmatprep.subr.bf16.mxu0 0
      %5957 = vmatpush1.bf16.msra.mxu0 0
      %5958 = vmatprep.subr.bf16.mxu0 0
      %5959 = vmatpush1.bf16.msra.mxu0 0
      %5960 = vmatprep.subr.bf16.mxu0 0
      %5961 = vmatpush1.bf16.msra.mxu0 0
      %5962 = vmatprep.subr.bf16.mxu0 0
      %5963 = vmatpush1.bf16.msra.mxu0 0
      %5964 = vmatprep.subr.bf16.mxu0 0
      %5965 = vmatpush1.bf16.msra.mxu0 0
      %5966 = vmatprep.subr.bf16.mxu0 0
      %5967 = vmatpush1.bf16.msra.mxu0 0
      %5968 = vmatprep.subr.bf16.mxu0 0
      %5969 = vmatpush1.bf16.msra.mxu0 0
      %5970 = vmatprep.mubr.bf16.mxu0 0
      %5971 = vmatmul.mubr.bf16.gmra.mrb[0].mxu0 %v5933
      %v5972 = vpop.f32.mrb[0].mxu0
      %v5973 = vadd.f32 0.0, %v5972
      %v5974 = vpop.f32.mrb[0].mxu0
      %v5975 = vpop.f32.mrb[0].mxu0
      %v5976 = vpop.f32.mrb[0].mxu0
      %5977 = vdwg.mxu0
      %5978 = vrot.lane.b32.xlu0 %v1119, 112
      %v5979 = vpop.permute.xlu0 %5978
      %v5981 = vsel %vm1128, %v5633, 0
      %v5984 = vsel %vm2076, %v5979, 0
      %5986 = vmatprep.subr.bf16.mxu0 0
      %5987 = vmatpush1.bf16.msra.mxu0 %v5984
      %5988 = vmatprep.subr.bf16.mxu0 0
      %5989 = vmatpush1.bf16.msra.mxu0 0
      %5990 = vmatprep.subr.bf16.mxu0 0
      %5991 = vmatpush1.bf16.msra.mxu0 0
      %5992 = vmatprep.subr.bf16.mxu0 0
      %5993 = vmatpush1.bf16.msra.mxu0 0
      %5994 = vmatprep.subr.bf16.mxu0 0
      %5995 = vmatpush1.bf16.msra.mxu0 0
      %5996 = vmatprep.subr.bf16.mxu0 0
      %5997 = vmatpush1.bf16.msra.mxu0 0
      %5998 = vmatprep.subr.bf16.mxu0 0
      %5999 = vmatpush1.bf16.msra.mxu0 0
      %6000 = vmatprep.subr.bf16.mxu0 0
      %6001 = vmatpush1.bf16.msra.mxu0 0
      %6002 = vmatprep.subr.bf16.mxu0 0
      %6003 = vmatpush1.bf16.msra.mxu0 0
      %6004 = vmatprep.subr.bf16.mxu0 0
      %6005 = vmatpush1.bf16.msra.mxu0 0
      %6006 = vmatprep.subr.bf16.mxu0 0
      %6007 = vmatpush1.bf16.msra.mxu0 0
      %6008 = vmatprep.subr.bf16.mxu0 0
      %6009 = vmatpush1.bf16.msra.mxu0 0
      %6010 = vmatprep.subr.bf16.mxu0 0
      %6011 = vmatpush1.bf16.msra.mxu0 0
      %6012 = vmatprep.subr.bf16.mxu0 0
      %6013 = vmatpush1.bf16.msra.mxu0 0
      %6014 = vmatprep.subr.bf16.mxu0 0
      %6015 = vmatpush1.bf16.msra.mxu0 0
      %6016 = vmatprep.subr.bf16.mxu0 0
      %6017 = vmatpush1.bf16.msra.mxu0 0
      %6018 = vmatprep.mubr.bf16.mxu0 0
      %6019 = vmatmul.mubr.bf16.gmra.mrb[0].mxu0 %v5981
      %v6020 = vpop.f32.mrb[0].mxu0
      %v6021 = vadd.f32 0.0, %v6020
      %v6022 = vpop.f32.mrb[0].mxu0
      %v6023 = vpop.f32.mrb[0].mxu0
      %v6024 = vpop.f32.mrb[0].mxu0
      %6025 = vdwg.mxu0
      %6026 = vrot.lane.b32.xlu0 %v1120, 112
      %v6027 = vpop.permute.xlu0 %6026
      %v6029 = vsel %vm1128, %v5634, 0
      %v6032 = vsel %vm2076, %v6027, 0
      %6034 = vmatprep.subr.bf16.mxu0 0
      %6035 = vmatpush1.bf16.msra.mxu0 %v6032
      %6036 = vmatprep.subr.bf16.mxu0 0
      %6037 = vmatpush1.bf16.msra.mxu0 0
      %6038 = vmatprep.subr.bf16.mxu0 0
      %6039 = vmatpush1.bf16.msra.mxu0 0
      %6040 = vmatprep.subr.bf16.mxu0 0
      %6041 = vmatpush1.bf16.msra.mxu0 0
      %6042 = vmatprep.subr.bf16.mxu0 0
      %6043 = vmatpush1.bf16.msra.mxu0 0
      %6044 = vmatprep.subr.bf16.mxu0 0
      %6045 = vmatpush1.bf16.msra.mxu0 0
      %6046 = vmatprep.subr.bf16.mxu0 0
      %6047 = vmatpush1.bf16.msra.mxu0 0
      %6048 = vmatprep.subr.bf16.mxu0 0
      %6049 = vmatpush1.bf16.msra.mxu0 0
      %6050 = vmatprep.subr.bf16.mxu0 0
      %6051 = vmatpush1.bf16.msra.mxu0 0
      %6052 = vmatprep.subr.bf16.mxu0 0
      %6053 = vmatpush1.bf16.msra.mxu0 0
      %6054 = vmatprep.subr.bf16.mxu0 0
      %6055 = vmatpush1.bf16.msra.mxu0 0
      %6056 = vmatprep.subr.bf16.mxu0 0
      %6057 = vmatpush1.bf16.msra.mxu0 0
      %6058 = vmatprep.subr.bf16.mxu0 0
      %6059 = vmatpush1.bf16.msra.mxu0 0
      %6060 = vmatprep.subr.bf16.mxu0 0
      %6061 = vmatpush1.bf16.msra.mxu0 0
      %6062 = vmatprep.subr.bf16.mxu0 0
      %6063 = vmatpush1.bf16.msra.mxu0 0
      %6064 = vmatprep.subr.bf16.mxu0 0
      %6065 = vmatpush1.bf16.msra.mxu0 0
      %6066 = vmatprep.mubr.bf16.mxu0 0
      %6067 = vmatmul.mubr.bf16.gmra.mrb[0].mxu0 %v6029
      %v6068 = vpop.f32.mrb[0].mxu0
      %v6069 = vadd.f32 0.0, %v6068
      %v6070 = vpop.f32.mrb[0].mxu0
      %v6071 = vpop.f32.mrb[0].mxu0
      %v6072 = vpop.f32.mrb[0].mxu0
      %6073 = vdwg.mxu0
      %6074 = vrot.lane.b32.xlu0 %v1121, 112
      %v6075 = vpop.permute.xlu0 %6074
      %v6077 = vsel %vm1128, %v5635, 0
      %v6080 = vsel %vm2076, %v6075, 0
      %6082 = vmatprep.subr.bf16.mxu0 0
      %6083 = vmatpush1.bf16.msra.mxu0 %v6080
      %6084 = vmatprep.subr.bf16.mxu0 0
      %6085 = vmatpush1.bf16.msra.mxu0 0
      %6086 = vmatprep.subr.bf16.mxu0 0
      %6087 = vmatpush1.bf16.msra.mxu0 0
      %6088 = vmatprep.subr.bf16.mxu0 0
      %6089 = vmatpush1.bf16.msra.mxu0 0
      %6090 = vmatprep.subr.bf16.mxu0 0
      %6091 = vmatpush1.bf16.msra.mxu0 0
      %6092 = vmatprep.subr.bf16.mxu0 0
      %6093 = vmatpush1.bf16.msra.mxu0 0
      %6094 = vmatprep.subr.bf16.mxu0 0
      %6095 = vmatpush1.bf16.msra.mxu0 0
      %6096 = vmatprep.subr.bf16.mxu0 0
      %6097 = vmatpush1.bf16.msra.mxu0 0
      %6098 = vmatprep.subr.bf16.mxu0 0
      %6099 = vmatpush1.bf16.msra.mxu0 0
      %6100 = vmatprep.subr.bf16.mxu0 0
      %6101 = vmatpush1.bf16.msra.mxu0 0
      %6102 = vmatprep.subr.bf16.mxu0 0
      %6103 = vmatpush1.bf16.msra.mxu0 0
      %6104 = vmatprep.subr.bf16.mxu0 0
      %6105 = vmatpush1.bf16.msra.mxu0 0
      %6106 = vmatprep.subr.bf16.mxu0 0
      %6107 = vmatpush1.bf16.msra.mxu0 0
      %6108 = vmatprep.subr.bf16.mxu0 0
      %6109 = vmatpush1.bf16.msra.mxu0 0
      %6110 = vmatprep.subr.bf16.mxu0 0
      %6111 = vmatpush1.bf16.msra.mxu0 0
      %6112 = vmatprep.subr.bf16.mxu0 0
      %6113 = vmatpush1.bf16.msra.mxu0 0
      %6114 = vmatprep.mubr.bf16.mxu0 0
      %6115 = vmatmul.mubr.bf16.gmra.mrb[0].mxu0 %v6077
      %v6116 = vpop.f32.mrb[0].mxu0
      %v6117 = vadd.f32 0.0, %v6116
      %v6118 = vpop.f32.mrb[0].mxu0
      %v6119 = vpop.f32.mrb[0].mxu0
      %v6120 = vpop.f32.mrb[0].mxu0
      %6121 = vdwg.mxu0
      %6122 = vrot.lane.b32.xlu0 %v1122, 112
      %v6123 = vpop.permute.xlu0 %6122
      %v6125 = vsel %vm1128, %v5636, 0
      %v6128 = vsel %vm2076, %v6123, 0
      %6130 = vmatprep.subr.bf16.mxu0 0
      %6131 = vmatpush1.bf16.msra.mxu0 %v6128
      %6132 = vmatprep.subr.bf16.mxu0 0
      %6133 = vmatpush1.bf16.msra.mxu0 0
      %6134 = vmatprep.subr.bf16.mxu0 0
      %6135 = vmatpush1.bf16.msra.mxu0 0
      %6136 = vmatprep.subr.bf16.mxu0 0
      %6137 = vmatpush1.bf16.msra.mxu0 0
      %6138 = vmatprep.subr.bf16.mxu0 0
      %6139 = vmatpush1.bf16.msra.mxu0 0
      %6140 = vmatprep.subr.bf16.mxu0 0
      %6141 = vmatpush1.bf16.msra.mxu0 0
      %6142 = vmatprep.subr.bf16.mxu0 0
      %6143 = vmatpush1.bf16.msra.mxu0 0
      %6144 = vmatprep.subr.bf16.mxu0 0
      %6145 = vmatpush1.bf16.msra.mxu0 0
      %6146 = vmatprep.subr.bf16.mxu0 0
      %6147 = vmatpush1.bf16.msra.mxu0 0
      %6148 = vmatprep.subr.bf16.mxu0 0
      %6149 = vmatpush1.bf16.msra.mxu0 0
      %6150 = vmatprep.subr.bf16.mxu0 0
      %6151 = vmatpush1.bf16.msra.mxu0 0
      %6152 = vmatprep.subr.bf16.mxu0 0
      %6153 = vmatpush1.bf16.msra.mxu0 0
      %6154 = vmatprep.subr.bf16.mxu0 0
      %6155 = vmatpush1.bf16.msra.mxu0 0
      %6156 = vmatprep.subr.bf16.mxu0 0
      %6157 = vmatpush1.bf16.msra.mxu0 0
      %6158 = vmatprep.subr.bf16.mxu0 0
      %6159 = vmatpush1.bf16.msra.mxu0 0
      %6160 = vmatprep.subr.bf16.mxu0 0
      %6161 = vmatpush1.bf16.msra.mxu0 0
      %6162 = vmatprep.mubr.bf16.mxu0 0
      %6163 = vmatmul.mubr.bf16.gmra.mrb[0].mxu0 %v6125
      %v6164 = vpop.f32.mrb[0].mxu0
      %v6165 = vadd.f32 0.0, %v6164
      %v6166 = vpop.f32.mrb[0].mxu0
      %v6167 = vpop.f32.mrb[0].mxu0
      %v6168 = vpop.f32.mrb[0].mxu0
      %6169 = vdwg.mxu0
      %6170 = vrot.lane.b32.xlu0 %v1123, 112
      %v6171 = vpop.permute.xlu0 %6170
      %v6173 = vsel %vm1128, %v5637, 0
      %v6176 = vsel %vm2076, %v6171, 0
      %6178 = vmatprep.subr.bf16.mxu0 0
      %6179 = vmatpush1.bf16.msra.mxu0 %v6176
      %6180 = vmatprep.subr.bf16.mxu0 0
      %6181 = vmatpush1.bf16.msra.mxu0 0
      %6182 = vmatprep.subr.bf16.mxu0 0
      %6183 = vmatpush1.bf16.msra.mxu0 0
      %6184 = vmatprep.subr.bf16.mxu0 0
      %6185 = vmatpush1.bf16.msra.mxu0 0
      %6186 = vmatprep.subr.bf16.mxu0 0
      %6187 = vmatpush1.bf16.msra.mxu0 0
      %6188 = vmatprep.subr.bf16.mxu0 0
      %6189 = vmatpush1.bf16.msra.mxu0 0
      %6190 = vmatprep.subr.bf16.mxu0 0
      %6191 = vmatpush1.bf16.msra.mxu0 0
      %6192 = vmatprep.subr.bf16.mxu0 0
      %6193 = vmatpush1.bf16.msra.mxu0 0
      %6194 = vmatprep.subr.bf16.mxu0 0
      %6195 = vmatpush1.bf16.msra.mxu0 0
      %6196 = vmatprep.subr.bf16.mxu0 0
      %6197 = vmatpush1.bf16.msra.mxu0 0
      %6198 = vmatprep.subr.bf16.mxu0 0
      %6199 = vmatpush1.bf16.msra.mxu0 0
      %6200 = vmatprep.subr.bf16.mxu0 0
      %6201 = vmatpush1.bf16.msra.mxu0 0
      %6202 = vmatprep.subr.bf16.mxu0 0
      %6203 = vmatpush1.bf16.msra.mxu0 0
      %6204 = vmatprep.subr.bf16.mxu0 0
      %6205 = vmatpush1.bf16.msra.mxu0 0
      %6206 = vmatprep.subr.bf16.mxu0 0
      %6207 = vmatpush1.bf16.msra.mxu0 0
      %6208 = vmatprep.subr.bf16.mxu0 0
      %6209 = vmatpush1.bf16.msra.mxu0 0
      %6210 = vmatprep.mubr.bf16.mxu0 0
      %6211 = vmatmul.mubr.bf16.gmra.mrb[0].mxu0 %v6173
      %v6212 = vpop.f32.mrb[0].mxu0
      %v6213 = vadd.f32 0.0, %v6212
      %v6214 = vpop.f32.mrb[0].mxu0
      %v6215 = vpop.f32.mrb[0].mxu0
      %v6216 = vpop.f32.mrb[0].mxu0
      %6217 = vdwg.mxu0
      %6218 = vrot.lane.b32.xlu0 %v1124, 112
      %v6219 = vpop.permute.xlu0 %6218
      %v6221 = vsel %vm1128, %v5638, 0
      %v6224 = vsel %vm2076, %v6219, 0
      %6226 = vmatprep.subr.bf16.mxu0 0
      %6227 = vmatpush1.bf16.msra.mxu0 %v6224
      %6228 = vmatprep.subr.bf16.mxu0 0
      %6229 = vmatpush1.bf16.msra.mxu0 0
      %6230 = vmatprep.subr.bf16.mxu0 0
      %6231 = vmatpush1.bf16.msra.mxu0 0
      %6232 = vmatprep.subr.bf16.mxu0 0
      %6233 = vmatpush1.bf16.msra.mxu0 0
      %6234 = vmatprep.subr.bf16.mxu0 0
      %6235 = vmatpush1.bf16.msra.mxu0 0
      %6236 = vmatprep.subr.bf16.mxu0 0
      %6237 = vmatpush1.bf16.msra.mxu0 0
      %6238 = vmatprep.subr.bf16.mxu0 0
      %6239 = vmatpush1.bf16.msra.mxu0 0
      %6240 = vmatprep.subr.bf16.mxu0 0
      %6241 = vmatpush1.bf16.msra.mxu0 0
      %6242 = vmatprep.subr.bf16.mxu0 0
      %6243 = vmatpush1.bf16.msra.mxu0 0
      %6244 = vmatprep.subr.bf16.mxu0 0
      %6245 = vmatpush1.bf16.msra.mxu0 0
      %6246 = vmatprep.subr.bf16.mxu0 0
      %6247 = vmatpush1.bf16.msra.mxu0 0
      %6248 = vmatprep.subr.bf16.mxu0 0
      %6249 = vmatpush1.bf16.msra.mxu0 0
      %6250 = vmatprep.subr.bf16.mxu0 0
      %6251 = vmatpush1.bf16.msra.mxu0 0
      %6252 = vmatprep.subr.bf16.mxu0 0
      %6253 = vmatpush1.bf16.msra.mxu0 0
      %6254 = vmatprep.subr.bf16.mxu0 0
      %6255 = vmatpush1.bf16.msra.mxu0 0
      %6256 = vmatprep.subr.bf16.mxu0 0
      %6257 = vmatpush1.bf16.msra.mxu0 0
      %6258 = vmatprep.mubr.bf16.mxu0 0
      %6259 = vmatmul.mubr.bf16.gmra.mrb[0].mxu0 %v6221
      %v6260 = vpop.f32.mrb[0].mxu0
      %v6261 = vadd.f32 0.0, %v6260
      %v6262 = vpop.f32.mrb[0].mxu0
      %v6263 = vpop.f32.mrb[0].mxu0
      %v6264 = vpop.f32.mrb[0].mxu0
      %6265 = vdwg.mxu0
      %6266 = vrot.lane.b32.xlu0 %v1125, 112
      %v6267 = vpop.permute.xlu0 %6266
      %v6269 = vsel %vm1128, %v5639, 0
      %v6272 = vsel %vm2076, %v6267, 0
      %6274 = vmatprep.subr.bf16.mxu0 0
      %6275 = vmatpush1.bf16.msra.mxu0 %v6272
      %6276 = vmatprep.subr.bf16.mxu0 0
      %6277 = vmatpush1.bf16.msra.mxu0 0
      %6278 = vmatprep.subr.bf16.mxu0 0
      %6279 = vmatpush1.bf16.msra.mxu0 0
      %6280 = vmatprep.subr.bf16.mxu0 0
      %6281 = vmatpush1.bf16.msra.mxu0 0
      %6282 = vmatprep.subr.bf16.mxu0 0
      %6283 = vmatpush1.bf16.msra.mxu0 0
      %6284 = vmatprep.subr.bf16.mxu0 0
      %6285 = vmatpush1.bf16.msra.mxu0 0
      %6286 = vmatprep.subr.bf16.mxu0 0
      %6287 = vmatpush1.bf16.msra.mxu0 0
      %6288 = vmatprep.subr.bf16.mxu0 0
      %6289 = vmatpush1.bf16.msra.mxu0 0
      %6290 = vmatprep.subr.bf16.mxu0 0
      %6291 = vmatpush1.bf16.msra.mxu0 0
      %6292 = vmatprep.subr.bf16.mxu0 0
      %6293 = vmatpush1.bf16.msra.mxu0 0
      %6294 = vmatprep.subr.bf16.mxu0 0
      %6295 = vmatpush1.bf16.msra.mxu0 0
      %6296 = vmatprep.subr.bf16.mxu0 0
      %6297 = vmatpush1.bf16.msra.mxu0 0
      %6298 = vmatprep.subr.bf16.mxu0 0
      %6299 = vmatpush1.bf16.msra.mxu0 0
      %6300 = vmatprep.subr.bf16.mxu0 0
      %6301 = vmatpush1.bf16.msra.mxu0 0
      %6302 = vmatprep.subr.bf16.mxu0 0
      %6303 = vmatpush1.bf16.msra.mxu0 0
      %6304 = vmatprep.subr.bf16.mxu0 0
      %6305 = vmatpush1.bf16.msra.mxu0 0
      %6306 = vmatprep.mubr.bf16.mxu0 0
      %6307 = vmatmul.mubr.bf16.gmra.mrb[0].mxu0 %v6269
      %v6308 = vpop.f32.mrb[0].mxu0
      %v6309 = vadd.f32 0.0, %v6308
      %v6310 = vpop.f32.mrb[0].mxu0
      %v6311 = vpop.f32.mrb[0].mxu0
      %v6312 = vpop.f32.mrb[0].mxu0
      %6313 = vdwg.mxu0
      %6314 = vrot.lane.b32.xlu0 %v1126, 112
      %v6315 = vpop.permute.xlu0 %6314
      %v6317 = vsel %vm1128, %v5640, 0
      %v6320 = vsel %vm2076, %v6315, 0
      %6322 = vmatprep.subr.bf16.mxu0 0
      %6323 = vmatpush1.bf16.msra.mxu0 %v6320
      %6324 = vmatprep.subr.bf16.mxu0 0
      %6325 = vmatpush1.bf16.msra.mxu0 0
      %6326 = vmatprep.subr.bf16.mxu0 0
      %6327 = vmatpush1.bf16.msra.mxu0 0
      %6328 = vmatprep.subr.bf16.mxu0 0
      %6329 = vmatpush1.bf16.msra.mxu0 0
      %6330 = vmatprep.subr.bf16.mxu0 0
      %6331 = vmatpush1.bf16.msra.mxu0 0
      %6332 = vmatprep.subr.bf16.mxu0 0
      %6333 = vmatpush1.bf16.msra.mxu0 0
      %6334 = vmatprep.subr.bf16.mxu0 0
      %6335 = vmatpush1.bf16.msra.mxu0 0
      %6336 = vmatprep.subr.bf16.mxu0 0
      %6337 = vmatpush1.bf16.msra.mxu0 0
      %6338 = vmatprep.subr.bf16.mxu0 0
      %6339 = vmatpush1.bf16.msra.mxu0 0
      %6340 = vmatprep.subr.bf16.mxu0 0
      %6341 = vmatpush1.bf16.msra.mxu0 0
      %6342 = vmatprep.subr.bf16.mxu0 0
      %6343 = vmatpush1.bf16.msra.mxu0 0
      %6344 = vmatprep.subr.bf16.mxu0 0
      %6345 = vmatpush1.bf16.msra.mxu0 0
      %6346 = vmatprep.subr.bf16.mxu0 0
      %6347 = vmatpush1.bf16.msra.mxu0 0
      %6348 = vmatprep.subr.bf16.mxu0 0
      %6349 = vmatpush1.bf16.msra.mxu0 0
      %6350 = vmatprep.subr.bf16.mxu0 0
      %6351 = vmatpush1.bf16.msra.mxu0 0
      %6352 = vmatprep.subr.bf16.mxu0 0
      %6353 = vmatpush1.bf16.msra.mxu0 0
      %6354 = vmatprep.mubr.bf16.mxu0 0
      %6355 = vmatmul.mubr.bf16.gmra.mrb[0].mxu0 %v6317
      %v6356 = vpop.f32.mrb[0].mxu0
      %v6357 = vadd.f32 0.0, %v6356
      %v6358 = vpop.f32.mrb[0].mxu0
      %v6359 = vpop.f32.mrb[0].mxu0
      %v6360 = vpop.f32.mrb[0].mxu0
      %6361 = vdwg.mxu0
      %6362 = vrot.lane.b32.xlu0 %v1127, 112
      %v6363 = vpop.permute.xlu0 %6362
      %v6365 = vsel %vm1128, %v5641, 0
      %v6368 = vsel %vm2076, %v6363, 0
      %6370 = vmatprep.subr.bf16.mxu0 0
      %6371 = vmatpush1.bf16.msra.mxu0 %v6368
      %6372 = vmatprep.subr.bf16.mxu0 0
      %6373 = vmatpush1.bf16.msra.mxu0 0
      %6374 = vmatprep.subr.bf16.mxu0 0
      %6375 = vmatpush1.bf16.msra.mxu0 0
      %6376 = vmatprep.subr.bf16.mxu0 0
      %6377 = vmatpush1.bf16.msra.mxu0 0
      %6378 = vmatprep.subr.bf16.mxu0 0
      %6379 = vmatpush1.bf16.msra.mxu0 0
      %6380 = vmatprep.subr.bf16.mxu0 0
      %6381 = vmatpush1.bf16.msra.mxu0 0
      %6382 = vmatprep.subr.bf16.mxu0 0
      %6383 = vmatpush1.bf16.msra.mxu0 0
      %6384 = vmatprep.subr.bf16.mxu0 0
      %6385 = vmatpush1.bf16.msra.mxu0 0
      %6386 = vmatprep.subr.bf16.mxu0 0
      %6387 = vmatpush1.bf16.msra.mxu0 0
      %6388 = vmatprep.subr.bf16.mxu0 0
      %6389 = vmatpush1.bf16.msra.mxu0 0
      %6390 = vmatprep.subr.bf16.mxu0 0
      %6391 = vmatpush1.bf16.msra.mxu0 0
      %6392 = vmatprep.subr.bf16.mxu0 0
      %6393 = vmatpush1.bf16.msra.mxu0 0
      %6394 = vmatprep.subr.bf16.mxu0 0
      %6395 = vmatpush1.bf16.msra.mxu0 0
      %6396 = vmatprep.subr.bf16.mxu0 0
      %6397 = vmatpush1.bf16.msra.mxu0 0
      %6398 = vmatprep.subr.bf16.mxu0 0
      %6399 = vmatpush1.bf16.msra.mxu0 0
      %6400 = vmatprep.subr.bf16.mxu0 0
      %6401 = vmatpush1.bf16.msra.mxu0 0
      %6402 = vmatprep.mubr.bf16.mxu0 0
      %6403 = vmatmul.mubr.bf16.gmra.mrb[0].mxu0 %v6365
      %v6404 = vpop.f32.mrb[0].mxu0
      %v6405 = vadd.f32 0.0, %v6404
      %v6406 = vpop.f32.mrb[0].mxu0
      %v6407 = vpop.f32.mrb[0].mxu0
      %v6408 = vpop.f32.mrb[0].mxu0
      %6409 = vdwg.mxu0
      %6410 = vrot.lane.b32.xlu0 %v1080, 104
      %v6411 = vpop.permute.xlu0 %6410
      %6412 = vrot.lane.b32.xlu0 %v1096, 104
      %v6413 = vpop.permute.xlu0 %6412
      %v6415 = vsel %vm1128, %v6411, 0
      %v6418 = vsel %vm1128, %v6413, 0
      %6420 = vmatprep.subr.bf16.mxu0 0
      %6421 = vmatpush1.bf16.xpose.msra.mxu0 %v6418
      %6422 = vmatprep.subr.bf16.mxu0 0
      %6423 = vmatpush1.bf16.xpose.msra.mxu0 0
      %6424 = vmatprep.subr.bf16.mxu0 0
      %6425 = vmatpush1.bf16.xpose.msra.mxu0 0
      %6426 = vmatprep.subr.bf16.mxu0 0
      %6427 = vmatpush1.bf16.xpose.msra.mxu0 0
      %6428 = vmatprep.subr.bf16.mxu0 0
      %6429 = vmatpush1.bf16.xpose.msra.mxu0 0
      %6430 = vmatprep.subr.bf16.mxu0 0
      %6431 = vmatpush1.bf16.xpose.msra.mxu0 0
      %6432 = vmatprep.subr.bf16.mxu0 0
      %6433 = vmatpush1.bf16.xpose.msra.mxu0 0
      %6434 = vmatprep.subr.bf16.mxu0 0
      %6435 = vmatpush1.bf16.xpose.msra.mxu0 0
      %6436 = vmatprep.subr.bf16.mxu0 0
      %6437 = vmatpush1.bf16.xpose.msra.mxu0 0
      %6438 = vmatprep.subr.bf16.mxu0 0
      %6439 = vmatpush1.bf16.xpose.msra.mxu0 0
      %6440 = vmatprep.subr.bf16.mxu0 0
      %6441 = vmatpush1.bf16.xpose.msra.mxu0 0
      %6442 = vmatprep.subr.bf16.mxu0 0
      %6443 = vmatpush1.bf16.xpose.msra.mxu0 0
      %6444 = vmatprep.subr.bf16.mxu0 0
      %6445 = vmatpush1.bf16.xpose.msra.mxu0 0
      %6446 = vmatprep.subr.bf16.mxu0 0
      %6447 = vmatpush1.bf16.xpose.msra.mxu0 0
      %6448 = vmatprep.subr.bf16.mxu0 0
      %6449 = vmatpush1.bf16.xpose.msra.mxu0 0
      %6450 = vmatprep.subr.bf16.mxu0 0
      %6451 = vmatpush1.bf16.xpose.msra.mxu0 0
      %6452 = vmatprep.mubr.bf16.mxu0 0
      %6453 = vmatmul.mubr.bf16.gmra.mrb[0].mxu0 %v6415
      %v6454 = vpop.f32.mrb[0].mxu0
      %v6455 = vadd.f32 0.0, %v6454
      %v6456 = vpop.f32.mrb[0].mxu0
      %v6457 = vpop.f32.mrb[0].mxu0
      %v6458 = vpop.f32.mrb[0].mxu0
      %6459 = vdwg.mxu0
      %6460 = vrot.lane.b32.xlu0 %v1081, 104
      %v6461 = vpop.permute.xlu0 %6460
      %6462 = vrot.lane.b32.xlu0 %v1097, 104
      %v6463 = vpop.permute.xlu0 %6462
      %v6465 = vsel %vm1128, %v6461, 0
      %v6468 = vsel %vm1128, %v6463, 0
      %6470 = vmatprep.subr.bf16.mxu0 0
      %6471 = vmatpush1.bf16.xpose.msra.mxu0 %v6468
      %6472 = vmatprep.subr.bf16.mxu0 0
      %6473 = vmatpush1.bf16.xpose.msra.mxu0 0
      %6474 = vmatprep.subr.bf16.mxu0 0
      %6475 = vmatpush1.bf16.xpose.msra.mxu0 0
      %6476 = vmatprep.subr.bf16.mxu0 0
      %6477 = vmatpush1.bf16.xpose.msra.mxu0 0
      %6478 = vmatprep.subr.bf16.mxu0 0
      %6479 = vmatpush1.bf16.xpose.msra.mxu0 0
      %6480 = vmatprep.subr.bf16.mxu0 0
      %6481 = vmatpush1.bf16.xpose.msra.mxu0 0
      %6482 = vmatprep.subr.bf16.mxu0 0
      %6483 = vmatpush1.bf16.xpose.msra.mxu0 0
      %6484 = vmatprep.subr.bf16.mxu0 0
      %6485 = vmatpush1.bf16.xpose.msra.mxu0 0
      %6486 = vmatprep.subr.bf16.mxu0 0
      %6487 = vmatpush1.bf16.xpose.msra.mxu0 0
      %6488 = vmatprep.subr.bf16.mxu0 0
      %6489 = vmatpush1.bf16.xpose.msra.mxu0 0
      %6490 = vmatprep.subr.bf16.mxu0 0
      %6491 = vmatpush1.bf16.xpose.msra.mxu0 0
      %6492 = vmatprep.subr.bf16.mxu0 0
      %6493 = vmatpush1.bf16.xpose.msra.mxu0 0
      %6494 = vmatprep.subr.bf16.mxu0 0
      %6495 = vmatpush1.bf16.xpose.msra.mxu0 0
      %6496 = vmatprep.subr.bf16.mxu0 0
      %6497 = vmatpush1.bf16.xpose.msra.mxu0 0
      %6498 = vmatprep.subr.bf16.mxu0 0
      %6499 = vmatpush1.bf16.xpose.msra.mxu0 0
      %6500 = vmatprep.subr.bf16.mxu0 0
      %6501 = vmatpush1.bf16.xpose.msra.mxu0 0
      %6502 = vmatprep.mubr.bf16.mxu0 0
      %6503 = vmatmul.mubr.bf16.gmra.mrb[0].mxu0 %v6465
      %v6504 = vpop.f32.mrb[0].mxu0
      %v6505 = vadd.f32 0.0, %v6504
      %v6506 = vpop.f32.mrb[0].mxu0
      %v6507 = vpop.f32.mrb[0].mxu0
      %v6508 = vpop.f32.mrb[0].mxu0
      %6509 = vdwg.mxu0
      %6510 = vrot.lane.b32.xlu0 %v1082, 104
      %v6511 = vpop.permute.xlu0 %6510
      %6512 = vrot.lane.b32.xlu0 %v1098, 104
      %v6513 = vpop.permute.xlu0 %6512
      %v6515 = vsel %vm1128, %v6511, 0
      %v6518 = vsel %vm1128, %v6513, 0
      %6520 = vmatprep.subr.bf16.mxu0 0
      %6521 = vmatpush1.bf16.xpose.msra.mxu0 %v6518
      %6522 = vmatprep.subr.bf16.mxu0 0
      %6523 = vmatpush1.bf16.xpose.msra.mxu0 0
      %6524 = vmatprep.subr.bf16.mxu0 0
      %6525 = vmatpush1.bf16.xpose.msra.mxu0 0
      %6526 = vmatprep.subr.bf16.mxu0 0
      %6527 = vmatpush1.bf16.xpose.msra.mxu0 0
      %6528 = vmatprep.subr.bf16.mxu0 0
      %6529 = vmatpush1.bf16.xpose.msra.mxu0 0
      %6530 = vmatprep.subr.bf16.mxu0 0
      %6531 = vmatpush1.bf16.xpose.msra.mxu0 0
      %6532 = vmatprep.subr.bf16.mxu0 0
      %6533 = vmatpush1.bf16.xpose.msra.mxu0 0
      %6534 = vmatprep.subr.bf16.mxu0 0
      %6535 = vmatpush1.bf16.xpose.msra.mxu0 0
      %6536 = vmatprep.subr.bf16.mxu0 0
      %6537 = vmatpush1.bf16.xpose.msra.mxu0 0
      %6538 = vmatprep.subr.bf16.mxu0 0
      %6539 = vmatpush1.bf16.xpose.msra.mxu0 0
      %6540 = vmatprep.subr.bf16.mxu0 0
      %6541 = vmatpush1.bf16.xpose.msra.mxu0 0
      %6542 = vmatprep.subr.bf16.mxu0 0
      %6543 = vmatpush1.bf16.xpose.msra.mxu0 0
      %6544 = vmatprep.subr.bf16.mxu0 0
      %6545 = vmatpush1.bf16.xpose.msra.mxu0 0
      %6546 = vmatprep.subr.bf16.mxu0 0
      %6547 = vmatpush1.bf16.xpose.msra.mxu0 0
      %6548 = vmatprep.subr.bf16.mxu0 0
      %6549 = vmatpush1.bf16.xpose.msra.mxu0 0
      %6550 = vmatprep.subr.bf16.mxu0 0
      %6551 = vmatpush1.bf16.xpose.msra.mxu0 0
      %6552 = vmatprep.mubr.bf16.mxu0 0
      %6553 = vmatmul.mubr.bf16.gmra.mrb[0].mxu0 %v6515
      %v6554 = vpop.f32.mrb[0].mxu0
      %v6555 = vadd.f32 0.0, %v6554
      %v6556 = vpop.f32.mrb[0].mxu0
      %v6557 = vpop.f32.mrb[0].mxu0
      %v6558 = vpop.f32.mrb[0].mxu0
      %6559 = vdwg.mxu0
      %6560 = vrot.lane.b32.xlu0 %v1083, 104
      %v6561 = vpop.permute.xlu0 %6560
      %6562 = vrot.lane.b32.xlu0 %v1099, 104
      %v6563 = vpop.permute.xlu0 %6562
      %v6565 = vsel %vm1128, %v6561, 0
      %v6568 = vsel %vm1128, %v6563, 0
      %6570 = vmatprep.subr.bf16.mxu0 0
      %6571 = vmatpush1.bf16.xpose.msra.mxu0 %v6568
      %6572 = vmatprep.subr.bf16.mxu0 0
      %6573 = vmatpush1.bf16.xpose.msra.mxu0 0
      %6574 = vmatprep.subr.bf16.mxu0 0
      %6575 = vmatpush1.bf16.xpose.msra.mxu0 0
      %6576 = vmatprep.subr.bf16.mxu0 0
      %6577 = vmatpush1.bf16.xpose.msra.mxu0 0
      %6578 = vmatprep.subr.bf16.mxu0 0
      %6579 = vmatpush1.bf16.xpose.msra.mxu0 0
      %6580 = vmatprep.subr.bf16.mxu0 0
      %6581 = vmatpush1.bf16.xpose.msra.mxu0 0
      %6582 = vmatprep.subr.bf16.mxu0 0
      %6583 = vmatpush1.bf16.xpose.msra.mxu0 0
      %6584 = vmatprep.subr.bf16.mxu0 0
      %6585 = vmatpush1.bf16.xpose.msra.mxu0 0
      %6586 = vmatprep.subr.bf16.mxu0 0
      %6587 = vmatpush1.bf16.xpose.msra.mxu0 0
      %6588 = vmatprep.subr.bf16.mxu0 0
      %6589 = vmatpush1.bf16.xpose.msra.mxu0 0
      %6590 = vmatprep.subr.bf16.mxu0 0
      %6591 = vmatpush1.bf16.xpose.msra.mxu0 0
      %6592 = vmatprep.subr.bf16.mxu0 0
      %6593 = vmatpush1.bf16.xpose.msra.mxu0 0
      %6594 = vmatprep.subr.bf16.mxu0 0
      %6595 = vmatpush1.bf16.xpose.msra.mxu0 0
      %6596 = vmatprep.subr.bf16.mxu0 0
      %6597 = vmatpush1.bf16.xpose.msra.mxu0 0
      %6598 = vmatprep.subr.bf16.mxu0 0
      %6599 = vmatpush1.bf16.xpose.msra.mxu0 0
      %6600 = vmatprep.subr.bf16.mxu0 0
      %6601 = vmatpush1.bf16.xpose.msra.mxu0 0
      %6602 = vmatprep.mubr.bf16.mxu0 0
      %6603 = vmatmul.mubr.bf16.gmra.mrb[0].mxu0 %v6565
      %v6604 = vpop.f32.mrb[0].mxu0
      %v6605 = vadd.f32 0.0, %v6604
      %v6606 = vpop.f32.mrb[0].mxu0
      %v6607 = vpop.f32.mrb[0].mxu0
      %v6608 = vpop.f32.mrb[0].mxu0
      %6609 = vdwg.mxu0
      %6610 = vrot.lane.b32.xlu0 %v1084, 104
      %v6611 = vpop.permute.xlu0 %6610
      %6612 = vrot.lane.b32.xlu0 %v1100, 104
      %v6613 = vpop.permute.xlu0 %6612
      %v6615 = vsel %vm1128, %v6611, 0
      %v6618 = vsel %vm1128, %v6613, 0
      %6620 = vmatprep.subr.bf16.mxu0 0
      %6621 = vmatpush1.bf16.xpose.msra.mxu0 %v6618
      %6622 = vmatprep.subr.bf16.mxu0 0
      %6623 = vmatpush1.bf16.xpose.msra.mxu0 0
      %6624 = vmatprep.subr.bf16.mxu0 0
      %6625 = vmatpush1.bf16.xpose.msra.mxu0 0
      %6626 = vmatprep.subr.bf16.mxu0 0
      %6627 = vmatpush1.bf16.xpose.msra.mxu0 0
      %6628 = vmatprep.subr.bf16.mxu0 0
      %6629 = vmatpush1.bf16.xpose.msra.mxu0 0
      %6630 = vmatprep.subr.bf16.mxu0 0
      %6631 = vmatpush1.bf16.xpose.msra.mxu0 0
      %6632 = vmatprep.subr.bf16.mxu0 0
      %6633 = vmatpush1.bf16.xpose.msra.mxu0 0
      %6634 = vmatprep.subr.bf16.mxu0 0
      %6635 = vmatpush1.bf16.xpose.msra.mxu0 0
      %6636 = vmatprep.subr.bf16.mxu0 0
      %6637 = vmatpush1.bf16.xpose.msra.mxu0 0
      %6638 = vmatprep.subr.bf16.mxu0 0
      %6639 = vmatpush1.bf16.xpose.msra.mxu0 0
      %6640 = vmatprep.subr.bf16.mxu0 0
      %6641 = vmatpush1.bf16.xpose.msra.mxu0 0
      %6642 = vmatprep.subr.bf16.mxu0 0
      %6643 = vmatpush1.bf16.xpose.msra.mxu0 0
      %6644 = vmatprep.subr.bf16.mxu0 0
      %6645 = vmatpush1.bf16.xpose.msra.mxu0 0
      %6646 = vmatprep.subr.bf16.mxu0 0
      %6647 = vmatpush1.bf16.xpose.msra.mxu0 0
      %6648 = vmatprep.subr.bf16.mxu0 0
      %6649 = vmatpush1.bf16.xpose.msra.mxu0 0
      %6650 = vmatprep.subr.bf16.mxu0 0
      %6651 = vmatpush1.bf16.xpose.msra.mxu0 0
      %6652 = vmatprep.mubr.bf16.mxu0 0
      %6653 = vmatmul.mubr.bf16.gmra.mrb[0].mxu0 %v6615
      %v6654 = vpop.f32.mrb[0].mxu0
      %v6655 = vadd.f32 0.0, %v6654
      %v6656 = vpop.f32.mrb[0].mxu0
      %v6657 = vpop.f32.mrb[0].mxu0
      %v6658 = vpop.f32.mrb[0].mxu0
      %6659 = vdwg.mxu0
      %6660 = vrot.lane.b32.xlu0 %v1085, 104
      %v6661 = vpop.permute.xlu0 %6660
      %6662 = vrot.lane.b32.xlu0 %v1101, 104
      %v6663 = vpop.permute.xlu0 %6662
      %v6665 = vsel %vm1128, %v6661, 0
      %v6668 = vsel %vm1128, %v6663, 0
      %6670 = vmatprep.subr.bf16.mxu0 0
      %6671 = vmatpush1.bf16.xpose.msra.mxu0 %v6668
      %6672 = vmatprep.subr.bf16.mxu0 0
      %6673 = vmatpush1.bf16.xpose.msra.mxu0 0
      %6674 = vmatprep.subr.bf16.mxu0 0
      %6675 = vmatpush1.bf16.xpose.msra.mxu0 0
      %6676 = vmatprep.subr.bf16.mxu0 0
      %6677 = vmatpush1.bf16.xpose.msra.mxu0 0
      %6678 = vmatprep.subr.bf16.mxu0 0
      %6679 = vmatpush1.bf16.xpose.msra.mxu0 0
      %6680 = vmatprep.subr.bf16.mxu0 0
      %6681 = vmatpush1.bf16.xpose.msra.mxu0 0
      %6682 = vmatprep.subr.bf16.mxu0 0
      %6683 = vmatpush1.bf16.xpose.msra.mxu0 0
      %6684 = vmatprep.subr.bf16.mxu0 0
      %6685 = vmatpush1.bf16.xpose.msra.mxu0 0
      %6686 = vmatprep.subr.bf16.mxu0 0
      %6687 = vmatpush1.bf16.xpose.msra.mxu0 0
      %6688 = vmatprep.subr.bf16.mxu0 0
      %6689 = vmatpush1.bf16.xpose.msra.mxu0 0
      %6690 = vmatprep.subr.bf16.mxu0 0
      %6691 = vmatpush1.bf16.xpose.msra.mxu0 0
      %6692 = vmatprep.subr.bf16.mxu0 0
      %6693 = vmatpush1.bf16.xpose.msra.mxu0 0
      %6694 = vmatprep.subr.bf16.mxu0 0
      %6695 = vmatpush1.bf16.xpose.msra.mxu0 0
      %6696 = vmatprep.subr.bf16.mxu0 0
      %6697 = vmatpush1.bf16.xpose.msra.mxu0 0
      %6698 = vmatprep.subr.bf16.mxu0 0
      %6699 = vmatpush1.bf16.xpose.msra.mxu0 0
      %6700 = vmatprep.subr.bf16.mxu0 0
      %6701 = vmatpush1.bf16.xpose.msra.mxu0 0
      %6702 = vmatprep.mubr.bf16.mxu0 0
      %6703 = vmatmul.mubr.bf16.gmra.mrb[0].mxu0 %v6665
      %v6704 = vpop.f32.mrb[0].mxu0
      %v6705 = vadd.f32 0.0, %v6704
      %v6706 = vpop.f32.mrb[0].mxu0
      %v6707 = vpop.f32.mrb[0].mxu0
      %v6708 = vpop.f32.mrb[0].mxu0
      %6709 = vdwg.mxu0
      %6710 = vrot.lane.b32.xlu0 %v1086, 104
      %v6711 = vpop.permute.xlu0 %6710
      %6712 = vrot.lane.b32.xlu0 %v1102, 104
      %v6713 = vpop.permute.xlu0 %6712
      %v6715 = vsel %vm1128, %v6711, 0
      %v6718 = vsel %vm1128, %v6713, 0
      %6720 = vmatprep.subr.bf16.mxu0 0
      %6721 = vmatpush1.bf16.xpose.msra.mxu0 %v6718
      %6722 = vmatprep.subr.bf16.mxu0 0
      %6723 = vmatpush1.bf16.xpose.msra.mxu0 0
      %6724 = vmatprep.subr.bf16.mxu0 0
      %6725 = vmatpush1.bf16.xpose.msra.mxu0 0
      %6726 = vmatprep.subr.bf16.mxu0 0
      %6727 = vmatpush1.bf16.xpose.msra.mxu0 0
      %6728 = vmatprep.subr.bf16.mxu0 0
      %6729 = vmatpush1.bf16.xpose.msra.mxu0 0
      %6730 = vmatprep.subr.bf16.mxu0 0
      %6731 = vmatpush1.bf16.xpose.msra.mxu0 0
      %6732 = vmatprep.subr.bf16.mxu0 0
      %6733 = vmatpush1.bf16.xpose.msra.mxu0 0
      %6734 = vmatprep.subr.bf16.mxu0 0
      %6735 = vmatpush1.bf16.xpose.msra.mxu0 0
      %6736 = vmatprep.subr.bf16.mxu0 0
      %6737 = vmatpush1.bf16.xpose.msra.mxu0 0
      %6738 = vmatprep.subr.bf16.mxu0 0
      %6739 = vmatpush1.bf16.xpose.msra.mxu0 0
      %6740 = vmatprep.subr.bf16.mxu0 0
      %6741 = vmatpush1.bf16.xpose.msra.mxu0 0
      %6742 = vmatprep.subr.bf16.mxu0 0
      %6743 = vmatpush1.bf16.xpose.msra.mxu0 0
      %6744 = vmatprep.subr.bf16.mxu0 0
      %6745 = vmatpush1.bf16.xpose.msra.mxu0 0
      %6746 = vmatprep.subr.bf16.mxu0 0
      %6747 = vmatpush1.bf16.xpose.msra.mxu0 0
      %6748 = vmatprep.subr.bf16.mxu0 0
      %6749 = vmatpush1.bf16.xpose.msra.mxu0 0
      %6750 = vmatprep.subr.bf16.mxu0 0
      %6751 = vmatpush1.bf16.xpose.msra.mxu0 0
      %6752 = vmatprep.mubr.bf16.mxu0 0
      %6753 = vmatmul.mubr.bf16.gmra.mrb[0].mxu0 %v6715
      %v6754 = vpop.f32.mrb[0].mxu0
      %v6755 = vadd.f32 0.0, %v6754
      %v6756 = vpop.f32.mrb[0].mxu0
      %v6757 = vpop.f32.mrb[0].mxu0
      %v6758 = vpop.f32.mrb[0].mxu0
      %6759 = vdwg.mxu0
      %6760 = vrot.lane.b32.xlu0 %v1087, 104
      %v6761 = vpop.permute.xlu0 %6760
      %6762 = vrot.lane.b32.xlu0 %v1103, 104
      %v6763 = vpop.permute.xlu0 %6762
      %v6765 = vsel %vm1128, %v6761, 0
      %v6768 = vsel %vm1128, %v6763, 0
      %6770 = vmatprep.subr.bf16.mxu0 0
      %6771 = vmatpush1.bf16.xpose.msra.mxu0 %v6768
      %6772 = vmatprep.subr.bf16.mxu0 0
      %6773 = vmatpush1.bf16.xpose.msra.mxu0 0
      %6774 = vmatprep.subr.bf16.mxu0 0
      %6775 = vmatpush1.bf16.xpose.msra.mxu0 0
      %6776 = vmatprep.subr.bf16.mxu0 0
      %6777 = vmatpush1.bf16.xpose.msra.mxu0 0
      %6778 = vmatprep.subr.bf16.mxu0 0
      %6779 = vmatpush1.bf16.xpose.msra.mxu0 0
      %6780 = vmatprep.subr.bf16.mxu0 0
      %6781 = vmatpush1.bf16.xpose.msra.mxu0 0
      %6782 = vmatprep.subr.bf16.mxu0 0
      %6783 = vmatpush1.bf16.xpose.msra.mxu0 0
      %6784 = vmatprep.subr.bf16.mxu0 0
      %6785 = vmatpush1.bf16.xpose.msra.mxu0 0
      %6786 = vmatprep.subr.bf16.mxu0 0
      %6787 = vmatpush1.bf16.xpose.msra.mxu0 0
      %6788 = vmatprep.subr.bf16.mxu0 0
      %6789 = vmatpush1.bf16.xpose.msra.mxu0 0
      %6790 = vmatprep.subr.bf16.mxu0 0
      %6791 = vmatpush1.bf16.xpose.msra.mxu0 0
      %6792 = vmatprep.subr.bf16.mxu0 0
      %6793 = vmatpush1.bf16.xpose.msra.mxu0 0
      %6794 = vmatprep.subr.bf16.mxu0 0
      %6795 = vmatpush1.bf16.xpose.msra.mxu0 0
      %6796 = vmatprep.subr.bf16.mxu0 0
      %6797 = vmatpush1.bf16.xpose.msra.mxu0 0
      %6798 = vmatprep.subr.bf16.mxu0 0
      %6799 = vmatpush1.bf16.xpose.msra.mxu0 0
      %6800 = vmatprep.subr.bf16.mxu0 0
      %6801 = vmatpush1.bf16.xpose.msra.mxu0 0
      %6802 = vmatprep.mubr.bf16.mxu0 0
      %6803 = vmatmul.mubr.bf16.gmra.mrb[0].mxu0 %v6765
      %v6804 = vpop.f32.mrb[0].mxu0
      %v6805 = vadd.f32 0.0, %v6804
      %v6806 = vpop.f32.mrb[0].mxu0
      %v6807 = vpop.f32.mrb[0].mxu0
      %v6808 = vpop.f32.mrb[0].mxu0
      %6809 = vdwg.mxu0
      %6810 = vrot.lane.b32.xlu0 %v1088, 104
      %v6811 = vpop.permute.xlu0 %6810
      %6812 = vrot.lane.b32.xlu0 %v1104, 104
      %v6813 = vpop.permute.xlu0 %6812
      %v6815 = vsel %vm1128, %v6811, 0
      %v6818 = vsel %vm1128, %v6813, 0
      %6820 = vmatprep.subr.bf16.mxu0 0
      %6821 = vmatpush1.bf16.xpose.msra.mxu0 %v6818
      %6822 = vmatprep.subr.bf16.mxu0 0
      %6823 = vmatpush1.bf16.xpose.msra.mxu0 0
      %6824 = vmatprep.subr.bf16.mxu0 0
      %6825 = vmatpush1.bf16.xpose.msra.mxu0 0
      %6826 = vmatprep.subr.bf16.mxu0 0
      %6827 = vmatpush1.bf16.xpose.msra.mxu0 0
      %6828 = vmatprep.subr.bf16.mxu0 0
      %6829 = vmatpush1.bf16.xpose.msra.mxu0 0
      %6830 = vmatprep.subr.bf16.mxu0 0
      %6831 = vmatpush1.bf16.xpose.msra.mxu0 0
      %6832 = vmatprep.subr.bf16.mxu0 0
      %6833 = vmatpush1.bf16.xpose.msra.mxu0 0
      %6834 = vmatprep.subr.bf16.mxu0 0
      %6835 = vmatpush1.bf16.xpose.msra.mxu0 0
      %6836 = vmatprep.subr.bf16.mxu0 0
      %6837 = vmatpush1.bf16.xpose.msra.mxu0 0
      %6838 = vmatprep.subr.bf16.mxu0 0
      %6839 = vmatpush1.bf16.xpose.msra.mxu0 0
      %6840 = vmatprep.subr.bf16.mxu0 0
      %6841 = vmatpush1.bf16.xpose.msra.mxu0 0
      %6842 = vmatprep.subr.bf16.mxu0 0
      %6843 = vmatpush1.bf16.xpose.msra.mxu0 0
      %6844 = vmatprep.subr.bf16.mxu0 0
      %6845 = vmatpush1.bf16.xpose.msra.mxu0 0
      %6846 = vmatprep.subr.bf16.mxu0 0
      %6847 = vmatpush1.bf16.xpose.msra.mxu0 0
      %6848 = vmatprep.subr.bf16.mxu0 0
      %6849 = vmatpush1.bf16.xpose.msra.mxu0 0
      %6850 = vmatprep.subr.bf16.mxu0 0
      %6851 = vmatpush1.bf16.xpose.msra.mxu0 0
      %6852 = vmatprep.mubr.bf16.mxu0 0
      %6853 = vmatmul.mubr.bf16.gmra.mrb[0].mxu0 %v6815
      %v6854 = vpop.f32.mrb[0].mxu0
      %v6855 = vadd.f32 0.0, %v6854
      %v6856 = vpop.f32.mrb[0].mxu0
      %v6857 = vpop.f32.mrb[0].mxu0
      %v6858 = vpop.f32.mrb[0].mxu0
      %6859 = vdwg.mxu0
      %6860 = vrot.lane.b32.xlu0 %v1089, 104
      %v6861 = vpop.permute.xlu0 %6860
      %6862 = vrot.lane.b32.xlu0 %v1105, 104
      %v6863 = vpop.permute.xlu0 %6862
      %v6865 = vsel %vm1128, %v6861, 0
      %v6868 = vsel %vm1128, %v6863, 0
      %6870 = vmatprep.subr.bf16.mxu0 0
      %6871 = vmatpush1.bf16.xpose.msra.mxu0 %v6868
      %6872 = vmatprep.subr.bf16.mxu0 0
      %6873 = vmatpush1.bf16.xpose.msra.mxu0 0
      %6874 = vmatprep.subr.bf16.mxu0 0
      %6875 = vmatpush1.bf16.xpose.msra.mxu0 0
      %6876 = vmatprep.subr.bf16.mxu0 0
      %6877 = vmatpush1.bf16.xpose.msra.mxu0 0
      %6878 = vmatprep.subr.bf16.mxu0 0
      %6879 = vmatpush1.bf16.xpose.msra.mxu0 0
      %6880 = vmatprep.subr.bf16.mxu0 0
      %6881 = vmatpush1.bf16.xpose.msra.mxu0 0
      %6882 = vmatprep.subr.bf16.mxu0 0
      %6883 = vmatpush1.bf16.xpose.msra.mxu0 0
      %6884 = vmatprep.subr.bf16.mxu0 0
      %6885 = vmatpush1.bf16.xpose.msra.mxu0 0
      %6886 = vmatprep.subr.bf16.mxu0 0
      %6887 = vmatpush1.bf16.xpose.msra.mxu0 0
      %6888 = vmatprep.subr.bf16.mxu0 0
      %6889 = vmatpush1.bf16.xpose.msra.mxu0 0
      %6890 = vmatprep.subr.bf16.mxu0 0
      %6891 = vmatpush1.bf16.xpose.msra.mxu0 0
      %6892 = vmatprep.subr.bf16.mxu0 0
      %6893 = vmatpush1.bf16.xpose.msra.mxu0 0
      %6894 = vmatprep.subr.bf16.mxu0 0
      %6895 = vmatpush1.bf16.xpose.msra.mxu0 0
      %6896 = vmatprep.subr.bf16.mxu0 0
      %6897 = vmatpush1.bf16.xpose.msra.mxu0 0
      %6898 = vmatprep.subr.bf16.mxu0 0
      %6899 = vmatpush1.bf16.xpose.msra.mxu0 0
      %6900 = vmatprep.subr.bf16.mxu0 0
      %6901 = vmatpush1.bf16.xpose.msra.mxu0 0
      %6902 = vmatprep.mubr.bf16.mxu0 0
      %6903 = vmatmul.mubr.bf16.gmra.mrb[0].mxu0 %v6865
      %v6904 = vpop.f32.mrb[0].mxu0
      %v6905 = vadd.f32 0.0, %v6904
      %v6906 = vpop.f32.mrb[0].mxu0
      %v6907 = vpop.f32.mrb[0].mxu0
      %v6908 = vpop.f32.mrb[0].mxu0
      %6909 = vdwg.mxu0
      %6910 = vrot.lane.b32.xlu0 %v1090, 104
      %v6911 = vpop.permute.xlu0 %6910
      %6912 = vrot.lane.b32.xlu0 %v1106, 104
      %v6913 = vpop.permute.xlu0 %6912
      %v6915 = vsel %vm1128, %v6911, 0
      %v6918 = vsel %vm1128, %v6913, 0
      %6920 = vmatprep.subr.bf16.mxu0 0
      %6921 = vmatpush1.bf16.xpose.msra.mxu0 %v6918
      %6922 = vmatprep.subr.bf16.mxu0 0
      %6923 = vmatpush1.bf16.xpose.msra.mxu0 0
      %6924 = vmatprep.subr.bf16.mxu0 0
      %6925 = vmatpush1.bf16.xpose.msra.mxu0 0
      %6926 = vmatprep.subr.bf16.mxu0 0
      %6927 = vmatpush1.bf16.xpose.msra.mxu0 0
      %6928 = vmatprep.subr.bf16.mxu0 0
      %6929 = vmatpush1.bf16.xpose.msra.mxu0 0
      %6930 = vmatprep.subr.bf16.mxu0 0
      %6931 = vmatpush1.bf16.xpose.msra.mxu0 0
      %6932 = vmatprep.subr.bf16.mxu0 0
      %6933 = vmatpush1.bf16.xpose.msra.mxu0 0
      %6934 = vmatprep.subr.bf16.mxu0 0
      %6935 = vmatpush1.bf16.xpose.msra.mxu0 0
      %6936 = vmatprep.subr.bf16.mxu0 0
      %6937 = vmatpush1.bf16.xpose.msra.mxu0 0
      %6938 = vmatprep.subr.bf16.mxu0 0
      %6939 = vmatpush1.bf16.xpose.msra.mxu0 0
      %6940 = vmatprep.subr.bf16.mxu0 0
      %6941 = vmatpush1.bf16.xpose.msra.mxu0 0
      %6942 = vmatprep.subr.bf16.mxu0 0
      %6943 = vmatpush1.bf16.xpose.msra.mxu0 0
      %6944 = vmatprep.subr.bf16.mxu0 0
      %6945 = vmatpush1.bf16.xpose.msra.mxu0 0
      %6946 = vmatprep.subr.bf16.mxu0 0
      %6947 = vmatpush1.bf16.xpose.msra.mxu0 0
      %6948 = vmatprep.subr.bf16.mxu0 0
      %6949 = vmatpush1.bf16.xpose.msra.mxu0 0
      %6950 = vmatprep.subr.bf16.mxu0 0
      %6951 = vmatpush1.bf16.xpose.msra.mxu0 0
      %6952 = vmatprep.mubr.bf16.mxu0 0
      %6953 = vmatmul.mubr.bf16.gmra.mrb[0].mxu0 %v6915
      %v6954 = vpop.f32.mrb[0].mxu0
      %v6955 = vadd.f32 0.0, %v6954
      %v6956 = vpop.f32.mrb[0].mxu0
      %v6957 = vpop.f32.mrb[0].mxu0
      %v6958 = vpop.f32.mrb[0].mxu0
      %6959 = vdwg.mxu0
      %6960 = vrot.lane.b32.xlu0 %v1091, 104
      %v6961 = vpop.permute.xlu0 %6960
      %6962 = vrot.lane.b32.xlu0 %v1107, 104
      %v6963 = vpop.permute.xlu0 %6962
      %v6965 = vsel %vm1128, %v6961, 0
      %v6968 = vsel %vm1128, %v6963, 0
      %6970 = vmatprep.subr.bf16.mxu0 0
      %6971 = vmatpush1.bf16.xpose.msra.mxu0 %v6968
      %6972 = vmatprep.subr.bf16.mxu0 0
      %6973 = vmatpush1.bf16.xpose.msra.mxu0 0
      %6974 = vmatprep.subr.bf16.mxu0 0
      %6975 = vmatpush1.bf16.xpose.msra.mxu0 0
      %6976 = vmatprep.subr.bf16.mxu0 0
      %6977 = vmatpush1.bf16.xpose.msra.mxu0 0
      %6978 = vmatprep.subr.bf16.mxu0 0
      %6979 = vmatpush1.bf16.xpose.msra.mxu0 0
      %6980 = vmatprep.subr.bf16.mxu0 0
      %6981 = vmatpush1.bf16.xpose.msra.mxu0 0
      %6982 = vmatprep.subr.bf16.mxu0 0
      %6983 = vmatpush1.bf16.xpose.msra.mxu0 0
      %6984 = vmatprep.subr.bf16.mxu0 0
      %6985 = vmatpush1.bf16.xpose.msra.mxu0 0
      %6986 = vmatprep.subr.bf16.mxu0 0
      %6987 = vmatpush1.bf16.xpose.msra.mxu0 0
      %6988 = vmatprep.subr.bf16.mxu0 0
      %6989 = vmatpush1.bf16.xpose.msra.mxu0 0
      %6990 = vmatprep.subr.bf16.mxu0 0
      %6991 = vmatpush1.bf16.xpose.msra.mxu0 0
      %6992 = vmatprep.subr.bf16.mxu0 0
      %6993 = vmatpush1.bf16.xpose.msra.mxu0 0
      %6994 = vmatprep.subr.bf16.mxu0 0
      %6995 = vmatpush1.bf16.xpose.msra.mxu0 0
      %6996 = vmatprep.subr.bf16.mxu0 0
      %6997 = vmatpush1.bf16.xpose.msra.mxu0 0
      %6998 = vmatprep.subr.bf16.mxu0 0
      %6999 = vmatpush1.bf16.xpose.msra.mxu0 0
      %7000 = vmatprep.subr.bf16.mxu0 0
      %7001 = vmatpush1.bf16.xpose.msra.mxu0 0
      %7002 = vmatprep.mubr.bf16.mxu0 0
      %7003 = vmatmul.mubr.bf16.gmra.mrb[0].mxu0 %v6965
      %v7004 = vpop.f32.mrb[0].mxu0
      %v7005 = vadd.f32 0.0, %v7004
      %v7006 = vpop.f32.mrb[0].mxu0
      %v7007 = vpop.f32.mrb[0].mxu0
      %v7008 = vpop.f32.mrb[0].mxu0
      %7009 = vdwg.mxu0
      %7010 = vrot.lane.b32.xlu0 %v1092, 104
      %v7011 = vpop.permute.xlu0 %7010
      %7012 = vrot.lane.b32.xlu0 %v1108, 104
      %v7013 = vpop.permute.xlu0 %7012
      %v7015 = vsel %vm1128, %v7011, 0
      %v7018 = vsel %vm1128, %v7013, 0
      %7020 = vmatprep.subr.bf16.mxu0 0
      %7021 = vmatpush1.bf16.xpose.msra.mxu0 %v7018
      %7022 = vmatprep.subr.bf16.mxu0 0
      %7023 = vmatpush1.bf16.xpose.msra.mxu0 0
      %7024 = vmatprep.subr.bf16.mxu0 0
      %7025 = vmatpush1.bf16.xpose.msra.mxu0 0
      %7026 = vmatprep.subr.bf16.mxu0 0
      %7027 = vmatpush1.bf16.xpose.msra.mxu0 0
      %7028 = vmatprep.subr.bf16.mxu0 0
      %7029 = vmatpush1.bf16.xpose.msra.mxu0 0
      %7030 = vmatprep.subr.bf16.mxu0 0
      %7031 = vmatpush1.bf16.xpose.msra.mxu0 0
      %7032 = vmatprep.subr.bf16.mxu0 0
      %7033 = vmatpush1.bf16.xpose.msra.mxu0 0
      %7034 = vmatprep.subr.bf16.mxu0 0
      %7035 = vmatpush1.bf16.xpose.msra.mxu0 0
      %7036 = vmatprep.subr.bf16.mxu0 0
      %7037 = vmatpush1.bf16.xpose.msra.mxu0 0
      %7038 = vmatprep.subr.bf16.mxu0 0
      %7039 = vmatpush1.bf16.xpose.msra.mxu0 0
      %7040 = vmatprep.subr.bf16.mxu0 0
      %7041 = vmatpush1.bf16.xpose.msra.mxu0 0
      %7042 = vmatprep.subr.bf16.mxu0 0
      %7043 = vmatpush1.bf16.xpose.msra.mxu0 0
      %7044 = vmatprep.subr.bf16.mxu0 0
      %7045 = vmatpush1.bf16.xpose.msra.mxu0 0
      %7046 = vmatprep.subr.bf16.mxu0 0
      %7047 = vmatpush1.bf16.xpose.msra.mxu0 0
      %7048 = vmatprep.subr.bf16.mxu0 0
      %7049 = vmatpush1.bf16.xpose.msra.mxu0 0
      %7050 = vmatprep.subr.bf16.mxu0 0
      %7051 = vmatpush1.bf16.xpose.msra.mxu0 0
      %7052 = vmatprep.mubr.bf16.mxu0 0
      %7053 = vmatmul.mubr.bf16.gmra.mrb[0].mxu0 %v7015
      %v7054 = vpop.f32.mrb[0].mxu0
      %v7055 = vadd.f32 0.0, %v7054
      %v7056 = vpop.f32.mrb[0].mxu0
      %v7057 = vpop.f32.mrb[0].mxu0
      %v7058 = vpop.f32.mrb[0].mxu0
      %7059 = vdwg.mxu0
      %7060 = vrot.lane.b32.xlu0 %v1093, 104
      %v7061 = vpop.permute.xlu0 %7060
      %7062 = vrot.lane.b32.xlu0 %v1109, 104
      %v7063 = vpop.permute.xlu0 %7062
      %v7065 = vsel %vm1128, %v7061, 0
      %v7068 = vsel %vm1128, %v7063, 0
      %7070 = vmatprep.subr.bf16.mxu0 0
      %7071 = vmatpush1.bf16.xpose.msra.mxu0 %v7068
      %7072 = vmatprep.subr.bf16.mxu0 0
      %7073 = vmatpush1.bf16.xpose.msra.mxu0 0
      %7074 = vmatprep.subr.bf16.mxu0 0
      %7075 = vmatpush1.bf16.xpose.msra.mxu0 0
      %7076 = vmatprep.subr.bf16.mxu0 0
      %7077 = vmatpush1.bf16.xpose.msra.mxu0 0
      %7078 = vmatprep.subr.bf16.mxu0 0
      %7079 = vmatpush1.bf16.xpose.msra.mxu0 0
      %7080 = vmatprep.subr.bf16.mxu0 0
      %7081 = vmatpush1.bf16.xpose.msra.mxu0 0
      %7082 = vmatprep.subr.bf16.mxu0 0
      %7083 = vmatpush1.bf16.xpose.msra.mxu0 0
      %7084 = vmatprep.subr.bf16.mxu0 0
      %7085 = vmatpush1.bf16.xpose.msra.mxu0 0
      %7086 = vmatprep.subr.bf16.mxu0 0
      %7087 = vmatpush1.bf16.xpose.msra.mxu0 0
      %7088 = vmatprep.subr.bf16.mxu0 0
      %7089 = vmatpush1.bf16.xpose.msra.mxu0 0
      %7090 = vmatprep.subr.bf16.mxu0 0
      %7091 = vmatpush1.bf16.xpose.msra.mxu0 0
      %7092 = vmatprep.subr.bf16.mxu0 0
      %7093 = vmatpush1.bf16.xpose.msra.mxu0 0
      %7094 = vmatprep.subr.bf16.mxu0 0
      %7095 = vmatpush1.bf16.xpose.msra.mxu0 0
      %7096 = vmatprep.subr.bf16.mxu0 0
      %7097 = vmatpush1.bf16.xpose.msra.mxu0 0
      %7098 = vmatprep.subr.bf16.mxu0 0
      %7099 = vmatpush1.bf16.xpose.msra.mxu0 0
      %7100 = vmatprep.subr.bf16.mxu0 0
      %7101 = vmatpush1.bf16.xpose.msra.mxu0 0
      %7102 = vmatprep.mubr.bf16.mxu0 0
      %7103 = vmatmul.mubr.bf16.gmra.mrb[0].mxu0 %v7065
      %v7104 = vpop.f32.mrb[0].mxu0
      %v7105 = vadd.f32 0.0, %v7104
      %v7106 = vpop.f32.mrb[0].mxu0
      %v7107 = vpop.f32.mrb[0].mxu0
      %v7108 = vpop.f32.mrb[0].mxu0
      %7109 = vdwg.mxu0
      %7110 = vrot.lane.b32.xlu0 %v1094, 104
      %v7111 = vpop.permute.xlu0 %7110
      %7112 = vrot.lane.b32.xlu0 %v1110, 104
      %v7113 = vpop.permute.xlu0 %7112
      %v7115 = vsel %vm1128, %v7111, 0
      %v7118 = vsel %vm1128, %v7113, 0
      %7120 = vmatprep.subr.bf16.mxu0 0
      %7121 = vmatpush1.bf16.xpose.msra.mxu0 %v7118
      %7122 = vmatprep.subr.bf16.mxu0 0
      %7123 = vmatpush1.bf16.xpose.msra.mxu0 0
      %7124 = vmatprep.subr.bf16.mxu0 0
      %7125 = vmatpush1.bf16.xpose.msra.mxu0 0
      %7126 = vmatprep.subr.bf16.mxu0 0
      %7127 = vmatpush1.bf16.xpose.msra.mxu0 0
      %7128 = vmatprep.subr.bf16.mxu0 0
      %7129 = vmatpush1.bf16.xpose.msra.mxu0 0
      %7130 = vmatprep.subr.bf16.mxu0 0
      %7131 = vmatpush1.bf16.xpose.msra.mxu0 0
      %7132 = vmatprep.subr.bf16.mxu0 0
      %7133 = vmatpush1.bf16.xpose.msra.mxu0 0
      %7134 = vmatprep.subr.bf16.mxu0 0
      %7135 = vmatpush1.bf16.xpose.msra.mxu0 0
      %7136 = vmatprep.subr.bf16.mxu0 0
      %7137 = vmatpush1.bf16.xpose.msra.mxu0 0
      %7138 = vmatprep.subr.bf16.mxu0 0
      %7139 = vmatpush1.bf16.xpose.msra.mxu0 0
      %7140 = vmatprep.subr.bf16.mxu0 0
      %7141 = vmatpush1.bf16.xpose.msra.mxu0 0
      %7142 = vmatprep.subr.bf16.mxu0 0
      %7143 = vmatpush1.bf16.xpose.msra.mxu0 0
      %7144 = vmatprep.subr.bf16.mxu0 0
      %7145 = vmatpush1.bf16.xpose.msra.mxu0 0
      %7146 = vmatprep.subr.bf16.mxu0 0
      %7147 = vmatpush1.bf16.xpose.msra.mxu0 0
      %7148 = vmatprep.subr.bf16.mxu0 0
      %7149 = vmatpush1.bf16.xpose.msra.mxu0 0
      %7150 = vmatprep.subr.bf16.mxu0 0
      %7151 = vmatpush1.bf16.xpose.msra.mxu0 0
      %7152 = vmatprep.mubr.bf16.mxu0 0
      %7153 = vmatmul.mubr.bf16.gmra.mrb[0].mxu0 %v7115
      %v7154 = vpop.f32.mrb[0].mxu0
      %v7155 = vadd.f32 0.0, %v7154
      %v7156 = vpop.f32.mrb[0].mxu0
      %v7157 = vpop.f32.mrb[0].mxu0
      %v7158 = vpop.f32.mrb[0].mxu0
      %7159 = vdwg.mxu0
      %7160 = vrot.lane.b32.xlu0 %v1095, 104
      %v7161 = vpop.permute.xlu0 %7160
      %7162 = vrot.lane.b32.xlu0 %v1111, 104
      %v7163 = vpop.permute.xlu0 %7162
      %v7165 = vsel %vm1128, %v7161, 0
      %v7168 = vsel %vm1128, %v7163, 0
      %7170 = vmatprep.subr.bf16.mxu0 0
      %7171 = vmatpush1.bf16.xpose.msra.mxu0 %v7168
      %7172 = vmatprep.subr.bf16.mxu0 0
      %7173 = vmatpush1.bf16.xpose.msra.mxu0 0
      %7174 = vmatprep.subr.bf16.mxu0 0
      %7175 = vmatpush1.bf16.xpose.msra.mxu0 0
      %7176 = vmatprep.subr.bf16.mxu0 0
      %7177 = vmatpush1.bf16.xpose.msra.mxu0 0
      %7178 = vmatprep.subr.bf16.mxu0 0
      %7179 = vmatpush1.bf16.xpose.msra.mxu0 0
      %7180 = vmatprep.subr.bf16.mxu0 0
      %7181 = vmatpush1.bf16.xpose.msra.mxu0 0
      %7182 = vmatprep.subr.bf16.mxu0 0
      %7183 = vmatpush1.bf16.xpose.msra.mxu0 0
      %7184 = vmatprep.subr.bf16.mxu0 0
      %7185 = vmatpush1.bf16.xpose.msra.mxu0 0
      %7186 = vmatprep.subr.bf16.mxu0 0
      %7187 = vmatpush1.bf16.xpose.msra.mxu0 0
      %7188 = vmatprep.subr.bf16.mxu0 0
      %7189 = vmatpush1.bf16.xpose.msra.mxu0 0
      %7190 = vmatprep.subr.bf16.mxu0 0
      %7191 = vmatpush1.bf16.xpose.msra.mxu0 0
      %7192 = vmatprep.subr.bf16.mxu0 0
      %7193 = vmatpush1.bf16.xpose.msra.mxu0 0
      %7194 = vmatprep.subr.bf16.mxu0 0
      %7195 = vmatpush1.bf16.xpose.msra.mxu0 0
      %7196 = vmatprep.subr.bf16.mxu0 0
      %7197 = vmatpush1.bf16.xpose.msra.mxu0 0
      %7198 = vmatprep.subr.bf16.mxu0 0
      %7199 = vmatpush1.bf16.xpose.msra.mxu0 0
      %7200 = vmatprep.subr.bf16.mxu0 0
      %7201 = vmatpush1.bf16.xpose.msra.mxu0 0
      %7202 = vmatprep.mubr.bf16.mxu0 0
      %7203 = vmatmul.mubr.bf16.gmra.mrb[0].mxu0 %v7165
      %v7204 = vpop.f32.mrb[0].mxu0
      %v7205 = vadd.f32 0.0, %v7204
      %v7206 = vpop.f32.mrb[0].mxu0
      %v7207 = vpop.f32.mrb[0].mxu0
      %v7208 = vpop.f32.mrb[0].mxu0
      %7209 = vdwg.mxu0
      %v7210 = vmul.f32 %v6455, 0.35355338
      %v7211 = vmul.f32 %v6505, 0.35355338
      %v7212 = vmul.f32 %v6555, 0.35355338
      %v7213 = vmul.f32 %v6605, 0.35355338
      %v7214 = vmul.f32 %v6655, 0.35355338
      %v7215 = vmul.f32 %v6705, 0.35355338
      %v7216 = vmul.f32 %v6755, 0.35355338
      %v7217 = vmul.f32 %v6805, 0.35355338
      %v7218 = vmul.f32 %v6855, 0.35355338
      %v7219 = vmul.f32 %v6905, 0.35355338
      %v7220 = vmul.f32 %v6955, 0.35355338
      %v7221 = vmul.f32 %v7005, 0.35355338
      %v7222 = vmul.f32 %v7055, 0.35355338
      %v7223 = vmul.f32 %v7105, 0.35355338
      %v7224 = vmul.f32 %v7155, 0.35355338
      %v7225 = vmul.f32 %v7205, 0.35355338
      %v7226 = vsel %vm1128, %v7210, -inf
      %7227 = vmax.xlane.f32.xlu0 %v7226
      %v7228 = vpop.xlane.xlu0 %7227
      %v7229 = vsel %vm1128, %v7211, -inf
      %7230 = vmax.xlane.f32.xlu0 %v7229
      %v7231 = vpop.xlane.xlu0 %7230
      %v7232 = vsel %vm1128, %v7212, -inf
      %7233 = vmax.xlane.f32.xlu0 %v7232
      %v7234 = vpop.xlane.xlu0 %7233
      %v7235 = vsel %vm1128, %v7213, -inf
      %7236 = vmax.xlane.f32.xlu0 %v7235
      %v7237 = vpop.xlane.xlu0 %7236
      %v7238 = vsel %vm1128, %v7214, -inf
      %7239 = vmax.xlane.f32.xlu0 %v7238
      %v7240 = vpop.xlane.xlu0 %7239
      %v7241 = vsel %vm1128, %v7215, -inf
      %7242 = vmax.xlane.f32.xlu0 %v7241
      %v7243 = vpop.xlane.xlu0 %7242
      %v7244 = vsel %vm1128, %v7216, -inf
      %7245 = vmax.xlane.f32.xlu0 %v7244
      %v7246 = vpop.xlane.xlu0 %7245
      %v7247 = vsel %vm1128, %v7217, -inf
      %7248 = vmax.xlane.f32.xlu0 %v7247
      %v7249 = vpop.xlane.xlu0 %7248
      %v7250 = vsel %vm1128, %v7218, -inf
      %7251 = vmax.xlane.f32.xlu0 %v7250
      %v7252 = vpop.xlane.xlu0 %7251
      %v7253 = vsel %vm1128, %v7219, -inf
      %7254 = vmax.xlane.f32.xlu0 %v7253
      %v7255 = vpop.xlane.xlu0 %7254
      %v7256 = vsel %vm1128, %v7220, -inf
      %7257 = vmax.xlane.f32.xlu0 %v7256
      %v7258 = vpop.xlane.xlu0 %7257
      %v7259 = vsel %vm1128, %v7221, -inf
      %7260 = vmax.xlane.f32.xlu0 %v7259
      %v7261 = vpop.xlane.xlu0 %7260
      %v7262 = vsel %vm1128, %v7222, -inf
      %7263 = vmax.xlane.f32.xlu0 %v7262
      %v7264 = vpop.xlane.xlu0 %7263
      %v7265 = vsel %vm1128, %v7223, -inf
      %7266 = vmax.xlane.f32.xlu0 %v7265
      %v7267 = vpop.xlane.xlu0 %7266
      %v7268 = vsel %vm1128, %v7224, -inf
      %7269 = vmax.xlane.f32.xlu0 %v7268
      %v7270 = vpop.xlane.xlu0 %7269
      %v7271 = vsel %vm1128, %v7225, -inf
      %7272 = vmax.xlane.f32.xlu0 %v7271
      %v7273 = vpop.xlane.xlu0 %7272
      %v7274 = vsub.f32 %v7210, %v7228
      %v7275 = vsub.f32 %v7211, %v7231
      %v7276 = vsub.f32 %v7212, %v7234
      %v7277 = vsub.f32 %v7213, %v7237
      %v7278 = vsub.f32 %v7214, %v7240
      %v7279 = vsub.f32 %v7215, %v7243
      %v7280 = vsub.f32 %v7216, %v7246
      %v7281 = vsub.f32 %v7217, %v7249
      %v7282 = vsub.f32 %v7218, %v7252
      %v7283 = vsub.f32 %v7219, %v7255
      %v7284 = vsub.f32 %v7220, %v7258
      %v7285 = vsub.f32 %v7221, %v7261
      %v7286 = vsub.f32 %v7222, %v7264
      %v7287 = vsub.f32 %v7223, %v7267
      %v7288 = vsub.f32 %v7224, %v7270
      %v7289 = vsub.f32 %v7225, %v7273
      %v7290 = vmul.f32 %v7274, 1.442695
      %v7291 = vpow.pop %v7290
      %v7292 = vmul.f32 %v7275, 1.442695
      %v7293 = vpow.pop %v7292
      %v7294 = vmul.f32 %v7276, 1.442695
      %v7295 = vpow.pop %v7294
      %v7296 = vmul.f32 %v7277, 1.442695
      %v7297 = vpow.pop %v7296
      %v7298 = vmul.f32 %v7278, 1.442695
      %v7299 = vpow.pop %v7298
      %v7300 = vmul.f32 %v7279, 1.442695
      %v7301 = vpow.pop %v7300
      %v7302 = vmul.f32 %v7280, 1.442695
      %v7303 = vpow.pop %v7302
      %v7304 = vmul.f32 %v7281, 1.442695
      %v7305 = vpow.pop %v7304
      %v7306 = vmul.f32 %v7282, 1.442695
      %v7307 = vpow.pop %v7306
      %v7308 = vmul.f32 %v7283, 1.442695
      %v7309 = vpow.pop %v7308
      %v7310 = vmul.f32 %v7284, 1.442695
      %v7311 = vpow.pop %v7310
      %v7312 = vmul.f32 %v7285, 1.442695
      %v7313 = vpow.pop %v7312
      %v7314 = vmul.f32 %v7286, 1.442695
      %v7315 = vpow.pop %v7314
      %v7316 = vmul.f32 %v7287, 1.442695
      %v7317 = vpow.pop %v7316
      %v7318 = vmul.f32 %v7288, 1.442695
      %v7319 = vpow.pop %v7318
      %v7320 = vmul.f32 %v7289, 1.442695
      %v7321 = vpow.pop %v7320
      %v7322 = vsel %vm1128, %v7291, 0.0
      %7323 = vadd.xlane.f32.xlu0 %v7322
      %v7324 = vpop.xlane.xlu0 %7323
      %v7325 = vsel %vm1128, %v7293, 0.0
      %7326 = vadd.xlane.f32.xlu0 %v7325
      %v7327 = vpop.xlane.xlu0 %7326
      %v7328 = vsel %vm1128, %v7295, 0.0
      %7329 = vadd.xlane.f32.xlu0 %v7328
      %v7330 = vpop.xlane.xlu0 %7329
      %v7331 = vsel %vm1128, %v7297, 0.0
      %7332 = vadd.xlane.f32.xlu0 %v7331
      %v7333 = vpop.xlane.xlu0 %7332
      %v7334 = vsel %vm1128, %v7299, 0.0
      %7335 = vadd.xlane.f32.xlu0 %v7334
      %v7336 = vpop.xlane.xlu0 %7335
      %v7337 = vsel %vm1128, %v7301, 0.0
      %7338 = vadd.xlane.f32.xlu0 %v7337
      %v7339 = vpop.xlane.xlu0 %7338
      %v7340 = vsel %vm1128, %v7303, 0.0
      %7341 = vadd.xlane.f32.xlu0 %v7340
      %v7342 = vpop.xlane.xlu0 %7341
      %v7343 = vsel %vm1128, %v7305, 0.0
      %7344 = vadd.xlane.f32.xlu0 %v7343
      %v7345 = vpop.xlane.xlu0 %7344
      %v7346 = vsel %vm1128, %v7307, 0.0
      %7347 = vadd.xlane.f32.xlu0 %v7346
      %v7348 = vpop.xlane.xlu0 %7347
      %v7349 = vsel %vm1128, %v7309, 0.0
      %7350 = vadd.xlane.f32.xlu0 %v7349
      %v7351 = vpop.xlane.xlu0 %7350
      %v7352 = vsel %vm1128, %v7311, 0.0
      %7353 = vadd.xlane.f32.xlu0 %v7352
      %v7354 = vpop.xlane.xlu0 %7353
      %v7355 = vsel %vm1128, %v7313, 0.0
      %7356 = vadd.xlane.f32.xlu0 %v7355
      %v7357 = vpop.xlane.xlu0 %7356
      %v7358 = vsel %vm1128, %v7315, 0.0
      %7359 = vadd.xlane.f32.xlu0 %v7358
      %v7360 = vpop.xlane.xlu0 %7359
      %v7361 = vsel %vm1128, %v7317, 0.0
      %7362 = vadd.xlane.f32.xlu0 %v7361
      %v7363 = vpop.xlane.xlu0 %7362
      %v7364 = vsel %vm1128, %v7319, 0.0
      %7365 = vadd.xlane.f32.xlu0 %v7364
      %v7366 = vpop.xlane.xlu0 %7365
      %v7367 = vsel %vm1128, %v7321, 0.0
      %7368 = vadd.xlane.f32.xlu0 %v7367
      %v7369 = vpop.xlane.xlu0 %7368
      %v7370 = vrcp.pop %v7324
      %v7371 = vmul.f32 %v7291, %v7370
      %v7372 = vrcp.pop %v7327
      %v7373 = vmul.f32 %v7293, %v7372
      %v7374 = vrcp.pop %v7330
      %v7375 = vmul.f32 %v7295, %v7374
      %v7376 = vrcp.pop %v7333
      %v7377 = vmul.f32 %v7297, %v7376
      %v7378 = vrcp.pop %v7336
      %v7379 = vmul.f32 %v7299, %v7378
      %v7380 = vrcp.pop %v7339
      %v7381 = vmul.f32 %v7301, %v7380
      %v7382 = vrcp.pop %v7342
      %v7383 = vmul.f32 %v7303, %v7382
      %v7384 = vrcp.pop %v7345
      %v7385 = vmul.f32 %v7305, %v7384
      %v7386 = vrcp.pop %v7348
      %v7387 = vmul.f32 %v7307, %v7386
      %v7388 = vrcp.pop %v7351
      %v7389 = vmul.f32 %v7309, %v7388
      %v7390 = vrcp.pop %v7354
      %v7391 = vmul.f32 %v7311, %v7390
      %v7392 = vrcp.pop %v7357
      %v7393 = vmul.f32 %v7313, %v7392
      %v7394 = vrcp.pop %v7360
      %v7395 = vmul.f32 %v7315, %v7394
      %v7396 = vrcp.pop %v7363
      %v7397 = vmul.f32 %v7317, %v7396
      %v7398 = vrcp.pop %v7366
      %v7399 = vmul.f32 %v7319, %v7398
      %v7400 = vrcp.pop %v7369
      %v7401 = vmul.f32 %v7321, %v7400
      %v7402 = vpack.c.bf16 %v7371, %v7371
      %v7403 = vpack.c.bf16 %v7373, %v7373
      %v7404 = vpack.c.bf16 %v7375, %v7375
      %v7405 = vpack.c.bf16 %v7377, %v7377
      %v7406 = vpack.c.bf16 %v7379, %v7379
      %v7407 = vpack.c.bf16 %v7381, %v7381
      %v7408 = vpack.c.bf16 %v7383, %v7383
      %v7409 = vpack.c.bf16 %v7385, %v7385
      %v7410 = vpack.c.bf16 %v7387, %v7387
      %v7411 = vpack.c.bf16 %v7389, %v7389
      %v7412 = vpack.c.bf16 %v7391, %v7391
      %v7413 = vpack.c.bf16 %v7393, %v7393
      %v7414 = vpack.c.bf16 %v7395, %v7395
      %v7415 = vpack.c.bf16 %v7397, %v7397
      %v7416 = vpack.c.bf16 %v7399, %v7399
      %v7417 = vpack.c.bf16 %v7401, %v7401
      %7418 = vrot.lane.b32.xlu0 %v1112, 104
      %v7419 = vpop.permute.xlu0 %7418
      %v7421 = vsel %vm1128, %v7402, 0
      %v7424 = vsel %vm2076, %v7419, 0
      %7426 = vmatprep.subr.bf16.mxu0 0
      %7427 = vmatpush1.bf16.msra.mxu0 %v7424
      %7428 = vmatprep.subr.bf16.mxu0 0
      %7429 = vmatpush1.bf16.msra.mxu0 0
      %7430 = vmatprep.subr.bf16.mxu0 0
      %7431 = vmatpush1.bf16.msra.mxu0 0
      %7432 = vmatprep.subr.bf16.mxu0 0
      %7433 = vmatpush1.bf16.msra.mxu0 0
      %7434 = vmatprep.subr.bf16.mxu0 0
      %7435 = vmatpush1.bf16.msra.mxu0 0
      %7436 = vmatprep.subr.bf16.mxu0 0
      %7437 = vmatpush1.bf16.msra.mxu0 0
      %7438 = vmatprep.subr.bf16.mxu0 0
      %7439 = vmatpush1.bf16.msra.mxu0 0
      %7440 = vmatprep.subr.bf16.mxu0 0
      %7441 = vmatpush1.bf16.msra.mxu0 0
      %7442 = vmatprep.subr.bf16.mxu0 0
      %7443 = vmatpush1.bf16.msra.mxu0 0
      %7444 = vmatprep.subr.bf16.mxu0 0
      %7445 = vmatpush1.bf16.msra.mxu0 0
      %7446 = vmatprep.subr.bf16.mxu0 0
      %7447 = vmatpush1.bf16.msra.mxu0 0
      %7448 = vmatprep.subr.bf16.mxu0 0
      %7449 = vmatpush1.bf16.msra.mxu0 0
      %7450 = vmatprep.subr.bf16.mxu0 0
      %7451 = vmatpush1.bf16.msra.mxu0 0
      %7452 = vmatprep.subr.bf16.mxu0 0
      %7453 = vmatpush1.bf16.msra.mxu0 0
      %7454 = vmatprep.subr.bf16.mxu0 0
      %7455 = vmatpush1.bf16.msra.mxu0 0
      %7456 = vmatprep.subr.bf16.mxu0 0
      %7457 = vmatpush1.bf16.msra.mxu0 0
      %7458 = vmatprep.mubr.bf16.mxu0 0
      %7459 = vmatmul.mubr.bf16.gmra.mrb[0].mxu0 %v7421
      %v7460 = vpop.f32.mrb[0].mxu0
      %v7461 = vadd.f32 0.0, %v7460
      %v7462 = vpop.f32.mrb[0].mxu0
      %v7463 = vpop.f32.mrb[0].mxu0
      %v7464 = vpop.f32.mrb[0].mxu0
      %7465 = vdwg.mxu0
      %7466 = vrot.lane.b32.xlu0 %v1113, 104
      %v7467 = vpop.permute.xlu0 %7466
      %v7469 = vsel %vm1128, %v7403, 0
      %v7472 = vsel %vm2076, %v7467, 0
      %7474 = vmatprep.subr.bf16.mxu0 0
      %7475 = vmatpush1.bf16.msra.mxu0 %v7472
      %7476 = vmatprep.subr.bf16.mxu0 0
      %7477 = vmatpush1.bf16.msra.mxu0 0
      %7478 = vmatprep.subr.bf16.mxu0 0
      %7479 = vmatpush1.bf16.msra.mxu0 0
      %7480 = vmatprep.subr.bf16.mxu0 0
      %7481 = vmatpush1.bf16.msra.mxu0 0
      %7482 = vmatprep.subr.bf16.mxu0 0
      %7483 = vmatpush1.bf16.msra.mxu0 0
      %7484 = vmatprep.subr.bf16.mxu0 0
      %7485 = vmatpush1.bf16.msra.mxu0 0
      %7486 = vmatprep.subr.bf16.mxu0 0
      %7487 = vmatpush1.bf16.msra.mxu0 0
      %7488 = vmatprep.subr.bf16.mxu0 0
      %7489 = vmatpush1.bf16.msra.mxu0 0
      %7490 = vmatprep.subr.bf16.mxu0 0
      %7491 = vmatpush1.bf16.msra.mxu0 0
      %7492 = vmatprep.subr.bf16.mxu0 0
      %7493 = vmatpush1.bf16.msra.mxu0 0
      %7494 = vmatprep.subr.bf16.mxu0 0
      %7495 = vmatpush1.bf16.msra.mxu0 0
      %7496 = vmatprep.subr.bf16.mxu0 0
      %7497 = vmatpush1.bf16.msra.mxu0 0
      %7498 = vmatprep.subr.bf16.mxu0 0
      %7499 = vmatpush1.bf16.msra.mxu0 0
      %7500 = vmatprep.subr.bf16.mxu0 0
      %7501 = vmatpush1.bf16.msra.mxu0 0
      %7502 = vmatprep.subr.bf16.mxu0 0
      %7503 = vmatpush1.bf16.msra.mxu0 0
      %7504 = vmatprep.subr.bf16.mxu0 0
      %7505 = vmatpush1.bf16.msra.mxu0 0
      %7506 = vmatprep.mubr.bf16.mxu0 0
      %7507 = vmatmul.mubr.bf16.gmra.mrb[0].mxu0 %v7469
      %v7508 = vpop.f32.mrb[0].mxu0
      %v7509 = vadd.f32 0.0, %v7508
      %v7510 = vpop.f32.mrb[0].mxu0
      %v7511 = vpop.f32.mrb[0].mxu0
      %v7512 = vpop.f32.mrb[0].mxu0
      %7513 = vdwg.mxu0
      %7514 = vrot.lane.b32.xlu0 %v1114, 104
      %v7515 = vpop.permute.xlu0 %7514
      %v7517 = vsel %vm1128, %v7404, 0
      %v7520 = vsel %vm2076, %v7515, 0
      %7522 = vmatprep.subr.bf16.mxu0 0
      %7523 = vmatpush1.bf16.msra.mxu0 %v7520
      %7524 = vmatprep.subr.bf16.mxu0 0
      %7525 = vmatpush1.bf16.msra.mxu0 0
      %7526 = vmatprep.subr.bf16.mxu0 0
      %7527 = vmatpush1.bf16.msra.mxu0 0
      %7528 = vmatprep.subr.bf16.mxu0 0
      %7529 = vmatpush1.bf16.msra.mxu0 0
      %7530 = vmatprep.subr.bf16.mxu0 0
      %7531 = vmatpush1.bf16.msra.mxu0 0
      %7532 = vmatprep.subr.bf16.mxu0 0
      %7533 = vmatpush1.bf16.msra.mxu0 0
      %7534 = vmatprep.subr.bf16.mxu0 0
      %7535 = vmatpush1.bf16.msra.mxu0 0
      %7536 = vmatprep.subr.bf16.mxu0 0
      %7537 = vmatpush1.bf16.msra.mxu0 0
      %7538 = vmatprep.subr.bf16.mxu0 0
      %7539 = vmatpush1.bf16.msra.mxu0 0
      %7540 = vmatprep.subr.bf16.mxu0 0
      %7541 = vmatpush1.bf16.msra.mxu0 0
      %7542 = vmatprep.subr.bf16.mxu0 0
      %7543 = vmatpush1.bf16.msra.mxu0 0
      %7544 = vmatprep.subr.bf16.mxu0 0
      %7545 = vmatpush1.bf16.msra.mxu0 0
      %7546 = vmatprep.subr.bf16.mxu0 0
      %7547 = vmatpush1.bf16.msra.mxu0 0
      %7548 = vmatprep.subr.bf16.mxu0 0
      %7549 = vmatpush1.bf16.msra.mxu0 0
      %7550 = vmatprep.subr.bf16.mxu0 0
      %7551 = vmatpush1.bf16.msra.mxu0 0
      %7552 = vmatprep.subr.bf16.mxu0 0
      %7553 = vmatpush1.bf16.msra.mxu0 0
      %7554 = vmatprep.mubr.bf16.mxu0 0
      %7555 = vmatmul.mubr.bf16.gmra.mrb[0].mxu0 %v7517
      %v7556 = vpop.f32.mrb[0].mxu0
      %v7557 = vadd.f32 0.0, %v7556
      %v7558 = vpop.f32.mrb[0].mxu0
      %v7559 = vpop.f32.mrb[0].mxu0
      %v7560 = vpop.f32.mrb[0].mxu0
      %7561 = vdwg.mxu0
      %7562 = vrot.lane.b32.xlu0 %v1115, 104
      %v7563 = vpop.permute.xlu0 %7562
      %v7565 = vsel %vm1128, %v7405, 0
      %v7568 = vsel %vm2076, %v7563, 0
      %7570 = vmatprep.subr.bf16.mxu0 0
      %7571 = vmatpush1.bf16.msra.mxu0 %v7568
      %7572 = vmatprep.subr.bf16.mxu0 0
      %7573 = vmatpush1.bf16.msra.mxu0 0
      %7574 = vmatprep.subr.bf16.mxu0 0
      %7575 = vmatpush1.bf16.msra.mxu0 0
      %7576 = vmatprep.subr.bf16.mxu0 0
      %7577 = vmatpush1.bf16.msra.mxu0 0
      %7578 = vmatprep.subr.bf16.mxu0 0
      %7579 = vmatpush1.bf16.msra.mxu0 0
      %7580 = vmatprep.subr.bf16.mxu0 0
      %7581 = vmatpush1.bf16.msra.mxu0 0
      %7582 = vmatprep.subr.bf16.mxu0 0
      %7583 = vmatpush1.bf16.msra.mxu0 0
      %7584 = vmatprep.subr.bf16.mxu0 0
      %7585 = vmatpush1.bf16.msra.mxu0 0
      %7586 = vmatprep.subr.bf16.mxu0 0
      %7587 = vmatpush1.bf16.msra.mxu0 0
      %7588 = vmatprep.subr.bf16.mxu0 0
      %7589 = vmatpush1.bf16.msra.mxu0 0
      %7590 = vmatprep.subr.bf16.mxu0 0
      %7591 = vmatpush1.bf16.msra.mxu0 0
      %7592 = vmatprep.subr.bf16.mxu0 0
      %7593 = vmatpush1.bf16.msra.mxu0 0
      %7594 = vmatprep.subr.bf16.mxu0 0
      %7595 = vmatpush1.bf16.msra.mxu0 0
      %7596 = vmatprep.subr.bf16.mxu0 0
      %7597 = vmatpush1.bf16.msra.mxu0 0
      %7598 = vmatprep.subr.bf16.mxu0 0
      %7599 = vmatpush1.bf16.msra.mxu0 0
      %7600 = vmatprep.subr.bf16.mxu0 0
      %7601 = vmatpush1.bf16.msra.mxu0 0
      %7602 = vmatprep.mubr.bf16.mxu0 0
      %7603 = vmatmul.mubr.bf16.gmra.mrb[0].mxu0 %v7565
      %v7604 = vpop.f32.mrb[0].mxu0
      %v7605 = vadd.f32 0.0, %v7604
      %v7606 = vpop.f32.mrb[0].mxu0
      %v7607 = vpop.f32.mrb[0].mxu0
      %v7608 = vpop.f32.mrb[0].mxu0
      %7609 = vdwg.mxu0
      %7610 = vrot.lane.b32.xlu0 %v1116, 104
      %v7611 = vpop.permute.xlu0 %7610
      %v7613 = vsel %vm1128, %v7406, 0
      %v7616 = vsel %vm2076, %v7611, 0
      %7618 = vmatprep.subr.bf16.mxu0 0
      %7619 = vmatpush1.bf16.msra.mxu0 %v7616
      %7620 = vmatprep.subr.bf16.mxu0 0
      %7621 = vmatpush1.bf16.msra.mxu0 0
      %7622 = vmatprep.subr.bf16.mxu0 0
      %7623 = vmatpush1.bf16.msra.mxu0 0
      %7624 = vmatprep.subr.bf16.mxu0 0
      %7625 = vmatpush1.bf16.msra.mxu0 0
      %7626 = vmatprep.subr.bf16.mxu0 0
      %7627 = vmatpush1.bf16.msra.mxu0 0
      %7628 = vmatprep.subr.bf16.mxu0 0
      %7629 = vmatpush1.bf16.msra.mxu0 0
      %7630 = vmatprep.subr.bf16.mxu0 0
      %7631 = vmatpush1.bf16.msra.mxu0 0
      %7632 = vmatprep.subr.bf16.mxu0 0
      %7633 = vmatpush1.bf16.msra.mxu0 0
      %7634 = vmatprep.subr.bf16.mxu0 0
      %7635 = vmatpush1.bf16.msra.mxu0 0
      %7636 = vmatprep.subr.bf16.mxu0 0
      %7637 = vmatpush1.bf16.msra.mxu0 0
      %7638 = vmatprep.subr.bf16.mxu0 0
      %7639 = vmatpush1.bf16.msra.mxu0 0
      %7640 = vmatprep.subr.bf16.mxu0 0
      %7641 = vmatpush1.bf16.msra.mxu0 0
      %7642 = vmatprep.subr.bf16.mxu0 0
      %7643 = vmatpush1.bf16.msra.mxu0 0
      %7644 = vmatprep.subr.bf16.mxu0 0
      %7645 = vmatpush1.bf16.msra.mxu0 0
      %7646 = vmatprep.subr.bf16.mxu0 0
      %7647 = vmatpush1.bf16.msra.mxu0 0
      %7648 = vmatprep.subr.bf16.mxu0 0
      %7649 = vmatpush1.bf16.msra.mxu0 0
      %7650 = vmatprep.mubr.bf16.mxu0 0
      %7651 = vmatmul.mubr.bf16.gmra.mrb[0].mxu0 %v7613
      %v7652 = vpop.f32.mrb[0].mxu0
      %v7653 = vadd.f32 0.0, %v7652
      %v7654 = vpop.f32.mrb[0].mxu0
      %v7655 = vpop.f32.mrb[0].mxu0
      %v7656 = vpop.f32.mrb[0].mxu0
      %7657 = vdwg.mxu0
      %7658 = vrot.lane.b32.xlu0 %v1117, 104
      %v7659 = vpop.permute.xlu0 %7658
      %v7661 = vsel %vm1128, %v7407, 0
      %v7664 = vsel %vm2076, %v7659, 0
      %7666 = vmatprep.subr.bf16.mxu0 0
      %7667 = vmatpush1.bf16.msra.mxu0 %v7664
      %7668 = vmatprep.subr.bf16.mxu0 0
      %7669 = vmatpush1.bf16.msra.mxu0 0
      %7670 = vmatprep.subr.bf16.mxu0 0
      %7671 = vmatpush1.bf16.msra.mxu0 0
      %7672 = vmatprep.subr.bf16.mxu0 0
      %7673 = vmatpush1.bf16.msra.mxu0 0
      %7674 = vmatprep.subr.bf16.mxu0 0
      %7675 = vmatpush1.bf16.msra.mxu0 0
      %7676 = vmatprep.subr.bf16.mxu0 0
      %7677 = vmatpush1.bf16.msra.mxu0 0
      %7678 = vmatprep.subr.bf16.mxu0 0
      %7679 = vmatpush1.bf16.msra.mxu0 0
      %7680 = vmatprep.subr.bf16.mxu0 0
      %7681 = vmatpush1.bf16.msra.mxu0 0
      %7682 = vmatprep.subr.bf16.mxu0 0
      %7683 = vmatpush1.bf16.msra.mxu0 0
      %7684 = vmatprep.subr.bf16.mxu0 0
      %7685 = vmatpush1.bf16.msra.mxu0 0
      %7686 = vmatprep.subr.bf16.mxu0 0
      %7687 = vmatpush1.bf16.msra.mxu0 0
      %7688 = vmatprep.subr.bf16.mxu0 0
      %7689 = vmatpush1.bf16.msra.mxu0 0
      %7690 = vmatprep.subr.bf16.mxu0 0
      %7691 = vmatpush1.bf16.msra.mxu0 0
      %7692 = vmatprep.subr.bf16.mxu0 0
      %7693 = vmatpush1.bf16.msra.mxu0 0
      %7694 = vmatprep.subr.bf16.mxu0 0
      %7695 = vmatpush1.bf16.msra.mxu0 0
      %7696 = vmatprep.subr.bf16.mxu0 0
      %7697 = vmatpush1.bf16.msra.mxu0 0
      %7698 = vmatprep.mubr.bf16.mxu0 0
      %7699 = vmatmul.mubr.bf16.gmra.mrb[0].mxu0 %v7661
      %v7700 = vpop.f32.mrb[0].mxu0
      %v7701 = vadd.f32 0.0, %v7700
      %v7702 = vpop.f32.mrb[0].mxu0
      %v7703 = vpop.f32.mrb[0].mxu0
      %v7704 = vpop.f32.mrb[0].mxu0
      %7705 = vdwg.mxu0
      %7706 = vrot.lane.b32.xlu0 %v1118, 104
      %v7707 = vpop.permute.xlu0 %7706
      %v7709 = vsel %vm1128, %v7408, 0
      %v7712 = vsel %vm2076, %v7707, 0
      %7714 = vmatprep.subr.bf16.mxu0 0
      %7715 = vmatpush1.bf16.msra.mxu0 %v7712
      %7716 = vmatprep.subr.bf16.mxu0 0
      %7717 = vmatpush1.bf16.msra.mxu0 0
      %7718 = vmatprep.subr.bf16.mxu0 0
      %7719 = vmatpush1.bf16.msra.mxu0 0
      %7720 = vmatprep.subr.bf16.mxu0 0
      %7721 = vmatpush1.bf16.msra.mxu0 0
      %7722 = vmatprep.subr.bf16.mxu0 0
      %7723 = vmatpush1.bf16.msra.mxu0 0
      %7724 = vmatprep.subr.bf16.mxu0 0
      %7725 = vmatpush1.bf16.msra.mxu0 0
      %7726 = vmatprep.subr.bf16.mxu0 0
      %7727 = vmatpush1.bf16.msra.mxu0 0
      %7728 = vmatprep.subr.bf16.mxu0 0
      %7729 = vmatpush1.bf16.msra.mxu0 0
      %7730 = vmatprep.subr.bf16.mxu0 0
      %7731 = vmatpush1.bf16.msra.mxu0 0
      %7732 = vmatprep.subr.bf16.mxu0 0
      %7733 = vmatpush1.bf16.msra.mxu0 0
      %7734 = vmatprep.subr.bf16.mxu0 0
      %7735 = vmatpush1.bf16.msra.mxu0 0
      %7736 = vmatprep.subr.bf16.mxu0 0
      %7737 = vmatpush1.bf16.msra.mxu0 0
      %7738 = vmatprep.subr.bf16.mxu0 0
      %7739 = vmatpush1.bf16.msra.mxu0 0
      %7740 = vmatprep.subr.bf16.mxu0 0
      %7741 = vmatpush1.bf16.msra.mxu0 0
      %7742 = vmatprep.subr.bf16.mxu0 0
      %7743 = vmatpush1.bf16.msra.mxu0 0
      %7744 = vmatprep.subr.bf16.mxu0 0
      %7745 = vmatpush1.bf16.msra.mxu0 0
      %7746 = vmatprep.mubr.bf16.mxu0 0
      %7747 = vmatmul.mubr.bf16.gmra.mrb[0].mxu0 %v7709
      %v7748 = vpop.f32.mrb[0].mxu0
      %v7749 = vadd.f32 0.0, %v7748
      %v7750 = vpop.f32.mrb[0].mxu0
      %v7751 = vpop.f32.mrb[0].mxu0
      %v7752 = vpop.f32.mrb[0].mxu0
      %7753 = vdwg.mxu0
      %7754 = vrot.lane.b32.xlu0 %v1119, 104
      %v7755 = vpop.permute.xlu0 %7754
      %v7757 = vsel %vm1128, %v7409, 0
      %v7760 = vsel %vm2076, %v7755, 0
      %7762 = vmatprep.subr.bf16.mxu0 0
      %7763 = vmatpush1.bf16.msra.mxu0 %v7760
      %7764 = vmatprep.subr.bf16.mxu0 0
      %7765 = vmatpush1.bf16.msra.mxu0 0
      %7766 = vmatprep.subr.bf16.mxu0 0
      %7767 = vmatpush1.bf16.msra.mxu0 0
      %7768 = vmatprep.subr.bf16.mxu0 0
      %7769 = vmatpush1.bf16.msra.mxu0 0
      %7770 = vmatprep.subr.bf16.mxu0 0
      %7771 = vmatpush1.bf16.msra.mxu0 0
      %7772 = vmatprep.subr.bf16.mxu0 0
      %7773 = vmatpush1.bf16.msra.mxu0 0
      %7774 = vmatprep.subr.bf16.mxu0 0
      %7775 = vmatpush1.bf16.msra.mxu0 0
      %7776 = vmatprep.subr.bf16.mxu0 0
      %7777 = vmatpush1.bf16.msra.mxu0 0
      %7778 = vmatprep.subr.bf16.mxu0 0
      %7779 = vmatpush1.bf16.msra.mxu0 0
      %7780 = vmatprep.subr.bf16.mxu0 0
      %7781 = vmatpush1.bf16.msra.mxu0 0
      %7782 = vmatprep.subr.bf16.mxu0 0
      %7783 = vmatpush1.bf16.msra.mxu0 0
      %7784 = vmatprep.subr.bf16.mxu0 0
      %7785 = vmatpush1.bf16.msra.mxu0 0
      %7786 = vmatprep.subr.bf16.mxu0 0
      %7787 = vmatpush1.bf16.msra.mxu0 0
      %7788 = vmatprep.subr.bf16.mxu0 0
      %7789 = vmatpush1.bf16.msra.mxu0 0
      %7790 = vmatprep.subr.bf16.mxu0 0
      %7791 = vmatpush1.bf16.msra.mxu0 0
      %7792 = vmatprep.subr.bf16.mxu0 0
      %7793 = vmatpush1.bf16.msra.mxu0 0
      %7794 = vmatprep.mubr.bf16.mxu0 0
      %7795 = vmatmul.mubr.bf16.gmra.mrb[0].mxu0 %v7757
      %v7796 = vpop.f32.mrb[0].mxu0
      %v7797 = vadd.f32 0.0, %v7796
      %v7798 = vpop.f32.mrb[0].mxu0
      %v7799 = vpop.f32.mrb[0].mxu0
      %v7800 = vpop.f32.mrb[0].mxu0
      %7801 = vdwg.mxu0
      %7802 = vrot.lane.b32.xlu0 %v1120, 104
      %v7803 = vpop.permute.xlu0 %7802
      %v7805 = vsel %vm1128, %v7410, 0
      %v7808 = vsel %vm2076, %v7803, 0
      %7810 = vmatprep.subr.bf16.mxu0 0
      %7811 = vmatpush1.bf16.msra.mxu0 %v7808
      %7812 = vmatprep.subr.bf16.mxu0 0
      %7813 = vmatpush1.bf16.msra.mxu0 0
      %7814 = vmatprep.subr.bf16.mxu0 0
      %7815 = vmatpush1.bf16.msra.mxu0 0
      %7816 = vmatprep.subr.bf16.mxu0 0
      %7817 = vmatpush1.bf16.msra.mxu0 0
      %7818 = vmatprep.subr.bf16.mxu0 0
      %7819 = vmatpush1.bf16.msra.mxu0 0
      %7820 = vmatprep.subr.bf16.mxu0 0
      %7821 = vmatpush1.bf16.msra.mxu0 0
      %7822 = vmatprep.subr.bf16.mxu0 0
      %7823 = vmatpush1.bf16.msra.mxu0 0
      %7824 = vmatprep.subr.bf16.mxu0 0
      %7825 = vmatpush1.bf16.msra.mxu0 0
      %7826 = vmatprep.subr.bf16.mxu0 0
      %7827 = vmatpush1.bf16.msra.mxu0 0
      %7828 = vmatprep.subr.bf16.mxu0 0
      %7829 = vmatpush1.bf16.msra.mxu0 0
      %7830 = vmatprep.subr.bf16.mxu0 0
      %7831 = vmatpush1.bf16.msra.mxu0 0
      %7832 = vmatprep.subr.bf16.mxu0 0
      %7833 = vmatpush1.bf16.msra.mxu0 0
      %7834 = vmatprep.subr.bf16.mxu0 0
      %7835 = vmatpush1.bf16.msra.mxu0 0
      %7836 = vmatprep.subr.bf16.mxu0 0
      %7837 = vmatpush1.bf16.msra.mxu0 0
      %7838 = vmatprep.subr.bf16.mxu0 0
      %7839 = vmatpush1.bf16.msra.mxu0 0
      %7840 = vmatprep.subr.bf16.mxu0 0
      %7841 = vmatpush1.bf16.msra.mxu0 0
      %7842 = vmatprep.mubr.bf16.mxu0 0
      %7843 = vmatmul.mubr.bf16.gmra.mrb[0].mxu0 %v7805
      %v7844 = vpop.f32.mrb[0].mxu0
      %v7845 = vadd.f32 0.0, %v7844
      %v7846 = vpop.f32.mrb[0].mxu0
      %v7847 = vpop.f32.mrb[0].mxu0
      %v7848 = vpop.f32.mrb[0].mxu0
      %7849 = vdwg.mxu0
      %7850 = vrot.lane.b32.xlu0 %v1121, 104
      %v7851 = vpop.permute.xlu0 %7850
      %v7853 = vsel %vm1128, %v7411, 0
      %v7856 = vsel %vm2076, %v7851, 0
      %7858 = vmatprep.subr.bf16.mxu0 0
      %7859 = vmatpush1.bf16.msra.mxu0 %v7856
      %7860 = vmatprep.subr.bf16.mxu0 0
      %7861 = vmatpush1.bf16.msra.mxu0 0
      %7862 = vmatprep.subr.bf16.mxu0 0
      %7863 = vmatpush1.bf16.msra.mxu0 0
      %7864 = vmatprep.subr.bf16.mxu0 0
      %7865 = vmatpush1.bf16.msra.mxu0 0
      %7866 = vmatprep.subr.bf16.mxu0 0
      %7867 = vmatpush1.bf16.msra.mxu0 0
      %7868 = vmatprep.subr.bf16.mxu0 0
      %7869 = vmatpush1.bf16.msra.mxu0 0
      %7870 = vmatprep.subr.bf16.mxu0 0
      %7871 = vmatpush1.bf16.msra.mxu0 0
      %7872 = vmatprep.subr.bf16.mxu0 0
      %7873 = vmatpush1.bf16.msra.mxu0 0
      %7874 = vmatprep.subr.bf16.mxu0 0
      %7875 = vmatpush1.bf16.msra.mxu0 0
      %7876 = vmatprep.subr.bf16.mxu0 0
      %7877 = vmatpush1.bf16.msra.mxu0 0
      %7878 = vmatprep.subr.bf16.mxu0 0
      %7879 = vmatpush1.bf16.msra.mxu0 0
      %7880 = vmatprep.subr.bf16.mxu0 0
      %7881 = vmatpush1.bf16.msra.mxu0 0
      %7882 = vmatprep.subr.bf16.mxu0 0
      %7883 = vmatpush1.bf16.msra.mxu0 0
      %7884 = vmatprep.subr.bf16.mxu0 0
      %7885 = vmatpush1.bf16.msra.mxu0 0
      %7886 = vmatprep.subr.bf16.mxu0 0
      %7887 = vmatpush1.bf16.msra.mxu0 0
      %7888 = vmatprep.subr.bf16.mxu0 0
      %7889 = vmatpush1.bf16.msra.mxu0 0
      %7890 = vmatprep.mubr.bf16.mxu0 0
      %7891 = vmatmul.mubr.bf16.gmra.mrb[0].mxu0 %v7853
      %v7892 = vpop.f32.mrb[0].mxu0
      %v7893 = vadd.f32 0.0, %v7892
      %v7894 = vpop.f32.mrb[0].mxu0
      %v7895 = vpop.f32.mrb[0].mxu0
      %v7896 = vpop.f32.mrb[0].mxu0
      %7897 = vdwg.mxu0
      %7898 = vrot.lane.b32.xlu0 %v1122, 104
      %v7899 = vpop.permute.xlu0 %7898
      %v7901 = vsel %vm1128, %v7412, 0
      %v7904 = vsel %vm2076, %v7899, 0
      %7906 = vmatprep.subr.bf16.mxu0 0
      %7907 = vmatpush1.bf16.msra.mxu0 %v7904
      %7908 = vmatprep.subr.bf16.mxu0 0
      %7909 = vmatpush1.bf16.msra.mxu0 0
      %7910 = vmatprep.subr.bf16.mxu0 0
      %7911 = vmatpush1.bf16.msra.mxu0 0
      %7912 = vmatprep.subr.bf16.mxu0 0
      %7913 = vmatpush1.bf16.msra.mxu0 0
      %7914 = vmatprep.subr.bf16.mxu0 0
      %7915 = vmatpush1.bf16.msra.mxu0 0
      %7916 = vmatprep.subr.bf16.mxu0 0
      %7917 = vmatpush1.bf16.msra.mxu0 0
      %7918 = vmatprep.subr.bf16.mxu0 0
      %7919 = vmatpush1.bf16.msra.mxu0 0
      %7920 = vmatprep.subr.bf16.mxu0 0
      %7921 = vmatpush1.bf16.msra.mxu0 0
      %7922 = vmatprep.subr.bf16.mxu0 0
      %7923 = vmatpush1.bf16.msra.mxu0 0
      %7924 = vmatprep.subr.bf16.mxu0 0
      %7925 = vmatpush1.bf16.msra.mxu0 0
      %7926 = vmatprep.subr.bf16.mxu0 0
      %7927 = vmatpush1.bf16.msra.mxu0 0
      %7928 = vmatprep.subr.bf16.mxu0 0
      %7929 = vmatpush1.bf16.msra.mxu0 0
      %7930 = vmatprep.subr.bf16.mxu0 0
      %7931 = vmatpush1.bf16.msra.mxu0 0
      %7932 = vmatprep.subr.bf16.mxu0 0
      %7933 = vmatpush1.bf16.msra.mxu0 0
      %7934 = vmatprep.subr.bf16.mxu0 0
      %7935 = vmatpush1.bf16.msra.mxu0 0
      %7936 = vmatprep.subr.bf16.mxu0 0
      %7937 = vmatpush1.bf16.msra.mxu0 0
      %7938 = vmatprep.mubr.bf16.mxu0 0
      %7939 = vmatmul.mubr.bf16.gmra.mrb[0].mxu0 %v7901
      %v7940 = vpop.f32.mrb[0].mxu0
      %v7941 = vadd.f32 0.0, %v7940
      %v7942 = vpop.f32.mrb[0].mxu0
      %v7943 = vpop.f32.mrb[0].mxu0
      %v7944 = vpop.f32.mrb[0].mxu0
      %7945 = vdwg.mxu0
      %7946 = vrot.lane.b32.xlu0 %v1123, 104
      %v7947 = vpop.permute.xlu0 %7946
      %v7949 = vsel %vm1128, %v7413, 0
      %v7952 = vsel %vm2076, %v7947, 0
      %7954 = vmatprep.subr.bf16.mxu0 0
      %7955 = vmatpush1.bf16.msra.mxu0 %v7952
      %7956 = vmatprep.subr.bf16.mxu0 0
      %7957 = vmatpush1.bf16.msra.mxu0 0
      %7958 = vmatprep.subr.bf16.mxu0 0
      %7959 = vmatpush1.bf16.msra.mxu0 0
      %7960 = vmatprep.subr.bf16.mxu0 0
      %7961 = vmatpush1.bf16.msra.mxu0 0
      %7962 = vmatprep.subr.bf16.mxu0 0
      %7963 = vmatpush1.bf16.msra.mxu0 0
      %7964 = vmatprep.subr.bf16.mxu0 0
      %7965 = vmatpush1.bf16.msra.mxu0 0
      %7966 = vmatprep.subr.bf16.mxu0 0
      %7967 = vmatpush1.bf16.msra.mxu0 0
      %7968 = vmatprep.subr.bf16.mxu0 0
      %7969 = vmatpush1.bf16.msra.mxu0 0
      %7970 = vmatprep.subr.bf16.mxu0 0
      %7971 = vmatpush1.bf16.msra.mxu0 0
      %7972 = vmatprep.subr.bf16.mxu0 0
      %7973 = vmatpush1.bf16.msra.mxu0 0
      %7974 = vmatprep.subr.bf16.mxu0 0
      %7975 = vmatpush1.bf16.msra.mxu0 0
      %7976 = vmatprep.subr.bf16.mxu0 0
      %7977 = vmatpush1.bf16.msra.mxu0 0
      %7978 = vmatprep.subr.bf16.mxu0 0
      %7979 = vmatpush1.bf16.msra.mxu0 0
      %7980 = vmatprep.subr.bf16.mxu0 0
      %7981 = vmatpush1.bf16.msra.mxu0 0
      %7982 = vmatprep.subr.bf16.mxu0 0
      %7983 = vmatpush1.bf16.msra.mxu0 0
      %7984 = vmatprep.subr.bf16.mxu0 0
      %7985 = vmatpush1.bf16.msra.mxu0 0
      %7986 = vmatprep.mubr.bf16.mxu0 0
      %7987 = vmatmul.mubr.bf16.gmra.mrb[0].mxu0 %v7949
      %v7988 = vpop.f32.mrb[0].mxu0
      %v7989 = vadd.f32 0.0, %v7988
      %v7990 = vpop.f32.mrb[0].mxu0
      %v7991 = vpop.f32.mrb[0].mxu0
      %v7992 = vpop.f32.mrb[0].mxu0
      %7993 = vdwg.mxu0
      %7994 = vrot.lane.b32.xlu0 %v1124, 104
      %v7995 = vpop.permute.xlu0 %7994
      %v7997 = vsel %vm1128, %v7414, 0
      %v8000 = vsel %vm2076, %v7995, 0
      %8002 = vmatprep.subr.bf16.mxu0 0
      %8003 = vmatpush1.bf16.msra.mxu0 %v8000
      %8004 = vmatprep.subr.bf16.mxu0 0
      %8005 = vmatpush1.bf16.msra.mxu0 0
      %8006 = vmatprep.subr.bf16.mxu0 0
      %8007 = vmatpush1.bf16.msra.mxu0 0
      %8008 = vmatprep.subr.bf16.mxu0 0
      %8009 = vmatpush1.bf16.msra.mxu0 0
      %8010 = vmatprep.subr.bf16.mxu0 0
      %8011 = vmatpush1.bf16.msra.mxu0 0
      %8012 = vmatprep.subr.bf16.mxu0 0
      %8013 = vmatpush1.bf16.msra.mxu0 0
      %8014 = vmatprep.subr.bf16.mxu0 0
      %8015 = vmatpush1.bf16.msra.mxu0 0
      %8016 = vmatprep.subr.bf16.mxu0 0
      %8017 = vmatpush1.bf16.msra.mxu0 0
      %8018 = vmatprep.subr.bf16.mxu0 0
      %8019 = vmatpush1.bf16.msra.mxu0 0
      %8020 = vmatprep.subr.bf16.mxu0 0
      %8021 = vmatpush1.bf16.msra.mxu0 0
      %8022 = vmatprep.subr.bf16.mxu0 0
      %8023 = vmatpush1.bf16.msra.mxu0 0
      %8024 = vmatprep.subr.bf16.mxu0 0
      %8025 = vmatpush1.bf16.msra.mxu0 0
      %8026 = vmatprep.subr.bf16.mxu0 0
      %8027 = vmatpush1.bf16.msra.mxu0 0
      %8028 = vmatprep.subr.bf16.mxu0 0
      %8029 = vmatpush1.bf16.msra.mxu0 0
      %8030 = vmatprep.subr.bf16.mxu0 0
      %8031 = vmatpush1.bf16.msra.mxu0 0
      %8032 = vmatprep.subr.bf16.mxu0 0
      %8033 = vmatpush1.bf16.msra.mxu0 0
      %8034 = vmatprep.mubr.bf16.mxu0 0
      %8035 = vmatmul.mubr.bf16.gmra.mrb[0].mxu0 %v7997
      %v8036 = vpop.f32.mrb[0].mxu0
      %v8037 = vadd.f32 0.0, %v8036
      %v8038 = vpop.f32.mrb[0].mxu0
      %v8039 = vpop.f32.mrb[0].mxu0
      %v8040 = vpop.f32.mrb[0].mxu0
      %8041 = vdwg.mxu0
      %8042 = vrot.lane.b32.xlu0 %v1125, 104
      %v8043 = vpop.permute.xlu0 %8042
      %v8045 = vsel %vm1128, %v7415, 0
      %v8048 = vsel %vm2076, %v8043, 0
      %8050 = vmatprep.subr.bf16.mxu0 0
      %8051 = vmatpush1.bf16.msra.mxu0 %v8048
      %8052 = vmatprep.subr.bf16.mxu0 0
      %8053 = vmatpush1.bf16.msra.mxu0 0
      %8054 = vmatprep.subr.bf16.mxu0 0
      %8055 = vmatpush1.bf16.msra.mxu0 0
      %8056 = vmatprep.subr.bf16.mxu0 0
      %8057 = vmatpush1.bf16.msra.mxu0 0
      %8058 = vmatprep.subr.bf16.mxu0 0
      %8059 = vmatpush1.bf16.msra.mxu0 0
      %8060 = vmatprep.subr.bf16.mxu0 0
      %8061 = vmatpush1.bf16.msra.mxu0 0
      %8062 = vmatprep.subr.bf16.mxu0 0
      %8063 = vmatpush1.bf16.msra.mxu0 0
      %8064 = vmatprep.subr.bf16.mxu0 0
      %8065 = vmatpush1.bf16.msra.mxu0 0
      %8066 = vmatprep.subr.bf16.mxu0 0
      %8067 = vmatpush1.bf16.msra.mxu0 0
      %8068 = vmatprep.subr.bf16.mxu0 0
      %8069 = vmatpush1.bf16.msra.mxu0 0
      %8070 = vmatprep.subr.bf16.mxu0 0
      %8071 = vmatpush1.bf16.msra.mxu0 0
      %8072 = vmatprep.subr.bf16.mxu0 0
      %8073 = vmatpush1.bf16.msra.mxu0 0
      %8074 = vmatprep.subr.bf16.mxu0 0
      %8075 = vmatpush1.bf16.msra.mxu0 0
      %8076 = vmatprep.subr.bf16.mxu0 0
      %8077 = vmatpush1.bf16.msra.mxu0 0
      %8078 = vmatprep.subr.bf16.mxu0 0
      %8079 = vmatpush1.bf16.msra.mxu0 0
      %8080 = vmatprep.subr.bf16.mxu0 0
      %8081 = vmatpush1.bf16.msra.mxu0 0
      %8082 = vmatprep.mubr.bf16.mxu0 0
      %8083 = vmatmul.mubr.bf16.gmra.mrb[0].mxu0 %v8045
      %v8084 = vpop.f32.mrb[0].mxu0
      %v8085 = vadd.f32 0.0, %v8084
      %v8086 = vpop.f32.mrb[0].mxu0
      %v8087 = vpop.f32.mrb[0].mxu0
      %v8088 = vpop.f32.mrb[0].mxu0
      %8089 = vdwg.mxu0
      %8090 = vrot.lane.b32.xlu0 %v1126, 104
      %v8091 = vpop.permute.xlu0 %8090
      %v8093 = vsel %vm1128, %v7416, 0
      %v8096 = vsel %vm2076, %v8091, 0
      %8098 = vmatprep.subr.bf16.mxu0 0
      %8099 = vmatpush1.bf16.msra.mxu0 %v8096
      %8100 = vmatprep.subr.bf16.mxu0 0
      %8101 = vmatpush1.bf16.msra.mxu0 0
      %8102 = vmatprep.subr.bf16.mxu0 0
      %8103 = vmatpush1.bf16.msra.mxu0 0
      %8104 = vmatprep.subr.bf16.mxu0 0
      %8105 = vmatpush1.bf16.msra.mxu0 0
      %8106 = vmatprep.subr.bf16.mxu0 0
      %8107 = vmatpush1.bf16.msra.mxu0 0
      %8108 = vmatprep.subr.bf16.mxu0 0
      %8109 = vmatpush1.bf16.msra.mxu0 0
      %8110 = vmatprep.subr.bf16.mxu0 0
      %8111 = vmatpush1.bf16.msra.mxu0 0
      %8112 = vmatprep.subr.bf16.mxu0 0
      %8113 = vmatpush1.bf16.msra.mxu0 0
      %8114 = vmatprep.subr.bf16.mxu0 0
      %8115 = vmatpush1.bf16.msra.mxu0 0
      %8116 = vmatprep.subr.bf16.mxu0 0
      %8117 = vmatpush1.bf16.msra.mxu0 0
      %8118 = vmatprep.subr.bf16.mxu0 0
      %8119 = vmatpush1.bf16.msra.mxu0 0
      %8120 = vmatprep.subr.bf16.mxu0 0
      %8121 = vmatpush1.bf16.msra.mxu0 0
      %8122 = vmatprep.subr.bf16.mxu0 0
      %8123 = vmatpush1.bf16.msra.mxu0 0
      %8124 = vmatprep.subr.bf16.mxu0 0
      %8125 = vmatpush1.bf16.msra.mxu0 0
      %8126 = vmatprep.subr.bf16.mxu0 0
      %8127 = vmatpush1.bf16.msra.mxu0 0
      %8128 = vmatprep.subr.bf16.mxu0 0
      %8129 = vmatpush1.bf16.msra.mxu0 0
      %8130 = vmatprep.mubr.bf16.mxu0 0
      %8131 = vmatmul.mubr.bf16.gmra.mrb[0].mxu0 %v8093
      %v8132 = vpop.f32.mrb[0].mxu0
      %v8133 = vadd.f32 0.0, %v8132
      %v8134 = vpop.f32.mrb[0].mxu0
      %v8135 = vpop.f32.mrb[0].mxu0
      %v8136 = vpop.f32.mrb[0].mxu0
      %8137 = vdwg.mxu0
      %8138 = vrot.lane.b32.xlu0 %v1127, 104
      %v8139 = vpop.permute.xlu0 %8138
      %v8141 = vsel %vm1128, %v7417, 0
      %v8144 = vsel %vm2076, %v8139, 0
      %8146 = vmatprep.subr.bf16.mxu0 0
      %8147 = vmatpush1.bf16.msra.mxu0 %v8144
      %8148 = vmatprep.subr.bf16.mxu0 0
      %8149 = vmatpush1.bf16.msra.mxu0 0
      %8150 = vmatprep.subr.bf16.mxu0 0
      %8151 = vmatpush1.bf16.msra.mxu0 0
      %8152 = vmatprep.subr.bf16.mxu0 0
      %8153 = vmatpush1.bf16.msra.mxu0 0
      %8154 = vmatprep.subr.bf16.mxu0 0
      %8155 = vmatpush1.bf16.msra.mxu0 0
      %8156 = vmatprep.subr.bf16.mxu0 0
      %8157 = vmatpush1.bf16.msra.mxu0 0
      %8158 = vmatprep.subr.bf16.mxu0 0
      %8159 = vmatpush1.bf16.msra.mxu0 0
      %8160 = vmatprep.subr.bf16.mxu0 0
      %8161 = vmatpush1.bf16.msra.mxu0 0
      %8162 = vmatprep.subr.bf16.mxu0 0
      %8163 = vmatpush1.bf16.msra.mxu0 0
      %8164 = vmatprep.subr.bf16.mxu0 0
      %8165 = vmatpush1.bf16.msra.mxu0 0
      %8166 = vmatprep.subr.bf16.mxu0 0
      %8167 = vmatpush1.bf16.msra.mxu0 0
      %8168 = vmatprep.subr.bf16.mxu0 0
      %8169 = vmatpush1.bf16.msra.mxu0 0
      %8170 = vmatprep.subr.bf16.mxu0 0
      %8171 = vmatpush1.bf16.msra.mxu0 0
      %8172 = vmatprep.subr.bf16.mxu0 0
      %8173 = vmatpush1.bf16.msra.mxu0 0
      %8174 = vmatprep.subr.bf16.mxu0 0
      %8175 = vmatpush1.bf16.msra.mxu0 0
      %8176 = vmatprep.subr.bf16.mxu0 0
      %8177 = vmatpush1.bf16.msra.mxu0 0
      %8178 = vmatprep.mubr.bf16.mxu0 0
      %8179 = vmatmul.mubr.bf16.gmra.mrb[0].mxu0 %v8141
      %v8180 = vpop.f32.mrb[0].mxu0
      %v8181 = vadd.f32 0.0, %v8180
      %v8182 = vpop.f32.mrb[0].mxu0
      %v8183 = vpop.f32.mrb[0].mxu0
      %v8184 = vpop.f32.mrb[0].mxu0
      %8185 = vdwg.mxu0
      %8202 = vrot.lane.b32.xlu0 %v3894, 8
      %v8203 = vpop.permute.xlu0 %8202
      %8204 = vrot.lane.b32.xlu0 %v3943, 8
      %v8205 = vpop.permute.xlu0 %8204
      %8206 = vrot.lane.b32.xlu0 %v3992, 8
      %v8207 = vpop.permute.xlu0 %8206
      %8208 = vrot.lane.b32.xlu0 %v4041, 8
      %v8209 = vpop.permute.xlu0 %8208
      %8210 = vrot.lane.b32.xlu0 %v4090, 8
      %v8211 = vpop.permute.xlu0 %8210
      %8212 = vrot.lane.b32.xlu0 %v4139, 8
      %v8213 = vpop.permute.xlu0 %8212
      %8214 = vrot.lane.b32.xlu0 %v4188, 8
      %v8215 = vpop.permute.xlu0 %8214
      %8216 = vrot.lane.b32.xlu0 %v4237, 8
      %v8217 = vpop.permute.xlu0 %8216
      %8218 = vrot.lane.b32.xlu0 %v4286, 8
      %v8219 = vpop.permute.xlu0 %8218
      %8220 = vrot.lane.b32.xlu0 %v4335, 8
      %v8221 = vpop.permute.xlu0 %8220
      %8222 = vrot.lane.b32.xlu0 %v4384, 8
      %v8223 = vpop.permute.xlu0 %8222
      %8224 = vrot.lane.b32.xlu0 %v4433, 8
      %v8225 = vpop.permute.xlu0 %8224
      %8226 = vrot.lane.b32.xlu0 %v4482, 8
      %v8227 = vpop.permute.xlu0 %8226
      %8228 = vrot.lane.b32.xlu0 %v4531, 8
      %v8229 = vpop.permute.xlu0 %8228
      %8230 = vrot.lane.b32.xlu0 %v4580, 8
      %v8231 = vpop.permute.xlu0 %8230
      %8232 = vrot.lane.b32.xlu0 %v4629, 8
      %v8233 = vpop.permute.xlu0 %8232
      %8266 = vrot.lane.b32.xlu0 %v5685, 16
      %v8267 = vpop.permute.xlu0 %8266
      %8268 = vrot.lane.b32.xlu0 %v5733, 16
      %v8269 = vpop.permute.xlu0 %8268
      %8270 = vrot.lane.b32.xlu0 %v5781, 16
      %v8271 = vpop.permute.xlu0 %8270
      %8272 = vrot.lane.b32.xlu0 %v5829, 16
      %v8273 = vpop.permute.xlu0 %8272
      %8274 = vrot.lane.b32.xlu0 %v5877, 16
      %v8275 = vpop.permute.xlu0 %8274
      %8276 = vrot.lane.b32.xlu0 %v5925, 16
      %v8277 = vpop.permute.xlu0 %8276
      %8278 = vrot.lane.b32.xlu0 %v5973, 16
      %v8279 = vpop.permute.xlu0 %8278
      %8280 = vrot.lane.b32.xlu0 %v6021, 16
      %v8281 = vpop.permute.xlu0 %8280
      %8282 = vrot.lane.b32.xlu0 %v6069, 16
      %v8283 = vpop.permute.xlu0 %8282
      %8284 = vrot.lane.b32.xlu0 %v6117, 16
      %v8285 = vpop.permute.xlu0 %8284
      %8286 = vrot.lane.b32.xlu0 %v6165, 16
      %v8287 = vpop.permute.xlu0 %8286
      %8288 = vrot.lane.b32.xlu0 %v6213, 16
      %v8289 = vpop.permute.xlu0 %8288
      %8290 = vrot.lane.b32.xlu0 %v6261, 16
      %v8291 = vpop.permute.xlu0 %8290
      %8292 = vrot.lane.b32.xlu0 %v6309, 16
      %v8293 = vpop.permute.xlu0 %8292
      %8294 = vrot.lane.b32.xlu0 %v6357, 16
      %v8295 = vpop.permute.xlu0 %8294
      %8296 = vrot.lane.b32.xlu0 %v6405, 16
      %v8297 = vpop.permute.xlu0 %8296
      %8330 = vrot.lane.b32.xlu0 %v7461, 24
      %v8331 = vpop.permute.xlu0 %8330
      %8332 = vrot.lane.b32.xlu0 %v7509, 24
      %v8333 = vpop.permute.xlu0 %8332
      %8334 = vrot.lane.b32.xlu0 %v7557, 24
      %v8335 = vpop.permute.xlu0 %8334
      %8336 = vrot.lane.b32.xlu0 %v7605, 24
      %v8337 = vpop.permute.xlu0 %8336
      %8338 = vrot.lane.b32.xlu0 %v7653, 24
      %v8339 = vpop.permute.xlu0 %8338
      %8340 = vrot.lane.b32.xlu0 %v7701, 24
      %v8341 = vpop.permute.xlu0 %8340
      %8342 = vrot.lane.b32.xlu0 %v7749, 24
      %v8343 = vpop.permute.xlu0 %8342
      %8344 = vrot.lane.b32.xlu0 %v7797, 24
      %v8345 = vpop.permute.xlu0 %8344
      %8346 = vrot.lane.b32.xlu0 %v7845, 24
      %v8347 = vpop.permute.xlu0 %8346
      %8348 = vrot.lane.b32.xlu0 %v7893, 24
      %v8349 = vpop.permute.xlu0 %8348
      %8350 = vrot.lane.b32.xlu0 %v7941, 24
      %v8351 = vpop.permute.xlu0 %8350
      %8352 = vrot.lane.b32.xlu0 %v7989, 24
      %v8353 = vpop.permute.xlu0 %8352
      %8354 = vrot.lane.b32.xlu0 %v8037, 24
      %v8355 = vpop.permute.xlu0 %8354
      %8356 = vrot.lane.b32.xlu0 %v8085, 24
      %v8357 = vpop.permute.xlu0 %8356
      %8358 = vrot.lane.b32.xlu0 %v8133, 24
      %v8359 = vpop.permute.xlu0 %8358
      %8360 = vrot.lane.b32.xlu0 %v8181, 24
      %v8361 = vpop.permute.xlu0 %8360
      %v8378 = vsel %vm1128, %v2115, %v8203
      %v8379 = vsel %vm1128, %v2161, %v8205
      %v8380 = vsel %vm1128, %v2207, %v8207
      %v8381 = vsel %vm1128, %v2253, %v8209
      %v8382 = vsel %vm1128, %v2299, %v8211
      %v8383 = vsel %vm1128, %v2345, %v8213
      %v8384 = vsel %vm1128, %v2391, %v8215
      %v8385 = vsel %vm1128, %v2437, %v8217
      %v8386 = vsel %vm1128, %v2483, %v8219
      %v8387 = vsel %vm1128, %v2529, %v8221
      %v8388 = vsel %vm1128, %v2575, %v8223
      %v8389 = vsel %vm1128, %v2621, %v8225
      %v8390 = vsel %vm1128, %v2667, %v8227
      %v8391 = vsel %vm1128, %v2713, %v8229
      %v8392 = vsel %vm1128, %v2759, %v8231
      %v8393 = vsel %vm1128, %v2805, %v8233
      %vm8394 = vcmask 130048
      %v8395 = vsel %vm8394, %v8378, %v8267
      %v8396 = vsel %vm8394, %v8379, %v8269
      %v8397 = vsel %vm8394, %v8380, %v8271
      %v8398 = vsel %vm8394, %v8381, %v8273
      %v8399 = vsel %vm8394, %v8382, %v8275
      %v8400 = vsel %vm8394, %v8383, %v8277
      %v8401 = vsel %vm8394, %v8384, %v8279
      %v8402 = vsel %vm8394, %v8385, %v8281
      %v8403 = vsel %vm8394, %v8386, %v8283
      %v8404 = vsel %vm8394, %v8387, %v8285
      %v8405 = vsel %vm8394, %v8388, %v8287
      %v8406 = vsel %vm8394, %v8389, %v8289
      %v8407 = vsel %vm8394, %v8390, %v8291
      %v8408 = vsel %vm8394, %v8391, %v8293
      %v8409 = vsel %vm8394, %v8392, %v8295
      %v8410 = vsel %vm8394, %v8393, %v8297
      %vm8411 = vcmask 195584
      %v8412 = vsel %vm8411, %v8395, %v8331
      %v8413 = vsel %vm8411, %v8396, %v8333
      %v8414 = vsel %vm8411, %v8397, %v8335
      %v8415 = vsel %vm8411, %v8398, %v8337
      %v8416 = vsel %vm8411, %v8399, %v8339
      %v8417 = vsel %vm8411, %v8400, %v8341
      %v8418 = vsel %vm8411, %v8401, %v8343
      %v8419 = vsel %vm8411, %v8402, %v8345
      %v8420 = vsel %vm8411, %v8403, %v8347
      %v8421 = vsel %vm8411, %v8404, %v8349
      %v8422 = vsel %vm8411, %v8405, %v8351
      %v8423 = vsel %vm8411, %v8406, %v8353
      %v8424 = vsel %vm8411, %v8407, %v8355
      %v8425 = vsel %vm8411, %v8408, %v8357
      %v8426 = vsel %vm8411, %v8409, %v8359
      %v8427 = vsel %vm8411, %v8410, %v8361
      %v8428 = vpack.c.bf16 %v8413, %v8412
      %v8429 = vpack.c.bf16 %v8415, %v8414
      %v8430 = vpack.c.bf16 %v8417, %v8416
      %v8431 = vpack.c.bf16 %v8419, %v8418
      %v8432 = vpack.c.bf16 %v8421, %v8420
      %v8433 = vpack.c.bf16 %v8423, %v8422
      %v8434 = vpack.c.bf16 %v8425, %v8424
      %v8435 = vpack.c.bf16 %v8427, %v8426
      %s8436 = smul.u32 %s30, 4
      %s8437 = smul.addr %s8436, 4
      %s8438 = scalar_lea.vmem %s4, %s8437
      %v8439 = vld [vmem:[%s8438] sm:$0xf]
      %v8440 = vld [vmem:[%s8438 + $0x4] sm:$0xf]
      %v8441 = vld [vmem:[%s8438 + $0x8] sm:$0xf]
      %v8442 = vld [vmem:[%s8438 + $0xc] sm:$0xf]
      %s8443 = scalar_lea.vmem %s5, %s30
      %v8444 = vld [vmem:[%s8443] sm:$0x1]
      %v8446 = vlaneseq
      %v8447 = vshrl.u32 %v8446, 7
      %v8448 = vsub.s32 0, %v8447
      %v8449 = vrot.slane %v8444, %v8448
      %v8455 = vunpack.c.l.b16 %v8439
      %v8456 = vunpack.c.l.b16 %v8440
      %v8457 = vunpack.c.l.b16 %v8441
      %v8458 = vunpack.c.l.b16 %v8442
      %v8459 = vpack.c.b16 %v8456, %v8455
      %v8460 = vpack.c.b16 %v8458, %v8457
      %v8464 = vsel %vm541, %v8428, 0
      %v8467 = vsel %vm541, %v8429, 0
      %v8470 = vsel %vm541, %v8430, 0
      %v8473 = vsel %vm541, %v8431, 0
      %v8476 = vsel %vm541, %v8432, 0
      %v8479 = vsel %vm541, %v8433, 0
      %v8482 = vsel %vm541, %v8434, 0
      %v8485 = vsel %vm541, %v8435, 0
      %8487 = vmatprep.subr.bf16.mxu0 0
      %8488 = vmatpush1.bf16.msra.mxu0 %v8459
      %8489 = vmatprep.subr.bf16.mxu0 0
      %8490 = vmatpush1.bf16.msra.mxu0 %v8460
      %8491 = vmatprep.subr.bf16.mxu0 0
      %8492 = vmatpush1.bf16.msra.mxu0 0
      %8493 = vmatprep.subr.bf16.mxu0 0
      %8494 = vmatpush1.bf16.msra.mxu0 0
      %8495 = vmatprep.subr.bf16.mxu0 0
      %8496 = vmatpush1.bf16.msra.mxu0 0
      %8497 = vmatprep.subr.bf16.mxu0 0
      %8498 = vmatpush1.bf16.msra.mxu0 0
      %8499 = vmatprep.subr.bf16.mxu0 0
      %8500 = vmatpush1.bf16.msra.mxu0 0
      %8501 = vmatprep.subr.bf16.mxu0 0
      %8502 = vmatpush1.bf16.msra.mxu0 0
      %8503 = vmatprep.subr.bf16.mxu0 0
      %8504 = vmatpush1.bf16.msra.mxu0 0
      %8505 = vmatprep.subr.bf16.mxu0 0
      %8506 = vmatpush1.bf16.msra.mxu0 0
      %8507 = vmatprep.subr.bf16.mxu0 0
      %8508 = vmatpush1.bf16.msra.mxu0 0
      %8509 = vmatprep.subr.bf16.mxu0 0
      %8510 = vmatpush1.bf16.msra.mxu0 0
      %8511 = vmatprep.subr.bf16.mxu0 0
      %8512 = vmatpush1.bf16.msra.mxu0 0
      %8513 = vmatprep.subr.bf16.mxu0 0
      %8514 = vmatpush1.bf16.msra.mxu0 0
      %8515 = vmatprep.subr.bf16.mxu0 0
      %8516 = vmatpush1.bf16.msra.mxu0 0
      %8517 = vmatprep.subr.bf16.mxu0 0
      %8518 = vmatpush1.bf16.msra.mxu0 0
      %8519 = vmatprep.mubr.bf16.mxu0 0
      %8520 = vmatmul.mubr.bf16.gmra.mrb[0].mxu0 %v8464
      %v8521 = vpop.f32.mrb[0].mxu0
      %v8522 = vadd.f32 %v8449, %v8521
      %v8523 = vpop.f32.mrb[0].mxu0
      %v8524 = vpop.f32.mrb[0].mxu0
      %v8525 = vadd.f32 %v8449, %v8524
      %v8526 = vpop.f32.mrb[0].mxu0
      %8527 = vmatprep.mubr.bf16.mxu0 0
      %8528 = vmatmul.mubr.bf16.gmra.mrb[0].mxu0 %v8467
      %v8529 = vpop.f32.mrb[0].mxu0
      %v8530 = vadd.f32 %v8449, %v8529
      %v8531 = vpop.f32.mrb[0].mxu0
      %v8532 = vpop.f32.mrb[0].mxu0
      %v8533 = vadd.f32 %v8449, %v8532
      %v8534 = vpop.f32.mrb[0].mxu0
      %8535 = vmatprep.mubr.bf16.mxu0 0
      %8536 = vmatmul.mubr.bf16.gmra.mrb[0].mxu0 %v8470
      %v8537 = vpop.f32.mrb[0].mxu0
      %v8538 = vadd.f32 %v8449, %v8537
      %v8539 = vpop.f32.mrb[0].mxu0
      %v8540 = vpop.f32.mrb[0].mxu0
      %v8541 = vadd.f32 %v8449, %v8540
      %v8542 = vpop.f32.mrb[0].mxu0
      %8543 = vmatprep.mubr.bf16.mxu0 0
      %8544 = vmatmul.mubr.bf16.gmra.mrb[0].mxu0 %v8473
      %v8545 = vpop.f32.mrb[0].mxu0
      %v8546 = vadd.f32 %v8449, %v8545
      %v8547 = vpop.f32.mrb[0].mxu0
      %v8548 = vpop.f32.mrb[0].mxu0
      %v8549 = vadd.f32 %v8449, %v8548
      %v8550 = vpop.f32.mrb[0].mxu0
      %8551 = vmatprep.mubr.bf16.mxu0 0
      %8552 = vmatmul.mubr.bf16.gmra.mrb[0].mxu0 %v8476
      %v8553 = vpop.f32.mrb[0].mxu0
      %v8554 = vadd.f32 %v8449, %v8553
      %v8555 = vpop.f32.mrb[0].mxu0
      %v8556 = vpop.f32.mrb[0].mxu0
      %v8557 = vadd.f32 %v8449, %v8556
      %v8558 = vpop.f32.mrb[0].mxu0
      %8559 = vmatprep.mubr.bf16.mxu0 0
      %8560 = vmatmul.mubr.bf16.gmra.mrb[0].mxu0 %v8479
      %v8561 = vpop.f32.mrb[0].mxu0
      %v8562 = vadd.f32 %v8449, %v8561
      %v8563 = vpop.f32.mrb[0].mxu0
      %v8564 = vpop.f32.mrb[0].mxu0
      %v8565 = vadd.f32 %v8449, %v8564
      %v8566 = vpop.f32.mrb[0].mxu0
      %8567 = vmatprep.mubr.bf16.mxu0 0
      %8568 = vmatmul.mubr.bf16.gmra.mrb[0].mxu0 %v8482
      %v8569 = vpop.f32.mrb[0].mxu0
      %v8570 = vadd.f32 %v8449, %v8569
      %v8571 = vpop.f32.mrb[0].mxu0
      %v8572 = vpop.f32.mrb[0].mxu0
      %v8573 = vadd.f32 %v8449, %v8572
      %v8574 = vpop.f32.mrb[0].mxu0
      %8575 = vmatprep.mubr.bf16.mxu0 0
      %8576 = vmatmul.mubr.bf16.gmra.mrb[0].mxu0 %v8485
      %v8577 = vpop.f32.mrb[0].mxu0
      %v8578 = vadd.f32 %v8449, %v8577
      %v8579 = vpop.f32.mrb[0].mxu0
      %v8580 = vpop.f32.mrb[0].mxu0
      %v8581 = vadd.f32 %v8449, %v8580
      %v8582 = vpop.f32.mrb[0].mxu0
      %8583 = vdwg.mxu0
      %v8584 = vadd.f32 %v521, %v8522
      %v8585 = vadd.f32 %v522, %v8525
      %v8586 = vadd.f32 %v523, %v8530
      %v8587 = vadd.f32 %v524, %v8533
      %v8588 = vadd.f32 %v525, %v8538
      %v8589 = vadd.f32 %v526, %v8541
      %v8590 = vadd.f32 %v527, %v8546
      %v8591 = vadd.f32 %v528, %v8549
      %v8592 = vadd.f32 %v529, %v8554
      %v8593 = vadd.f32 %v530, %v8557
      %v8594 = vadd.f32 %v531, %v8562
      %v8595 = vadd.f32 %v532, %v8565
      %v8596 = vadd.f32 %v533, %v8570
      %v8597 = vadd.f32 %v534, %v8573
      %v8598 = vadd.f32 %v535, %v8578
      %v8599 = vadd.f32 %v536, %v8581
      %s8600 = scalar_lea.vmem %s6, %s30
      %v8601 = vld [vmem:[%s8600] sm:$0x1]
      %s8602 = scalar_lea.vmem %s7, %s30
      %v8603 = vld [vmem:[%s8602] sm:$0x1]
      %v8604 = vsel %vm541, %v8584, 0.0
      %8605 = vadd.xlane.f32.xlu0 %v8604
      %v8606 = vpop.xlane.xlu0 %8605
      %v8607 = vsel %vm541, %v8585, 0.0
      %8608 = vadd.xlane.f32.xlu0 %v8607
      %v8609 = vpop.xlane.xlu0 %8608
      %v8610 = vsel %vm541, %v8586, 0.0
      %8611 = vadd.xlane.f32.xlu0 %v8610
      %v8612 = vpop.xlane.xlu0 %8611
      %v8613 = vsel %vm541, %v8587, 0.0
      %8614 = vadd.xlane.f32.xlu0 %v8613
      %v8615 = vpop.xlane.xlu0 %8614
      %v8616 = vsel %vm541, %v8588, 0.0
      %8617 = vadd.xlane.f32.xlu0 %v8616
      %v8618 = vpop.xlane.xlu0 %8617
      %v8619 = vsel %vm541, %v8589, 0.0
      %8620 = vadd.xlane.f32.xlu0 %v8619
      %v8621 = vpop.xlane.xlu0 %8620
      %v8622 = vsel %vm541, %v8590, 0.0
      %8623 = vadd.xlane.f32.xlu0 %v8622
      %v8624 = vpop.xlane.xlu0 %8623
      %v8625 = vsel %vm541, %v8591, 0.0
      %8626 = vadd.xlane.f32.xlu0 %v8625
      %v8627 = vpop.xlane.xlu0 %8626
      %v8628 = vsel %vm541, %v8592, 0.0
      %8629 = vadd.xlane.f32.xlu0 %v8628
      %v8630 = vpop.xlane.xlu0 %8629
      %v8631 = vsel %vm541, %v8593, 0.0
      %8632 = vadd.xlane.f32.xlu0 %v8631
      %v8633 = vpop.xlane.xlu0 %8632
      %v8634 = vsel %vm541, %v8594, 0.0
      %8635 = vadd.xlane.f32.xlu0 %v8634
      %v8636 = vpop.xlane.xlu0 %8635
      %v8637 = vsel %vm541, %v8595, 0.0
      %8638 = vadd.xlane.f32.xlu0 %v8637
      %v8639 = vpop.xlane.xlu0 %8638
      %v8640 = vsel %vm541, %v8596, 0.0
      %8641 = vadd.xlane.f32.xlu0 %v8640
      %v8642 = vpop.xlane.xlu0 %8641
      %v8643 = vsel %vm541, %v8597, 0.0
      %8644 = vadd.xlane.f32.xlu0 %v8643
      %v8645 = vpop.xlane.xlu0 %8644
      %v8646 = vsel %vm541, %v8598, 0.0
      %8647 = vadd.xlane.f32.xlu0 %v8646
      %v8648 = vpop.xlane.xlu0 %8647
      %v8649 = vsel %vm541, %v8599, 0.0
      %8650 = vadd.xlane.f32.xlu0 %v8649
      %v8651 = vpop.xlane.xlu0 %8650
      %v8652 = vmul.f32 %v8606, %v590
      %v8653 = vmul.f32 %v8609, %v590
      %v8654 = vmul.f32 %v8612, %v590
      %v8655 = vmul.f32 %v8615, %v590
      %v8656 = vmul.f32 %v8618, %v590
      %v8657 = vmul.f32 %v8621, %v590
      %v8658 = vmul.f32 %v8624, %v590
      %v8659 = vmul.f32 %v8627, %v590
      %v8660 = vmul.f32 %v8630, %v590
      %v8661 = vmul.f32 %v8633, %v590
      %v8662 = vmul.f32 %v8636, %v590
      %v8663 = vmul.f32 %v8639, %v590
      %v8664 = vmul.f32 %v8642, %v590
      %v8665 = vmul.f32 %v8645, %v590
      %v8666 = vmul.f32 %v8648, %v590
      %v8667 = vmul.f32 %v8651, %v590
      %v8668 = vsub.f32 %v8584, %v8652
      %v8669 = vsub.f32 %v8585, %v8653
      %v8670 = vsub.f32 %v8586, %v8654
      %v8671 = vsub.f32 %v8587, %v8655
      %v8672 = vsub.f32 %v8588, %v8656
      %v8673 = vsub.f32 %v8589, %v8657
      %v8674 = vsub.f32 %v8590, %v8658
      %v8675 = vsub.f32 %v8591, %v8659
      %v8676 = vsub.f32 %v8592, %v8660
      %v8677 = vsub.f32 %v8593, %v8661
      %v8678 = vsub.f32 %v8594, %v8662
      %v8679 = vsub.f32 %v8595, %v8663
      %v8680 = vsub.f32 %v8596, %v8664
      %v8681 = vsub.f32 %v8597, %v8665
      %v8682 = vsub.f32 %v8598, %v8666
      %v8683 = vsub.f32 %v8599, %v8667
      %v8684 = vmul.f32 %v8668, %v8668
      %v8685 = vmul.f32 %v8669, %v8669
      %v8686 = vmul.f32 %v8670, %v8670
      %v8687 = vmul.f32 %v8671, %v8671
      %v8688 = vmul.f32 %v8672, %v8672
      %v8689 = vmul.f32 %v8673, %v8673
      %v8690 = vmul.f32 %v8674, %v8674
      %v8691 = vmul.f32 %v8675, %v8675
      %v8692 = vmul.f32 %v8676, %v8676
      %v8693 = vmul.f32 %v8677, %v8677
      %v8694 = vmul.f32 %v8678, %v8678
      %v8695 = vmul.f32 %v8679, %v8679
      %v8696 = vmul.f32 %v8680, %v8680
      %v8697 = vmul.f32 %v8681, %v8681
      %v8698 = vmul.f32 %v8682, %v8682
      %v8699 = vmul.f32 %v8683, %v8683
      %v8700 = vsel %vm541, %v8684, 0.0
      %8701 = vadd.xlane.f32.xlu0 %v8700
      %v8702 = vpop.xlane.xlu0 %8701
      %v8703 = vsel %vm541, %v8685, 0.0
      %8704 = vadd.xlane.f32.xlu0 %v8703
      %v8705 = vpop.xlane.xlu0 %8704
      %v8706 = vsel %vm541, %v8686, 0.0
      %8707 = vadd.xlane.f32.xlu0 %v8706
      %v8708 = vpop.xlane.xlu0 %8707
      %v8709 = vsel %vm541, %v8687, 0.0
      %8710 = vadd.xlane.f32.xlu0 %v8709
      %v8711 = vpop.xlane.xlu0 %8710
      %v8712 = vsel %vm541, %v8688, 0.0
      %8713 = vadd.xlane.f32.xlu0 %v8712
      %v8714 = vpop.xlane.xlu0 %8713
      %v8715 = vsel %vm541, %v8689, 0.0
      %8716 = vadd.xlane.f32.xlu0 %v8715
      %v8717 = vpop.xlane.xlu0 %8716
      %v8718 = vsel %vm541, %v8690, 0.0
      %8719 = vadd.xlane.f32.xlu0 %v8718
      %v8720 = vpop.xlane.xlu0 %8719
      %v8721 = vsel %vm541, %v8691, 0.0
      %8722 = vadd.xlane.f32.xlu0 %v8721
      %v8723 = vpop.xlane.xlu0 %8722
      %v8724 = vsel %vm541, %v8692, 0.0
      %8725 = vadd.xlane.f32.xlu0 %v8724
      %v8726 = vpop.xlane.xlu0 %8725
      %v8727 = vsel %vm541, %v8693, 0.0
      %8728 = vadd.xlane.f32.xlu0 %v8727
      %v8729 = vpop.xlane.xlu0 %8728
      %v8730 = vsel %vm541, %v8694, 0.0
      %8731 = vadd.xlane.f32.xlu0 %v8730
      %v8732 = vpop.xlane.xlu0 %8731
      %v8733 = vsel %vm541, %v8695, 0.0
      %8734 = vadd.xlane.f32.xlu0 %v8733
      %v8735 = vpop.xlane.xlu0 %8734
      %v8736 = vsel %vm541, %v8696, 0.0
      %8737 = vadd.xlane.f32.xlu0 %v8736
      %v8738 = vpop.xlane.xlu0 %8737
      %v8739 = vsel %vm541, %v8697, 0.0
      %8740 = vadd.xlane.f32.xlu0 %v8739
      %v8741 = vpop.xlane.xlu0 %8740
      %v8742 = vsel %vm541, %v8698, 0.0
      %8743 = vadd.xlane.f32.xlu0 %v8742
      %v8744 = vpop.xlane.xlu0 %8743
      %v8745 = vsel %vm541, %v8699, 0.0
      %8746 = vadd.xlane.f32.xlu0 %v8745
      %v8747 = vpop.xlane.xlu0 %8746
      %v8748 = vmul.f32 %v8702, %v590
      %v8749 = vmul.f32 %v8705, %v590
      %v8750 = vmul.f32 %v8708, %v590
      %v8751 = vmul.f32 %v8711, %v590
      %v8752 = vmul.f32 %v8714, %v590
      %v8753 = vmul.f32 %v8717, %v590
      %v8754 = vmul.f32 %v8720, %v590
      %v8755 = vmul.f32 %v8723, %v590
      %v8756 = vmul.f32 %v8726, %v590
      %v8757 = vmul.f32 %v8729, %v590
      %v8758 = vmul.f32 %v8732, %v590
      %v8759 = vmul.f32 %v8735, %v590
      %v8760 = vmul.f32 %v8738, %v590
      %v8761 = vmul.f32 %v8741, %v590
      %v8762 = vmul.f32 %v8744, %v590
      %v8763 = vmul.f32 %v8747, %v590
      %v8764 = vadd.f32 %v8748, 1e-05
      %v8765 = vadd.f32 %v8749, 1e-05
      %v8766 = vadd.f32 %v8750, 1e-05
      %v8767 = vadd.f32 %v8751, 1e-05
      %v8768 = vadd.f32 %v8752, 1e-05
      %v8769 = vadd.f32 %v8753, 1e-05
      %v8770 = vadd.f32 %v8754, 1e-05
      %v8771 = vadd.f32 %v8755, 1e-05
      %v8772 = vadd.f32 %v8756, 1e-05
      %v8773 = vadd.f32 %v8757, 1e-05
      %v8774 = vadd.f32 %v8758, 1e-05
      %v8775 = vadd.f32 %v8759, 1e-05
      %v8776 = vadd.f32 %v8760, 1e-05
      %v8777 = vadd.f32 %v8761, 1e-05
      %v8778 = vadd.f32 %v8762, 1e-05
      %v8779 = vadd.f32 %v8763, 1e-05
      %v8780 = vrsqrt.pop %v8764
      %v8781 = vrsqrt.pop %v8765
      %v8782 = vrsqrt.pop %v8766
      %v8783 = vrsqrt.pop %v8767
      %v8784 = vrsqrt.pop %v8768
      %v8785 = vrsqrt.pop %v8769
      %v8786 = vrsqrt.pop %v8770
      %v8787 = vrsqrt.pop %v8771
      %v8788 = vrsqrt.pop %v8772
      %v8789 = vrsqrt.pop %v8773
      %v8790 = vrsqrt.pop %v8774
      %v8791 = vrsqrt.pop %v8775
      %v8792 = vrsqrt.pop %v8776
      %v8793 = vrsqrt.pop %v8777
      %v8794 = vrsqrt.pop %v8778
      %v8795 = vrsqrt.pop %v8779
      %v8796 = vmul.f32 %v8668, %v8780
      %v8797 = vmul.f32 %v8669, %v8781
      %v8798 = vmul.f32 %v8670, %v8782
      %v8799 = vmul.f32 %v8671, %v8783
      %v8800 = vmul.f32 %v8672, %v8784
      %v8801 = vmul.f32 %v8673, %v8785
      %v8802 = vmul.f32 %v8674, %v8786
      %v8803 = vmul.f32 %v8675, %v8787
      %v8804 = vmul.f32 %v8676, %v8788
      %v8805 = vmul.f32 %v8677, %v8789
      %v8806 = vmul.f32 %v8678, %v8790
      %v8807 = vmul.f32 %v8679, %v8791
      %v8808 = vmul.f32 %v8680, %v8792
      %v8809 = vmul.f32 %v8681, %v8793
      %v8810 = vmul.f32 %v8682, %v8794
      %v8811 = vmul.f32 %v8683, %v8795
      %v8813 = vlaneseq
      %v8814 = vshrl.u32 %v8813, 7
      %v8815 = vsub.s32 0, %v8814
      %v8816 = vrot.slane %v8601, %v8815
      %v8818 = vmul.f32 %v8796, %v8816
      %v8819 = vmul.f32 %v8797, %v8816
      %v8820 = vmul.f32 %v8798, %v8816
      %v8821 = vmul.f32 %v8799, %v8816
      %v8822 = vmul.f32 %v8800, %v8816
      %v8823 = vmul.f32 %v8801, %v8816
      %v8824 = vmul.f32 %v8802, %v8816
      %v8825 = vmul.f32 %v8803, %v8816
      %v8826 = vmul.f32 %v8804, %v8816
      %v8827 = vmul.f32 %v8805, %v8816
      %v8828 = vmul.f32 %v8806, %v8816
      %v8829 = vmul.f32 %v8807, %v8816
      %v8830 = vmul.f32 %v8808, %v8816
      %v8831 = vmul.f32 %v8809, %v8816
      %v8832 = vmul.f32 %v8810, %v8816
      %v8833 = vmul.f32 %v8811, %v8816
      %v8835 = vlaneseq
      %v8836 = vshrl.u32 %v8835, 7
      %v8837 = vsub.s32 0, %v8836
      %v8838 = vrot.slane %v8603, %v8837
      %v8840 = vadd.f32 %v8818, %v8838
      %v8841 = vadd.f32 %v8819, %v8838
      %v8842 = vadd.f32 %v8820, %v8838
      %v8843 = vadd.f32 %v8821, %v8838
      %v8844 = vadd.f32 %v8822, %v8838
      %v8845 = vadd.f32 %v8823, %v8838
      %v8846 = vadd.f32 %v8824, %v8838
      %v8847 = vadd.f32 %v8825, %v8838
      %v8848 = vadd.f32 %v8826, %v8838
      %v8849 = vadd.f32 %v8827, %v8838
      %v8850 = vadd.f32 %v8828, %v8838
      %v8851 = vadd.f32 %v8829, %v8838
      %v8852 = vadd.f32 %v8830, %v8838
      %v8853 = vadd.f32 %v8831, %v8838
      %v8854 = vadd.f32 %v8832, %v8838
      %v8855 = vadd.f32 %v8833, %v8838
      %v8856 = vpack.c.bf16 %v8841, %v8840
      %v8857 = vpack.c.bf16 %v8843, %v8842
      %v8858 = vpack.c.bf16 %v8845, %v8844
      %v8859 = vpack.c.bf16 %v8847, %v8846
      %v8860 = vpack.c.bf16 %v8849, %v8848
      %v8861 = vpack.c.bf16 %v8851, %v8850
      %v8862 = vpack.c.bf16 %v8853, %v8852
      %v8863 = vpack.c.bf16 %v8855, %v8854
      %s8864 = smul.addr %s8436, 4
      %s8865 = scalar_lea.vmem %s8, %s8864
      %v8866 = vld [vmem:[%s8865] sm:$0xf]
      %v8867 = vld [vmem:[%s8865 + $0x4] sm:$0xf]
      %v8868 = vld [vmem:[%s8865 + $0x8] sm:$0xf]
      %v8869 = vld [vmem:[%s8865 + $0xc] sm:$0xf]
      %s8870 = scalar_lea.vmem %s9, %s30
      %v8871 = vld [vmem:[%s8870] sm:$0x1]
      %v8873 = vlaneseq
      %v8874 = vshrl.u32 %v8873, 7
      %v8875 = vsub.s32 0, %v8874
      %v8876 = vrot.slane %v8871, %v8875
      %v8882 = vunpack.c.l.b16 %v8866
      %v8883 = vunpack.c.l.b16 %v8867
      %v8884 = vunpack.c.l.b16 %v8868
      %v8885 = vunpack.c.l.b16 %v8869
      %v8886 = vpack.c.b16 %v8883, %v8882
      %v8887 = vpack.c.b16 %v8885, %v8884
      %v8891 = vsel %vm541, %v8856, 0
      %v8894 = vsel %vm541, %v8857, 0
      %v8897 = vsel %vm541, %v8858, 0
      %v8900 = vsel %vm541, %v8859, 0
      %v8903 = vsel %vm541, %v8860, 0
      %v8906 = vsel %vm541, %v8861, 0
      %v8909 = vsel %vm541, %v8862, 0
      %v8912 = vsel %vm541, %v8863, 0
      %8914 = vmatprep.subr.bf16.mxu0 0
      %8915 = vmatpush1.bf16.msra.mxu0 %v8886
      %8916 = vmatprep.subr.bf16.mxu0 0
      %8917 = vmatpush1.bf16.msra.mxu0 %v8887
      %8918 = vmatprep.subr.bf16.mxu0 0
      %8919 = vmatpush1.bf16.msra.mxu0 0
      %8920 = vmatprep.subr.bf16.mxu0 0
      %8921 = vmatpush1.bf16.msra.mxu0 0
      %8922 = vmatprep.subr.bf16.mxu0 0
      %8923 = vmatpush1.bf16.msra.mxu0 0
      %8924 = vmatprep.subr.bf16.mxu0 0
      %8925 = vmatpush1.bf16.msra.mxu0 0
      %8926 = vmatprep.subr.bf16.mxu0 0
      %8927 = vmatpush1.bf16.msra.mxu0 0
      %8928 = vmatprep.subr.bf16.mxu0 0
      %8929 = vmatpush1.bf16.msra.mxu0 0
      %8930 = vmatprep.subr.bf16.mxu0 0
      %8931 = vmatpush1.bf16.msra.mxu0 0
      %8932 = vmatprep.subr.bf16.mxu0 0
      %8933 = vmatpush1.bf16.msra.mxu0 0
      %8934 = vmatprep.subr.bf16.mxu0 0
      %8935 = vmatpush1.bf16.msra.mxu0 0
      %8936 = vmatprep.subr.bf16.mxu0 0
      %8937 = vmatpush1.bf16.msra.mxu0 0
      %8938 = vmatprep.subr.bf16.mxu0 0
      %8939 = vmatpush1.bf16.msra.mxu0 0
      %8940 = vmatprep.subr.bf16.mxu0 0
      %8941 = vmatpush1.bf16.msra.mxu0 0
      %8942 = vmatprep.subr.bf16.mxu0 0
      %8943 = vmatpush1.bf16.msra.mxu0 0
      %8944 = vmatprep.subr.bf16.mxu0 0
      %8945 = vmatpush1.bf16.msra.mxu0 0
      %8946 = vmatprep.mubr.bf16.mxu0 0
      %8947 = vmatmul.mubr.bf16.gmra.mrb[0].mxu0 %v8891
      %v8948 = vpop.f32.mrb[0].mxu0
      %v8949 = vadd.f32 %v8876, %v8948
      %v8950 = vpop.f32.mrb[0].mxu0
      %v8951 = vpop.f32.mrb[0].mxu0
      %v8952 = vadd.f32 %v8876, %v8951
      %v8953 = vpop.f32.mrb[0].mxu0
      %8954 = vmatprep.mubr.bf16.mxu0 0
      %8955 = vmatmul.mubr.bf16.gmra.mrb[0].mxu0 %v8894
      %v8956 = vpop.f32.mrb[0].mxu0
      %v8957 = vadd.f32 %v8876, %v8956
      %v8958 = vpop.f32.mrb[0].mxu0
      %v8959 = vpop.f32.mrb[0].mxu0
      %v8960 = vadd.f32 %v8876, %v8959
      %v8961 = vpop.f32.mrb[0].mxu0
      %8962 = vmatprep.mubr.bf16.mxu0 0
      %8963 = vmatmul.mubr.bf16.gmra.mrb[0].mxu0 %v8897
      %v8964 = vpop.f32.mrb[0].mxu0
      %v8965 = vadd.f32 %v8876, %v8964
      %v8966 = vpop.f32.mrb[0].mxu0
      %v8967 = vpop.f32.mrb[0].mxu0
      %v8968 = vadd.f32 %v8876, %v8967
      %v8969 = vpop.f32.mrb[0].mxu0
      %8970 = vmatprep.mubr.bf16.mxu0 0
      %8971 = vmatmul.mubr.bf16.gmra.mrb[0].mxu0 %v8900
      %v8972 = vpop.f32.mrb[0].mxu0
      %v8973 = vadd.f32 %v8876, %v8972
      %v8974 = vpop.f32.mrb[0].mxu0
      %v8975 = vpop.f32.mrb[0].mxu0
      %v8976 = vadd.f32 %v8876, %v8975
      %v8977 = vpop.f32.mrb[0].mxu0
      %8978 = vmatprep.mubr.bf16.mxu0 0
      %8979 = vmatmul.mubr.bf16.gmra.mrb[0].mxu0 %v8903
      %v8980 = vpop.f32.mrb[0].mxu0
      %v8981 = vadd.f32 %v8876, %v8980
      %v8982 = vpop.f32.mrb[0].mxu0
      %v8983 = vpop.f32.mrb[0].mxu0
      %v8984 = vadd.f32 %v8876, %v8983
      %v8985 = vpop.f32.mrb[0].mxu0
      %8986 = vmatprep.mubr.bf16.mxu0 0
      %8987 = vmatmul.mubr.bf16.gmra.mrb[0].mxu0 %v8906
      %v8988 = vpop.f32.mrb[0].mxu0
      %v8989 = vadd.f32 %v8876, %v8988
      %v8990 = vpop.f32.mrb[0].mxu0
      %v8991 = vpop.f32.mrb[0].mxu0
      %v8992 = vadd.f32 %v8876, %v8991
      %v8993 = vpop.f32.mrb[0].mxu0
      %8994 = vmatprep.mubr.bf16.mxu0 0
      %8995 = vmatmul.mubr.bf16.gmra.mrb[0].mxu0 %v8909
      %v8996 = vpop.f32.mrb[0].mxu0
      %v8997 = vadd.f32 %v8876, %v8996
      %v8998 = vpop.f32.mrb[0].mxu0
      %v8999 = vpop.f32.mrb[0].mxu0
      %v9000 = vadd.f32 %v8876, %v8999
      %v9001 = vpop.f32.mrb[0].mxu0
      %9002 = vmatprep.mubr.bf16.mxu0 0
      %9003 = vmatmul.mubr.bf16.gmra.mrb[0].mxu0 %v8912
      %v9004 = vpop.f32.mrb[0].mxu0
      %v9005 = vadd.f32 %v8876, %v9004
      %v9006 = vpop.f32.mrb[0].mxu0
      %v9007 = vpop.f32.mrb[0].mxu0
      %v9008 = vadd.f32 %v8876, %v9007
      %v9009 = vpop.f32.mrb[0].mxu0
      %9010 = vdwg.mxu0
      %v9011 = vmul.f32 %v8949, %v8949
      %v9012 = vmul.f32 %v8952, %v8952
      %v9013 = vmul.f32 %v8957, %v8957
      %v9014 = vmul.f32 %v8960, %v8960
      %v9015 = vmul.f32 %v8965, %v8965
      %v9016 = vmul.f32 %v8968, %v8968
      %v9017 = vmul.f32 %v8973, %v8973
      %v9018 = vmul.f32 %v8976, %v8976
      %v9019 = vmul.f32 %v8981, %v8981
      %v9020 = vmul.f32 %v8984, %v8984
      %v9021 = vmul.f32 %v8989, %v8989
      %v9022 = vmul.f32 %v8992, %v8992
      %v9023 = vmul.f32 %v8997, %v8997
      %v9024 = vmul.f32 %v9000, %v9000
      %v9025 = vmul.f32 %v9005, %v9005
      %v9026 = vmul.f32 %v9008, %v9008
      %v9027 = vmul.f32 %v8949, %v9011
      %v9028 = vmul.f32 %v8952, %v9012
      %v9029 = vmul.f32 %v8957, %v9013
      %v9030 = vmul.f32 %v8960, %v9014
      %v9031 = vmul.f32 %v8965, %v9015
      %v9032 = vmul.f32 %v8968, %v9016
      %v9033 = vmul.f32 %v8973, %v9017
      %v9034 = vmul.f32 %v8976, %v9018
      %v9035 = vmul.f32 %v8981, %v9019
      %v9036 = vmul.f32 %v8984, %v9020
      %v9037 = vmul.f32 %v8989, %v9021
      %v9038 = vmul.f32 %v8992, %v9022
      %v9039 = vmul.f32 %v8997, %v9023
      %v9040 = vmul.f32 %v9000, %v9024
      %v9041 = vmul.f32 %v9005, %v9025
      %v9042 = vmul.f32 %v9008, %v9026
      %v9043 = vmul.f32 %v9027, 0.044715
      %v9044 = vmul.f32 %v9028, 0.044715
      %v9045 = vmul.f32 %v9029, 0.044715
      %v9046 = vmul.f32 %v9030, 0.044715
      %v9047 = vmul.f32 %v9031, 0.044715
      %v9048 = vmul.f32 %v9032, 0.044715
      %v9049 = vmul.f32 %v9033, 0.044715
      %v9050 = vmul.f32 %v9034, 0.044715
      %v9051 = vmul.f32 %v9035, 0.044715
      %v9052 = vmul.f32 %v9036, 0.044715
      %v9053 = vmul.f32 %v9037, 0.044715
      %v9054 = vmul.f32 %v9038, 0.044715
      %v9055 = vmul.f32 %v9039, 0.044715
      %v9056 = vmul.f32 %v9040, 0.044715
      %v9057 = vmul.f32 %v9041, 0.044715
      %v9058 = vmul.f32 %v9042, 0.044715
      %v9059 = vadd.f32 %v8949, %v9043
      %v9060 = vadd.f32 %v8952, %v9044
      %v9061 = vadd.f32 %v8957, %v9045
      %v9062 = vadd.f32 %v8960, %v9046
      %v9063 = vadd.f32 %v8965, %v9047
      %v9064 = vadd.f32 %v8968, %v9048
      %v9065 = vadd.f32 %v8973, %v9049
      %v9066 = vadd.f32 %v8976, %v9050
      %v9067 = vadd.f32 %v8981, %v9051
      %v9068 = vadd.f32 %v8984, %v9052
      %v9069 = vadd.f32 %v8989, %v9053
      %v9070 = vadd.f32 %v8992, %v9054
      %v9071 = vadd.f32 %v8997, %v9055
      %v9072 = vadd.f32 %v9000, %v9056
      %v9073 = vadd.f32 %v9005, %v9057
      %v9074 = vadd.f32 %v9008, %v9058
      %v9075 = vmul.f32 %v9059, 0.7978846
      %v9076 = vmul.f32 %v9060, 0.7978846
      %v9077 = vmul.f32 %v9061, 0.7978846
      %v9078 = vmul.f32 %v9062, 0.7978846
      %v9079 = vmul.f32 %v9063, 0.7978846
      %v9080 = vmul.f32 %v9064, 0.7978846
      %v9081 = vmul.f32 %v9065, 0.7978846
      %v9082 = vmul.f32 %v9066, 0.7978846
      %v9083 = vmul.f32 %v9067, 0.7978846
      %v9084 = vmul.f32 %v9068, 0.7978846
      %v9085 = vmul.f32 %v9069, 0.7978846
      %v9086 = vmul.f32 %v9070, 0.7978846
      %v9087 = vmul.f32 %v9071, 0.7978846
      %v9088 = vmul.f32 %v9072, 0.7978846
      %v9089 = vmul.f32 %v9073, 0.7978846
      %v9090 = vmul.f32 %v9074, 0.7978846
      %v9091 = vtanh.pop %v9075
      %v9092 = vtanh.pop %v9076
      %v9093 = vtanh.pop %v9077
      %v9094 = vtanh.pop %v9078
      %v9095 = vtanh.pop %v9079
      %v9096 = vtanh.pop %v9080
      %v9097 = vtanh.pop %v9081
      %v9098 = vtanh.pop %v9082
      %v9099 = vtanh.pop %v9083
      %v9100 = vtanh.pop %v9084
      %v9101 = vtanh.pop %v9085
      %v9102 = vtanh.pop %v9086
      %v9103 = vtanh.pop %v9087
      %v9104 = vtanh.pop %v9088
      %v9105 = vtanh.pop %v9089
      %v9106 = vtanh.pop %v9090
      %v9107 = vadd.f32 %v9091, 1.0
      %v9108 = vadd.f32 %v9092, 1.0
      %v9109 = vadd.f32 %v9093, 1.0
      %v9110 = vadd.f32 %v9094, 1.0
      %v9111 = vadd.f32 %v9095, 1.0
      %v9112 = vadd.f32 %v9096, 1.0
      %v9113 = vadd.f32 %v9097, 1.0
      %v9114 = vadd.f32 %v9098, 1.0
      %v9115 = vadd.f32 %v9099, 1.0
      %v9116 = vadd.f32 %v9100, 1.0
      %v9117 = vadd.f32 %v9101, 1.0
      %v9118 = vadd.f32 %v9102, 1.0
      %v9119 = vadd.f32 %v9103, 1.0
      %v9120 = vadd.f32 %v9104, 1.0
      %v9121 = vadd.f32 %v9105, 1.0
      %v9122 = vadd.f32 %v9106, 1.0
      %v9123 = vmul.f32 %v9107, 0.5
      %v9124 = vmul.f32 %v9108, 0.5
      %v9125 = vmul.f32 %v9109, 0.5
      %v9126 = vmul.f32 %v9110, 0.5
      %v9127 = vmul.f32 %v9111, 0.5
      %v9128 = vmul.f32 %v9112, 0.5
      %v9129 = vmul.f32 %v9113, 0.5
      %v9130 = vmul.f32 %v9114, 0.5
      %v9131 = vmul.f32 %v9115, 0.5
      %v9132 = vmul.f32 %v9116, 0.5
      %v9133 = vmul.f32 %v9117, 0.5
      %v9134 = vmul.f32 %v9118, 0.5
      %v9135 = vmul.f32 %v9119, 0.5
      %v9136 = vmul.f32 %v9120, 0.5
      %v9137 = vmul.f32 %v9121, 0.5
      %v9138 = vmul.f32 %v9122, 0.5
      %v9139 = vmul.f32 %v8949, %v9123
      %v9140 = vmul.f32 %v8952, %v9124
      %v9141 = vmul.f32 %v8957, %v9125
      %v9142 = vmul.f32 %v8960, %v9126
      %v9143 = vmul.f32 %v8965, %v9127
      %v9144 = vmul.f32 %v8968, %v9128
      %v9145 = vmul.f32 %v8973, %v9129
      %v9146 = vmul.f32 %v8976, %v9130
      %v9147 = vmul.f32 %v8981, %v9131
      %v9148 = vmul.f32 %v8984, %v9132
      %v9149 = vmul.f32 %v8989, %v9133
      %v9150 = vmul.f32 %v8992, %v9134
      %v9151 = vmul.f32 %v8997, %v9135
      %v9152 = vmul.f32 %v9000, %v9136
      %v9153 = vmul.f32 %v9005, %v9137
      %v9154 = vmul.f32 %v9008, %v9138
      %v9155 = vpack.c.bf16 %v9140, %v9139
      %v9156 = vpack.c.bf16 %v9142, %v9141
      %v9157 = vpack.c.bf16 %v9144, %v9143
      %v9158 = vpack.c.bf16 %v9146, %v9145
      %v9159 = vpack.c.bf16 %v9148, %v9147
      %v9160 = vpack.c.bf16 %v9150, %v9149
      %v9161 = vpack.c.bf16 %v9152, %v9151
      %v9162 = vpack.c.bf16 %v9154, %v9153
      %s9163 = smul.u32 %s30, 8
      %s9164 = smul.addr %s9163, 4
      %s9165 = scalar_lea.vmem %s10, %s9164
      %v9166 = vld [vmem:[%s9165] sm:$0xf]
      %v9167 = vld [vmem:[%s9165 + $0x4] sm:$0xf]
      %v9168 = vld [vmem:[%s9165 + $0x8] sm:$0xf]
      %v9169 = vld [vmem:[%s9165 + $0xc] sm:$0xf]
      %v9170 = vld [vmem:[%s9165 + $0x10] sm:$0xf]
      %v9171 = vld [vmem:[%s9165 + $0x14] sm:$0xf]
      %v9172 = vld [vmem:[%s9165 + $0x18] sm:$0xf]
      %v9173 = vld [vmem:[%s9165 + $0x1c] sm:$0xf]
      %v9182 = vunpack.c.l.b16 %v9166
      %v9183 = vunpack.c.l.b16 %v9167
      %v9184 = vunpack.c.l.b16 %v9168
      %v9185 = vunpack.c.l.b16 %v9169
      %v9186 = vunpack.c.l.b16 %v9170
      %v9187 = vunpack.c.l.b16 %v9171
      %v9188 = vunpack.c.l.b16 %v9172
      %v9189 = vunpack.c.l.b16 %v9173
      %v9190 = vpack.c.b16 %v9183, %v9182
      %v9191 = vpack.c.b16 %v9185, %v9184
      %v9192 = vpack.c.b16 %v9187, %v9186
      %v9193 = vpack.c.b16 %v9189, %v9188
      %vm9198 = vcmask 523264
      %v9200 = vsel %vm9198, %v9155, 0
      %v9203 = vsel %vm9198, %v9156, 0
      %v9206 = vsel %vm9198, %v9157, 0
      %v9209 = vsel %vm9198, %v9158, 0
      %v9212 = vsel %vm9198, %v9159, 0
      %v9215 = vsel %vm9198, %v9160, 0
      %v9218 = vsel %vm9198, %v9161, 0
      %v9221 = vsel %vm9198, %v9162, 0
      %9223 = vmatprep.subr.bf16.mxu0 0
      %9224 = vmatpush1.bf16.msra.mxu0 %v9190
      %9225 = vmatprep.subr.bf16.mxu0 0
      %9226 = vmatpush1.bf16.msra.mxu0 %v9191
      %9227 = vmatprep.subr.bf16.mxu0 0
      %9228 = vmatpush1.bf16.msra.mxu0 %v9192
      %9229 = vmatprep.subr.bf16.mxu0 0
      %9230 = vmatpush1.bf16.msra.mxu0 %v9193
      %9231 = vmatprep.subr.bf16.mxu0 0
      %9232 = vmatpush1.bf16.msra.mxu0 0
      %9233 = vmatprep.subr.bf16.mxu0 0
      %9234 = vmatpush1.bf16.msra.mxu0 0
      %9235 = vmatprep.subr.bf16.mxu0 0
      %9236 = vmatpush1.bf16.msra.mxu0 0
      %9237 = vmatprep.subr.bf16.mxu0 0
      %9238 = vmatpush1.bf16.msra.mxu0 0
      %9239 = vmatprep.subr.bf16.mxu0 0
      %9240 = vmatpush1.bf16.msra.mxu0 0
      %9241 = vmatprep.subr.bf16.mxu0 0
      %9242 = vmatpush1.bf16.msra.mxu0 0
      %9243 = vmatprep.subr.bf16.mxu0 0
      %9244 = vmatpush1.bf16.msra.mxu0 0
      %9245 = vmatprep.subr.bf16.mxu0 0
      %9246 = vmatpush1.bf16.msra.mxu0 0
      %9247 = vmatprep.subr.bf16.mxu0 0
      %9248 = vmatpush1.bf16.msra.mxu0 0
      %9249 = vmatprep.subr.bf16.mxu0 0
      %9250 = vmatpush1.bf16.msra.mxu0 0
      %9251 = vmatprep.subr.bf16.mxu0 0
      %9252 = vmatpush1.bf16.msra.mxu0 0
      %9253 = vmatprep.subr.bf16.mxu0 0
      %9254 = vmatpush1.bf16.msra.mxu0 0
      %9255 = vmatprep.mubr.bf16.mxu0 0
      %9256 = vmatmul.mubr.bf16.gmra.mrb[0].mxu0 %v9200
      %v9257 = vpop.f32.mrb[0].mxu0
      %v9258 = vadd.f32 0.0, %v9257
      %v9259 = vpop.f32.mrb[0].mxu0
      %v9260 = vpop.f32.mrb[0].mxu0
      %v9261 = vadd.f32 0.0, %v9260
      %v9262 = vpop.f32.mrb[0].mxu0
      %9263 = vmatprep.mubr.bf16.mxu0 0
      %9264 = vmatmul.mubr.bf16.gmra.mrb[0].mxu0 %v9203
      %v9265 = vpop.f32.mrb[0].mxu0
      %v9266 = vadd.f32 0.0, %v9265
      %v9267 = vpop.f32.mrb[0].mxu0
      %v9268 = vpop.f32.mrb[0].mxu0
      %v9269 = vadd.f32 0.0, %v9268
      %v9270 = vpop.f32.mrb[0].mxu0
      %9271 = vmatprep.mubr.bf16.mxu0 0
      %9272 = vmatmul.mubr.bf16.gmra.mrb[0].mxu0 %v9206
      %v9273 = vpop.f32.mrb[0].mxu0
      %v9274 = vadd.f32 0.0, %v9273
      %v9275 = vpop.f32.mrb[0].mxu0
      %v9276 = vpop.f32.mrb[0].mxu0
      %v9277 = vadd.f32 0.0, %v9276
      %v9278 = vpop.f32.mrb[0].mxu0
      %9279 = vmatprep.mubr.bf16.mxu0 0
      %9280 = vmatmul.mubr.bf16.gmra.mrb[0].mxu0 %v9209
      %v9281 = vpop.f32.mrb[0].mxu0
      %v9282 = vadd.f32 0.0, %v9281
      %v9283 = vpop.f32.mrb[0].mxu0
      %v9284 = vpop.f32.mrb[0].mxu0
      %v9285 = vadd.f32 0.0, %v9284
      %v9286 = vpop.f32.mrb[0].mxu0
      %9287 = vmatprep.mubr.bf16.mxu0 0
      %9288 = vmatmul.mubr.bf16.gmra.mrb[0].mxu0 %v9212
      %v9289 = vpop.f32.mrb[0].mxu0
      %v9290 = vadd.f32 0.0, %v9289
      %v9291 = vpop.f32.mrb[0].mxu0
      %v9292 = vpop.f32.mrb[0].mxu0
      %v9293 = vadd.f32 0.0, %v9292
      %v9294 = vpop.f32.mrb[0].mxu0
      %9295 = vmatprep.mubr.bf16.mxu0 0
      %9296 = vmatmul.mubr.bf16.gmra.mrb[0].mxu0 %v9215
      %v9297 = vpop.f32.mrb[0].mxu0
      %v9298 = vadd.f32 0.0, %v9297
      %v9299 = vpop.f32.mrb[0].mxu0
      %v9300 = vpop.f32.mrb[0].mxu0
      %v9301 = vadd.f32 0.0, %v9300
      %v9302 = vpop.f32.mrb[0].mxu0
      %9303 = vmatprep.mubr.bf16.mxu0 0
      %9304 = vmatmul.mubr.bf16.gmra.mrb[0].mxu0 %v9218
      %v9305 = vpop.f32.mrb[0].mxu0
      %v9306 = vadd.f32 0.0, %v9305
      %v9307 = vpop.f32.mrb[0].mxu0
      %v9308 = vpop.f32.mrb[0].mxu0
      %v9309 = vadd.f32 0.0, %v9308
      %v9310 = vpop.f32.mrb[0].mxu0
      %9311 = vmatprep.mubr.bf16.mxu0 0
      %9312 = vmatmul.mubr.bf16.gmra.mrb[0].mxu0 %v9221
      %v9313 = vpop.f32.mrb[0].mxu0
      %v9314 = vadd.f32 0.0, %v9313
      %v9315 = vpop.f32.mrb[0].mxu0
      %v9316 = vpop.f32.mrb[0].mxu0
      %v9317 = vadd.f32 0.0, %v9316
      %v9318 = vpop.f32.mrb[0].mxu0
      %9319 = vdwg.mxu0
      %v9320 = vadd.f32 %v8584, %v9258
      %v9321 = vadd.f32 %v8585, %v9261
      %v9322 = vadd.f32 %v8586, %v9266
      %v9323 = vadd.f32 %v8587, %v9269
      %v9324 = vadd.f32 %v8588, %v9274
      %v9325 = vadd.f32 %v8589, %v9277
      %v9326 = vadd.f32 %v8590, %v9282
      %v9327 = vadd.f32 %v8591, %v9285
      %v9328 = vadd.f32 %v8592, %v9290
      %v9329 = vadd.f32 %v8593, %v9293
      %v9330 = vadd.f32 %v8594, %v9298
      %v9331 = vadd.f32 %v8595, %v9301
      %v9332 = vadd.f32 %v8596, %v9306
      %v9333 = vadd.f32 %v8597, %v9309
      %v9334 = vadd.f32 %v8598, %v9314
      %v9335 = vadd.f32 %v8599, %v9317
      %s9336 = scalar_lea.vmem %s11, %s30
      %v9337 = vld [vmem:[%s9336] sm:$0x1]
      %v9339 = vlaneseq
      %v9340 = vshrl.u32 %v9339, 7
      %v9341 = vsub.s32 0, %v9340
      %v9342 = vrot.slane %v9337, %v9341
      %v9344 = vadd.f32 %v9320, %v9342
      %v9345 = vadd.f32 %v9321, %v9342
      %v9346 = vadd.f32 %v9322, %v9342
      %v9347 = vadd.f32 %v9323, %v9342
      %v9348 = vadd.f32 %v9324, %v9342
      %v9349 = vadd.f32 %v9325, %v9342
      %v9350 = vadd.f32 %v9326, %v9342
      %v9351 = vadd.f32 %v9327, %v9342
      %v9352 = vadd.f32 %v9328, %v9342
      %v9353 = vadd.f32 %v9329, %v9342
      %v9354 = vadd.f32 %v9330, %v9342
      %v9355 = vadd.f32 %v9331, %v9342
      %v9356 = vadd.f32 %v9332, %v9342
      %v9357 = vadd.f32 %v9333, %v9342
      %v9358 = vadd.f32 %v9334, %v9342
      %v9359 = vadd.f32 %v9335, %v9342
      %9360 = vst.msk [vmem:[#allocation2] sm:$0xff] %vm541, %v9344
      %9361 = vst.msk [vmem:[#allocation2 + $0x8] sm:$0xff] %vm541, %v9345
      %9362 = vst.msk [vmem:[#allocation2 + $0x10] sm:$0xff] %vm541, %v9346
      %9363 = vst.msk [vmem:[#allocation2 + $0x18] sm:$0xff] %vm541, %v9347
      %9364 = vst.msk [vmem:[#allocation2 + $0x20] sm:$0xff] %vm541, %v9348
      %9365 = vst.msk [vmem:[#allocation2 + $0x28] sm:$0xff] %vm541, %v9349
      %9366 = vst.msk [vmem:[#allocation2 + $0x30] sm:$0xff] %vm541, %v9350
      %9367 = vst.msk [vmem:[#allocation2 + $0x38] sm:$0xff] %vm541, %v9351
      %9368 = vst.msk [vmem:[#allocation2 + $0x40] sm:$0xff] %vm541, %v9352
      %9369 = vst.msk [vmem:[#allocation2 + $0x48] sm:$0xff] %vm541, %v9353
      %9370 = vst.msk [vmem:[#allocation2 + $0x50] sm:$0xff] %vm541, %v9354
      %9371 = vst.msk [vmem:[#allocation2 + $0x58] sm:$0xff] %vm541, %v9355
      %9372 = vst.msk [vmem:[#allocation2 + $0x60] sm:$0xff] %vm541, %v9356
      %9373 = vst.msk [vmem:[#allocation2 + $0x68] sm:$0xff] %vm541, %v9357
      %9374 = vst.msk [vmem:[#allocation2 + $0x70] sm:$0xff] %vm541, %v9358
      %9375 = vst.msk [vmem:[#allocation2 + $0x78] sm:$0xff] %vm541, %v9359
      %p9376 = scmp.eq.s32.totalorder %s30, 1
      // Predicated region
      $region81: #{tpu_custom_call.1} parent=75 // pred_check
        %p9377 = pneg %p9376
      $region82: #{tpu_custom_call.1} parent=75 // pred_check_branch
        %9379 = sbr.rel (%p9377) target = $region84
      $region83: #{tpu_custom_call.1} parent=75 // pred_region
        %v9380 = vld [vmem:[%s12] sm:$0x1]
        %v9381 = vld [vmem:[%s13] sm:$0x1]
        %v9382 = vsel %vm541, %v9344, 0.0
        %9383 = vadd.xlane.f32.xlu0 %v9382
        %v9384 = vpop.xlane.xlu0 %9383
        %v9385 = vsel %vm541, %v9345, 0.0
        %9386 = vadd.xlane.f32.xlu0 %v9385
        %v9387 = vpop.xlane.xlu0 %9386
        %v9388 = vsel %vm541, %v9346, 0.0
        %9389 = vadd.xlane.f32.xlu0 %v9388
        %v9390 = vpop.xlane.xlu0 %9389
        %v9391 = vsel %vm541, %v9347, 0.0
        %9392 = vadd.xlane.f32.xlu0 %v9391
        %v9393 = vpop.xlane.xlu0 %9392
        %v9394 = vsel %vm541, %v9348, 0.0
        %9395 = vadd.xlane.f32.xlu0 %v9394
        %v9396 = vpop.xlane.xlu0 %9395
        %v9397 = vsel %vm541, %v9349, 0.0
        %9398 = vadd.xlane.f32.xlu0 %v9397
        %v9399 = vpop.xlane.xlu0 %9398
        %v9400 = vsel %vm541, %v9350, 0.0
        %9401 = vadd.xlane.f32.xlu0 %v9400
        %v9402 = vpop.xlane.xlu0 %9401
        %v9403 = vsel %vm541, %v9351, 0.0
        %9404 = vadd.xlane.f32.xlu0 %v9403
        %v9405 = vpop.xlane.xlu0 %9404
        %v9406 = vsel %vm541, %v9352, 0.0
        %9407 = vadd.xlane.f32.xlu0 %v9406
        %v9408 = vpop.xlane.xlu0 %9407
        %v9409 = vsel %vm541, %v9353, 0.0
        %9410 = vadd.xlane.f32.xlu0 %v9409
        %v9411 = vpop.xlane.xlu0 %9410
        %v9412 = vsel %vm541, %v9354, 0.0
        %9413 = vadd.xlane.f32.xlu0 %v9412
        %v9414 = vpop.xlane.xlu0 %9413
        %v9415 = vsel %vm541, %v9355, 0.0
        %9416 = vadd.xlane.f32.xlu0 %v9415
        %v9417 = vpop.xlane.xlu0 %9416
        %v9418 = vsel %vm541, %v9356, 0.0
        %9419 = vadd.xlane.f32.xlu0 %v9418
        %v9420 = vpop.xlane.xlu0 %9419
        %v9421 = vsel %vm541, %v9357, 0.0
        %9422 = vadd.xlane.f32.xlu0 %v9421
        %v9423 = vpop.xlane.xlu0 %9422
        %v9424 = vsel %vm541, %v9358, 0.0
        %9425 = vadd.xlane.f32.xlu0 %v9424
        %v9426 = vpop.xlane.xlu0 %9425
        %v9427 = vsel %vm541, %v9359, 0.0
        %9428 = vadd.xlane.f32.xlu0 %v9427
        %v9429 = vpop.xlane.xlu0 %9428
        %v9430 = vmul.f32 %v9384, %v590
        %v9431 = vmul.f32 %v9387, %v590
        %v9432 = vmul.f32 %v9390, %v590
        %v9433 = vmul.f32 %v9393, %v590
        %v9434 = vmul.f32 %v9396, %v590
        %v9435 = vmul.f32 %v9399, %v590
        %v9436 = vmul.f32 %v9402, %v590
        %v9437 = vmul.f32 %v9405, %v590
        %v9438 = vmul.f32 %v9408, %v590
        %v9439 = vmul.f32 %v9411, %v590
        %v9440 = vmul.f32 %v9414, %v590
        %v9441 = vmul.f32 %v9417, %v590
        %v9442 = vmul.f32 %v9420, %v590
        %v9443 = vmul.f32 %v9423, %v590
        %v9444 = vmul.f32 %v9426, %v590
        %v9445 = vmul.f32 %v9429, %v590
        %v9446 = vsub.f32 %v9344, %v9430
        %v9447 = vsub.f32 %v9345, %v9431
        %v9448 = vsub.f32 %v9346, %v9432
        %v9449 = vsub.f32 %v9347, %v9433
        %v9450 = vsub.f32 %v9348, %v9434
        %v9451 = vsub.f32 %v9349, %v9435
        %v9452 = vsub.f32 %v9350, %v9436
        %v9453 = vsub.f32 %v9351, %v9437
        %v9454 = vsub.f32 %v9352, %v9438
        %v9455 = vsub.f32 %v9353, %v9439
        %v9456 = vsub.f32 %v9354, %v9440
        %v9457 = vsub.f32 %v9355, %v9441
        %v9458 = vsub.f32 %v9356, %v9442
        %v9459 = vsub.f32 %v9357, %v9443
        %v9460 = vsub.f32 %v9358, %v9444
        %v9461 = vsub.f32 %v9359, %v9445
        %v9462 = vmul.f32 %v9446, %v9446
        %v9463 = vmul.f32 %v9447, %v9447
        %v9464 = vmul.f32 %v9448, %v9448
        %v9465 = vmul.f32 %v9449, %v9449
        %v9466 = vmul.f32 %v9450, %v9450
        %v9467 = vmul.f32 %v9451, %v9451
        %v9468 = vmul.f32 %v9452, %v9452
        %v9469 = vmul.f32 %v9453, %v9453
        %v9470 = vmul.f32 %v9454, %v9454
        %v9471 = vmul.f32 %v9455, %v9455
        %v9472 = vmul.f32 %v9456, %v9456
        %v9473 = vmul.f32 %v9457, %v9457
        %v9474 = vmul.f32 %v9458, %v9458
        %v9475 = vmul.f32 %v9459, %v9459
        %v9476 = vmul.f32 %v9460, %v9460
        %v9477 = vmul.f32 %v9461, %v9461
        %v9478 = vsel %vm541, %v9462, 0.0
        %9479 = vadd.xlane.f32.xlu0 %v9478
        %v9480 = vpop.xlane.xlu0 %9479
        %v9481 = vsel %vm541, %v9463, 0.0
        %9482 = vadd.xlane.f32.xlu0 %v9481
        %v9483 = vpop.xlane.xlu0 %9482
        %v9484 = vsel %vm541, %v9464, 0.0
        %9485 = vadd.xlane.f32.xlu0 %v9484
        %v9486 = vpop.xlane.xlu0 %9485
        %v9487 = vsel %vm541, %v9465, 0.0
        %9488 = vadd.xlane.f32.xlu0 %v9487
        %v9489 = vpop.xlane.xlu0 %9488
        %v9490 = vsel %vm541, %v9466, 0.0
        %9491 = vadd.xlane.f32.xlu0 %v9490
        %v9492 = vpop.xlane.xlu0 %9491
        %v9493 = vsel %vm541, %v9467, 0.0
        %9494 = vadd.xlane.f32.xlu0 %v9493
        %v9495 = vpop.xlane.xlu0 %9494
        %v9496 = vsel %vm541, %v9468, 0.0
        %9497 = vadd.xlane.f32.xlu0 %v9496
        %v9498 = vpop.xlane.xlu0 %9497
        %v9499 = vsel %vm541, %v9469, 0.0
        %9500 = vadd.xlane.f32.xlu0 %v9499
        %v9501 = vpop.xlane.xlu0 %9500
        %v9502 = vsel %vm541, %v9470, 0.0
        %9503 = vadd.xlane.f32.xlu0 %v9502
        %v9504 = vpop.xlane.xlu0 %9503
        %v9505 = vsel %vm541, %v9471, 0.0
        %9506 = vadd.xlane.f32.xlu0 %v9505
        %v9507 = vpop.xlane.xlu0 %9506
        %v9508 = vsel %vm541, %v9472, 0.0
        %9509 = vadd.xlane.f32.xlu0 %v9508
        %v9510 = vpop.xlane.xlu0 %9509
        %v9511 = vsel %vm541, %v9473, 0.0
        %9512 = vadd.xlane.f32.xlu0 %v9511
        %v9513 = vpop.xlane.xlu0 %9512
        %v9514 = vsel %vm541, %v9474, 0.0
        %9515 = vadd.xlane.f32.xlu0 %v9514
        %v9516 = vpop.xlane.xlu0 %9515
        %v9517 = vsel %vm541, %v9475, 0.0
        %9518 = vadd.xlane.f32.xlu0 %v9517
        %v9519 = vpop.xlane.xlu0 %9518
        %v9520 = vsel %vm541, %v9476, 0.0
        %9521 = vadd.xlane.f32.xlu0 %v9520
        %v9522 = vpop.xlane.xlu0 %9521
        %v9523 = vsel %vm541, %v9477, 0.0
        %9524 = vadd.xlane.f32.xlu0 %v9523
        %v9525 = vpop.xlane.xlu0 %9524
        %v9526 = vmul.f32 %v9480, %v590
        %v9527 = vmul.f32 %v9483, %v590
        %v9528 = vmul.f32 %v9486, %v590
        %v9529 = vmul.f32 %v9489, %v590
        %v9530 = vmul.f32 %v9492, %v590
        %v9531 = vmul.f32 %v9495, %v590
        %v9532 = vmul.f32 %v9498, %v590
        %v9533 = vmul.f32 %v9501, %v590
        %v9534 = vmul.f32 %v9504, %v590
        %v9535 = vmul.f32 %v9507, %v590
        %v9536 = vmul.f32 %v9510, %v590
        %v9537 = vmul.f32 %v9513, %v590
        %v9538 = vmul.f32 %v9516, %v590
        %v9539 = vmul.f32 %v9519, %v590
        %v9540 = vmul.f32 %v9522, %v590
        %v9541 = vmul.f32 %v9525, %v590
        %v9542 = vadd.f32 %v9526, 1e-05
        %v9543 = vadd.f32 %v9527, 1e-05
        %v9544 = vadd.f32 %v9528, 1e-05
        %v9545 = vadd.f32 %v9529, 1e-05
        %v9546 = vadd.f32 %v9530, 1e-05
        %v9547 = vadd.f32 %v9531, 1e-05
        %v9548 = vadd.f32 %v9532, 1e-05
        %v9549 = vadd.f32 %v9533, 1e-05
        %v9550 = vadd.f32 %v9534, 1e-05
        %v9551 = vadd.f32 %v9535, 1e-05
        %v9552 = vadd.f32 %v9536, 1e-05
        %v9553 = vadd.f32 %v9537, 1e-05
        %v9554 = vadd.f32 %v9538, 1e-05
        %v9555 = vadd.f32 %v9539, 1e-05
        %v9556 = vadd.f32 %v9540, 1e-05
        %v9557 = vadd.f32 %v9541, 1e-05
        %v9558 = vrsqrt.pop %v9542
        %v9559 = vrsqrt.pop %v9543
        %v9560 = vrsqrt.pop %v9544
        %v9561 = vrsqrt.pop %v9545
        %v9562 = vrsqrt.pop %v9546
        %v9563 = vrsqrt.pop %v9547
        %v9564 = vrsqrt.pop %v9548
        %v9565 = vrsqrt.pop %v9549
        %v9566 = vrsqrt.pop %v9550
        %v9567 = vrsqrt.pop %v9551
        %v9568 = vrsqrt.pop %v9552
        %v9569 = vrsqrt.pop %v9553
        %v9570 = vrsqrt.pop %v9554
        %v9571 = vrsqrt.pop %v9555
        %v9572 = vrsqrt.pop %v9556
        %v9573 = vrsqrt.pop %v9557
        %v9574 = vmul.f32 %v9446, %v9558
        %v9575 = vmul.f32 %v9447, %v9559
        %v9576 = vmul.f32 %v9448, %v9560
        %v9577 = vmul.f32 %v9449, %v9561
        %v9578 = vmul.f32 %v9450, %v9562
        %v9579 = vmul.f32 %v9451, %v9563
        %v9580 = vmul.f32 %v9452, %v9564
        %v9581 = vmul.f32 %v9453, %v9565
        %v9582 = vmul.f32 %v9454, %v9566
        %v9583 = vmul.f32 %v9455, %v9567
        %v9584 = vmul.f32 %v9456, %v9568
        %v9585 = vmul.f32 %v9457, %v9569
        %v9586 = vmul.f32 %v9458, %v9570
        %v9587 = vmul.f32 %v9459, %v9571
        %v9588 = vmul.f32 %v9460, %v9572
        %v9589 = vmul.f32 %v9461, %v9573
        %v9591 = vlaneseq
        %v9592 = vshrl.u32 %v9591, 7
        %v9593 = vsub.s32 0, %v9592
        %v9594 = vrot.slane %v9380, %v9593
        %v9596 = vmul.f32 %v9574, %v9594
        %v9597 = vmul.f32 %v9575, %v9594
        %v9598 = vmul.f32 %v9576, %v9594
        %v9599 = vmul.f32 %v9577, %v9594
        %v9600 = vmul.f32 %v9578, %v9594
        %v9601 = vmul.f32 %v9579, %v9594
        %v9602 = vmul.f32 %v9580, %v9594
        %v9603 = vmul.f32 %v9581, %v9594
        %v9604 = vmul.f32 %v9582, %v9594
        %v9605 = vmul.f32 %v9583, %v9594
        %v9606 = vmul.f32 %v9584, %v9594
        %v9607 = vmul.f32 %v9585, %v9594
        %v9608 = vmul.f32 %v9586, %v9594
        %v9609 = vmul.f32 %v9587, %v9594
        %v9610 = vmul.f32 %v9588, %v9594
        %v9611 = vmul.f32 %v9589, %v9594
        %v9613 = vlaneseq
        %v9614 = vshrl.u32 %v9613, 7
        %v9615 = vsub.s32 0, %v9614
        %v9616 = vrot.slane %v9381, %v9615
        %v9618 = vadd.f32 %v9596, %v9616
        %v9619 = vadd.f32 %v9597, %v9616
        %v9620 = vadd.f32 %v9598, %v9616
        %v9621 = vadd.f32 %v9599, %v9616
        %v9622 = vadd.f32 %v9600, %v9616
        %v9623 = vadd.f32 %v9601, %v9616
        %v9624 = vadd.f32 %v9602, %v9616
        %v9625 = vadd.f32 %v9603, %v9616
        %v9626 = vadd.f32 %v9604, %v9616
        %v9627 = vadd.f32 %v9605, %v9616
        %v9628 = vadd.f32 %v9606, %v9616
        %v9629 = vadd.f32 %v9607, %v9616
        %v9630 = vadd.f32 %v9608, %v9616
        %v9631 = vadd.f32 %v9609, %v9616
        %v9632 = vadd.f32 %v9610, %v9616
        %v9633 = vadd.f32 %v9611, %v9616
        %9634 = vst.msk [vmem:[%s481] sm:$0xff] %vm541, %v9618
        %9635 = vst.msk [vmem:[%s481 + $0x8] sm:$0xff] %vm541, %v9619
        %9636 = vst.msk [vmem:[%s481 + $0x10] sm:$0xff] %vm541, %v9620
        %9637 = vst.msk [vmem:[%s481 + $0x18] sm:$0xff] %vm541, %v9621
        %9638 = vst.msk [vmem:[%s481 + $0x20] sm:$0xff] %vm541, %v9622
        %9639 = vst.msk [vmem:[%s481 + $0x28] sm:$0xff] %vm541, %v9623
        %9640 = vst.msk [vmem:[%s481 + $0x30] sm:$0xff] %vm541, %v9624
        %9641 = vst.msk [vmem:[%s481 + $0x38] sm:$0xff] %vm541, %v9625
        %9642 = vst.msk [vmem:[%s481 + $0x40] sm:$0xff] %vm541, %v9626
        %9643 = vst.msk [vmem:[%s481 + $0x48] sm:$0xff] %vm541, %v9627
        %9644 = vst.msk [vmem:[%s481 + $0x50] sm:$0xff] %vm541, %v9628
        %9645 = vst.msk [vmem:[%s481 + $0x58] sm:$0xff] %vm541, %v9629
        %9646 = vst.msk [vmem:[%s481 + $0x60] sm:$0xff] %vm541, %v9630
        %9647 = vst.msk [vmem:[%s481 + $0x68] sm:$0xff] %vm541, %v9631
        %9648 = vst.msk [vmem:[%s481 + $0x70] sm:$0xff] %vm541, %v9632
        %9649 = vst.msk [vmem:[%s481 + $0x78] sm:$0xff] %vm541, %v9633
      $region84: #{tpu_custom_call.1} parent=75 // pred_fallthru
        _
      %s9650 = smul.u32 16, %s29
      %p9651 = scmp.lt.s32.totalorder %s9650, 31
      %s9652 = scalar_select %p9651, %s9650, 31
      %s9653 = smul.addr %s9652, 8
      %s9654 = scalar_lea.vmem %s14, %s9653
      // Predicated region
      $region85: #{tpu_custom_call.1} parent=75 // pred_check
        %p9655 = pneg %p354
      $region86: #{tpu_custom_call.1} parent=75 // pred_check_branch
        %9657 = sbr.rel (%p9655) target = $region88
      $region87: #{tpu_custom_call.1} parent=75 // pred_region
        %s9658 = smul.u32 16, %s29
      $region88: #{tpu_custom_call.1} parent=75 // pred_fallthru
        _
    $region76: #{tpu_custom_call.1} parent=5 // pred_fallthru
      _
    %p9659 = scmp.le.s32.totalorder 2, %s20
    // Predicated region
    $region89: #{tpu_custom_call.1} parent=5 // pred_check
      %p9660 = pneg %p9659
    $region90: #{tpu_custom_call.1} parent=5 // pred_check_branch
      %9662 = sbr.rel (%p9660) target = $region92
    $region91: #{tpu_custom_call.1} parent=5 // pred_region
      %s9663 = ssub.s32 %s20, 2
      // Predicated region
      $region93: #{tpu_custom_call.1} parent=91 // pred_check
        %p9664 = pneg %p360
      $region94: #{tpu_custom_call.1} parent=91 // pred_check_branch
        %9666 = sbr.rel (%p9664) target = $region96
      $region95: #{tpu_custom_call.1} parent=91 // pred_region
        %s9667 = smul.u32 16, %s31
        %p9668 = scmp.lt.s32.totalorder %s9667, 31
        %s9669 = scalar_select %p9668, %s9667, 31
        %s9670 = smul.addr %s9669, 8
        %s9671 = scalar_lea.vmem %s14, %s9670
      $region96: #{tpu_custom_call.1} parent=91 // pred_fallthru
        _
    $region92: #{tpu_custom_call.1} parent=5 // pred_fallthru
      _
  $region6: #{tpu_custom_call.1} parent=0 // loop_footer
    %s24 = sadd.s32 1, %s20
  $region7: #{tpu_custom_call.1} parent=0 // loop_footer_branch
    %19 = sbr.rel target = $region3
  $region8: #{tpu_custom_call.1} parent=0 // loop_exit
    _

</llo_original>
